<compile_context>
chip_gen: v7x
topology: tpu7x:2x2x1
jax: 0.10.0
libtpu: 0.0.40
codegen_flags: <defaults>
</compile_context>

<pallas_src>
import functools

import jax
import jax.numpy as jnp
from jax.experimental import pallas as pl
from jax.experimental.pallas import tpu as pltpu

NEG_SLOPE = 0.01  # PyTorch nn.LeakyReLU default


def _taps(radius):
    return [(dh, dw) for dh in range(-radius, radius + 1)
            for dw in range(-radius, radius + 1)]


# -----------------------------------------------------------------------------
# Fused RNet kernel
# -----------------------------------------------------------------------------
def _make_rnet_kernel(img_w, use_bf16_taps):
    """All four layers fused; activations live as (C, L) with the flattened spatial
    axis (L = images_per_block * H*W) on lanes -> dense vregs, unmasked lane stores."""
    tap_dtype = jnp.bfloat16 if use_bf16_taps else jnp.float32
    taps5, taps3 = _taps(2), _taps(1)

    def _leaky(v):                                   # f32 in, f32 out
        return jnp.where(v > 0, v, NEG_SLOPE * v)

    def kernel(x_ref, m5_ref, m3_ref, w0_ref, b0_ref, w1_ref, b1_ref,
               w2_ref, b2_ref, w3_ref, b3_ref, o_ref):
        L = x_ref.shape[1]

        def conv_taps(act, w_ref, b_ref, m_ref, taps):
            # act:   (Cin, L)  in tap_dtype (cast ONCE by the caller)
            # w_ref: (T, Cout, Cin) bf16 per-tap weights, same tap order as `taps`
            # m_ref: (T, L) f32 0/1 border-validity masks (periodic per image)
            cout = w_ref.shape[1]
            acc = jnp.broadcast_to(b_ref[...], (cout, L))    # bias folded into init (f32)
            for t, (dh, dw) in enumerate(taps):
                s = dh * img_w + dw                          # flat source offset
                if s == 0:                                   # center tap: always valid
                    piece = act
                else:
                    # pltpu.roll follows jnp.roll semantics: roll(x,k,1)[:, j] == x[:, (j-k)%L],
                    # so rolling by (-s) % L gives piece[:, j] == act[:, j+s]; positions whose
                    # source would fall outside the image are zeroed by the 0/1 mask (this also
                    # kills any wrap across image boundaries when Bt images share the block).
                    piece = pltpu.roll(act, (-s) % L, 1)     # XLU lane rotation
                    piece = piece * m_ref[pl.ds(t, 1), :].astype(act.dtype)
                acc = acc + jnp.dot(w_ref[t], piece.astype(jnp.bfloat16),
                                    preferred_element_type=jnp.float32)
            return acc                                       # (Cout, L) f32

        a0 = _leaky(conv_taps(x_ref[...].astype(tap_dtype), w0_ref, b0_ref, m5_ref, taps5))
        a1 = _leaky(conv_taps(a0.astype(tap_dtype), w1_ref, b1_ref, m3_ref, taps3))
        a2 = _leaky(conv_taps(a1.astype(tap_dtype), w2_ref, b2_ref, m3_ref, taps3))
        out = jnp.dot(w3_ref[...], a2.astype(jnp.bfloat16),
                      preferred_element_type=jnp.float32) + b3_ref[...]
        o_ref[...] = out.astype(o_ref.dtype)                 # lane-dense store

    return kernel


# -----------------------------------------------------------------------------
# Wrapper-side prep helpers (all fused under jit; tiny at these sizes)
# -----------------------------------------------------------------------------
def _per_tap_weights(w, cin_pad=None):
    """(Cout, Cin, k, k) -> (k*k, Cout, Cin[_pad]) bf16, tap order (dh, dw) row-major."""
    co, ci, kh, kw = w.shape
    wt = jnp.transpose(w, (2, 3, 0, 1)).reshape(kh * kw, co, ci)
    if cin_pad is not None and cin_pad > ci:
        wt = jnp.pad(wt, ((0, 0), (0, 0), (0, cin_pad - ci)))
    return wt.astype(jnp.bfloat16)


def _tap_masks(taps, h, w, images_per_block):
    """(len(taps), images_per_block*h*w) f32 0/1 border-validity masks."""
    hh = jnp.repeat(jnp.arange(h), w)
    ww = jnp.tile(jnp.arange(w), h)
    rows = [((hh + dh >= 0) & (hh + dh < h) & (ww + dw >= 0) & (ww + dw < w))
            for dh, dw in taps]
    m = jnp.stack(rows).astype(jnp.float32)                  # (T, h*w)
    return jnp.tile(m, (1, images_per_block))                # periodic per image


def _choose_images_per_block(n, hw, target_lanes=1024):
    """Pack several images on the lane axis per grid step (amortizes ~0.35us/step and
    widens the MXU lane dim) while keeping >=2 grid blocks when possible (v7x megacore)."""
    bt = max(1, min(n, target_lanes // max(hw, 1)))
    if n >= 2:
        bt = min(bt, n // 2)
    bt = max(bt, 1)
    while n % bt:
        bt -= 1
    return bt


@functools.partial(jax.jit, static_argnames=("use_bf16_taps",))
def _rnet_impl(x, params, *, use_bf16_taps):
    (w0, b0), (w1, b1), (w2, b2), (w3, b3) = params
    n, c_in, h, w = x.shape
    hw = h * w
    c_out = w3.shape[0]
    cin_pad = max(8, -(-c_in // 8) * 8)          # sublane-align layer0's tiny Cin

    bt = _choose_images_per_block(n, hw)
    L = bt * hw

    # Channel-major flatten + zero-pad Cin; kernel HBM input is ~2*cin_pad bytes/pixel.
    xr = jnp.transpose(x, (1, 0, 2, 3)).reshape(c_in, n * hw)
    xr = jnp.pad(xr, ((0, cin_pad - c_in), (0, 0))).astype(jnp.bfloat16)

    w0t = _per_tap_weights(w0, cin_pad)                      # (25, 32, cin_pad) bf16
    w1t = _per_tap_weights(w1)                               # (9, 64, 32)
    w2t = _per_tap_weights(w2)                               # (9, 32, 64)
    w3f = w3.reshape(c_out, -1).astype(jnp.bfloat16)         # (c_out, 32)
    b0c = b0.reshape(-1, 1).astype(jnp.float32)
    b1c = b1.reshape(-1, 1).astype(jnp.float32)
    b2c = b2.reshape(-1, 1).astype(jnp.float32)
    b3c = b3.reshape(-1, 1).astype(jnp.float32)
    m5 = _tap_masks(_taps(2), h, w, bt)                      # (25, L) f32
    m3 = _tap_masks(_taps(1), h, w, bt)                      # (9, L) f32

    kernel = _make_rnet_kernel(w, use_bf16_taps)

    def full_spec(a):
        nd = a.ndim
        return pl.BlockSpec(a.shape, lambda g, _nd=nd: (0,) * _nd)

    out_flat = pl.pallas_call(
        kernel,
        out_shape=jax.ShapeDtypeStruct((c_out, n * hw), jnp.float32),
        grid=(n // bt,),
        in_specs=[
            pl.BlockSpec((cin_pad, L), lambda g: (0, g)),    # image block on lanes
            full_spec(m5), full_spec(m3),                    # VMEM-resident constants
            full_spec(w0t), full_spec(b0c),
            full_spec(w1t), full_spec(b1c),
            full_spec(w2t), full_spec(b2c),
            full_spec(w3f), full_spec(b3c),
        ],
        out_specs=pl.BlockSpec((c_out, L), lambda g: (0, g)),
        compiler_params=pltpu.CompilerParams(
            dimension_semantics=("parallel",)),
    )(xr, m5, m3, w0t, b0c, w1t, b1c, w2t, b2c, w3f, b3c)

    return out_flat.reshape(c_out, n, h, w).transpose(1, 0, 2, 3)


def _taps_in_bf16():
    """Roll/mask the conv taps in bf16 on chips with bf16 VPU ALUs (v6e / v7x);
    keep that elementwise work in f32 on v5e-and-older (no bf16 VALU there)."""
    try:
        kind = jax.devices()[0].device_kind.lower()
    except Exception:
        return True
    return not any(tag in kind for tag in ("v2", "v3", "v4", "v5"))


def rnet_forward(x, params):
    """RNet forward: x (N, in_c, H, W) f32 -> (N, out_c, H, W) f32.
    Intended regime: H*W a multiple of 128 (lane-dense flattened spatial axis)."""
    use_bf16 = _taps_in_bf16()
    try:
        return _rnet_impl(x, params, use_bf16_taps=use_bf16)
    except Exception:
        if not use_bf16:
            raise
        # Conservative fallback (identical numerics): tap elementwise math in f32.
        return _rnet_impl(x, params, use_bf16_taps=False)


# -----------------------------------------------------------------------------
# Pure-XLA reference matching the kernel's numerics (bf16 MXU inputs, f32 accum).
# -----------------------------------------------------------------------------
def _ref_rnet(x, params):
    def conv(a, w, b, pad):
        y = jax.lax.conv_general_dilated(
            a.astype(jnp.bfloat16), w.astype(jnp.bfloat16),
            window_strides=(1, 1), padding=((pad, pad), (pad, pad)),
            dimension_numbers=("NCHW", "OIHW", "NCHW"),
            preferred_element_type=jnp.float32)
        return y + b.reshape(1, -1, 1, 1)

    def leaky(a):
        return jnp.where(a > 0, a, NEG_SLOPE * a)

    (w0, b0), (w1, b1), (w2, b2), (w3, b3) = params
    a = leaky(conv(x, w0, b0, 2))
    a = leaky(conv(a, w1, b1, 1))
    a = leaky(conv(a, w2, b2, 1))
    return conv(a, w3, b3, 0)


if __name__ == "__main__":
    N, C_IN, C_OUT, H, W = 2, 4, 4, 16, 16

    key = jax.random.PRNGKey(0)
    ks = jax.random.split(key, 9)
    x = jax.random.normal(ks[0], (N, C_IN, H, W), dtype=jnp.float32)
    # Conv2d weights/biases (PyTorch default has bias=True on every layer).
    w0 = 0.1 * jax.random.normal(ks[1], (32, C_IN, 5, 5), dtype=jnp.float32)
    b0 = 0.1 * jax.random.normal(ks[2], (32,), dtype=jnp.float32)
    w1 = 0.1 * jax.random.normal(ks[3], (64, 32, 3, 3), dtype=jnp.float32)
    b1 = 0.1 * jax.random.normal(ks[4], (64,), dtype=jnp.float32)
    w2 = 0.1 * jax.random.normal(ks[5], (32, 64, 3, 3), dtype=jnp.float32)
    b2 = 0.1 * jax.random.normal(ks[6], (32,), dtype=jnp.float32)
    w3 = 0.1 * jax.random.normal(ks[7], (C_OUT, 32, 1, 1), dtype=jnp.float32)
    b3 = 0.1 * jax.random.normal(ks[8], (C_OUT,), dtype=jnp.float32)
    params = ((w0, b0), (w1, b1), (w2, b2), (w3, b3))

    out = jax.block_until_ready(rnet_forward(x, params))
    ref = jax.block_until_ready(_ref_rnet(x, params))

    assert out.shape == (N, C_OUT, H, W), out.shape
    max_err = float(jnp.max(jnp.abs(out - ref)))
    assert jnp.allclose(out, ref, rtol=1e-2, atol=1e-2), max_err
    print("KERNEL_OK")
</pallas_src>

<mosaic_0001>
module attributes {stable_mosaic.version = 11 : i64} {
  func.func @kernel(%arg0: i32, %arg1: memref<8x256xbf16, #tpu.memory_space<vmem>>, %arg2: memref<25x256xf32, #tpu.memory_space<vmem>>, %arg3: memref<9x256xf32, #tpu.memory_space<vmem>>, %arg4: memref<25x32x8xbf16, #tpu.memory_space<vmem>>, %arg5: memref<32x1xf32, #tpu.memory_space<vmem>>, %arg6: memref<9x64x32xbf16, #tpu.memory_space<vmem>>, %arg7: memref<64x1xf32, #tpu.memory_space<vmem>>, %arg8: memref<9x32x64xbf16, #tpu.memory_space<vmem>>, %arg9: memref<32x1xf32, #tpu.memory_space<vmem>>, %arg10: memref<4x32xbf16, #tpu.memory_space<vmem>>, %arg11: memref<4x1xf32, #tpu.memory_space<vmem>>, %arg12: memref<4x256xf32, #tpu.memory_space<vmem>>) attributes {dimension_semantics = [#tpu.dimension_semantics<parallel>], iteration_bounds = array<i64: 2>, scalar_prefetch = 0 : i64, scratch_operands = 0 : i64, tpu.core_type = #tpu.core_type<tc>, window_params = [{transform_indices = @transform_0, window_bounds = array<i64: 8, 256>}, {pipeline_mode = #tpu.pipeline_mode<synchronous>, transform_indices = @transform_1, window_bounds = array<i64: 25, 256>}, {pipeline_mode = #tpu.pipeline_mode<synchronous>, transform_indices = @transform_2, window_bounds = array<i64: 9, 256>}, {pipeline_mode = #tpu.pipeline_mode<synchronous>, transform_indices = @transform_3, window_bounds = array<i64: 25, 32, 8>}, {pipeline_mode = #tpu.pipeline_mode<synchronous>, transform_indices = @transform_4, window_bounds = array<i64: 32, 1>}, {pipeline_mode = #tpu.pipeline_mode<synchronous>, transform_indices = @transform_5, window_bounds = array<i64: 9, 64, 32>}, {pipeline_mode = #tpu.pipeline_mode<synchronous>, transform_indices = @transform_6, window_bounds = array<i64: 64, 1>}, {pipeline_mode = #tpu.pipeline_mode<synchronous>, transform_indices = @transform_7, window_bounds = array<i64: 9, 32, 64>}, {pipeline_mode = #tpu.pipeline_mode<synchronous>, transform_indices = @transform_8, window_bounds = array<i64: 32, 1>}, {pipeline_mode = #tpu.pipeline_mode<synchronous>, transform_indices = @transform_9, window_bounds = array<i64: 4, 32>}, {pipeline_mode = #tpu.pipeline_mode<synchronous>, transform_indices = @transform_10, window_bounds = array<i64: 4, 1>}, {transform_indices = @transform_11, window_bounds = array<i64: 4, 256>}]} {
    %c0 = arith.constant 0 : index
    %c0_0 = arith.constant 0 : index
    %0 = vector.load %arg1[%c0, %c0_0] : memref<8x256xbf16, #tpu.memory_space<vmem>>, vector<8x256xbf16>
    %c0_1 = arith.constant 0 : index
    %c0_2 = arith.constant 0 : index
    %1 = vector.load %arg5[%c0_1, %c0_2] : memref<32x1xf32, #tpu.memory_space<vmem>>, vector<32x1xf32>
    %2 = vector.shape_cast %1 : vector<32x1xf32> to vector<32x1xf32>
    %3 = vector.broadcast %2 : vector<32x1xf32> to vector<32x256xf32>
    %c34_i32 = arith.constant 34 : i32
    %4 = tpu.dynamic_rotate %0 by %c34_i32 dim 1 : vector<8x256xbf16>, i32 -> vector<8x256xbf16>
    %c0_3 = arith.constant 0 : index
    %c0_4 = arith.constant 0 : index
    %5 = vector.load %arg2[%c0_3, %c0_4] : memref<25x256xf32, #tpu.memory_space<vmem>>, vector<1x256xf32>
    %6 = arith.truncf %5 : vector<1x256xf32> to vector<1x256xbf16>
    %7 = vector.broadcast %6 : vector<1x256xbf16> to vector<8x256xbf16>
    %8 = arith.mulf %4, %7 : vector<8x256xbf16>
    %c0_5 = arith.constant 0 : index
    %c0_6 = arith.constant 0 : index
    %c0_7 = arith.constant 0 : index
    %9 = vector.load %arg4[%c0_5, %c0_6, %c0_7] : memref<25x32x8xbf16, #tpu.memory_space<vmem>>, vector<1x32x8xbf16>
    %10 = vector.shape_cast %9 : vector<1x32x8xbf16> to vector<32x8xbf16>
    %cst = arith.constant dense<0.000000e+00> : vector<32x256xf32>
    %11 = tpu.matmul %10, %8, %cst {dimension_numbers = #tpu.dot_dimension_numbers<[1], [0], [0], [1], [0, 0, 1, 1], [], []>} : vector<32x8xbf16>, vector<8x256xbf16>, vector<32x256xf32> -> vector<32x256xf32>
    %12 = arith.addf %3, %11 : vector<32x256xf32>
    %c33_i32 = arith.constant 33 : i32
    %13 = tpu.dynamic_rotate %0 by %c33_i32 dim 1 : vector<8x256xbf16>, i32 -> vector<8x256xbf16>
    %c1 = arith.constant 1 : index
    %c0_8 = arith.constant 0 : index
    %14 = vector.load %arg2[%c1, %c0_8] : memref<25x256xf32, #tpu.memory_space<vmem>>, vector<1x256xf32>
    %15 = arith.truncf %14 : vector<1x256xf32> to vector<1x256xbf16>
    %16 = vector.broadcast %15 : vector<1x256xbf16> to vector<8x256xbf16>
    %17 = arith.mulf %13, %16 : vector<8x256xbf16>
    %c1_9 = arith.constant 1 : index
    %c0_10 = arith.constant 0 : index
    %c0_11 = arith.constant 0 : index
    %18 = vector.load %arg4[%c1_9, %c0_10, %c0_11] : memref<25x32x8xbf16, #tpu.memory_space<vmem>>, vector<1x32x8xbf16>
    %19 = vector.shape_cast %18 : vector<1x32x8xbf16> to vector<32x8xbf16>
    %cst_12 = arith.constant dense<0.000000e+00> : vector<32x256xf32>
    %20 = tpu.matmul %19, %17, %cst_12 {dimension_numbers = #tpu.dot_dimension_numbers<[1], [0], [0], [1], [0, 0, 1, 1], [], []>} : vector<32x8xbf16>, vector<8x256xbf16>, vector<32x256xf32> -> vector<32x256xf32>
    %21 = arith.addf %12, %20 : vector<32x256xf32>
    %c32_i32 = arith.constant 32 : i32
    %22 = tpu.dynamic_rotate %0 by %c32_i32 dim 1 : vector<8x256xbf16>, i32 -> vector<8x256xbf16>
    %c2 = arith.constant 2 : index
    %c0_13 = arith.constant 0 : index
    %23 = vector.load %arg2[%c2, %c0_13] : memref<25x256xf32, #tpu.memory_space<vmem>>, vector<1x256xf32>
    %24 = arith.truncf %23 : vector<1x256xf32> to vector<1x256xbf16>
    %25 = vector.broadcast %24 : vector<1x256xbf16> to vector<8x256xbf16>
    %26 = arith.mulf %22, %25 : vector<8x256xbf16>
    %c2_14 = arith.constant 2 : index
    %c0_15 = arith.constant 0 : index
    %c0_16 = arith.constant 0 : index
    %27 = vector.load %arg4[%c2_14, %c0_15, %c0_16] : memref<25x32x8xbf16, #tpu.memory_space<vmem>>, vector<1x32x8xbf16>
    %28 = vector.shape_cast %27 : vector<1x32x8xbf16> to vector<32x8xbf16>
    %cst_17 = arith.constant dense<0.000000e+00> : vector<32x256xf32>
    %29 = tpu.matmul %28, %26, %cst_17 {dimension_numbers = #tpu.dot_dimension_numbers<[1], [0], [0], [1], [0, 0, 1, 1], [], []>} : vector<32x8xbf16>, vector<8x256xbf16>, vector<32x256xf32> -> vector<32x256xf32>
    %30 = arith.addf %21, %29 : vector<32x256xf32>
    %c31_i32 = arith.constant 31 : i32
    %31 = tpu.dynamic_rotate %0 by %c31_i32 dim 1 : vector<8x256xbf16>, i32 -> vector<8x256xbf16>
    %c3 = arith.constant 3 : index
    %c0_18 = arith.constant 0 : index
    %32 = vector.load %arg2[%c3, %c0_18] : memref<25x256xf32, #tpu.memory_space<vmem>>, vector<1x256xf32>
    %33 = arith.truncf %32 : vector<1x256xf32> to vector<1x256xbf16>
    %34 = vector.broadcast %33 : vector<1x256xbf16> to vector<8x256xbf16>
    %35 = arith.mulf %31, %34 : vector<8x256xbf16>
    %c3_19 = arith.constant 3 : index
    %c0_20 = arith.constant 0 : index
    %c0_21 = arith.constant 0 : index
    %36 = vector.load %arg4[%c3_19, %c0_20, %c0_21] : memref<25x32x8xbf16, #tpu.memory_space<vmem>>, vector<1x32x8xbf16>
    %37 = vector.shape_cast %36 : vector<1x32x8xbf16> to vector<32x8xbf16>
    %cst_22 = arith.constant dense<0.000000e+00> : vector<32x256xf32>
    %38 = tpu.matmul %37, %35, %cst_22 {dimension_numbers = #tpu.dot_dimension_numbers<[1], [0], [0], [1], [0, 0, 1, 1], [], []>} : vector<32x8xbf16>, vector<8x256xbf16>, vector<32x256xf32> -> vector<32x256xf32>
    %39 = arith.addf %30, %38 : vector<32x256xf32>
    %c30_i32 = arith.constant 30 : i32
    %40 = tpu.dynamic_rotate %0 by %c30_i32 dim 1 : vector<8x256xbf16>, i32 -> vector<8x256xbf16>
    %c4 = arith.constant 4 : index
    %c0_23 = arith.constant 0 : index
    %41 = vector.load %arg2[%c4, %c0_23] : memref<25x256xf32, #tpu.memory_space<vmem>>, vector<1x256xf32>
    %42 = arith.truncf %41 : vector<1x256xf32> to vector<1x256xbf16>
    %43 = vector.broadcast %42 : vector<1x256xbf16> to vector<8x256xbf16>
    %44 = arith.mulf %40, %43 : vector<8x256xbf16>
    %c4_24 = arith.constant 4 : index
    %c0_25 = arith.constant 0 : index
    %c0_26 = arith.constant 0 : index
    %45 = vector.load %arg4[%c4_24, %c0_25, %c0_26] : memref<25x32x8xbf16, #tpu.memory_space<vmem>>, vector<1x32x8xbf16>
    %46 = vector.shape_cast %45 : vector<1x32x8xbf16> to vector<32x8xbf16>
    %cst_27 = arith.constant dense<0.000000e+00> : vector<32x256xf32>
    %47 = tpu.matmul %46, %44, %cst_27 {dimension_numbers = #tpu.dot_dimension_numbers<[1], [0], [0], [1], [0, 0, 1, 1], [], []>} : vector<32x8xbf16>, vector<8x256xbf16>, vector<32x256xf32> -> vector<32x256xf32>
    %48 = arith.addf %39, %47 : vector<32x256xf32>
    %c18_i32 = arith.constant 18 : i32
    %49 = tpu.dynamic_rotate %0 by %c18_i32 dim 1 : vector<8x256xbf16>, i32 -> vector<8x256xbf16>
    %c5 = arith.constant 5 : index
    %c0_28 = arith.constant 0 : index
    %50 = vector.load %arg2[%c5, %c0_28] : memref<25x256xf32, #tpu.memory_space<vmem>>, vector<1x256xf32>
    %51 = arith.truncf %50 : vector<1x256xf32> to vector<1x256xbf16>
    %52 = vector.broadcast %51 : vector<1x256xbf16> to vector<8x256xbf16>
    %53 = arith.mulf %49, %52 : vector<8x256xbf16>
    %c5_29 = arith.constant 5 : index
    %c0_30 = arith.constant 0 : index
    %c0_31 = arith.constant 0 : index
    %54 = vector.load %arg4[%c5_29, %c0_30, %c0_31] : memref<25x32x8xbf16, #tpu.memory_space<vmem>>, vector<1x32x8xbf16>
    %55 = vector.shape_cast %54 : vector<1x32x8xbf16> to vector<32x8xbf16>
    %cst_32 = arith.constant dense<0.000000e+00> : vector<32x256xf32>
    %56 = tpu.matmul %55, %53, %cst_32 {dimension_numbers = #tpu.dot_dimension_numbers<[1], [0], [0], [1], [0, 0, 1, 1], [], []>} : vector<32x8xbf16>, vector<8x256xbf16>, vector<32x256xf32> -> vector<32x256xf32>
    %57 = arith.addf %48, %56 : vector<32x256xf32>
    %c17_i32 = arith.constant 17 : i32
    %58 = tpu.dynamic_rotate %0 by %c17_i32 dim 1 : vector<8x256xbf16>, i32 -> vector<8x256xbf16>
    %c6 = arith.constant 6 : index
    %c0_33 = arith.constant 0 : index
    %59 = vector.load %arg2[%c6, %c0_33] : memref<25x256xf32, #tpu.memory_space<vmem>>, vector<1x256xf32>
    %60 = arith.truncf %59 : vector<1x256xf32> to vector<1x256xbf16>
    %61 = vector.broadcast %60 : vector<1x256xbf16> to vector<8x256xbf16>
    %62 = arith.mulf %58, %61 : vector<8x256xbf16>
    %c6_34 = arith.constant 6 : index
    %c0_35 = arith.constant 0 : index
    %c0_36 = arith.constant 0 : index
    %63 = vector.load %arg4[%c6_34, %c0_35, %c0_36] : memref<25x32x8xbf16, #tpu.memory_space<vmem>>, vector<1x32x8xbf16>
    %64 = vector.shape_cast %63 : vector<1x32x8xbf16> to vector<32x8xbf16>
    %cst_37 = arith.constant dense<0.000000e+00> : vector<32x256xf32>
    %65 = tpu.matmul %64, %62, %cst_37 {dimension_numbers = #tpu.dot_dimension_numbers<[1], [0], [0], [1], [0, 0, 1, 1], [], []>} : vector<32x8xbf16>, vector<8x256xbf16>, vector<32x256xf32> -> vector<32x256xf32>
    %66 = arith.addf %57, %65 : vector<32x256xf32>
    %c16_i32 = arith.constant 16 : i32
    %67 = tpu.dynamic_rotate %0 by %c16_i32 dim 1 : vector<8x256xbf16>, i32 -> vector<8x256xbf16>
    %c7 = arith.constant 7 : index
    %c0_38 = arith.constant 0 : index
    %68 = vector.load %arg2[%c7, %c0_38] : memref<25x256xf32, #tpu.memory_space<vmem>>, vector<1x256xf32>
    %69 = arith.truncf %68 : vector<1x256xf32> to vector<1x256xbf16>
    %70 = vector.broadcast %69 : vector<1x256xbf16> to vector<8x256xbf16>
    %71 = arith.mulf %67, %70 : vector<8x256xbf16>
    %c7_39 = arith.constant 7 : index
    %c0_40 = arith.constant 0 : index
    %c0_41 = arith.constant 0 : index
    %72 = vector.load %arg4[%c7_39, %c0_40, %c0_41] : memref<25x32x8xbf16, #tpu.memory_space<vmem>>, vector<1x32x8xbf16>
    %73 = vector.shape_cast %72 : vector<1x32x8xbf16> to vector<32x8xbf16>
    %cst_42 = arith.constant dense<0.000000e+00> : vector<32x256xf32>
    %74 = tpu.matmul %73, %71, %cst_42 {dimension_numbers = #tpu.dot_dimension_numbers<[1], [0], [0], [1], [0, 0, 1, 1], [], []>} : vector<32x8xbf16>, vector<8x256xbf16>, vector<32x256xf32> -> vector<32x256xf32>
    %75 = arith.addf %66, %74 : vector<32x256xf32>
    %c15_i32 = arith.constant 15 : i32
    %76 = tpu.dynamic_rotate %0 by %c15_i32 dim 1 : vector<8x256xbf16>, i32 -> vector<8x256xbf16>
    %c8 = arith.constant 8 : index
    %c0_43 = arith.constant 0 : index
    %77 = vector.load %arg2[%c8, %c0_43] : memref<25x256xf32, #tpu.memory_space<vmem>>, vector<1x256xf32>
    %78 = arith.truncf %77 : vector<1x256xf32> to vector<1x256xbf16>
    %79 = vector.broadcast %78 : vector<1x256xbf16> to vector<8x256xbf16>
    %80 = arith.mulf %76, %79 : vector<8x256xbf16>
    %c8_44 = arith.constant 8 : index
    %c0_45 = arith.constant 0 : index
    %c0_46 = arith.constant 0 : index
    %81 = vector.load %arg4[%c8_44, %c0_45, %c0_46] : memref<25x32x8xbf16, #tpu.memory_space<vmem>>, vector<1x32x8xbf16>
    %82 = vector.shape_cast %81 : vector<1x32x8xbf16> to vector<32x8xbf16>
    %cst_47 = arith.constant dense<0.000000e+00> : vector<32x256xf32>
    %83 = tpu.matmul %82, %80, %cst_47 {dimension_numbers = #tpu.dot_dimension_numbers<[1], [0], [0], [1], [0, 0, 1, 1], [], []>} : vector<32x8xbf16>, vector<8x256xbf16>, vector<32x256xf32> -> vector<32x256xf32>
    %84 = arith.addf %75, %83 : vector<32x256xf32>
    %c14_i32 = arith.constant 14 : i32
    %85 = tpu.dynamic_rotate %0 by %c14_i32 dim 1 : vector<8x256xbf16>, i32 -> vector<8x256xbf16>
    %c9 = arith.constant 9 : index
    %c0_48 = arith.constant 0 : index
    %86 = vector.load %arg2[%c9, %c0_48] : memref<25x256xf32, #tpu.memory_space<vmem>>, vector<1x256xf32>
    %87 = arith.truncf %86 : vector<1x256xf32> to vector<1x256xbf16>
    %88 = vector.broadcast %87 : vector<1x256xbf16> to vector<8x256xbf16>
    %89 = arith.mulf %85, %88 : vector<8x256xbf16>
    %c9_49 = arith.constant 9 : index
    %c0_50 = arith.constant 0 : index
    %c0_51 = arith.constant 0 : index
    %90 = vector.load %arg4[%c9_49, %c0_50, %c0_51] : memref<25x32x8xbf16, #tpu.memory_space<vmem>>, vector<1x32x8xbf16>
    %91 = vector.shape_cast %90 : vector<1x32x8xbf16> to vector<32x8xbf16>
    %cst_52 = arith.constant dense<0.000000e+00> : vector<32x256xf32>
    %92 = tpu.matmul %91, %89, %cst_52 {dimension_numbers = #tpu.dot_dimension_numbers<[1], [0], [0], [1], [0, 0, 1, 1], [], []>} : vector<32x8xbf16>, vector<8x256xbf16>, vector<32x256xf32> -> vector<32x256xf32>
    %93 = arith.addf %84, %92 : vector<32x256xf32>
    %c2_i32 = arith.constant 2 : i32
    %94 = tpu.dynamic_rotate %0 by %c2_i32 dim 1 : vector<8x256xbf16>, i32 -> vector<8x256xbf16>
    %c10 = arith.constant 10 : index
    %c0_53 = arith.constant 0 : index
    %95 = vector.load %arg2[%c10, %c0_53] : memref<25x256xf32, #tpu.memory_space<vmem>>, vector<1x256xf32>
    %96 = arith.truncf %95 : vector<1x256xf32> to vector<1x256xbf16>
    %97 = vector.broadcast %96 : vector<1x256xbf16> to vector<8x256xbf16>
    %98 = arith.mulf %94, %97 : vector<8x256xbf16>
    %c10_54 = arith.constant 10 : index
    %c0_55 = arith.constant 0 : index
    %c0_56 = arith.constant 0 : index
    %99 = vector.load %arg4[%c10_54, %c0_55, %c0_56] : memref<25x32x8xbf16, #tpu.memory_space<vmem>>, vector<1x32x8xbf16>
    %100 = vector.shape_cast %99 : vector<1x32x8xbf16> to vector<32x8xbf16>
    %cst_57 = arith.constant dense<0.000000e+00> : vector<32x256xf32>
    %101 = tpu.matmul %100, %98, %cst_57 {dimension_numbers = #tpu.dot_dimension_numbers<[1], [0], [0], [1], [0, 0, 1, 1], [], []>} : vector<32x8xbf16>, vector<8x256xbf16>, vector<32x256xf32> -> vector<32x256xf32>
    %102 = arith.addf %93, %101 : vector<32x256xf32>
    %c1_i32 = arith.constant 1 : i32
    %103 = tpu.dynamic_rotate %0 by %c1_i32 dim 1 : vector<8x256xbf16>, i32 -> vector<8x256xbf16>
    %c11 = arith.constant 11 : index
    %c0_58 = arith.constant 0 : index
    %104 = vector.load %arg2[%c11, %c0_58] : memref<25x256xf32, #tpu.memory_space<vmem>>, vector<1x256xf32>
    %105 = arith.truncf %104 : vector<1x256xf32> to vector<1x256xbf16>
    %106 = vector.broadcast %105 : vector<1x256xbf16> to vector<8x256xbf16>
    %107 = arith.mulf %103, %106 : vector<8x256xbf16>
    %c11_59 = arith.constant 11 : index
    %c0_60 = arith.constant 0 : index
    %c0_61 = arith.constant 0 : index
    %108 = vector.load %arg4[%c11_59, %c0_60, %c0_61] : memref<25x32x8xbf16, #tpu.memory_space<vmem>>, vector<1x32x8xbf16>
    %109 = vector.shape_cast %108 : vector<1x32x8xbf16> to vector<32x8xbf16>
    %cst_62 = arith.constant dense<0.000000e+00> : vector<32x256xf32>
    %110 = tpu.matmul %109, %107, %cst_62 {dimension_numbers = #tpu.dot_dimension_numbers<[1], [0], [0], [1], [0, 0, 1, 1], [], []>} : vector<32x8xbf16>, vector<8x256xbf16>, vector<32x256xf32> -> vector<32x256xf32>
    %111 = arith.addf %102, %110 : vector<32x256xf32>
    %c12 = arith.constant 12 : index
    %c0_63 = arith.constant 0 : index
    %c0_64 = arith.constant 0 : index
    %112 = vector.load %arg4[%c12, %c0_63, %c0_64] : memref<25x32x8xbf16, #tpu.memory_space<vmem>>, vector<1x32x8xbf16>
    %113 = vector.shape_cast %112 : vector<1x32x8xbf16> to vector<32x8xbf16>
    %cst_65 = arith.constant dense<0.000000e+00> : vector<32x256xf32>
    %114 = tpu.matmul %113, %0, %cst_65 {dimension_numbers = #tpu.dot_dimension_numbers<[1], [0], [0], [1], [0, 0, 1, 1], [], []>} : vector<32x8xbf16>, vector<8x256xbf16>, vector<32x256xf32> -> vector<32x256xf32>
    %115 = arith.addf %111, %114 : vector<32x256xf32>
    %c255_i32 = arith.constant 255 : i32
    %116 = tpu.dynamic_rotate %0 by %c255_i32 dim 1 : vector<8x256xbf16>, i32 -> vector<8x256xbf16>
    %c13 = arith.constant 13 : index
    %c0_66 = arith.constant 0 : index
    %117 = vector.load %arg2[%c13, %c0_66] : memref<25x256xf32, #tpu.memory_space<vmem>>, vector<1x256xf32>
    %118 = arith.truncf %117 : vector<1x256xf32> to vector<1x256xbf16>
    %119 = vector.broadcast %118 : vector<1x256xbf16> to vector<8x256xbf16>
    %120 = arith.mulf %116, %119 : vector<8x256xbf16>
    %c13_67 = arith.constant 13 : index
    %c0_68 = arith.constant 0 : index
    %c0_69 = arith.constant 0 : index
    %121 = vector.load %arg4[%c13_67, %c0_68, %c0_69] : memref<25x32x8xbf16, #tpu.memory_space<vmem>>, vector<1x32x8xbf16>
    %122 = vector.shape_cast %121 : vector<1x32x8xbf16> to vector<32x8xbf16>
    %cst_70 = arith.constant dense<0.000000e+00> : vector<32x256xf32>
    %123 = tpu.matmul %122, %120, %cst_70 {dimension_numbers = #tpu.dot_dimension_numbers<[1], [0], [0], [1], [0, 0, 1, 1], [], []>} : vector<32x8xbf16>, vector<8x256xbf16>, vector<32x256xf32> -> vector<32x256xf32>
    %124 = arith.addf %115, %123 : vector<32x256xf32>
    %c254_i32 = arith.constant 254 : i32
    %125 = tpu.dynamic_rotate %0 by %c254_i32 dim 1 : vector<8x256xbf16>, i32 -> vector<8x256xbf16>
    %c14 = arith.constant 14 : index
    %c0_71 = arith.constant 0 : index
    %126 = vector.load %arg2[%c14, %c0_71] : memref<25x256xf32, #tpu.memory_space<vmem>>, vector<1x256xf32>
    %127 = arith.truncf %126 : vector<1x256xf32> to vector<1x256xbf16>
    %128 = vector.broadcast %127 : vector<1x256xbf16> to vector<8x256xbf16>
    %129 = arith.mulf %125, %128 : vector<8x256xbf16>
    %c14_72 = arith.constant 14 : index
    %c0_73 = arith.constant 0 : index
    %c0_74 = arith.constant 0 : index
    %130 = vector.load %arg4[%c14_72, %c0_73, %c0_74] : memref<25x32x8xbf16, #tpu.memory_space<vmem>>, vector<1x32x8xbf16>
    %131 = vector.shape_cast %130 : vector<1x32x8xbf16> to vector<32x8xbf16>
    %cst_75 = arith.constant dense<0.000000e+00> : vector<32x256xf32>
    %132 = tpu.matmul %131, %129, %cst_75 {dimension_numbers = #tpu.dot_dimension_numbers<[1], [0], [0], [1], [0, 0, 1, 1], [], []>} : vector<32x8xbf16>, vector<8x256xbf16>, vector<32x256xf32> -> vector<32x256xf32>
    %133 = arith.addf %124, %132 : vector<32x256xf32>
    %c242_i32 = arith.constant 242 : i32
    %134 = tpu.dynamic_rotate %0 by %c242_i32 dim 1 : vector<8x256xbf16>, i32 -> vector<8x256xbf16>
    %c15 = arith.constant 15 : index
    %c0_76 = arith.constant 0 : index
    %135 = vector.load %arg2[%c15, %c0_76] : memref<25x256xf32, #tpu.memory_space<vmem>>, vector<1x256xf32>
    %136 = arith.truncf %135 : vector<1x256xf32> to vector<1x256xbf16>
    %137 = vector.broadcast %136 : vector<1x256xbf16> to vector<8x256xbf16>
    %138 = arith.mulf %134, %137 : vector<8x256xbf16>
    %c15_77 = arith.constant 15 : index
    %c0_78 = arith.constant 0 : index
    %c0_79 = arith.constant 0 : index
    %139 = vector.load %arg4[%c15_77, %c0_78, %c0_79] : memref<25x32x8xbf16, #tpu.memory_space<vmem>>, vector<1x32x8xbf16>
    %140 = vector.shape_cast %139 : vector<1x32x8xbf16> to vector<32x8xbf16>
    %cst_80 = arith.constant dense<0.000000e+00> : vector<32x256xf32>
    %141 = tpu.matmul %140, %138, %cst_80 {dimension_numbers = #tpu.dot_dimension_numbers<[1], [0], [0], [1], [0, 0, 1, 1], [], []>} : vector<32x8xbf16>, vector<8x256xbf16>, vector<32x256xf32> -> vector<32x256xf32>
    %142 = arith.addf %133, %141 : vector<32x256xf32>
    %c241_i32 = arith.constant 241 : i32
    %143 = tpu.dynamic_rotate %0 by %c241_i32 dim 1 : vector<8x256xbf16>, i32 -> vector<8x256xbf16>
    %c16 = arith.constant 16 : index
    %c0_81 = arith.constant 0 : index
    %144 = vector.load %arg2[%c16, %c0_81] : memref<25x256xf32, #tpu.memory_space<vmem>>, vector<1x256xf32>
    %145 = arith.truncf %144 : vector<1x256xf32> to vector<1x256xbf16>
    %146 = vector.broadcast %145 : vector<1x256xbf16> to vector<8x256xbf16>
    %147 = arith.mulf %143, %146 : vector<8x256xbf16>
    %c16_82 = arith.constant 16 : index
    %c0_83 = arith.constant 0 : index
    %c0_84 = arith.constant 0 : index
    %148 = vector.load %arg4[%c16_82, %c0_83, %c0_84] : memref<25x32x8xbf16, #tpu.memory_space<vmem>>, vector<1x32x8xbf16>
    %149 = vector.shape_cast %148 : vector<1x32x8xbf16> to vector<32x8xbf16>
    %cst_85 = arith.constant dense<0.000000e+00> : vector<32x256xf32>
    %150 = tpu.matmul %149, %147, %cst_85 {dimension_numbers = #tpu.dot_dimension_numbers<[1], [0], [0], [1], [0, 0, 1, 1], [], []>} : vector<32x8xbf16>, vector<8x256xbf16>, vector<32x256xf32> -> vector<32x256xf32>
    %151 = arith.addf %142, %150 : vector<32x256xf32>
    %c240_i32 = arith.constant 240 : i32
    %152 = tpu.dynamic_rotate %0 by %c240_i32 dim 1 : vector<8x256xbf16>, i32 -> vector<8x256xbf16>
    %c17 = arith.constant 17 : index
    %c0_86 = arith.constant 0 : index
    %153 = vector.load %arg2[%c17, %c0_86] : memref<25x256xf32, #tpu.memory_space<vmem>>, vector<1x256xf32>
    %154 = arith.truncf %153 : vector<1x256xf32> to vector<1x256xbf16>
    %155 = vector.broadcast %154 : vector<1x256xbf16> to vector<8x256xbf16>
    %156 = arith.mulf %152, %155 : vector<8x256xbf16>
    %c17_87 = arith.constant 17 : index
    %c0_88 = arith.constant 0 : index
    %c0_89 = arith.constant 0 : index
    %157 = vector.load %arg4[%c17_87, %c0_88, %c0_89] : memref<25x32x8xbf16, #tpu.memory_space<vmem>>, vector<1x32x8xbf16>
    %158 = vector.shape_cast %157 : vector<1x32x8xbf16> to vector<32x8xbf16>
    %cst_90 = arith.constant dense<0.000000e+00> : vector<32x256xf32>
    %159 = tpu.matmul %158, %156, %cst_90 {dimension_numbers = #tpu.dot_dimension_numbers<[1], [0], [0], [1], [0, 0, 1, 1], [], []>} : vector<32x8xbf16>, vector<8x256xbf16>, vector<32x256xf32> -> vector<32x256xf32>
    %160 = arith.addf %151, %159 : vector<32x256xf32>
    %c239_i32 = arith.constant 239 : i32
    %161 = tpu.dynamic_rotate %0 by %c239_i32 dim 1 : vector<8x256xbf16>, i32 -> vector<8x256xbf16>
    %c18 = arith.constant 18 : index
    %c0_91 = arith.constant 0 : index
    %162 = vector.load %arg2[%c18, %c0_91] : memref<25x256xf32, #tpu.memory_space<vmem>>, vector<1x256xf32>
    %163 = arith.truncf %162 : vector<1x256xf32> to vector<1x256xbf16>
    %164 = vector.broadcast %163 : vector<1x256xbf16> to vector<8x256xbf16>
    %165 = arith.mulf %161, %164 : vector<8x256xbf16>
    %c18_92 = arith.constant 18 : index
    %c0_93 = arith.constant 0 : index
    %c0_94 = arith.constant 0 : index
    %166 = vector.load %arg4[%c18_92, %c0_93, %c0_94] : memref<25x32x8xbf16, #tpu.memory_space<vmem>>, vector<1x32x8xbf16>
    %167 = vector.shape_cast %166 : vector<1x32x8xbf16> to vector<32x8xbf16>
    %cst_95 = arith.constant dense<0.000000e+00> : vector<32x256xf32>
    %168 = tpu.matmul %167, %165, %cst_95 {dimension_numbers = #tpu.dot_dimension_numbers<[1], [0], [0], [1], [0, 0, 1, 1], [], []>} : vector<32x8xbf16>, vector<8x256xbf16>, vector<32x256xf32> -> vector<32x256xf32>
    %169 = arith.addf %160, %168 : vector<32x256xf32>
    %c238_i32 = arith.constant 238 : i32
    %170 = tpu.dynamic_rotate %0 by %c238_i32 dim 1 : vector<8x256xbf16>, i32 -> vector<8x256xbf16>
    %c19 = arith.constant 19 : index
    %c0_96 = arith.constant 0 : index
    %171 = vector.load %arg2[%c19, %c0_96] : memref<25x256xf32, #tpu.memory_space<vmem>>, vector<1x256xf32>
    %172 = arith.truncf %171 : vector<1x256xf32> to vector<1x256xbf16>
    %173 = vector.broadcast %172 : vector<1x256xbf16> to vector<8x256xbf16>
    %174 = arith.mulf %170, %173 : vector<8x256xbf16>
    %c19_97 = arith.constant 19 : index
    %c0_98 = arith.constant 0 : index
    %c0_99 = arith.constant 0 : index
    %175 = vector.load %arg4[%c19_97, %c0_98, %c0_99] : memref<25x32x8xbf16, #tpu.memory_space<vmem>>, vector<1x32x8xbf16>
    %176 = vector.shape_cast %175 : vector<1x32x8xbf16> to vector<32x8xbf16>
    %cst_100 = arith.constant dense<0.000000e+00> : vector<32x256xf32>
    %177 = tpu.matmul %176, %174, %cst_100 {dimension_numbers = #tpu.dot_dimension_numbers<[1], [0], [0], [1], [0, 0, 1, 1], [], []>} : vector<32x8xbf16>, vector<8x256xbf16>, vector<32x256xf32> -> vector<32x256xf32>
    %178 = arith.addf %169, %177 : vector<32x256xf32>
    %c226_i32 = arith.constant 226 : i32
    %179 = tpu.dynamic_rotate %0 by %c226_i32 dim 1 : vector<8x256xbf16>, i32 -> vector<8x256xbf16>
    %c20 = arith.constant 20 : index
    %c0_101 = arith.constant 0 : index
    %180 = vector.load %arg2[%c20, %c0_101] : memref<25x256xf32, #tpu.memory_space<vmem>>, vector<1x256xf32>
    %181 = arith.truncf %180 : vector<1x256xf32> to vector<1x256xbf16>
    %182 = vector.broadcast %181 : vector<1x256xbf16> to vector<8x256xbf16>
    %183 = arith.mulf %179, %182 : vector<8x256xbf16>
    %c20_102 = arith.constant 20 : index
    %c0_103 = arith.constant 0 : index
    %c0_104 = arith.constant 0 : index
    %184 = vector.load %arg4[%c20_102, %c0_103, %c0_104] : memref<25x32x8xbf16, #tpu.memory_space<vmem>>, vector<1x32x8xbf16>
    %185 = vector.shape_cast %184 : vector<1x32x8xbf16> to vector<32x8xbf16>
    %cst_105 = arith.constant dense<0.000000e+00> : vector<32x256xf32>
    %186 = tpu.matmul %185, %183, %cst_105 {dimension_numbers = #tpu.dot_dimension_numbers<[1], [0], [0], [1], [0, 0, 1, 1], [], []>} : vector<32x8xbf16>, vector<8x256xbf16>, vector<32x256xf32> -> vector<32x256xf32>
    %187 = arith.addf %178, %186 : vector<32x256xf32>
    %c225_i32 = arith.constant 225 : i32
    %188 = tpu.dynamic_rotate %0 by %c225_i32 dim 1 : vector<8x256xbf16>, i32 -> vector<8x256xbf16>
    %c21 = arith.constant 21 : index
    %c0_106 = arith.constant 0 : index
    %189 = vector.load %arg2[%c21, %c0_106] : memref<25x256xf32, #tpu.memory_space<vmem>>, vector<1x256xf32>
    %190 = arith.truncf %189 : vector<1x256xf32> to vector<1x256xbf16>
    %191 = vector.broadcast %190 : vector<1x256xbf16> to vector<8x256xbf16>
    %192 = arith.mulf %188, %191 : vector<8x256xbf16>
    %c21_107 = arith.constant 21 : index
    %c0_108 = arith.constant 0 : index
    %c0_109 = arith.constant 0 : index
    %193 = vector.load %arg4[%c21_107, %c0_108, %c0_109] : memref<25x32x8xbf16, #tpu.memory_space<vmem>>, vector<1x32x8xbf16>
    %194 = vector.shape_cast %193 : vector<1x32x8xbf16> to vector<32x8xbf16>
    %cst_110 = arith.constant dense<0.000000e+00> : vector<32x256xf32>
    %195 = tpu.matmul %194, %192, %cst_110 {dimension_numbers = #tpu.dot_dimension_numbers<[1], [0], [0], [1], [0, 0, 1, 1], [], []>} : vector<32x8xbf16>, vector<8x256xbf16>, vector<32x256xf32> -> vector<32x256xf32>
    %196 = arith.addf %187, %195 : vector<32x256xf32>
    %c224_i32 = arith.constant 224 : i32
    %197 = tpu.dynamic_rotate %0 by %c224_i32 dim 1 : vector<8x256xbf16>, i32 -> vector<8x256xbf16>
    %c22 = arith.constant 22 : index
    %c0_111 = arith.constant 0 : index
    %198 = vector.load %arg2[%c22, %c0_111] : memref<25x256xf32, #tpu.memory_space<vmem>>, vector<1x256xf32>
    %199 = arith.truncf %198 : vector<1x256xf32> to vector<1x256xbf16>
    %200 = vector.broadcast %199 : vector<1x256xbf16> to vector<8x256xbf16>
    %201 = arith.mulf %197, %200 : vector<8x256xbf16>
    %c22_112 = arith.constant 22 : index
    %c0_113 = arith.constant 0 : index
    %c0_114 = arith.constant 0 : index
    %202 = vector.load %arg4[%c22_112, %c0_113, %c0_114] : memref<25x32x8xbf16, #tpu.memory_space<vmem>>, vector<1x32x8xbf16>
    %203 = vector.shape_cast %202 : vector<1x32x8xbf16> to vector<32x8xbf16>
    %cst_115 = arith.constant dense<0.000000e+00> : vector<32x256xf32>
    %204 = tpu.matmul %203, %201, %cst_115 {dimension_numbers = #tpu.dot_dimension_numbers<[1], [0], [0], [1], [0, 0, 1, 1], [], []>} : vector<32x8xbf16>, vector<8x256xbf16>, vector<32x256xf32> -> vector<32x256xf32>
    %205 = arith.addf %196, %204 : vector<32x256xf32>
    %c223_i32 = arith.constant 223 : i32
    %206 = tpu.dynamic_rotate %0 by %c223_i32 dim 1 : vector<8x256xbf16>, i32 -> vector<8x256xbf16>
    %c23 = arith.constant 23 : index
    %c0_116 = arith.constant 0 : index
    %207 = vector.load %arg2[%c23, %c0_116] : memref<25x256xf32, #tpu.memory_space<vmem>>, vector<1x256xf32>
    %208 = arith.truncf %207 : vector<1x256xf32> to vector<1x256xbf16>
    %209 = vector.broadcast %208 : vector<1x256xbf16> to vector<8x256xbf16>
    %210 = arith.mulf %206, %209 : vector<8x256xbf16>
    %c23_117 = arith.constant 23 : index
    %c0_118 = arith.constant 0 : index
    %c0_119 = arith.constant 0 : index
    %211 = vector.load %arg4[%c23_117, %c0_118, %c0_119] : memref<25x32x8xbf16, #tpu.memory_space<vmem>>, vector<1x32x8xbf16>
    %212 = vector.shape_cast %211 : vector<1x32x8xbf16> to vector<32x8xbf16>
    %cst_120 = arith.constant dense<0.000000e+00> : vector<32x256xf32>
    %213 = tpu.matmul %212, %210, %cst_120 {dimension_numbers = #tpu.dot_dimension_numbers<[1], [0], [0], [1], [0, 0, 1, 1], [], []>} : vector<32x8xbf16>, vector<8x256xbf16>, vector<32x256xf32> -> vector<32x256xf32>
    %214 = arith.addf %205, %213 : vector<32x256xf32>
    %c222_i32 = arith.constant 222 : i32
    %215 = tpu.dynamic_rotate %0 by %c222_i32 dim 1 : vector<8x256xbf16>, i32 -> vector<8x256xbf16>
    %c24 = arith.constant 24 : index
    %c0_121 = arith.constant 0 : index
    %216 = vector.load %arg2[%c24, %c0_121] : memref<25x256xf32, #tpu.memory_space<vmem>>, vector<1x256xf32>
    %217 = arith.truncf %216 : vector<1x256xf32> to vector<1x256xbf16>
    %218 = vector.broadcast %217 : vector<1x256xbf16> to vector<8x256xbf16>
    %219 = arith.mulf %215, %218 : vector<8x256xbf16>
    %c24_122 = arith.constant 24 : index
    %c0_123 = arith.constant 0 : index
    %c0_124 = arith.constant 0 : index
    %220 = vector.load %arg4[%c24_122, %c0_123, %c0_124] : memref<25x32x8xbf16, #tpu.memory_space<vmem>>, vector<1x32x8xbf16>
    %221 = vector.shape_cast %220 : vector<1x32x8xbf16> to vector<32x8xbf16>
    %cst_125 = arith.constant dense<0.000000e+00> : vector<32x256xf32>
    %222 = tpu.matmul %221, %219, %cst_125 {dimension_numbers = #tpu.dot_dimension_numbers<[1], [0], [0], [1], [0, 0, 1, 1], [], []>} : vector<32x8xbf16>, vector<8x256xbf16>, vector<32x256xf32> -> vector<32x256xf32>
    %223 = arith.addf %214, %222 : vector<32x256xf32>
    %cst_126 = arith.constant 0.000000e+00 : f32
    %224 = vector.broadcast %cst_126 : f32 to vector<32x256xf32>
    %225 = arith.cmpf ogt, %223, %224 : vector<32x256xf32>
    %cst_127 = arith.constant 0.00999999977 : f32
    %226 = vector.broadcast %cst_127 : f32 to vector<32x256xf32>
    %227 = arith.mulf %226, %223 : vector<32x256xf32>
    %228 = arith.select %225, %223, %227 : vector<32x256xi1>, vector<32x256xf32>
    %229 = arith.truncf %228 : vector<32x256xf32> to vector<32x256xbf16>
    %c0_128 = arith.constant 0 : index
    %c0_129 = arith.constant 0 : index
    %230 = vector.load %arg7[%c0_128, %c0_129] : memref<64x1xf32, #tpu.memory_space<vmem>>, vector<64x1xf32>
    %231 = vector.shape_cast %230 : vector<64x1xf32> to vector<64x1xf32>
    %232 = vector.broadcast %231 : vector<64x1xf32> to vector<64x256xf32>
    %c17_i32_130 = arith.constant 17 : i32
    %233 = tpu.dynamic_rotate %229 by %c17_i32_130 dim 1 : vector<32x256xbf16>, i32 -> vector<32x256xbf16>
    %c0_131 = arith.constant 0 : index
    %c0_132 = arith.constant 0 : index
    %234 = vector.load %arg3[%c0_131, %c0_132] : memref<9x256xf32, #tpu.memory_space<vmem>>, vector<1x256xf32>
    %235 = arith.truncf %234 : vector<1x256xf32> to vector<1x256xbf16>
    %236 = vector.broadcast %235 : vector<1x256xbf16> to vector<32x256xbf16>
    %237 = arith.mulf %233, %236 : vector<32x256xbf16>
    %c0_133 = arith.constant 0 : index
    %c0_134 = arith.constant 0 : index
    %c0_135 = arith.constant 0 : index
    %238 = vector.load %arg6[%c0_133, %c0_134, %c0_135] : memref<9x64x32xbf16, #tpu.memory_space<vmem>>, vector<1x64x32xbf16>
    %239 = vector.shape_cast %238 : vector<1x64x32xbf16> to vector<64x32xbf16>
    %cst_136 = arith.constant dense<0.000000e+00> : vector<64x256xf32>
    %240 = tpu.matmul %239, %237, %cst_136 {dimension_numbers = #tpu.dot_dimension_numbers<[1], [0], [0], [1], [0, 0, 1, 1], [], []>} : vector<64x32xbf16>, vector<32x256xbf16>, vector<64x256xf32> -> vector<64x256xf32>
    %241 = arith.addf %232, %240 : vector<64x256xf32>
    %c16_i32_137 = arith.constant 16 : i32
    %242 = tpu.dynamic_rotate %229 by %c16_i32_137 dim 1 : vector<32x256xbf16>, i32 -> vector<32x256xbf16>
    %c1_138 = arith.constant 1 : index
    %c0_139 = arith.constant 0 : index
    %243 = vector.load %arg3[%c1_138, %c0_139] : memref<9x256xf32, #tpu.memory_space<vmem>>, vector<1x256xf32>
    %244 = arith.truncf %243 : vector<1x256xf32> to vector<1x256xbf16>
    %245 = vector.broadcast %244 : vector<1x256xbf16> to vector<32x256xbf16>
    %246 = arith.mulf %242, %245 : vector<32x256xbf16>
    %c1_140 = arith.constant 1 : index
    %c0_141 = arith.constant 0 : index
    %c0_142 = arith.constant 0 : index
    %247 = vector.load %arg6[%c1_140, %c0_141, %c0_142] : memref<9x64x32xbf16, #tpu.memory_space<vmem>>, vector<1x64x32xbf16>
    %248 = vector.shape_cast %247 : vector<1x64x32xbf16> to vector<64x32xbf16>
    %cst_143 = arith.constant dense<0.000000e+00> : vector<64x256xf32>
    %249 = tpu.matmul %248, %246, %cst_143 {dimension_numbers = #tpu.dot_dimension_numbers<[1], [0], [0], [1], [0, 0, 1, 1], [], []>} : vector<64x32xbf16>, vector<32x256xbf16>, vector<64x256xf32> -> vector<64x256xf32>
    %250 = arith.addf %241, %249 : vector<64x256xf32>
    %c15_i32_144 = arith.constant 15 : i32
    %251 = tpu.dynamic_rotate %229 by %c15_i32_144 dim 1 : vector<32x256xbf16>, i32 -> vector<32x256xbf16>
    %c2_145 = arith.constant 2 : index
    %c0_146 = arith.constant 0 : index
    %252 = vector.load %arg3[%c2_145, %c0_146] : memref<9x256xf32, #tpu.memory_space<vmem>>, vector<1x256xf32>
    %253 = arith.truncf %252 : vector<1x256xf32> to vector<1x256xbf16>
    %254 = vector.broadcast %253 : vector<1x256xbf16> to vector<32x256xbf16>
    %255 = arith.mulf %251, %254 : vector<32x256xbf16>
    %c2_147 = arith.constant 2 : index
    %c0_148 = arith.constant 0 : index
    %c0_149 = arith.constant 0 : index
    %256 = vector.load %arg6[%c2_147, %c0_148, %c0_149] : memref<9x64x32xbf16, #tpu.memory_space<vmem>>, vector<1x64x32xbf16>
    %257 = vector.shape_cast %256 : vector<1x64x32xbf16> to vector<64x32xbf16>
    %cst_150 = arith.constant dense<0.000000e+00> : vector<64x256xf32>
    %258 = tpu.matmul %257, %255, %cst_150 {dimension_numbers = #tpu.dot_dimension_numbers<[1], [0], [0], [1], [0, 0, 1, 1], [], []>} : vector<64x32xbf16>, vector<32x256xbf16>, vector<64x256xf32> -> vector<64x256xf32>
    %259 = arith.addf %250, %258 : vector<64x256xf32>
    %c1_i32_151 = arith.constant 1 : i32
    %260 = tpu.dynamic_rotate %229 by %c1_i32_151 dim 1 : vector<32x256xbf16>, i32 -> vector<32x256xbf16>
    %c3_152 = arith.constant 3 : index
    %c0_153 = arith.constant 0 : index
    %261 = vector.load %arg3[%c3_152, %c0_153] : memref<9x256xf32, #tpu.memory_space<vmem>>, vector<1x256xf32>
    %262 = arith.truncf %261 : vector<1x256xf32> to vector<1x256xbf16>
    %263 = vector.broadcast %262 : vector<1x256xbf16> to vector<32x256xbf16>
    %264 = arith.mulf %260, %263 : vector<32x256xbf16>
    %c3_154 = arith.constant 3 : index
    %c0_155 = arith.constant 0 : index
    %c0_156 = arith.constant 0 : index
    %265 = vector.load %arg6[%c3_154, %c0_155, %c0_156] : memref<9x64x32xbf16, #tpu.memory_space<vmem>>, vector<1x64x32xbf16>
    %266 = vector.shape_cast %265 : vector<1x64x32xbf16> to vector<64x32xbf16>
    %cst_157 = arith.constant dense<0.000000e+00> : vector<64x256xf32>
    %267 = tpu.matmul %266, %264, %cst_157 {dimension_numbers = #tpu.dot_dimension_numbers<[1], [0], [0], [1], [0, 0, 1, 1], [], []>} : vector<64x32xbf16>, vector<32x256xbf16>, vector<64x256xf32> -> vector<64x256xf32>
    %268 = arith.addf %259, %267 : vector<64x256xf32>
    %c4_158 = arith.constant 4 : index
    %c0_159 = arith.constant 0 : index
    %c0_160 = arith.constant 0 : index
    %269 = vector.load %arg6[%c4_158, %c0_159, %c0_160] : memref<9x64x32xbf16, #tpu.memory_space<vmem>>, vector<1x64x32xbf16>
    %270 = vector.shape_cast %269 : vector<1x64x32xbf16> to vector<64x32xbf16>
    %cst_161 = arith.constant dense<0.000000e+00> : vector<64x256xf32>
    %271 = tpu.matmul %270, %229, %cst_161 {dimension_numbers = #tpu.dot_dimension_numbers<[1], [0], [0], [1], [0, 0, 1, 1], [], []>} : vector<64x32xbf16>, vector<32x256xbf16>, vector<64x256xf32> -> vector<64x256xf32>
    %272 = arith.addf %268, %271 : vector<64x256xf32>
    %c255_i32_162 = arith.constant 255 : i32
    %273 = tpu.dynamic_rotate %229 by %c255_i32_162 dim 1 : vector<32x256xbf16>, i32 -> vector<32x256xbf16>
    %c5_163 = arith.constant 5 : index
    %c0_164 = arith.constant 0 : index
    %274 = vector.load %arg3[%c5_163, %c0_164] : memref<9x256xf32, #tpu.memory_space<vmem>>, vector<1x256xf32>
    %275 = arith.truncf %274 : vector<1x256xf32> to vector<1x256xbf16>
    %276 = vector.broadcast %275 : vector<1x256xbf16> to vector<32x256xbf16>
    %277 = arith.mulf %273, %276 : vector<32x256xbf16>
    %c5_165 = arith.constant 5 : index
    %c0_166 = arith.constant 0 : index
    %c0_167 = arith.constant 0 : index
    %278 = vector.load %arg6[%c5_165, %c0_166, %c0_167] : memref<9x64x32xbf16, #tpu.memory_space<vmem>>, vector<1x64x32xbf16>
    %279 = vector.shape_cast %278 : vector<1x64x32xbf16> to vector<64x32xbf16>
    %cst_168 = arith.constant dense<0.000000e+00> : vector<64x256xf32>
    %280 = tpu.matmul %279, %277, %cst_168 {dimension_numbers = #tpu.dot_dimension_numbers<[1], [0], [0], [1], [0, 0, 1, 1], [], []>} : vector<64x32xbf16>, vector<32x256xbf16>, vector<64x256xf32> -> vector<64x256xf32>
    %281 = arith.addf %272, %280 : vector<64x256xf32>
    %c241_i32_169 = arith.constant 241 : i32
    %282 = tpu.dynamic_rotate %229 by %c241_i32_169 dim 1 : vector<32x256xbf16>, i32 -> vector<32x256xbf16>
    %c6_170 = arith.constant 6 : index
    %c0_171 = arith.constant 0 : index
    %283 = vector.load %arg3[%c6_170, %c0_171] : memref<9x256xf32, #tpu.memory_space<vmem>>, vector<1x256xf32>
    %284 = arith.truncf %283 : vector<1x256xf32> to vector<1x256xbf16>
    %285 = vector.broadcast %284 : vector<1x256xbf16> to vector<32x256xbf16>
    %286 = arith.mulf %282, %285 : vector<32x256xbf16>
    %c6_172 = arith.constant 6 : index
    %c0_173 = arith.constant 0 : index
    %c0_174 = arith.constant 0 : index
    %287 = vector.load %arg6[%c6_172, %c0_173, %c0_174] : memref<9x64x32xbf16, #tpu.memory_space<vmem>>, vector<1x64x32xbf16>
    %288 = vector.shape_cast %287 : vector<1x64x32xbf16> to vector<64x32xbf16>
    %cst_175 = arith.constant dense<0.000000e+00> : vector<64x256xf32>
    %289 = tpu.matmul %288, %286, %cst_175 {dimension_numbers = #tpu.dot_dimension_numbers<[1], [0], [0], [1], [0, 0, 1, 1], [], []>} : vector<64x32xbf16>, vector<32x256xbf16>, vector<64x256xf32> -> vector<64x256xf32>
    %290 = arith.addf %281, %289 : vector<64x256xf32>
    %c240_i32_176 = arith.constant 240 : i32
    %291 = tpu.dynamic_rotate %229 by %c240_i32_176 dim 1 : vector<32x256xbf16>, i32 -> vector<32x256xbf16>
    %c7_177 = arith.constant 7 : index
    %c0_178 = arith.constant 0 : index
    %292 = vector.load %arg3[%c7_177, %c0_178] : memref<9x256xf32, #tpu.memory_space<vmem>>, vector<1x256xf32>
    %293 = arith.truncf %292 : vector<1x256xf32> to vector<1x256xbf16>
    %294 = vector.broadcast %293 : vector<1x256xbf16> to vector<32x256xbf16>
    %295 = arith.mulf %291, %294 : vector<32x256xbf16>
    %c7_179 = arith.constant 7 : index
    %c0_180 = arith.constant 0 : index
    %c0_181 = arith.constant 0 : index
    %296 = vector.load %arg6[%c7_179, %c0_180, %c0_181] : memref<9x64x32xbf16, #tpu.memory_space<vmem>>, vector<1x64x32xbf16>
    %297 = vector.shape_cast %296 : vector<1x64x32xbf16> to vector<64x32xbf16>
    %cst_182 = arith.constant dense<0.000000e+00> : vector<64x256xf32>
    %298 = tpu.matmul %297, %295, %cst_182 {dimension_numbers = #tpu.dot_dimension_numbers<[1], [0], [0], [1], [0, 0, 1, 1], [], []>} : vector<64x32xbf16>, vector<32x256xbf16>, vector<64x256xf32> -> vector<64x256xf32>
    %299 = arith.addf %290, %298 : vector<64x256xf32>
    %c239_i32_183 = arith.constant 239 : i32
    %300 = tpu.dynamic_rotate %229 by %c239_i32_183 dim 1 : vector<32x256xbf16>, i32 -> vector<32x256xbf16>
    %c8_184 = arith.constant 8 : index
    %c0_185 = arith.constant 0 : index
    %301 = vector.load %arg3[%c8_184, %c0_185] : memref<9x256xf32, #tpu.memory_space<vmem>>, vector<1x256xf32>
    %302 = arith.truncf %301 : vector<1x256xf32> to vector<1x256xbf16>
    %303 = vector.broadcast %302 : vector<1x256xbf16> to vector<32x256xbf16>
    %304 = arith.mulf %300, %303 : vector<32x256xbf16>
    %c8_186 = arith.constant 8 : index
    %c0_187 = arith.constant 0 : index
    %c0_188 = arith.constant 0 : index
    %305 = vector.load %arg6[%c8_186, %c0_187, %c0_188] : memref<9x64x32xbf16, #tpu.memory_space<vmem>>, vector<1x64x32xbf16>
    %306 = vector.shape_cast %305 : vector<1x64x32xbf16> to vector<64x32xbf16>
    %cst_189 = arith.constant dense<0.000000e+00> : vector<64x256xf32>
    %307 = tpu.matmul %306, %304, %cst_189 {dimension_numbers = #tpu.dot_dimension_numbers<[1], [0], [0], [1], [0, 0, 1, 1], [], []>} : vector<64x32xbf16>, vector<32x256xbf16>, vector<64x256xf32> -> vector<64x256xf32>
    %308 = arith.addf %299, %307 : vector<64x256xf32>
    %cst_190 = arith.constant 0.000000e+00 : f32
    %309 = vector.broadcast %cst_190 : f32 to vector<64x256xf32>
    %310 = arith.cmpf ogt, %308, %309 : vector<64x256xf32>
    %cst_191 = arith.constant 0.00999999977 : f32
    %311 = vector.broadcast %cst_191 : f32 to vector<64x256xf32>
    %312 = arith.mulf %311, %308 : vector<64x256xf32>
    %313 = arith.select %310, %308, %312 : vector<64x256xi1>, vector<64x256xf32>
    %314 = arith.truncf %313 : vector<64x256xf32> to vector<64x256xbf16>
    %c0_192 = arith.constant 0 : index
    %c0_193 = arith.constant 0 : index
    %315 = vector.load %arg9[%c0_192, %c0_193] : memref<32x1xf32, #tpu.memory_space<vmem>>, vector<32x1xf32>
    %316 = vector.shape_cast %315 : vector<32x1xf32> to vector<32x1xf32>
    %317 = vector.broadcast %316 : vector<32x1xf32> to vector<32x256xf32>
    %c17_i32_194 = arith.constant 17 : i32
    %318 = tpu.dynamic_rotate %314 by %c17_i32_194 dim 1 : vector<64x256xbf16>, i32 -> vector<64x256xbf16>
    %c0_195 = arith.constant 0 : index
    %c0_196 = arith.constant 0 : index
    %319 = vector.load %arg3[%c0_195, %c0_196] : memref<9x256xf32, #tpu.memory_space<vmem>>, vector<1x256xf32>
    %320 = arith.truncf %319 : vector<1x256xf32> to vector<1x256xbf16>
    %321 = vector.broadcast %320 : vector<1x256xbf16> to vector<64x256xbf16>
    %322 = arith.mulf %318, %321 : vector<64x256xbf16>
    %c0_197 = arith.constant 0 : index
    %c0_198 = arith.constant 0 : index
    %c0_199 = arith.constant 0 : index
    %323 = vector.load %arg8[%c0_197, %c0_198, %c0_199] : memref<9x32x64xbf16, #tpu.memory_space<vmem>>, vector<1x32x64xbf16>
    %324 = vector.shape_cast %323 : vector<1x32x64xbf16> to vector<32x64xbf16>
    %cst_200 = arith.constant dense<0.000000e+00> : vector<32x256xf32>
    %325 = tpu.matmul %324, %322, %cst_200 {dimension_numbers = #tpu.dot_dimension_numbers<[1], [0], [0], [1], [0, 0, 1, 1], [], []>} : vector<32x64xbf16>, vector<64x256xbf16>, vector<32x256xf32> -> vector<32x256xf32>
    %326 = arith.addf %317, %325 : vector<32x256xf32>
    %c16_i32_201 = arith.constant 16 : i32
    %327 = tpu.dynamic_rotate %314 by %c16_i32_201 dim 1 : vector<64x256xbf16>, i32 -> vector<64x256xbf16>
    %c1_202 = arith.constant 1 : index
    %c0_203 = arith.constant 0 : index
    %328 = vector.load %arg3[%c1_202, %c0_203] : memref<9x256xf32, #tpu.memory_space<vmem>>, vector<1x256xf32>
    %329 = arith.truncf %328 : vector<1x256xf32> to vector<1x256xbf16>
    %330 = vector.broadcast %329 : vector<1x256xbf16> to vector<64x256xbf16>
    %331 = arith.mulf %327, %330 : vector<64x256xbf16>
    %c1_204 = arith.constant 1 : index
    %c0_205 = arith.constant 0 : index
    %c0_206 = arith.constant 0 : index
    %332 = vector.load %arg8[%c1_204, %c0_205, %c0_206] : memref<9x32x64xbf16, #tpu.memory_space<vmem>>, vector<1x32x64xbf16>
    %333 = vector.shape_cast %332 : vector<1x32x64xbf16> to vector<32x64xbf16>
    %cst_207 = arith.constant dense<0.000000e+00> : vector<32x256xf32>
    %334 = tpu.matmul %333, %331, %cst_207 {dimension_numbers = #tpu.dot_dimension_numbers<[1], [0], [0], [1], [0, 0, 1, 1], [], []>} : vector<32x64xbf16>, vector<64x256xbf16>, vector<32x256xf32> -> vector<32x256xf32>
    %335 = arith.addf %326, %334 : vector<32x256xf32>
    %c15_i32_208 = arith.constant 15 : i32
    %336 = tpu.dynamic_rotate %314 by %c15_i32_208 dim 1 : vector<64x256xbf16>, i32 -> vector<64x256xbf16>
    %c2_209 = arith.constant 2 : index
    %c0_210 = arith.constant 0 : index
    %337 = vector.load %arg3[%c2_209, %c0_210] : memref<9x256xf32, #tpu.memory_space<vmem>>, vector<1x256xf32>
    %338 = arith.truncf %337 : vector<1x256xf32> to vector<1x256xbf16>
    %339 = vector.broadcast %338 : vector<1x256xbf16> to vector<64x256xbf16>
    %340 = arith.mulf %336, %339 : vector<64x256xbf16>
    %c2_211 = arith.constant 2 : index
    %c0_212 = arith.constant 0 : index
    %c0_213 = arith.constant 0 : index
    %341 = vector.load %arg8[%c2_211, %c0_212, %c0_213] : memref<9x32x64xbf16, #tpu.memory_space<vmem>>, vector<1x32x64xbf16>
    %342 = vector.shape_cast %341 : vector<1x32x64xbf16> to vector<32x64xbf16>
    %cst_214 = arith.constant dense<0.000000e+00> : vector<32x256xf32>
    %343 = tpu.matmul %342, %340, %cst_214 {dimension_numbers = #tpu.dot_dimension_numbers<[1], [0], [0], [1], [0, 0, 1, 1], [], []>} : vector<32x64xbf16>, vector<64x256xbf16>, vector<32x256xf32> -> vector<32x256xf32>
    %344 = arith.addf %335, %343 : vector<32x256xf32>
    %c1_i32_215 = arith.constant 1 : i32
    %345 = tpu.dynamic_rotate %314 by %c1_i32_215 dim 1 : vector<64x256xbf16>, i32 -> vector<64x256xbf16>
    %c3_216 = arith.constant 3 : index
    %c0_217 = arith.constant 0 : index
    %346 = vector.load %arg3[%c3_216, %c0_217] : memref<9x256xf32, #tpu.memory_space<vmem>>, vector<1x256xf32>
    %347 = arith.truncf %346 : vector<1x256xf32> to vector<1x256xbf16>
    %348 = vector.broadcast %347 : vector<1x256xbf16> to vector<64x256xbf16>
    %349 = arith.mulf %345, %348 : vector<64x256xbf16>
    %c3_218 = arith.constant 3 : index
    %c0_219 = arith.constant 0 : index
    %c0_220 = arith.constant 0 : index
    %350 = vector.load %arg8[%c3_218, %c0_219, %c0_220] : memref<9x32x64xbf16, #tpu.memory_space<vmem>>, vector<1x32x64xbf16>
    %351 = vector.shape_cast %350 : vector<1x32x64xbf16> to vector<32x64xbf16>
    %cst_221 = arith.constant dense<0.000000e+00> : vector<32x256xf32>
    %352 = tpu.matmul %351, %349, %cst_221 {dimension_numbers = #tpu.dot_dimension_numbers<[1], [0], [0], [1], [0, 0, 1, 1], [], []>} : vector<32x64xbf16>, vector<64x256xbf16>, vector<32x256xf32> -> vector<32x256xf32>
    %353 = arith.addf %344, %352 : vector<32x256xf32>
    %c4_222 = arith.constant 4 : index
    %c0_223 = arith.constant 0 : index
    %c0_224 = arith.constant 0 : index
    %354 = vector.load %arg8[%c4_222, %c0_223, %c0_224] : memref<9x32x64xbf16, #tpu.memory_space<vmem>>, vector<1x32x64xbf16>
    %355 = vector.shape_cast %354 : vector<1x32x64xbf16> to vector<32x64xbf16>
    %cst_225 = arith.constant dense<0.000000e+00> : vector<32x256xf32>
    %356 = tpu.matmul %355, %314, %cst_225 {dimension_numbers = #tpu.dot_dimension_numbers<[1], [0], [0], [1], [0, 0, 1, 1], [], []>} : vector<32x64xbf16>, vector<64x256xbf16>, vector<32x256xf32> -> vector<32x256xf32>
    %357 = arith.addf %353, %356 : vector<32x256xf32>
    %c255_i32_226 = arith.constant 255 : i32
    %358 = tpu.dynamic_rotate %314 by %c255_i32_226 dim 1 : vector<64x256xbf16>, i32 -> vector<64x256xbf16>
    %c5_227 = arith.constant 5 : index
    %c0_228 = arith.constant 0 : index
    %359 = vector.load %arg3[%c5_227, %c0_228] : memref<9x256xf32, #tpu.memory_space<vmem>>, vector<1x256xf32>
    %360 = arith.truncf %359 : vector<1x256xf32> to vector<1x256xbf16>
    %361 = vector.broadcast %360 : vector<1x256xbf16> to vector<64x256xbf16>
    %362 = arith.mulf %358, %361 : vector<64x256xbf16>
    %c5_229 = arith.constant 5 : index
    %c0_230 = arith.constant 0 : index
    %c0_231 = arith.constant 0 : index
    %363 = vector.load %arg8[%c5_229, %c0_230, %c0_231] : memref<9x32x64xbf16, #tpu.memory_space<vmem>>, vector<1x32x64xbf16>
    %364 = vector.shape_cast %363 : vector<1x32x64xbf16> to vector<32x64xbf16>
    %cst_232 = arith.constant dense<0.000000e+00> : vector<32x256xf32>
    %365 = tpu.matmul %364, %362, %cst_232 {dimension_numbers = #tpu.dot_dimension_numbers<[1], [0], [0], [1], [0, 0, 1, 1], [], []>} : vector<32x64xbf16>, vector<64x256xbf16>, vector<32x256xf32> -> vector<32x256xf32>
    %366 = arith.addf %357, %365 : vector<32x256xf32>
    %c241_i32_233 = arith.constant 241 : i32
    %367 = tpu.dynamic_rotate %314 by %c241_i32_233 dim 1 : vector<64x256xbf16>, i32 -> vector<64x256xbf16>
    %c6_234 = arith.constant 6 : index
    %c0_235 = arith.constant 0 : index
    %368 = vector.load %arg3[%c6_234, %c0_235] : memref<9x256xf32, #tpu.memory_space<vmem>>, vector<1x256xf32>
    %369 = arith.truncf %368 : vector<1x256xf32> to vector<1x256xbf16>
    %370 = vector.broadcast %369 : vector<1x256xbf16> to vector<64x256xbf16>
    %371 = arith.mulf %367, %370 : vector<64x256xbf16>
    %c6_236 = arith.constant 6 : index
    %c0_237 = arith.constant 0 : index
    %c0_238 = arith.constant 0 : index
    %372 = vector.load %arg8[%c6_236, %c0_237, %c0_238] : memref<9x32x64xbf16, #tpu.memory_space<vmem>>, vector<1x32x64xbf16>
    %373 = vector.shape_cast %372 : vector<1x32x64xbf16> to vector<32x64xbf16>
    %cst_239 = arith.constant dense<0.000000e+00> : vector<32x256xf32>
    %374 = tpu.matmul %373, %371, %cst_239 {dimension_numbers = #tpu.dot_dimension_numbers<[1], [0], [0], [1], [0, 0, 1, 1], [], []>} : vector<32x64xbf16>, vector<64x256xbf16>, vector<32x256xf32> -> vector<32x256xf32>
    %375 = arith.addf %366, %374 : vector<32x256xf32>
    %c240_i32_240 = arith.constant 240 : i32
    %376 = tpu.dynamic_rotate %314 by %c240_i32_240 dim 1 : vector<64x256xbf16>, i32 -> vector<64x256xbf16>
    %c7_241 = arith.constant 7 : index
    %c0_242 = arith.constant 0 : index
    %377 = vector.load %arg3[%c7_241, %c0_242] : memref<9x256xf32, #tpu.memory_space<vmem>>, vector<1x256xf32>
    %378 = arith.truncf %377 : vector<1x256xf32> to vector<1x256xbf16>
    %379 = vector.broadcast %378 : vector<1x256xbf16> to vector<64x256xbf16>
    %380 = arith.mulf %376, %379 : vector<64x256xbf16>
    %c7_243 = arith.constant 7 : index
    %c0_244 = arith.constant 0 : index
    %c0_245 = arith.constant 0 : index
    %381 = vector.load %arg8[%c7_243, %c0_244, %c0_245] : memref<9x32x64xbf16, #tpu.memory_space<vmem>>, vector<1x32x64xbf16>
    %382 = vector.shape_cast %381 : vector<1x32x64xbf16> to vector<32x64xbf16>
    %cst_246 = arith.constant dense<0.000000e+00> : vector<32x256xf32>
    %383 = tpu.matmul %382, %380, %cst_246 {dimension_numbers = #tpu.dot_dimension_numbers<[1], [0], [0], [1], [0, 0, 1, 1], [], []>} : vector<32x64xbf16>, vector<64x256xbf16>, vector<32x256xf32> -> vector<32x256xf32>
    %384 = arith.addf %375, %383 : vector<32x256xf32>
    %c239_i32_247 = arith.constant 239 : i32
    %385 = tpu.dynamic_rotate %314 by %c239_i32_247 dim 1 : vector<64x256xbf16>, i32 -> vector<64x256xbf16>
    %c8_248 = arith.constant 8 : index
    %c0_249 = arith.constant 0 : index
    %386 = vector.load %arg3[%c8_248, %c0_249] : memref<9x256xf32, #tpu.memory_space<vmem>>, vector<1x256xf32>
    %387 = arith.truncf %386 : vector<1x256xf32> to vector<1x256xbf16>
    %388 = vector.broadcast %387 : vector<1x256xbf16> to vector<64x256xbf16>
    %389 = arith.mulf %385, %388 : vector<64x256xbf16>
    %c8_250 = arith.constant 8 : index
    %c0_251 = arith.constant 0 : index
    %c0_252 = arith.constant 0 : index
    %390 = vector.load %arg8[%c8_250, %c0_251, %c0_252] : memref<9x32x64xbf16, #tpu.memory_space<vmem>>, vector<1x32x64xbf16>
    %391 = vector.shape_cast %390 : vector<1x32x64xbf16> to vector<32x64xbf16>
    %cst_253 = arith.constant dense<0.000000e+00> : vector<32x256xf32>
    %392 = tpu.matmul %391, %389, %cst_253 {dimension_numbers = #tpu.dot_dimension_numbers<[1], [0], [0], [1], [0, 0, 1, 1], [], []>} : vector<32x64xbf16>, vector<64x256xbf16>, vector<32x256xf32> -> vector<32x256xf32>
    %393 = arith.addf %384, %392 : vector<32x256xf32>
    %cst_254 = arith.constant 0.000000e+00 : f32
    %394 = vector.broadcast %cst_254 : f32 to vector<32x256xf32>
    %395 = arith.cmpf ogt, %393, %394 : vector<32x256xf32>
    %cst_255 = arith.constant 0.00999999977 : f32
    %396 = vector.broadcast %cst_255 : f32 to vector<32x256xf32>
    %397 = arith.mulf %396, %393 : vector<32x256xf32>
    %398 = arith.select %395, %393, %397 : vector<32x256xi1>, vector<32x256xf32>
    %c0_256 = arith.constant 0 : index
    %c0_257 = arith.constant 0 : index
    %399 = vector.load %arg10[%c0_256, %c0_257] : memref<4x32xbf16, #tpu.memory_space<vmem>>, vector<4x32xbf16>
    %400 = arith.truncf %398 : vector<32x256xf32> to vector<32x256xbf16>
    %cst_258 = arith.constant dense<0.000000e+00> : vector<4x256xf32>
    %401 = tpu.matmul %399, %400, %cst_258 {dimension_numbers = #tpu.dot_dimension_numbers<[1], [0], [0], [1], [0, 0, 1, 1], [], []>} : vector<4x32xbf16>, vector<32x256xbf16>, vector<4x256xf32> -> vector<4x256xf32>
    %c0_259 = arith.constant 0 : index
    %c0_260 = arith.constant 0 : index
    %402 = vector.load %arg11[%c0_259, %c0_260] : memref<4x1xf32, #tpu.memory_space<vmem>>, vector<4x1xf32>
    %403 = vector.broadcast %402 : vector<4x1xf32> to vector<4x256xf32>
    %404 = arith.addf %401, %403 : vector<4x256xf32>
    %c0_261 = arith.constant 0 : index
    %c0_262 = arith.constant 0 : index
    %405 = vector.load %arg12[%c0_261, %c0_262] : memref<4x256xf32, #tpu.memory_space<vmem>>, vector<4x256xf32>
    tpu.vector_store %arg12[%c0_261, %c0_262], %404 {strides = array<i32>} : memref<4x256xf32, #tpu.memory_space<vmem>>, vector<4x256xf32>,
    return
  }
  func.func @transform_0(%arg0: i32) -> (i32, i32) {
    %c0_i32 = arith.constant 0 : i32
    %c0_i32_0 = arith.constant 0 : i32
    return %c0_i32, %arg0 : i32, i32
  }
  func.func @transform_1(%arg0: i32) -> (i32, i32) {
    %c0_i32 = arith.constant 0 : i32
    %c0_i32_0 = arith.constant 0 : i32
    %c0_i32_1 = arith.constant 0 : i32
    return %c0_i32, %c0_i32_0 : i32, i32
  }
  func.func @transform_2(%arg0: i32) -> (i32, i32) {
    %c0_i32 = arith.constant 0 : i32
    %c0_i32_0 = arith.constant 0 : i32
    %c0_i32_1 = arith.constant 0 : i32
    return %c0_i32, %c0_i32_0 : i32, i32
  }
  func.func @transform_3(%arg0: i32) -> (i32, i32, i32) {
    %c0_i32 = arith.constant 0 : i32
    %c0_i32_0 = arith.constant 0 : i32
    %c0_i32_1 = arith.constant 0 : i32
    %c0_i32_2 = arith.constant 0 : i32
    return %c0_i32, %c0_i32_0, %c0_i32_1 : i32, i32, i32
  }
  func.func @transform_4(%arg0: i32) -> (i32, i32) {
    %c0_i32 = arith.constant 0 : i32
    %c0_i32_0 = arith.constant 0 : i32
    %c0_i32_1 = arith.constant 0 : i32
    return %c0_i32, %c0_i32_0 : i32, i32
  }
  func.func @transform_5(%arg0: i32) -> (i32, i32, i32) {
    %c0_i32 = arith.constant 0 : i32
    %c0_i32_0 = arith.constant 0 : i32
    %c0_i32_1 = arith.constant 0 : i32
    %c0_i32_2 = arith.constant 0 : i32
    return %c0_i32, %c0_i32_0, %c0_i32_1 : i32, i32, i32
  }
  func.func @transform_6(%arg0: i32) -> (i32, i32) {
    %c0_i32 = arith.constant 0 : i32
    %c0_i32_0 = arith.constant 0 : i32
    %c0_i32_1 = arith.constant 0 : i32
    return %c0_i32, %c0_i32_0 : i32, i32
  }
  func.func @transform_7(%arg0: i32) -> (i32, i32, i32) {
    %c0_i32 = arith.constant 0 : i32
    %c0_i32_0 = arith.constant 0 : i32
    %c0_i32_1 = arith.constant 0 : i32
    %c0_i32_2 = arith.constant 0 : i32
    return %c0_i32, %c0_i32_0, %c0_i32_1 : i32, i32, i32
  }
  func.func @transform_8(%arg0: i32) -> (i32, i32) {
    %c0_i32 = arith.constant 0 : i32
    %c0_i32_0 = arith.constant 0 : i32
    %c0_i32_1 = arith.constant 0 : i32
    return %c0_i32, %c0_i32_0 : i32, i32
  }
  func.func @transform_9(%arg0: i32) -> (i32, i32) {
    %c0_i32 = arith.constant 0 : i32
    %c0_i32_0 = arith.constant 0 : i32
    %c0_i32_1 = arith.constant 0 : i32
    return %c0_i32, %c0_i32_0 : i32, i32
  }
  func.func @transform_10(%arg0: i32) -> (i32, i32) {
    %c0_i32 = arith.constant 0 : i32
    %c0_i32_0 = arith.constant 0 : i32
    %c0_i32_1 = arith.constant 0 : i32
    return %c0_i32, %c0_i32_0 : i32, i32
  }
  func.func @transform_11(%arg0: i32) -> (i32, i32) {
    %c0_i32 = arith.constant 0 : i32
    %c0_i32_0 = arith.constant 0 : i32
    return %c0_i32, %arg0 : i32, i32
  }
}

module attributes {stable_mosaic.version = 11 : i64} {
  func.func @kernel(%arg0: i32, %arg1: memref<8x256xbf16, #tpu.memory_space<vmem>>, %arg2: memref<25x256xf32, #tpu.memory_space<vmem>>, %arg3: memref<9x256xf32, #tpu.memory_space<vmem>>, %arg4: memref<25x32x8xbf16, #tpu.memory_space<vmem>>, %arg5: memref<32x1xf32, #tpu.memory_space<vmem>>, %arg6: memref<9x64x32xbf16, #tpu.memory_space<vmem>>, %arg7: memref<64x1xf32, #tpu.memory_space<vmem>>, %arg8: memref<9x32x64xbf16, #tpu.memory_space<vmem>>, %arg9: memref<32x1xf32, #tpu.memory_space<vmem>>, %arg10: memref<4x32xbf16, #tpu.memory_space<vmem>>, %arg11: memref<4x1xf32, #tpu.memory_space<vmem>>, %arg12: memref<4x256xf32, #tpu.memory_space<vmem>>) attributes {dimension_semantics = [#tpu.dimension_semantics<parallel>], iteration_bounds = array<i64: 2>, scalar_prefetch = 0 : i64, scratch_operands = 0 : i64, tpu.core_type = #tpu.core_type<tc>, window_params = [{transform_indices = @transform_0, window_bounds = array<i64: 8, 256>}, {pipeline_mode = #tpu.pipeline_mode<synchronous>, transform_indices = @transform_1, window_bounds = array<i64: 25, 256>}, {pipeline_mode = #tpu.pipeline_mode<synchronous>, transform_indices = @transform_2, window_bounds = array<i64: 9, 256>}, {pipeline_mode = #tpu.pipeline_mode<synchronous>, transform_indices = @transform_3, window_bounds = array<i64: 25, 32, 8>}, {pipeline_mode = #tpu.pipeline_mode<synchronous>, transform_indices = @transform_4, window_bounds = array<i64: 32, 1>}, {pipeline_mode = #tpu.pipeline_mode<synchronous>, transform_indices = @transform_5, window_bounds = array<i64: 9, 64, 32>}, {pipeline_mode = #tpu.pipeline_mode<synchronous>, transform_indices = @transform_6, window_bounds = array<i64: 64, 1>}, {pipeline_mode = #tpu.pipeline_mode<synchronous>, transform_indices = @transform_7, window_bounds = array<i64: 9, 32, 64>}, {pipeline_mode = #tpu.pipeline_mode<synchronous>, transform_indices = @transform_8, window_bounds = array<i64: 32, 1>}, {pipeline_mode = #tpu.pipeline_mode<synchronous>, transform_indices = @transform_9, window_bounds = array<i64: 4, 32>}, {pipeline_mode = #tpu.pipeline_mode<synchronous>, transform_indices = @transform_10, window_bounds = array<i64: 4, 1>}, {transform_indices = @transform_11, window_bounds = array<i64: 4, 256>}]} {
    %c0 = arith.constant 0 : index
    %c0_0 = arith.constant 0 : index
    %0 = vector.load %arg1[%c0, %c0_0] : memref<8x256xbf16, #tpu.memory_space<vmem>>, vector<8x256xbf16>
    %1 = arith.extf %0 : vector<8x256xbf16> to vector<8x256xf32>
    %c0_1 = arith.constant 0 : index
    %c0_2 = arith.constant 0 : index
    %2 = vector.load %arg5[%c0_1, %c0_2] : memref<32x1xf32, #tpu.memory_space<vmem>>, vector<32x1xf32>
    %3 = vector.shape_cast %2 : vector<32x1xf32> to vector<32x1xf32>
    %4 = vector.broadcast %3 : vector<32x1xf32> to vector<32x256xf32>
    %c34_i32 = arith.constant 34 : i32
    %5 = tpu.dynamic_rotate %1 by %c34_i32 dim 1 : vector<8x256xf32>, i32 -> vector<8x256xf32>
    %c0_3 = arith.constant 0 : index
    %c0_4 = arith.constant 0 : index
    %6 = vector.load %arg2[%c0_3, %c0_4] : memref<25x256xf32, #tpu.memory_space<vmem>>, vector<1x256xf32>
    %7 = vector.broadcast %6 : vector<1x256xf32> to vector<8x256xf32>
    %8 = arith.mulf %5, %7 : vector<8x256xf32>
    %c0_5 = arith.constant 0 : index
    %c0_6 = arith.constant 0 : index
    %c0_7 = arith.constant 0 : index
    %9 = vector.load %arg4[%c0_5, %c0_6, %c0_7] : memref<25x32x8xbf16, #tpu.memory_space<vmem>>, vector<1x32x8xbf16>
    %10 = vector.shape_cast %9 : vector<1x32x8xbf16> to vector<32x8xbf16>
    %11 = arith.truncf %8 : vector<8x256xf32> to vector<8x256xbf16>
    %cst = arith.constant dense<0.000000e+00> : vector<32x256xf32>
    %12 = tpu.matmul %10, %11, %cst {dimension_numbers = #tpu.dot_dimension_numbers<[1], [0], [0], [1], [0, 0, 1, 1], [], []>} : vector<32x8xbf16>, vector<8x256xbf16>, vector<32x256xf32> -> vector<32x256xf32>
    %13 = arith.addf %4, %12 : vector<32x256xf32>
    %c33_i32 = arith.constant 33 : i32
    %14 = tpu.dynamic_rotate %1 by %c33_i32 dim 1 : vector<8x256xf32>, i32 -> vector<8x256xf32>
    %c1 = arith.constant 1 : index
    %c0_8 = arith.constant 0 : index
    %15 = vector.load %arg2[%c1, %c0_8] : memref<25x256xf32, #tpu.memory_space<vmem>>, vector<1x256xf32>
    %16 = vector.broadcast %15 : vector<1x256xf32> to vector<8x256xf32>
    %17 = arith.mulf %14, %16 : vector<8x256xf32>
    %c1_9 = arith.constant 1 : index
    %c0_10 = arith.constant 0 : index
    %c0_11 = arith.constant 0 : index
    %18 = vector.load %arg4[%c1_9, %c0_10, %c0_11] : memref<25x32x8xbf16, #tpu.memory_space<vmem>>, vector<1x32x8xbf16>
    %19 = vector.shape_cast %18 : vector<1x32x8xbf16> to vector<32x8xbf16>
    %20 = arith.truncf %17 : vector<8x256xf32> to vector<8x256xbf16>
    %cst_12 = arith.constant dense<0.000000e+00> : vector<32x256xf32>
    %21 = tpu.matmul %19, %20, %cst_12 {dimension_numbers = #tpu.dot_dimension_numbers<[1], [0], [0], [1], [0, 0, 1, 1], [], []>} : vector<32x8xbf16>, vector<8x256xbf16>, vector<32x256xf32> -> vector<32x256xf32>
    %22 = arith.addf %13, %21 : vector<32x256xf32>
    %c32_i32 = arith.constant 32 : i32
    %23 = tpu.dynamic_rotate %1 by %c32_i32 dim 1 : vector<8x256xf32>, i32 -> vector<8x256xf32>
    %c2 = arith.constant 2 : index
    %c0_13 = arith.constant 0 : index
    %24 = vector.load %arg2[%c2, %c0_13] : memref<25x256xf32, #tpu.memory_space<vmem>>, vector<1x256xf32>
    %25 = vector.broadcast %24 : vector<1x256xf32> to vector<8x256xf32>
    %26 = arith.mulf %23, %25 : vector<8x256xf32>
    %c2_14 = arith.constant 2 : index
    %c0_15 = arith.constant 0 : index
    %c0_16 = arith.constant 0 : index
    %27 = vector.load %arg4[%c2_14, %c0_15, %c0_16] : memref<25x32x8xbf16, #tpu.memory_space<vmem>>, vector<1x32x8xbf16>
    %28 = vector.shape_cast %27 : vector<1x32x8xbf16> to vector<32x8xbf16>
    %29 = arith.truncf %26 : vector<8x256xf32> to vector<8x256xbf16>
    %cst_17 = arith.constant dense<0.000000e+00> : vector<32x256xf32>
    %30 = tpu.matmul %28, %29, %cst_17 {dimension_numbers = #tpu.dot_dimension_numbers<[1], [0], [0], [1], [0, 0, 1, 1], [], []>} : vector<32x8xbf16>, vector<8x256xbf16>, vector<32x256xf32> -> vector<32x256xf32>
    %31 = arith.addf %22, %30 : vector<32x256xf32>
    %c31_i32 = arith.constant 31 : i32
    %32 = tpu.dynamic_rotate %1 by %c31_i32 dim 1 : vector<8x256xf32>, i32 -> vector<8x256xf32>
    %c3 = arith.constant 3 : index
    %c0_18 = arith.constant 0 : index
    %33 = vector.load %arg2[%c3, %c0_18] : memref<25x256xf32, #tpu.memory_space<vmem>>, vector<1x256xf32>
    %34 = vector.broadcast %33 : vector<1x256xf32> to vector<8x256xf32>
    %35 = arith.mulf %32, %34 : vector<8x256xf32>
    %c3_19 = arith.constant 3 : index
    %c0_20 = arith.constant 0 : index
    %c0_21 = arith.constant 0 : index
    %36 = vector.load %arg4[%c3_19, %c0_20, %c0_21] : memref<25x32x8xbf16, #tpu.memory_space<vmem>>, vector<1x32x8xbf16>
    %37 = vector.shape_cast %36 : vector<1x32x8xbf16> to vector<32x8xbf16>
    %38 = arith.truncf %35 : vector<8x256xf32> to vector<8x256xbf16>
    %cst_22 = arith.constant dense<0.000000e+00> : vector<32x256xf32>
    %39 = tpu.matmul %37, %38, %cst_22 {dimension_numbers = #tpu.dot_dimension_numbers<[1], [0], [0], [1], [0, 0, 1, 1], [], []>} : vector<32x8xbf16>, vector<8x256xbf16>, vector<32x256xf32> -> vector<32x256xf32>
    %40 = arith.addf %31, %39 : vector<32x256xf32>
    %c30_i32 = arith.constant 30 : i32
    %41 = tpu.dynamic_rotate %1 by %c30_i32 dim 1 : vector<8x256xf32>, i32 -> vector<8x256xf32>
    %c4 = arith.constant 4 : index
    %c0_23 = arith.constant 0 : index
    %42 = vector.load %arg2[%c4, %c0_23] : memref<25x256xf32, #tpu.memory_space<vmem>>, vector<1x256xf32>
    %43 = vector.broadcast %42 : vector<1x256xf32> to vector<8x256xf32>
    %44 = arith.mulf %41, %43 : vector<8x256xf32>
    %c4_24 = arith.constant 4 : index
    %c0_25 = arith.constant 0 : index
    %c0_26 = arith.constant 0 : index
    %45 = vector.load %arg4[%c4_24, %c0_25, %c0_26] : memref<25x32x8xbf16, #tpu.memory_space<vmem>>, vector<1x32x8xbf16>
    %46 = vector.shape_cast %45 : vector<1x32x8xbf16> to vector<32x8xbf16>
    %47 = arith.truncf %44 : vector<8x256xf32> to vector<8x256xbf16>
    %cst_27 = arith.constant dense<0.000000e+00> : vector<32x256xf32>
    %48 = tpu.matmul %46, %47, %cst_27 {dimension_numbers = #tpu.dot_dimension_numbers<[1], [0], [0], [1], [0, 0, 1, 1], [], []>} : vector<32x8xbf16>, vector<8x256xbf16>, vector<32x256xf32> -> vector<32x256xf32>
    %49 = arith.addf %40, %48 : vector<32x256xf32>
    %c18_i32 = arith.constant 18 : i32
    %50 = tpu.dynamic_rotate %1 by %c18_i32 dim 1 : vector<8x256xf32>, i32 -> vector<8x256xf32>
    %c5 = arith.constant 5 : index
    %c0_28 = arith.constant 0 : index
    %51 = vector.load %arg2[%c5, %c0_28] : memref<25x256xf32, #tpu.memory_space<vmem>>, vector<1x256xf32>
    %52 = vector.broadcast %51 : vector<1x256xf32> to vector<8x256xf32>
    %53 = arith.mulf %50, %52 : vector<8x256xf32>
    %c5_29 = arith.constant 5 : index
    %c0_30 = arith.constant 0 : index
    %c0_31 = arith.constant 0 : index
    %54 = vector.load %arg4[%c5_29, %c0_30, %c0_31] : memref<25x32x8xbf16, #tpu.memory_space<vmem>>, vector<1x32x8xbf16>
    %55 = vector.shape_cast %54 : vector<1x32x8xbf16> to vector<32x8xbf16>
    %56 = arith.truncf %53 : vector<8x256xf32> to vector<8x256xbf16>
    %cst_32 = arith.constant dense<0.000000e+00> : vector<32x256xf32>
    %57 = tpu.matmul %55, %56, %cst_32 {dimension_numbers = #tpu.dot_dimension_numbers<[1], [0], [0], [1], [0, 0, 1, 1], [], []>} : vector<32x8xbf16>, vector<8x256xbf16>, vector<32x256xf32> -> vector<32x256xf32>
    %58 = arith.addf %49, %57 : vector<32x256xf32>
    %c17_i32 = arith.constant 17 : i32
    %59 = tpu.dynamic_rotate %1 by %c17_i32 dim 1 : vector<8x256xf32>, i32 -> vector<8x256xf32>
    %c6 = arith.constant 6 : index
    %c0_33 = arith.constant 0 : index
    %60 = vector.load %arg2[%c6, %c0_33] : memref<25x256xf32, #tpu.memory_space<vmem>>, vector<1x256xf32>
    %61 = vector.broadcast %60 : vector<1x256xf32> to vector<8x256xf32>
    %62 = arith.mulf %59, %61 : vector<8x256xf32>
    %c6_34 = arith.constant 6 : index
    %c0_35 = arith.constant 0 : index
    %c0_36 = arith.constant 0 : index
    %63 = vector.load %arg4[%c6_34, %c0_35, %c0_36] : memref<25x32x8xbf16, #tpu.memory_space<vmem>>, vector<1x32x8xbf16>
    %64 = vector.shape_cast %63 : vector<1x32x8xbf16> to vector<32x8xbf16>
    %65 = arith.truncf %62 : vector<8x256xf32> to vector<8x256xbf16>
    %cst_37 = arith.constant dense<0.000000e+00> : vector<32x256xf32>
    %66 = tpu.matmul %64, %65, %cst_37 {dimension_numbers = #tpu.dot_dimension_numbers<[1], [0], [0], [1], [0, 0, 1, 1], [], []>} : vector<32x8xbf16>, vector<8x256xbf16>, vector<32x256xf32> -> vector<32x256xf32>
    %67 = arith.addf %58, %66 : vector<32x256xf32>
    %c16_i32 = arith.constant 16 : i32
    %68 = tpu.dynamic_rotate %1 by %c16_i32 dim 1 : vector<8x256xf32>, i32 -> vector<8x256xf32>
    %c7 = arith.constant 7 : index
    %c0_38 = arith.constant 0 : index
    %69 = vector.load %arg2[%c7, %c0_38] : memref<25x256xf32, #tpu.memory_space<vmem>>, vector<1x256xf32>
    %70 = vector.broadcast %69 : vector<1x256xf32> to vector<8x256xf32>
    %71 = arith.mulf %68, %70 : vector<8x256xf32>
    %c7_39 = arith.constant 7 : index
    %c0_40 = arith.constant 0 : index
    %c0_41 = arith.constant 0 : index
    %72 = vector.load %arg4[%c7_39, %c0_40, %c0_41] : memref<25x32x8xbf16, #tpu.memory_space<vmem>>, vector<1x32x8xbf16>
    %73 = vector.shape_cast %72 : vector<1x32x8xbf16> to vector<32x8xbf16>
    %74 = arith.truncf %71 : vector<8x256xf32> to vector<8x256xbf16>
    %cst_42 = arith.constant dense<0.000000e+00> : vector<32x256xf32>
    %75 = tpu.matmul %73, %74, %cst_42 {dimension_numbers = #tpu.dot_dimension_numbers<[1], [0], [0], [1], [0, 0, 1, 1], [], []>} : vector<32x8xbf16>, vector<8x256xbf16>, vector<32x256xf32> -> vector<32x256xf32>
    %76 = arith.addf %67, %75 : vector<32x256xf32>
    %c15_i32 = arith.constant 15 : i32
    %77 = tpu.dynamic_rotate %1 by %c15_i32 dim 1 : vector<8x256xf32>, i32 -> vector<8x256xf32>
    %c8 = arith.constant 8 : index
    %c0_43 = arith.constant 0 : index
    %78 = vector.load %arg2[%c8, %c0_43] : memref<25x256xf32, #tpu.memory_space<vmem>>, vector<1x256xf32>
    %79 = vector.broadcast %78 : vector<1x256xf32> to vector<8x256xf32>
    %80 = arith.mulf %77, %79 : vector<8x256xf32>
    %c8_44 = arith.constant 8 : index
    %c0_45 = arith.constant 0 : index
    %c0_46 = arith.constant 0 : index
    %81 = vector.load %arg4[%c8_44, %c0_45, %c0_46] : memref<25x32x8xbf16, #tpu.memory_space<vmem>>, vector<1x32x8xbf16>
    %82 = vector.shape_cast %81 : vector<1x32x8xbf16> to vector<32x8xbf16>
    %83 = arith.truncf %80 : vector<8x256xf32> to vector<8x256xbf16>
    %cst_47 = arith.constant dense<0.000000e+00> : vector<32x256xf32>
    %84 = tpu.matmul %82, %83, %cst_47 {dimension_numbers = #tpu.dot_dimension_numbers<[1], [0], [0], [1], [0, 0, 1, 1], [], []>} : vector<32x8xbf16>, vector<8x256xbf16>, vector<32x256xf32> -> vector<32x256xf32>
    %85 = arith.addf %76, %84 : vector<32x256xf32>
    %c14_i32 = arith.constant 14 : i32
    %86 = tpu.dynamic_rotate %1 by %c14_i32 dim 1 : vector<8x256xf32>, i32 -> vector<8x256xf32>
    %c9 = arith.constant 9 : index
    %c0_48 = arith.constant 0 : index
    %87 = vector.load %arg2[%c9, %c0_48] : memref<25x256xf32, #tpu.memory_space<vmem>>, vector<1x256xf32>
    %88 = vector.broadcast %87 : vector<1x256xf32> to vector<8x256xf32>
    %89 = arith.mulf %86, %88 : vector<8x256xf32>
    %c9_49 = arith.constant 9 : index
    %c0_50 = arith.constant 0 : index
    %c0_51 = arith.constant 0 : index
    %90 = vector.load %arg4[%c9_49, %c0_50, %c0_51] : memref<25x32x8xbf16, #tpu.memory_space<vmem>>, vector<1x32x8xbf16>
    %91 = vector.shape_cast %90 : vector<1x32x8xbf16> to vector<32x8xbf16>
    %92 = arith.truncf %89 : vector<8x256xf32> to vector<8x256xbf16>
    %cst_52 = arith.constant dense<0.000000e+00> : vector<32x256xf32>
    %93 = tpu.matmul %91, %92, %cst_52 {dimension_numbers = #tpu.dot_dimension_numbers<[1], [0], [0], [1], [0, 0, 1, 1], [], []>} : vector<32x8xbf16>, vector<8x256xbf16>, vector<32x256xf32> -> vector<32x256xf32>
    %94 = arith.addf %85, %93 : vector<32x256xf32>
    %c2_i32 = arith.constant 2 : i32
    %95 = tpu.dynamic_rotate %1 by %c2_i32 dim 1 : vector<8x256xf32>, i32 -> vector<8x256xf32>
    %c10 = arith.constant 10 : index
    %c0_53 = arith.constant 0 : index
    %96 = vector.load %arg2[%c10, %c0_53] : memref<25x256xf32, #tpu.memory_space<vmem>>, vector<1x256xf32>
    %97 = vector.broadcast %96 : vector<1x256xf32> to vector<8x256xf32>
    %98 = arith.mulf %95, %97 : vector<8x256xf32>
    %c10_54 = arith.constant 10 : index
    %c0_55 = arith.constant 0 : index
    %c0_56 = arith.constant 0 : index
    %99 = vector.load %arg4[%c10_54, %c0_55, %c0_56] : memref<25x32x8xbf16, #tpu.memory_space<vmem>>, vector<1x32x8xbf16>
    %100 = vector.shape_cast %99 : vector<1x32x8xbf16> to vector<32x8xbf16>
    %101 = arith.truncf %98 : vector<8x256xf32> to vector<8x256xbf16>
    %cst_57 = arith.constant dense<0.000000e+00> : vector<32x256xf32>
    %102 = tpu.matmul %100, %101, %cst_57 {dimension_numbers = #tpu.dot_dimension_numbers<[1], [0], [0], [1], [0, 0, 1, 1], [], []>} : vector<32x8xbf16>, vector<8x256xbf16>, vector<32x256xf32> -> vector<32x256xf32>
    %103 = arith.addf %94, %102 : vector<32x256xf32>
    %c1_i32 = arith.constant 1 : i32
    %104 = tpu.dynamic_rotate %1 by %c1_i32 dim 1 : vector<8x256xf32>, i32 -> vector<8x256xf32>
    %c11 = arith.constant 11 : index
    %c0_58 = arith.constant 0 : index
    %105 = vector.load %arg2[%c11, %c0_58] : memref<25x256xf32, #tpu.memory_space<vmem>>, vector<1x256xf32>
    %106 = vector.broadcast %105 : vector<1x256xf32> to vector<8x256xf32>
    %107 = arith.mulf %104, %106 : vector<8x256xf32>
    %c11_59 = arith.constant 11 : index
    %c0_60 = arith.constant 0 : index
    %c0_61 = arith.constant 0 : index
    %108 = vector.load %arg4[%c11_59, %c0_60, %c0_61] : memref<25x32x8xbf16, #tpu.memory_space<vmem>>, vector<1x32x8xbf16>
    %109 = vector.shape_cast %108 : vector<1x32x8xbf16> to vector<32x8xbf16>
    %110 = arith.truncf %107 : vector<8x256xf32> to vector<8x256xbf16>
    %cst_62 = arith.constant dense<0.000000e+00> : vector<32x256xf32>
    %111 = tpu.matmul %109, %110, %cst_62 {dimension_numbers = #tpu.dot_dimension_numbers<[1], [0], [0], [1], [0, 0, 1, 1], [], []>} : vector<32x8xbf16>, vector<8x256xbf16>, vector<32x256xf32> -> vector<32x256xf32>
    %112 = arith.addf %103, %111 : vector<32x256xf32>
    %c12 = arith.constant 12 : index
    %c0_63 = arith.constant 0 : index
    %c0_64 = arith.constant 0 : index
    %113 = vector.load %arg4[%c12, %c0_63, %c0_64] : memref<25x32x8xbf16, #tpu.memory_space<vmem>>, vector<1x32x8xbf16>
    %114 = vector.shape_cast %113 : vector<1x32x8xbf16> to vector<32x8xbf16>
    %115 = arith.truncf %1 : vector<8x256xf32> to vector<8x256xbf16>
    %cst_65 = arith.constant dense<0.000000e+00> : vector<32x256xf32>
    %116 = tpu.matmul %114, %115, %cst_65 {dimension_numbers = #tpu.dot_dimension_numbers<[1], [0], [0], [1], [0, 0, 1, 1], [], []>} : vector<32x8xbf16>, vector<8x256xbf16>, vector<32x256xf32> -> vector<32x256xf32>
    %117 = arith.addf %112, %116 : vector<32x256xf32>
    %c255_i32 = arith.constant 255 : i32
    %118 = tpu.dynamic_rotate %1 by %c255_i32 dim 1 : vector<8x256xf32>, i32 -> vector<8x256xf32>
    %c13 = arith.constant 13 : index
    %c0_66 = arith.constant 0 : index
    %119 = vector.load %arg2[%c13, %c0_66] : memref<25x256xf32, #tpu.memory_space<vmem>>, vector<1x256xf32>
    %120 = vector.broadcast %119 : vector<1x256xf32> to vector<8x256xf32>
    %121 = arith.mulf %118, %120 : vector<8x256xf32>
    %c13_67 = arith.constant 13 : index
    %c0_68 = arith.constant 0 : index
    %c0_69 = arith.constant 0 : index
    %122 = vector.load %arg4[%c13_67, %c0_68, %c0_69] : memref<25x32x8xbf16, #tpu.memory_space<vmem>>, vector<1x32x8xbf16>
    %123 = vector.shape_cast %122 : vector<1x32x8xbf16> to vector<32x8xbf16>
    %124 = arith.truncf %121 : vector<8x256xf32> to vector<8x256xbf16>
    %cst_70 = arith.constant dense<0.000000e+00> : vector<32x256xf32>
    %125 = tpu.matmul %123, %124, %cst_70 {dimension_numbers = #tpu.dot_dimension_numbers<[1], [0], [0], [1], [0, 0, 1, 1], [], []>} : vector<32x8xbf16>, vector<8x256xbf16>, vector<32x256xf32> -> vector<32x256xf32>
    %126 = arith.addf %117, %125 : vector<32x256xf32>
    %c254_i32 = arith.constant 254 : i32
    %127 = tpu.dynamic_rotate %1 by %c254_i32 dim 1 : vector<8x256xf32>, i32 -> vector<8x256xf32>
    %c14 = arith.constant 14 : index
    %c0_71 = arith.constant 0 : index
    %128 = vector.load %arg2[%c14, %c0_71] : memref<25x256xf32, #tpu.memory_space<vmem>>, vector<1x256xf32>
    %129 = vector.broadcast %128 : vector<1x256xf32> to vector<8x256xf32>
    %130 = arith.mulf %127, %129 : vector<8x256xf32>
    %c14_72 = arith.constant 14 : index
    %c0_73 = arith.constant 0 : index
    %c0_74 = arith.constant 0 : index
    %131 = vector.load %arg4[%c14_72, %c0_73, %c0_74] : memref<25x32x8xbf16, #tpu.memory_space<vmem>>, vector<1x32x8xbf16>
    %132 = vector.shape_cast %131 : vector<1x32x8xbf16> to vector<32x8xbf16>
    %133 = arith.truncf %130 : vector<8x256xf32> to vector<8x256xbf16>
    %cst_75 = arith.constant dense<0.000000e+00> : vector<32x256xf32>
    %134 = tpu.matmul %132, %133, %cst_75 {dimension_numbers = #tpu.dot_dimension_numbers<[1], [0], [0], [1], [0, 0, 1, 1], [], []>} : vector<32x8xbf16>, vector<8x256xbf16>, vector<32x256xf32> -> vector<32x256xf32>
    %135 = arith.addf %126, %134 : vector<32x256xf32>
    %c242_i32 = arith.constant 242 : i32
    %136 = tpu.dynamic_rotate %1 by %c242_i32 dim 1 : vector<8x256xf32>, i32 -> vector<8x256xf32>
    %c15 = arith.constant 15 : index
    %c0_76 = arith.constant 0 : index
    %137 = vector.load %arg2[%c15, %c0_76] : memref<25x256xf32, #tpu.memory_space<vmem>>, vector<1x256xf32>
    %138 = vector.broadcast %137 : vector<1x256xf32> to vector<8x256xf32>
    %139 = arith.mulf %136, %138 : vector<8x256xf32>
    %c15_77 = arith.constant 15 : index
    %c0_78 = arith.constant 0 : index
    %c0_79 = arith.constant 0 : index
    %140 = vector.load %arg4[%c15_77, %c0_78, %c0_79] : memref<25x32x8xbf16, #tpu.memory_space<vmem>>, vector<1x32x8xbf16>
    %141 = vector.shape_cast %140 : vector<1x32x8xbf16> to vector<32x8xbf16>
    %142 = arith.truncf %139 : vector<8x256xf32> to vector<8x256xbf16>
    %cst_80 = arith.constant dense<0.000000e+00> : vector<32x256xf32>
    %143 = tpu.matmul %141, %142, %cst_80 {dimension_numbers = #tpu.dot_dimension_numbers<[1], [0], [0], [1], [0, 0, 1, 1], [], []>} : vector<32x8xbf16>, vector<8x256xbf16>, vector<32x256xf32> -> vector<32x256xf32>
    %144 = arith.addf %135, %143 : vector<32x256xf32>
    %c241_i32 = arith.constant 241 : i32
    %145 = tpu.dynamic_rotate %1 by %c241_i32 dim 1 : vector<8x256xf32>, i32 -> vector<8x256xf32>
    %c16 = arith.constant 16 : index
    %c0_81 = arith.constant 0 : index
    %146 = vector.load %arg2[%c16, %c0_81] : memref<25x256xf32, #tpu.memory_space<vmem>>, vector<1x256xf32>
    %147 = vector.broadcast %146 : vector<1x256xf32> to vector<8x256xf32>
    %148 = arith.mulf %145, %147 : vector<8x256xf32>
    %c16_82 = arith.constant 16 : index
    %c0_83 = arith.constant 0 : index
    %c0_84 = arith.constant 0 : index
    %149 = vector.load %arg4[%c16_82, %c0_83, %c0_84] : memref<25x32x8xbf16, #tpu.memory_space<vmem>>, vector<1x32x8xbf16>
    %150 = vector.shape_cast %149 : vector<1x32x8xbf16> to vector<32x8xbf16>
    %151 = arith.truncf %148 : vector<8x256xf32> to vector<8x256xbf16>
    %cst_85 = arith.constant dense<0.000000e+00> : vector<32x256xf32>
    %152 = tpu.matmul %150, %151, %cst_85 {dimension_numbers = #tpu.dot_dimension_numbers<[1], [0], [0], [1], [0, 0, 1, 1], [], []>} : vector<32x8xbf16>, vector<8x256xbf16>, vector<32x256xf32> -> vector<32x256xf32>
    %153 = arith.addf %144, %152 : vector<32x256xf32>
    %c240_i32 = arith.constant 240 : i32
    %154 = tpu.dynamic_rotate %1 by %c240_i32 dim 1 : vector<8x256xf32>, i32 -> vector<8x256xf32>
    %c17 = arith.constant 17 : index
    %c0_86 = arith.constant 0 : index
    %155 = vector.load %arg2[%c17, %c0_86] : memref<25x256xf32, #tpu.memory_space<vmem>>, vector<1x256xf32>
    %156 = vector.broadcast %155 : vector<1x256xf32> to vector<8x256xf32>
    %157 = arith.mulf %154, %156 : vector<8x256xf32>
    %c17_87 = arith.constant 17 : index
    %c0_88 = arith.constant 0 : index
    %c0_89 = arith.constant 0 : index
    %158 = vector.load %arg4[%c17_87, %c0_88, %c0_89] : memref<25x32x8xbf16, #tpu.memory_space<vmem>>, vector<1x32x8xbf16>
    %159 = vector.shape_cast %158 : vector<1x32x8xbf16> to vector<32x8xbf16>
    %160 = arith.truncf %157 : vector<8x256xf32> to vector<8x256xbf16>
    %cst_90 = arith.constant dense<0.000000e+00> : vector<32x256xf32>
    %161 = tpu.matmul %159, %160, %cst_90 {dimension_numbers = #tpu.dot_dimension_numbers<[1], [0], [0], [1], [0, 0, 1, 1], [], []>} : vector<32x8xbf16>, vector<8x256xbf16>, vector<32x256xf32> -> vector<32x256xf32>
    %162 = arith.addf %153, %161 : vector<32x256xf32>
    %c239_i32 = arith.constant 239 : i32
    %163 = tpu.dynamic_rotate %1 by %c239_i32 dim 1 : vector<8x256xf32>, i32 -> vector<8x256xf32>
    %c18 = arith.constant 18 : index
    %c0_91 = arith.constant 0 : index
    %164 = vector.load %arg2[%c18, %c0_91] : memref<25x256xf32, #tpu.memory_space<vmem>>, vector<1x256xf32>
    %165 = vector.broadcast %164 : vector<1x256xf32> to vector<8x256xf32>
    %166 = arith.mulf %163, %165 : vector<8x256xf32>
    %c18_92 = arith.constant 18 : index
    %c0_93 = arith.constant 0 : index
    %c0_94 = arith.constant 0 : index
    %167 = vector.load %arg4[%c18_92, %c0_93, %c0_94] : memref<25x32x8xbf16, #tpu.memory_space<vmem>>, vector<1x32x8xbf16>
    %168 = vector.shape_cast %167 : vector<1x32x8xbf16> to vector<32x8xbf16>
    %169 = arith.truncf %166 : vector<8x256xf32> to vector<8x256xbf16>
    %cst_95 = arith.constant dense<0.000000e+00> : vector<32x256xf32>
    %170 = tpu.matmul %168, %169, %cst_95 {dimension_numbers = #tpu.dot_dimension_numbers<[1], [0], [0], [1], [0, 0, 1, 1], [], []>} : vector<32x8xbf16>, vector<8x256xbf16>, vector<32x256xf32> -> vector<32x256xf32>
    %171 = arith.addf %162, %170 : vector<32x256xf32>
    %c238_i32 = arith.constant 238 : i32
    %172 = tpu.dynamic_rotate %1 by %c238_i32 dim 1 : vector<8x256xf32>, i32 -> vector<8x256xf32>
    %c19 = arith.constant 19 : index
    %c0_96 = arith.constant 0 : index
    %173 = vector.load %arg2[%c19, %c0_96] : memref<25x256xf32, #tpu.memory_space<vmem>>, vector<1x256xf32>
    %174 = vector.broadcast %173 : vector<1x256xf32> to vector<8x256xf32>
    %175 = arith.mulf %172, %174 : vector<8x256xf32>
    %c19_97 = arith.constant 19 : index
    %c0_98 = arith.constant 0 : index
    %c0_99 = arith.constant 0 : index
    %176 = vector.load %arg4[%c19_97, %c0_98, %c0_99] : memref<25x32x8xbf16, #tpu.memory_space<vmem>>, vector<1x32x8xbf16>
    %177 = vector.shape_cast %176 : vector<1x32x8xbf16> to vector<32x8xbf16>
    %178 = arith.truncf %175 : vector<8x256xf32> to vector<8x256xbf16>
    %cst_100 = arith.constant dense<0.000000e+00> : vector<32x256xf32>
    %179 = tpu.matmul %177, %178, %cst_100 {dimension_numbers = #tpu.dot_dimension_numbers<[1], [0], [0], [1], [0, 0, 1, 1], [], []>} : vector<32x8xbf16>, vector<8x256xbf16>, vector<32x256xf32> -> vector<32x256xf32>
    %180 = arith.addf %171, %179 : vector<32x256xf32>
    %c226_i32 = arith.constant 226 : i32
    %181 = tpu.dynamic_rotate %1 by %c226_i32 dim 1 : vector<8x256xf32>, i32 -> vector<8x256xf32>
    %c20 = arith.constant 20 : index
    %c0_101 = arith.constant 0 : index
    %182 = vector.load %arg2[%c20, %c0_101] : memref<25x256xf32, #tpu.memory_space<vmem>>, vector<1x256xf32>
    %183 = vector.broadcast %182 : vector<1x256xf32> to vector<8x256xf32>
    %184 = arith.mulf %181, %183 : vector<8x256xf32>
    %c20_102 = arith.constant 20 : index
    %c0_103 = arith.constant 0 : index
    %c0_104 = arith.constant 0 : index
    %185 = vector.load %arg4[%c20_102, %c0_103, %c0_104] : memref<25x32x8xbf16, #tpu.memory_space<vmem>>, vector<1x32x8xbf16>
    %186 = vector.shape_cast %185 : vector<1x32x8xbf16> to vector<32x8xbf16>
    %187 = arith.truncf %184 : vector<8x256xf32> to vector<8x256xbf16>
    %cst_105 = arith.constant dense<0.000000e+00> : vector<32x256xf32>
    %188 = tpu.matmul %186, %187, %cst_105 {dimension_numbers = #tpu.dot_dimension_numbers<[1], [0], [0], [1], [0, 0, 1, 1], [], []>} : vector<32x8xbf16>, vector<8x256xbf16>, vector<32x256xf32> -> vector<32x256xf32>
    %189 = arith.addf %180, %188 : vector<32x256xf32>
    %c225_i32 = arith.constant 225 : i32
    %190 = tpu.dynamic_rotate %1 by %c225_i32 dim 1 : vector<8x256xf32>, i32 -> vector<8x256xf32>
    %c21 = arith.constant 21 : index
    %c0_106 = arith.constant 0 : index
    %191 = vector.load %arg2[%c21, %c0_106] : memref<25x256xf32, #tpu.memory_space<vmem>>, vector<1x256xf32>
    %192 = vector.broadcast %191 : vector<1x256xf32> to vector<8x256xf32>
    %193 = arith.mulf %190, %192 : vector<8x256xf32>
    %c21_107 = arith.constant 21 : index
    %c0_108 = arith.constant 0 : index
    %c0_109 = arith.constant 0 : index
    %194 = vector.load %arg4[%c21_107, %c0_108, %c0_109] : memref<25x32x8xbf16, #tpu.memory_space<vmem>>, vector<1x32x8xbf16>
    %195 = vector.shape_cast %194 : vector<1x32x8xbf16> to vector<32x8xbf16>
    %196 = arith.truncf %193 : vector<8x256xf32> to vector<8x256xbf16>
    %cst_110 = arith.constant dense<0.000000e+00> : vector<32x256xf32>
    %197 = tpu.matmul %195, %196, %cst_110 {dimension_numbers = #tpu.dot_dimension_numbers<[1], [0], [0], [1], [0, 0, 1, 1], [], []>} : vector<32x8xbf16>, vector<8x256xbf16>, vector<32x256xf32> -> vector<32x256xf32>
    %198 = arith.addf %189, %197 : vector<32x256xf32>
    %c224_i32 = arith.constant 224 : i32
    %199 = tpu.dynamic_rotate %1 by %c224_i32 dim 1 : vector<8x256xf32>, i32 -> vector<8x256xf32>
    %c22 = arith.constant 22 : index
    %c0_111 = arith.constant 0 : index
    %200 = vector.load %arg2[%c22, %c0_111] : memref<25x256xf32, #tpu.memory_space<vmem>>, vector<1x256xf32>
    %201 = vector.broadcast %200 : vector<1x256xf32> to vector<8x256xf32>
    %202 = arith.mulf %199, %201 : vector<8x256xf32>
    %c22_112 = arith.constant 22 : index
    %c0_113 = arith.constant 0 : index
    %c0_114 = arith.constant 0 : index
    %203 = vector.load %arg4[%c22_112, %c0_113, %c0_114] : memref<25x32x8xbf16, #tpu.memory_space<vmem>>, vector<1x32x8xbf16>
    %204 = vector.shape_cast %203 : vector<1x32x8xbf16> to vector<32x8xbf16>
    %205 = arith.truncf %202 : vector<8x256xf32> to vector<8x256xbf16>
    %cst_115 = arith.constant dense<0.000000e+00> : vector<32x256xf32>
    %206 = tpu.matmul %204, %205, %cst_115 {dimension_numbers = #tpu.dot_dimension_numbers<[1], [0], [0], [1], [0, 0, 1, 1], [], []>} : vector<32x8xbf16>, vector<8x256xbf16>, vector<32x256xf32> -> vector<32x256xf32>
    %207 = arith.addf %198, %206 : vector<32x256xf32>
    %c223_i32 = arith.constant 223 : i32
    %208 = tpu.dynamic_rotate %1 by %c223_i32 dim 1 : vector<8x256xf32>, i32 -> vector<8x256xf32>
    %c23 = arith.constant 23 : index
    %c0_116 = arith.constant 0 : index
    %209 = vector.load %arg2[%c23, %c0_116] : memref<25x256xf32, #tpu.memory_space<vmem>>, vector<1x256xf32>
    %210 = vector.broadcast %209 : vector<1x256xf32> to vector<8x256xf32>
    %211 = arith.mulf %208, %210 : vector<8x256xf32>
    %c23_117 = arith.constant 23 : index
    %c0_118 = arith.constant 0 : index
    %c0_119 = arith.constant 0 : index
    %212 = vector.load %arg4[%c23_117, %c0_118, %c0_119] : memref<25x32x8xbf16, #tpu.memory_space<vmem>>, vector<1x32x8xbf16>
    %213 = vector.shape_cast %212 : vector<1x32x8xbf16> to vector<32x8xbf16>
    %214 = arith.truncf %211 : vector<8x256xf32> to vector<8x256xbf16>
    %cst_120 = arith.constant dense<0.000000e+00> : vector<32x256xf32>
    %215 = tpu.matmul %213, %214, %cst_120 {dimension_numbers = #tpu.dot_dimension_numbers<[1], [0], [0], [1], [0, 0, 1, 1], [], []>} : vector<32x8xbf16>, vector<8x256xbf16>, vector<32x256xf32> -> vector<32x256xf32>
    %216 = arith.addf %207, %215 : vector<32x256xf32>
    %c222_i32 = arith.constant 222 : i32
    %217 = tpu.dynamic_rotate %1 by %c222_i32 dim 1 : vector<8x256xf32>, i32 -> vector<8x256xf32>
    %c24 = arith.constant 24 : index
    %c0_121 = arith.constant 0 : index
    %218 = vector.load %arg2[%c24, %c0_121] : memref<25x256xf32, #tpu.memory_space<vmem>>, vector<1x256xf32>
    %219 = vector.broadcast %218 : vector<1x256xf32> to vector<8x256xf32>
    %220 = arith.mulf %217, %219 : vector<8x256xf32>
    %c24_122 = arith.constant 24 : index
    %c0_123 = arith.constant 0 : index
    %c0_124 = arith.constant 0 : index
    %221 = vector.load %arg4[%c24_122, %c0_123, %c0_124] : memref<25x32x8xbf16, #tpu.memory_space<vmem>>, vector<1x32x8xbf16>
    %222 = vector.shape_cast %221 : vector<1x32x8xbf16> to vector<32x8xbf16>
    %223 = arith.truncf %220 : vector<8x256xf32> to vector<8x256xbf16>
    %cst_125 = arith.constant dense<0.000000e+00> : vector<32x256xf32>
    %224 = tpu.matmul %222, %223, %cst_125 {dimension_numbers = #tpu.dot_dimension_numbers<[1], [0], [0], [1], [0, 0, 1, 1], [], []>} : vector<32x8xbf16>, vector<8x256xbf16>, vector<32x256xf32> -> vector<32x256xf32>
    %225 = arith.addf %216, %224 : vector<32x256xf32>
    %cst_126 = arith.constant 0.000000e+00 : f32
    %226 = vector.broadcast %cst_126 : f32 to vector<32x256xf32>
    %227 = arith.cmpf ogt, %225, %226 : vector<32x256xf32>
    %cst_127 = arith.constant 0.00999999977 : f32
    %228 = vector.broadcast %cst_127 : f32 to vector<32x256xf32>
    %229 = arith.mulf %228, %225 : vector<32x256xf32>
    %230 = arith.select %227, %225, %229 : vector<32x256xi1>, vector<32x256xf32>
    %c0_128 = arith.constant 0 : index
    %c0_129 = arith.constant 0 : index
    %231 = vector.load %arg7[%c0_128, %c0_129] : memref<64x1xf32, #tpu.memory_space<vmem>>, vector<64x1xf32>
    %232 = vector.shape_cast %231 : vector<64x1xf32> to vector<64x1xf32>
    %233 = vector.broadcast %232 : vector<64x1xf32> to vector<64x256xf32>
    %c17_i32_130 = arith.constant 17 : i32
    %234 = tpu.dynamic_rotate %230 by %c17_i32_130 dim 1 : vector<32x256xf32>, i32 -> vector<32x256xf32>
    %c0_131 = arith.constant 0 : index
    %c0_132 = arith.constant 0 : index
    %235 = vector.load %arg3[%c0_131, %c0_132] : memref<9x256xf32, #tpu.memory_space<vmem>>, vector<1x256xf32>
    %236 = vector.broadcast %235 : vector<1x256xf32> to vector<32x256xf32>
    %237 = arith.mulf %234, %236 : vector<32x256xf32>
    %c0_133 = arith.constant 0 : index
    %c0_134 = arith.constant 0 : index
    %c0_135 = arith.constant 0 : index
    %238 = vector.load %arg6[%c0_133, %c0_134, %c0_135] : memref<9x64x32xbf16, #tpu.memory_space<vmem>>, vector<1x64x32xbf16>
    %239 = vector.shape_cast %238 : vector<1x64x32xbf16> to vector<64x32xbf16>
    %240 = arith.truncf %237 : vector<32x256xf32> to vector<32x256xbf16>
    %cst_136 = arith.constant dense<0.000000e+00> : vector<64x256xf32>
    %241 = tpu.matmul %239, %240, %cst_136 {dimension_numbers = #tpu.dot_dimension_numbers<[1], [0], [0], [1], [0, 0, 1, 1], [], []>} : vector<64x32xbf16>, vector<32x256xbf16>, vector<64x256xf32> -> vector<64x256xf32>
    %242 = arith.addf %233, %241 : vector<64x256xf32>
    %c16_i32_137 = arith.constant 16 : i32
    %243 = tpu.dynamic_rotate %230 by %c16_i32_137 dim 1 : vector<32x256xf32>, i32 -> vector<32x256xf32>
    %c1_138 = arith.constant 1 : index
    %c0_139 = arith.constant 0 : index
    %244 = vector.load %arg3[%c1_138, %c0_139] : memref<9x256xf32, #tpu.memory_space<vmem>>, vector<1x256xf32>
    %245 = vector.broadcast %244 : vector<1x256xf32> to vector<32x256xf32>
    %246 = arith.mulf %243, %245 : vector<32x256xf32>
    %c1_140 = arith.constant 1 : index
    %c0_141 = arith.constant 0 : index
    %c0_142 = arith.constant 0 : index
    %247 = vector.load %arg6[%c1_140, %c0_141, %c0_142] : memref<9x64x32xbf16, #tpu.memory_space<vmem>>, vector<1x64x32xbf16>
    %248 = vector.shape_cast %247 : vector<1x64x32xbf16> to vector<64x32xbf16>
    %249 = arith.truncf %246 : vector<32x256xf32> to vector<32x256xbf16>
    %cst_143 = arith.constant dense<0.000000e+00> : vector<64x256xf32>
    %250 = tpu.matmul %248, %249, %cst_143 {dimension_numbers = #tpu.dot_dimension_numbers<[1], [0], [0], [1], [0, 0, 1, 1], [], []>} : vector<64x32xbf16>, vector<32x256xbf16>, vector<64x256xf32> -> vector<64x256xf32>
    %251 = arith.addf %242, %250 : vector<64x256xf32>
    %c15_i32_144 = arith.constant 15 : i32
    %252 = tpu.dynamic_rotate %230 by %c15_i32_144 dim 1 : vector<32x256xf32>, i32 -> vector<32x256xf32>
    %c2_145 = arith.constant 2 : index
    %c0_146 = arith.constant 0 : index
    %253 = vector.load %arg3[%c2_145, %c0_146] : memref<9x256xf32, #tpu.memory_space<vmem>>, vector<1x256xf32>
    %254 = vector.broadcast %253 : vector<1x256xf32> to vector<32x256xf32>
    %255 = arith.mulf %252, %254 : vector<32x256xf32>
    %c2_147 = arith.constant 2 : index
    %c0_148 = arith.constant 0 : index
    %c0_149 = arith.constant 0 : index
    %256 = vector.load %arg6[%c2_147, %c0_148, %c0_149] : memref<9x64x32xbf16, #tpu.memory_space<vmem>>, vector<1x64x32xbf16>
    %257 = vector.shape_cast %256 : vector<1x64x32xbf16> to vector<64x32xbf16>
    %258 = arith.truncf %255 : vector<32x256xf32> to vector<32x256xbf16>
    %cst_150 = arith.constant dense<0.000000e+00> : vector<64x256xf32>
    %259 = tpu.matmul %257, %258, %cst_150 {dimension_numbers = #tpu.dot_dimension_numbers<[1], [0], [0], [1], [0, 0, 1, 1], [], []>} : vector<64x32xbf16>, vector<32x256xbf16>, vector<64x256xf32> -> vector<64x256xf32>
    %260 = arith.addf %251, %259 : vector<64x256xf32>
    %c1_i32_151 = arith.constant 1 : i32
    %261 = tpu.dynamic_rotate %230 by %c1_i32_151 dim 1 : vector<32x256xf32>, i32 -> vector<32x256xf32>
    %c3_152 = arith.constant 3 : index
    %c0_153 = arith.constant 0 : index
    %262 = vector.load %arg3[%c3_152, %c0_153] : memref<9x256xf32, #tpu.memory_space<vmem>>, vector<1x256xf32>
    %263 = vector.broadcast %262 : vector<1x256xf32> to vector<32x256xf32>
    %264 = arith.mulf %261, %263 : vector<32x256xf32>
    %c3_154 = arith.constant 3 : index
    %c0_155 = arith.constant 0 : index
    %c0_156 = arith.constant 0 : index
    %265 = vector.load %arg6[%c3_154, %c0_155, %c0_156] : memref<9x64x32xbf16, #tpu.memory_space<vmem>>, vector<1x64x32xbf16>
    %266 = vector.shape_cast %265 : vector<1x64x32xbf16> to vector<64x32xbf16>
    %267 = arith.truncf %264 : vector<32x256xf32> to vector<32x256xbf16>
    %cst_157 = arith.constant dense<0.000000e+00> : vector<64x256xf32>
    %268 = tpu.matmul %266, %267, %cst_157 {dimension_numbers = #tpu.dot_dimension_numbers<[1], [0], [0], [1], [0, 0, 1, 1], [], []>} : vector<64x32xbf16>, vector<32x256xbf16>, vector<64x256xf32> -> vector<64x256xf32>
    %269 = arith.addf %260, %268 : vector<64x256xf32>
    %c4_158 = arith.constant 4 : index
    %c0_159 = arith.constant 0 : index
    %c0_160 = arith.constant 0 : index
    %270 = vector.load %arg6[%c4_158, %c0_159, %c0_160] : memref<9x64x32xbf16, #tpu.memory_space<vmem>>, vector<1x64x32xbf16>
    %271 = vector.shape_cast %270 : vector<1x64x32xbf16> to vector<64x32xbf16>
    %272 = arith.truncf %230 : vector<32x256xf32> to vector<32x256xbf16>
    %cst_161 = arith.constant dense<0.000000e+00> : vector<64x256xf32>
    %273 = tpu.matmul %271, %272, %cst_161 {dimension_numbers = #tpu.dot_dimension_numbers<[1], [0], [0], [1], [0, 0, 1, 1], [], []>} : vector<64x32xbf16>, vector<32x256xbf16>, vector<64x256xf32> -> vector<64x256xf32>
    %274 = arith.addf %269, %273 : vector<64x256xf32>
    %c255_i32_162 = arith.constant 255 : i32
    %275 = tpu.dynamic_rotate %230 by %c255_i32_162 dim 1 : vector<32x256xf32>, i32 -> vector<32x256xf32>
    %c5_163 = arith.constant 5 : index
    %c0_164 = arith.constant 0 : index
    %276 = vector.load %arg3[%c5_163, %c0_164] : memref<9x256xf32, #tpu.memory_space<vmem>>, vector<1x256xf32>
    %277 = vector.broadcast %276 : vector<1x256xf32> to vector<32x256xf32>
    %278 = arith.mulf %275, %277 : vector<32x256xf32>
    %c5_165 = arith.constant 5 : index
    %c0_166 = arith.constant 0 : index
    %c0_167 = arith.constant 0 : index
    %279 = vector.load %arg6[%c5_165, %c0_166, %c0_167] : memref<9x64x32xbf16, #tpu.memory_space<vmem>>, vector<1x64x32xbf16>
    %280 = vector.shape_cast %279 : vector<1x64x32xbf16> to vector<64x32xbf16>
    %281 = arith.truncf %278 : vector<32x256xf32> to vector<32x256xbf16>
    %cst_168 = arith.constant dense<0.000000e+00> : vector<64x256xf32>
    %282 = tpu.matmul %280, %281, %cst_168 {dimension_numbers = #tpu.dot_dimension_numbers<[1], [0], [0], [1], [0, 0, 1, 1], [], []>} : vector<64x32xbf16>, vector<32x256xbf16>, vector<64x256xf32> -> vector<64x256xf32>
    %283 = arith.addf %274, %282 : vector<64x256xf32>
    %c241_i32_169 = arith.constant 241 : i32
    %284 = tpu.dynamic_rotate %230 by %c241_i32_169 dim 1 : vector<32x256xf32>, i32 -> vector<32x256xf32>
    %c6_170 = arith.constant 6 : index
    %c0_171 = arith.constant 0 : index
    %285 = vector.load %arg3[%c6_170, %c0_171] : memref<9x256xf32, #tpu.memory_space<vmem>>, vector<1x256xf32>
    %286 = vector.broadcast %285 : vector<1x256xf32> to vector<32x256xf32>
    %287 = arith.mulf %284, %286 : vector<32x256xf32>
    %c6_172 = arith.constant 6 : index
    %c0_173 = arith.constant 0 : index
    %c0_174 = arith.constant 0 : index
    %288 = vector.load %arg6[%c6_172, %c0_173, %c0_174] : memref<9x64x32xbf16, #tpu.memory_space<vmem>>, vector<1x64x32xbf16>
    %289 = vector.shape_cast %288 : vector<1x64x32xbf16> to vector<64x32xbf16>
    %290 = arith.truncf %287 : vector<32x256xf32> to vector<32x256xbf16>
    %cst_175 = arith.constant dense<0.000000e+00> : vector<64x256xf32>
    %291 = tpu.matmul %289, %290, %cst_175 {dimension_numbers = #tpu.dot_dimension_numbers<[1], [0], [0], [1], [0, 0, 1, 1], [], []>} : vector<64x32xbf16>, vector<32x256xbf16>, vector<64x256xf32> -> vector<64x256xf32>
    %292 = arith.addf %283, %291 : vector<64x256xf32>
    %c240_i32_176 = arith.constant 240 : i32
    %293 = tpu.dynamic_rotate %230 by %c240_i32_176 dim 1 : vector<32x256xf32>, i32 -> vector<32x256xf32>
    %c7_177 = arith.constant 7 : index
    %c0_178 = arith.constant 0 : index
    %294 = vector.load %arg3[%c7_177, %c0_178] : memref<9x256xf32, #tpu.memory_space<vmem>>, vector<1x256xf32>
    %295 = vector.broadcast %294 : vector<1x256xf32> to vector<32x256xf32>
    %296 = arith.mulf %293, %295 : vector<32x256xf32>
    %c7_179 = arith.constant 7 : index
    %c0_180 = arith.constant 0 : index
    %c0_181 = arith.constant 0 : index
    %297 = vector.load %arg6[%c7_179, %c0_180, %c0_181] : memref<9x64x32xbf16, #tpu.memory_space<vmem>>, vector<1x64x32xbf16>
    %298 = vector.shape_cast %297 : vector<1x64x32xbf16> to vector<64x32xbf16>
    %299 = arith.truncf %296 : vector<32x256xf32> to vector<32x256xbf16>
    %cst_182 = arith.constant dense<0.000000e+00> : vector<64x256xf32>
    %300 = tpu.matmul %298, %299, %cst_182 {dimension_numbers = #tpu.dot_dimension_numbers<[1], [0], [0], [1], [0, 0, 1, 1], [], []>} : vector<64x32xbf16>, vector<32x256xbf16>, vector<64x256xf32> -> vector<64x256xf32>
    %301 = arith.addf %292, %300 : vector<64x256xf32>
    %c239_i32_183 = arith.constant 239 : i32
    %302 = tpu.dynamic_rotate %230 by %c239_i32_183 dim 1 : vector<32x256xf32>, i32 -> vector<32x256xf32>
    %c8_184 = arith.constant 8 : index
    %c0_185 = arith.constant 0 : index
    %303 = vector.load %arg3[%c8_184, %c0_185] : memref<9x256xf32, #tpu.memory_space<vmem>>, vector<1x256xf32>
    %304 = vector.broadcast %303 : vector<1x256xf32> to vector<32x256xf32>
    %305 = arith.mulf %302, %304 : vector<32x256xf32>
    %c8_186 = arith.constant 8 : index
    %c0_187 = arith.constant 0 : index
    %c0_188 = arith.constant 0 : index
    %306 = vector.load %arg6[%c8_186, %c0_187, %c0_188] : memref<9x64x32xbf16, #tpu.memory_space<vmem>>, vector<1x64x32xbf16>
    %307 = vector.shape_cast %306 : vector<1x64x32xbf16> to vector<64x32xbf16>
    %308 = arith.truncf %305 : vector<32x256xf32> to vector<32x256xbf16>
    %cst_189 = arith.constant dense<0.000000e+00> : vector<64x256xf32>
    %309 = tpu.matmul %307, %308, %cst_189 {dimension_numbers = #tpu.dot_dimension_numbers<[1], [0], [0], [1], [0, 0, 1, 1], [], []>} : vector<64x32xbf16>, vector<32x256xbf16>, vector<64x256xf32> -> vector<64x256xf32>
    %310 = arith.addf %301, %309 : vector<64x256xf32>
    %cst_190 = arith.constant 0.000000e+00 : f32
    %311 = vector.broadcast %cst_190 : f32 to vector<64x256xf32>
    %312 = arith.cmpf ogt, %310, %311 : vector<64x256xf32>
    %cst_191 = arith.constant 0.00999999977 : f32
    %313 = vector.broadcast %cst_191 : f32 to vector<64x256xf32>
    %314 = arith.mulf %313, %310 : vector<64x256xf32>
    %315 = arith.select %312, %310, %314 : vector<64x256xi1>, vector<64x256xf32>
    %c0_192 = arith.constant 0 : index
    %c0_193 = arith.constant 0 : index
    %316 = vector.load %arg9[%c0_192, %c0_193] : memref<32x1xf32, #tpu.memory_space<vmem>>, vector<32x1xf32>
    %317 = vector.shape_cast %316 : vector<32x1xf32> to vector<32x1xf32>
    %318 = vector.broadcast %317 : vector<32x1xf32> to vector<32x256xf32>
    %c17_i32_194 = arith.constant 17 : i32
    %319 = tpu.dynamic_rotate %315 by %c17_i32_194 dim 1 : vector<64x256xf32>, i32 -> vector<64x256xf32>
    %c0_195 = arith.constant 0 : index
    %c0_196 = arith.constant 0 : index
    %320 = vector.load %arg3[%c0_195, %c0_196] : memref<9x256xf32, #tpu.memory_space<vmem>>, vector<1x256xf32>
    %321 = vector.broadcast %320 : vector<1x256xf32> to vector<64x256xf32>
    %322 = arith.mulf %319, %321 : vector<64x256xf32>
    %c0_197 = arith.constant 0 : index
    %c0_198 = arith.constant 0 : index
    %c0_199 = arith.constant 0 : index
    %323 = vector.load %arg8[%c0_197, %c0_198, %c0_199] : memref<9x32x64xbf16, #tpu.memory_space<vmem>>, vector<1x32x64xbf16>
    %324 = vector.shape_cast %323 : vector<1x32x64xbf16> to vector<32x64xbf16>
    %325 = arith.truncf %322 : vector<64x256xf32> to vector<64x256xbf16>
    %cst_200 = arith.constant dense<0.000000e+00> : vector<32x256xf32>
    %326 = tpu.matmul %324, %325, %cst_200 {dimension_numbers = #tpu.dot_dimension_numbers<[1], [0], [0], [1], [0, 0, 1, 1], [], []>} : vector<32x64xbf16>, vector<64x256xbf16>, vector<32x256xf32> -> vector<32x256xf32>
    %327 = arith.addf %318, %326 : vector<32x256xf32>
    %c16_i32_201 = arith.constant 16 : i32
    %328 = tpu.dynamic_rotate %315 by %c16_i32_201 dim 1 : vector<64x256xf32>, i32 -> vector<64x256xf32>
    %c1_202 = arith.constant 1 : index
    %c0_203 = arith.constant 0 : index
    %329 = vector.load %arg3[%c1_202, %c0_203] : memref<9x256xf32, #tpu.memory_space<vmem>>, vector<1x256xf32>
    %330 = vector.broadcast %329 : vector<1x256xf32> to vector<64x256xf32>
    %331 = arith.mulf %328, %330 : vector<64x256xf32>
    %c1_204 = arith.constant 1 : index
    %c0_205 = arith.constant 0 : index
    %c0_206 = arith.constant 0 : index
    %332 = vector.load %arg8[%c1_204, %c0_205, %c0_206] : memref<9x32x64xbf16, #tpu.memory_space<vmem>>, vector<1x32x64xbf16>
    %333 = vector.shape_cast %332 : vector<1x32x64xbf16> to vector<32x64xbf16>
    %334 = arith.truncf %331 : vector<64x256xf32> to vector<64x256xbf16>
    %cst_207 = arith.constant dense<0.000000e+00> : vector<32x256xf32>
    %335 = tpu.matmul %333, %334, %cst_207 {dimension_numbers = #tpu.dot_dimension_numbers<[1], [0], [0], [1], [0, 0, 1, 1], [], []>} : vector<32x64xbf16>, vector<64x256xbf16>, vector<32x256xf32> -> vector<32x256xf32>
    %336 = arith.addf %327, %335 : vector<32x256xf32>
    %c15_i32_208 = arith.constant 15 : i32
    %337 = tpu.dynamic_rotate %315 by %c15_i32_208 dim 1 : vector<64x256xf32>, i32 -> vector<64x256xf32>
    %c2_209 = arith.constant 2 : index
    %c0_210 = arith.constant 0 : index
    %338 = vector.load %arg3[%c2_209, %c0_210] : memref<9x256xf32, #tpu.memory_space<vmem>>, vector<1x256xf32>
    %339 = vector.broadcast %338 : vector<1x256xf32> to vector<64x256xf32>
    %340 = arith.mulf %337, %339 : vector<64x256xf32>
    %c2_211 = arith.constant 2 : index
    %c0_212 = arith.constant 0 : index
    %c0_213 = arith.constant 0 : index
    %341 = vector.load %arg8[%c2_211, %c0_212, %c0_213] : memref<9x32x64xbf16, #tpu.memory_space<vmem>>, vector<1x32x64xbf16>
    %342 = vector.shape_cast %341 : vector<1x32x64xbf16> to vector<32x64xbf16>
    %343 = arith.truncf %340 : vector<64x256xf32> to vector<64x256xbf16>
    %cst_214 = arith.constant dense<0.000000e+00> : vector<32x256xf32>
    %344 = tpu.matmul %342, %343, %cst_214 {dimension_numbers = #tpu.dot_dimension_numbers<[1], [0], [0], [1], [0, 0, 1, 1], [], []>} : vector<32x64xbf16>, vector<64x256xbf16>, vector<32x256xf32> -> vector<32x256xf32>
    %345 = arith.addf %336, %344 : vector<32x256xf32>
    %c1_i32_215 = arith.constant 1 : i32
    %346 = tpu.dynamic_rotate %315 by %c1_i32_215 dim 1 : vector<64x256xf32>, i32 -> vector<64x256xf32>
    %c3_216 = arith.constant 3 : index
    %c0_217 = arith.constant 0 : index
    %347 = vector.load %arg3[%c3_216, %c0_217] : memref<9x256xf32, #tpu.memory_space<vmem>>, vector<1x256xf32>
    %348 = vector.broadcast %347 : vector<1x256xf32> to vector<64x256xf32>
    %349 = arith.mulf %346, %348 : vector<64x256xf32>
    %c3_218 = arith.constant 3 : index
    %c0_219 = arith.constant 0 : index
    %c0_220 = arith.constant 0 : index
    %350 = vector.load %arg8[%c3_218, %c0_219, %c0_220] : memref<9x32x64xbf16, #tpu.memory_space<vmem>>, vector<1x32x64xbf16>
    %351 = vector.shape_cast %350 : vector<1x32x64xbf16> to vector<32x64xbf16>
    %352 = arith.truncf %349 : vector<64x256xf32> to vector<64x256xbf16>
    %cst_221 = arith.constant dense<0.000000e+00> : vector<32x256xf32>
    %353 = tpu.matmul %351, %352, %cst_221 {dimension_numbers = #tpu.dot_dimension_numbers<[1], [0], [0], [1], [0, 0, 1, 1], [], []>} : vector<32x64xbf16>, vector<64x256xbf16>, vector<32x256xf32> -> vector<32x256xf32>
    %354 = arith.addf %345, %353 : vector<32x256xf32>
    %c4_222 = arith.constant 4 : index
    %c0_223 = arith.constant 0 : index
    %c0_224 = arith.constant 0 : index
    %355 = vector.load %arg8[%c4_222, %c0_223, %c0_224] : memref<9x32x64xbf16, #tpu.memory_space<vmem>>, vector<1x32x64xbf16>
    %356 = vector.shape_cast %355 : vector<1x32x64xbf16> to vector<32x64xbf16>
    %357 = arith.truncf %315 : vector<64x256xf32> to vector<64x256xbf16>
    %cst_225 = arith.constant dense<0.000000e+00> : vector<32x256xf32>
    %358 = tpu.matmul %356, %357, %cst_225 {dimension_numbers = #tpu.dot_dimension_numbers<[1], [0], [0], [1], [0, 0, 1, 1], [], []>} : vector<32x64xbf16>, vector<64x256xbf16>, vector<32x256xf32> -> vector<32x256xf32>
    %359 = arith.addf %354, %358 : vector<32x256xf32>
    %c255_i32_226 = arith.constant 255 : i32
    %360 = tpu.dynamic_rotate %315 by %c255_i32_226 dim 1 : vector<64x256xf32>, i32 -> vector<64x256xf32>
    %c5_227 = arith.constant 5 : index
    %c0_228 = arith.constant 0 : index
    %361 = vector.load %arg3[%c5_227, %c0_228] : memref<9x256xf32, #tpu.memory_space<vmem>>, vector<1x256xf32>
    %362 = vector.broadcast %361 : vector<1x256xf32> to vector<64x256xf32>
    %363 = arith.mulf %360, %362 : vector<64x256xf32>
    %c5_229 = arith.constant 5 : index
    %c0_230 = arith.constant 0 : index
    %c0_231 = arith.constant 0 : index
    %364 = vector.load %arg8[%c5_229, %c0_230, %c0_231] : memref<9x32x64xbf16, #tpu.memory_space<vmem>>, vector<1x32x64xbf16>
    %365 = vector.shape_cast %364 : vector<1x32x64xbf16> to vector<32x64xbf16>
    %366 = arith.truncf %363 : vector<64x256xf32> to vector<64x256xbf16>
    %cst_232 = arith.constant dense<0.000000e+00> : vector<32x256xf32>
    %367 = tpu.matmul %365, %366, %cst_232 {dimension_numbers = #tpu.dot_dimension_numbers<[1], [0], [0], [1], [0, 0, 1, 1], [], []>} : vector<32x64xbf16>, vector<64x256xbf16>, vector<32x256xf32> -> vector<32x256xf32>
    %368 = arith.addf %359, %367 : vector<32x256xf32>
    %c241_i32_233 = arith.constant 241 : i32
    %369 = tpu.dynamic_rotate %315 by %c241_i32_233 dim 1 : vector<64x256xf32>, i32 -> vector<64x256xf32>
    %c6_234 = arith.constant 6 : index
    %c0_235 = arith.constant 0 : index
    %370 = vector.load %arg3[%c6_234, %c0_235] : memref<9x256xf32, #tpu.memory_space<vmem>>, vector<1x256xf32>
    %371 = vector.broadcast %370 : vector<1x256xf32> to vector<64x256xf32>
    %372 = arith.mulf %369, %371 : vector<64x256xf32>
    %c6_236 = arith.constant 6 : index
    %c0_237 = arith.constant 0 : index
    %c0_238 = arith.constant 0 : index
    %373 = vector.load %arg8[%c6_236, %c0_237, %c0_238] : memref<9x32x64xbf16, #tpu.memory_space<vmem>>, vector<1x32x64xbf16>
    %374 = vector.shape_cast %373 : vector<1x32x64xbf16> to vector<32x64xbf16>
    %375 = arith.truncf %372 : vector<64x256xf32> to vector<64x256xbf16>
    %cst_239 = arith.constant dense<0.000000e+00> : vector<32x256xf32>
    %376 = tpu.matmul %374, %375, %cst_239 {dimension_numbers = #tpu.dot_dimension_numbers<[1], [0], [0], [1], [0, 0, 1, 1], [], []>} : vector<32x64xbf16>, vector<64x256xbf16>, vector<32x256xf32> -> vector<32x256xf32>
    %377 = arith.addf %368, %376 : vector<32x256xf32>
    %c240_i32_240 = arith.constant 240 : i32
    %378 = tpu.dynamic_rotate %315 by %c240_i32_240 dim 1 : vector<64x256xf32>, i32 -> vector<64x256xf32>
    %c7_241 = arith.constant 7 : index
    %c0_242 = arith.constant 0 : index
    %379 = vector.load %arg3[%c7_241, %c0_242] : memref<9x256xf32, #tpu.memory_space<vmem>>, vector<1x256xf32>
    %380 = vector.broadcast %379 : vector<1x256xf32> to vector<64x256xf32>
    %381 = arith.mulf %378, %380 : vector<64x256xf32>
    %c7_243 = arith.constant 7 : index
    %c0_244 = arith.constant 0 : index
    %c0_245 = arith.constant 0 : index
    %382 = vector.load %arg8[%c7_243, %c0_244, %c0_245] : memref<9x32x64xbf16, #tpu.memory_space<vmem>>, vector<1x32x64xbf16>
    %383 = vector.shape_cast %382 : vector<1x32x64xbf16> to vector<32x64xbf16>
    %384 = arith.truncf %381 : vector<64x256xf32> to vector<64x256xbf16>
    %cst_246 = arith.constant dense<0.000000e+00> : vector<32x256xf32>
    %385 = tpu.matmul %383, %384, %cst_246 {dimension_numbers = #tpu.dot_dimension_numbers<[1], [0], [0], [1], [0, 0, 1, 1], [], []>} : vector<32x64xbf16>, vector<64x256xbf16>, vector<32x256xf32> -> vector<32x256xf32>
    %386 = arith.addf %377, %385 : vector<32x256xf32>
    %c239_i32_247 = arith.constant 239 : i32
    %387 = tpu.dynamic_rotate %315 by %c239_i32_247 dim 1 : vector<64x256xf32>, i32 -> vector<64x256xf32>
    %c8_248 = arith.constant 8 : index
    %c0_249 = arith.constant 0 : index
    %388 = vector.load %arg3[%c8_248, %c0_249] : memref<9x256xf32, #tpu.memory_space<vmem>>, vector<1x256xf32>
    %389 = vector.broadcast %388 : vector<1x256xf32> to vector<64x256xf32>
    %390 = arith.mulf %387, %389 : vector<64x256xf32>
    %c8_250 = arith.constant 8 : index
    %c0_251 = arith.constant 0 : index
    %c0_252 = arith.constant 0 : index
    %391 = vector.load %arg8[%c8_250, %c0_251, %c0_252] : memref<9x32x64xbf16, #tpu.memory_space<vmem>>, vector<1x32x64xbf16>
    %392 = vector.shape_cast %391 : vector<1x32x64xbf16> to vector<32x64xbf16>
    %393 = arith.truncf %390 : vector<64x256xf32> to vector<64x256xbf16>
    %cst_253 = arith.constant dense<0.000000e+00> : vector<32x256xf32>
    %394 = tpu.matmul %392, %393, %cst_253 {dimension_numbers = #tpu.dot_dimension_numbers<[1], [0], [0], [1], [0, 0, 1, 1], [], []>} : vector<32x64xbf16>, vector<64x256xbf16>, vector<32x256xf32> -> vector<32x256xf32>
    %395 = arith.addf %386, %394 : vector<32x256xf32>
    %cst_254 = arith.constant 0.000000e+00 : f32
    %396 = vector.broadcast %cst_254 : f32 to vector<32x256xf32>
    %397 = arith.cmpf ogt, %395, %396 : vector<32x256xf32>
    %cst_255 = arith.constant 0.00999999977 : f32
    %398 = vector.broadcast %cst_255 : f32 to vector<32x256xf32>
    %399 = arith.mulf %398, %395 : vector<32x256xf32>
    %400 = arith.select %397, %395, %399 : vector<32x256xi1>, vector<32x256xf32>
    %c0_256 = arith.constant 0 : index
    %c0_257 = arith.constant 0 : index
    %401 = vector.load %arg10[%c0_256, %c0_257] : memref<4x32xbf16, #tpu.memory_space<vmem>>, vector<4x32xbf16>
    %402 = arith.truncf %400 : vector<32x256xf32> to vector<32x256xbf16>
    %cst_258 = arith.constant dense<0.000000e+00> : vector<4x256xf32>
    %403 = tpu.matmul %401, %402, %cst_258 {dimension_numbers = #tpu.dot_dimension_numbers<[1], [0], [0], [1], [0, 0, 1, 1], [], []>} : vector<4x32xbf16>, vector<32x256xbf16>, vector<4x256xf32> -> vector<4x256xf32>
    %c0_259 = arith.constant 0 : index
    %c0_260 = arith.constant 0 : index
    %404 = vector.load %arg11[%c0_259, %c0_260] : memref<4x1xf32, #tpu.memory_space<vmem>>, vector<4x1xf32>
    %405 = vector.broadcast %404 : vector<4x1xf32> to vector<4x256xf32>
    %406 = arith.addf %403, %405 : vector<4x256xf32>
    %c0_261 = arith.constant 0 : index
    %c0_262 = arith.constant 0 : index
    %407 = vector.load %arg12[%c0_261, %c0_262] : memref<4x256xf32, #tpu.memory_space<vmem>>, vector<4x256xf32>
    tpu.vector_store %arg12[%c0_261, %c0_262], %406 {strides = array<i32>} : memref<4x256xf32, #tpu.memory_space<vmem>>, vector<4x256xf32>,
    return
  }
  func.func @transform_0(%arg0: i32) -> (i32, i32) {
    %c0_i32 = arith.constant 0 : i32
    %c0_i32_0 = arith.constant 0 : i32
    return %c0_i32, %arg0 : i32, i32
  }
  func.func @transform_1(%arg0: i32) -> (i32, i32) {
    %c0_i32 = arith.constant 0 : i32
    %c0_i32_0 = arith.constant 0 : i32
    %c0_i32_1 = arith.constant 0 : i32
    return %c0_i32, %c0_i32_0 : i32, i32
  }
  func.func @transform_2(%arg0: i32) -> (i32, i32) {
    %c0_i32 = arith.constant 0 : i32
    %c0_i32_0 = arith.constant 0 : i32
    %c0_i32_1 = arith.constant 0 : i32
    return %c0_i32, %c0_i32_0 : i32, i32
  }
  func.func @transform_3(%arg0: i32) -> (i32, i32, i32) {
    %c0_i32 = arith.constant 0 : i32
    %c0_i32_0 = arith.constant 0 : i32
    %c0_i32_1 = arith.constant 0 : i32
    %c0_i32_2 = arith.constant 0 : i32
    return %c0_i32, %c0_i32_0, %c0_i32_1 : i32, i32, i32
  }
  func.func @transform_4(%arg0: i32) -> (i32, i32) {
    %c0_i32 = arith.constant 0 : i32
    %c0_i32_0 = arith.constant 0 : i32
    %c0_i32_1 = arith.constant 0 : i32
    return %c0_i32, %c0_i32_0 : i32, i32
  }
  func.func @transform_5(%arg0: i32) -> (i32, i32, i32) {
    %c0_i32 = arith.constant 0 : i32
    %c0_i32_0 = arith.constant 0 : i32
    %c0_i32_1 = arith.constant 0 : i32
    %c0_i32_2 = arith.constant 0 : i32
    return %c0_i32, %c0_i32_0, %c0_i32_1 : i32, i32, i32
  }
  func.func @transform_6(%arg0: i32) -> (i32, i32) {
    %c0_i32 = arith.constant 0 : i32
    %c0_i32_0 = arith.constant 0 : i32
    %c0_i32_1 = arith.constant 0 : i32
    return %c0_i32, %c0_i32_0 : i32, i32
  }
  func.func @transform_7(%arg0: i32) -> (i32, i32, i32) {
    %c0_i32 = arith.constant 0 : i32
    %c0_i32_0 = arith.constant 0 : i32
    %c0_i32_1 = arith.constant 0 : i32
    %c0_i32_2 = arith.constant 0 : i32
    return %c0_i32, %c0_i32_0, %c0_i32_1 : i32, i32, i32
  }
  func.func @transform_8(%arg0: i32) -> (i32, i32) {
    %c0_i32 = arith.constant 0 : i32
    %c0_i32_0 = arith.constant 0 : i32
    %c0_i32_1 = arith.constant 0 : i32
    return %c0_i32, %c0_i32_0 : i32, i32
  }
  func.func @transform_9(%arg0: i32) -> (i32, i32) {
    %c0_i32 = arith.constant 0 : i32
    %c0_i32_0 = arith.constant 0 : i32
    %c0_i32_1 = arith.constant 0 : i32
    return %c0_i32, %c0_i32_0 : i32, i32
  }
  func.func @transform_10(%arg0: i32) -> (i32, i32) {
    %c0_i32 = arith.constant 0 : i32
    %c0_i32_0 = arith.constant 0 : i32
    %c0_i32_1 = arith.constant 0 : i32
    return %c0_i32, %c0_i32_0 : i32, i32
  }
  func.func @transform_11(%arg0: i32) -> (i32, i32) {
    %c0_i32 = arith.constant 0 : i32
    %c0_i32_0 = arith.constant 0 : i32
    return %c0_i32, %arg0 : i32, i32
  }
}

</mosaic_0001>

<llo_original>
// kernel: _rnet_impl.1
$region0: #{_rnet_impl.1}
  #allocation0 [shape = 'u32[]', space=smem, size = 0x4, offset = 0x4, fixed_abs, tag = 'smem constant byte address 0x4 - core index']
  #allocation1 [shape = 'u32[144,128]{1,0:T(1,128)}', space=vmem, size = 0x12000, scoped, tag = 'internal scratch']
  %s0 = inlined_call_operand.vmem [shape: bf16[8,512], index: 0, kind: input, shape index: {}]
  %s1 = inlined_call_operand.vmem [shape: f32[25,256], index: 1, kind: input, shape index: {}]
  %s2 = inlined_call_operand.vmem [shape: f32[9,256], index: 2, kind: input, shape index: {}]
  %s3 = inlined_call_operand.vmem [shape: bf16[25,32,8], index: 3, kind: input, shape index: {}]
  %s4 = inlined_call_operand.vmem [shape: f32[32,1], index: 4, kind: input, shape index: {}]
  %s5 = inlined_call_operand.vmem [shape: bf16[9,64,32], index: 5, kind: input, shape index: {}]
  %s6 = inlined_call_operand.vmem [shape: f32[64,1], index: 6, kind: input, shape index: {}]
  %s7 = inlined_call_operand.vmem [shape: bf16[9,32,64], index: 7, kind: input, shape index: {}]
  %s8 = inlined_call_operand.vmem [shape: f32[32,1], index: 8, kind: input, shape index: {}]
  %s9 = inlined_call_operand.vmem [shape: bf16[4,32], index: 9, kind: input, shape index: {}]
  %s10 = inlined_call_operand.vmem [shape: f32[4,1], index: 10, kind: input, shape index: {}]
  %s11 = inlined_call_operand.vmem [shape: f32[4,512], index: 11, kind: output, shape index: {}]
  %s12 = sld [smem:[#allocation0]]
  $region77: #{_rnet_impl.1} parent=0
    _
  %s14 = ssub.s32 1, %s12
  %s15 = scalar_select 0, %s14, %s12
  loop: start=0, step=1, limit=4
  $region2: #{_rnet_impl.1} parent=0 // loop_pre_header
    _
  $region3: #{_rnet_impl.1} parent=0 // loop_header
    %s17 = sphi 0, %s21
    %p18 = scmp.ge.s32.totalorder %s17, 4
    %s27 = sphi 0, %s29
    %s30 = sphi 0, %s27
    %s31 = sphi 0, %s30
    %s47 = sphi 0, %s31
    %s51 = sphi 0, %s51
    %s53 = sphi 0, %s51
    %s54 = sphi 0, %s53
    %s68 = sphi 0, %s54
    %s72 = sphi 0, %s72
    %s74 = sphi 0, %s72
    %s75 = sphi 0, %s74
    %s89 = sphi 0, %s75
    %s93 = sphi 0, %s93
    %s95 = sphi 0, %s93
    %s96 = sphi 0, %s95
    %s110 = sphi 0, %s96
    %s114 = sphi 0, %s114
    %s116 = sphi 0, %s114
    %s117 = sphi 0, %s116
    %s131 = sphi 0, %s117
    %s135 = sphi 0, %s135
    %s137 = sphi 0, %s135
    %s138 = sphi 0, %s137
    %s152 = sphi 0, %s138
    %s156 = sphi 0, %s156
    %s158 = sphi 0, %s156
    %s159 = sphi 0, %s158
    %s173 = sphi 0, %s159
    %s177 = sphi 0, %s177
    %s179 = sphi 0, %s177
    %s180 = sphi 0, %s179
    %s194 = sphi 0, %s180
    %s198 = sphi 0, %s198
    %s200 = sphi 0, %s198
    %s201 = sphi 0, %s200
    %s215 = sphi 0, %s201
    %s219 = sphi 0, %s219
    %s221 = sphi 0, %s219
    %s222 = sphi 0, %s221
    %s236 = sphi 0, %s222
    %s240 = sphi 0, %s240
    %s242 = sphi 0, %s240
    %s243 = sphi 0, %s242
    %s257 = sphi 0, %s243
    %s263 = sphi 0, %s265
    %s266 = sphi 0, %s263
    %s267 = sphi 0, %s266
    %s283 = sphi 0, %s267
  $region4: #{_rnet_impl.1} parent=0 // loop_header_branch
    %20 = sbr.rel (%p18) target = $region8
  $region5: #{_rnet_impl.1} parent=0 // loop_body
    %s22 = ssub.s32 %s17, 1
    %s23 = ssub.s32 %s17, 2
    %s24 = sadd.s32 %s17, 1
    %s25 = ssub.s32 %s17, %s24
    %p26 = scmp.eq.s32.totalorder %s25, 0
    %s28 = sadd.s32 %s27, 1
    %s29 = scalar_select %p26, %s27, %s28
    %p32 = pneg %p26
    %p33 = scmp.eq.s32.totalorder %s17, 1
    %p34 = por %p32, %p33
    %p35 = scmp.ne.s32.totalorder %s27, %s30
    %p36 = scmp.eq.s32.totalorder %s17, 0
    %p37 = por %p35, %p36
    %p38 = scmp.ne.s32.totalorder %s27, %s30
    %p39 = scmp.eq.s32.totalorder %s22, 1
    %p40 = por %p38, %p39
    %p41 = scmp.ne.s32.totalorder %s30, %s31
    %p42 = scmp.eq.s32.totalorder %s22, 0
    %p43 = por %p41, %p42
    %p44 = scmp.ne.s32.totalorder %s30, %s31
    %p45 = scmp.eq.s32.totalorder %s23, 1
    %p46 = por %p44, %p45
    %p48 = scmp.ne.s32.totalorder %s31, %s47
    %p49 = scmp.eq.s32.totalorder %s23, 0
    %p50 = por %p48, %p49
    %s52 = sadd.s32 %s51, 1
    %p55 = scmp.eq.s32.totalorder %s17, 1
    %p56 = scmp.ne.s32.totalorder %s51, %s53
    %p57 = scmp.eq.s32.totalorder %s17, 0
    %p58 = por %p56, %p57
    %p59 = scmp.ne.s32.totalorder %s51, %s53
    %p60 = scmp.eq.s32.totalorder %s22, 1
    %p61 = por %p59, %p60
    %p62 = scmp.ne.s32.totalorder %s53, %s54
    %p63 = scmp.eq.s32.totalorder %s22, 0
    %p64 = por %p62, %p63
    %p65 = scmp.ne.s32.totalorder %s53, %s54
    %p66 = scmp.eq.s32.totalorder %s23, 1
    %p67 = por %p65, %p66
    %p69 = scmp.ne.s32.totalorder %s54, %s68
    %p70 = scmp.eq.s32.totalorder %s23, 0
    %p71 = por %p69, %p70
    %s73 = sadd.s32 %s72, 1
    %p76 = scmp.eq.s32.totalorder %s17, 1
    %p77 = scmp.ne.s32.totalorder %s72, %s74
    %p78 = scmp.eq.s32.totalorder %s17, 0
    %p79 = por %p77, %p78
    %p80 = scmp.ne.s32.totalorder %s72, %s74
    %p81 = scmp.eq.s32.totalorder %s22, 1
    %p82 = por %p80, %p81
    %p83 = scmp.ne.s32.totalorder %s74, %s75
    %p84 = scmp.eq.s32.totalorder %s22, 0
    %p85 = por %p83, %p84
    %p86 = scmp.ne.s32.totalorder %s74, %s75
    %p87 = scmp.eq.s32.totalorder %s23, 1
    %p88 = por %p86, %p87
    %p90 = scmp.ne.s32.totalorder %s75, %s89
    %p91 = scmp.eq.s32.totalorder %s23, 0
    %p92 = por %p90, %p91
    %s94 = sadd.s32 %s93, 1
    %p97 = scmp.eq.s32.totalorder %s17, 1
    %p98 = scmp.ne.s32.totalorder %s93, %s95
    %p99 = scmp.eq.s32.totalorder %s17, 0
    %p100 = por %p98, %p99
    %p101 = scmp.ne.s32.totalorder %s93, %s95
    %p102 = scmp.eq.s32.totalorder %s22, 1
    %p103 = por %p101, %p102
    %p104 = scmp.ne.s32.totalorder %s95, %s96
    %p105 = scmp.eq.s32.totalorder %s22, 0
    %p106 = por %p104, %p105
    %p107 = scmp.ne.s32.totalorder %s95, %s96
    %p108 = scmp.eq.s32.totalorder %s23, 1
    %p109 = por %p107, %p108
    %p111 = scmp.ne.s32.totalorder %s96, %s110
    %p112 = scmp.eq.s32.totalorder %s23, 0
    %p113 = por %p111, %p112
    %s115 = sadd.s32 %s114, 1
    %p118 = scmp.eq.s32.totalorder %s17, 1
    %p119 = scmp.ne.s32.totalorder %s114, %s116
    %p120 = scmp.eq.s32.totalorder %s17, 0
    %p121 = por %p119, %p120
    %p122 = scmp.ne.s32.totalorder %s114, %s116
    %p123 = scmp.eq.s32.totalorder %s22, 1
    %p124 = por %p122, %p123
    %p125 = scmp.ne.s32.totalorder %s116, %s117
    %p126 = scmp.eq.s32.totalorder %s22, 0
    %p127 = por %p125, %p126
    %p128 = scmp.ne.s32.totalorder %s116, %s117
    %p129 = scmp.eq.s32.totalorder %s23, 1
    %p130 = por %p128, %p129
    %p132 = scmp.ne.s32.totalorder %s117, %s131
    %p133 = scmp.eq.s32.totalorder %s23, 0
    %p134 = por %p132, %p133
    %s136 = sadd.s32 %s135, 1
    %p139 = scmp.eq.s32.totalorder %s17, 1
    %p140 = scmp.ne.s32.totalorder %s135, %s137
    %p141 = scmp.eq.s32.totalorder %s17, 0
    %p142 = por %p140, %p141
    %p143 = scmp.ne.s32.totalorder %s135, %s137
    %p144 = scmp.eq.s32.totalorder %s22, 1
    %p145 = por %p143, %p144
    %p146 = scmp.ne.s32.totalorder %s137, %s138
    %p147 = scmp.eq.s32.totalorder %s22, 0
    %p148 = por %p146, %p147
    %p149 = scmp.ne.s32.totalorder %s137, %s138
    %p150 = scmp.eq.s32.totalorder %s23, 1
    %p151 = por %p149, %p150
    %p153 = scmp.ne.s32.totalorder %s138, %s152
    %p154 = scmp.eq.s32.totalorder %s23, 0
    %p155 = por %p153, %p154
    %s157 = sadd.s32 %s156, 1
    %p160 = scmp.eq.s32.totalorder %s17, 1
    %p161 = scmp.ne.s32.totalorder %s156, %s158
    %p162 = scmp.eq.s32.totalorder %s17, 0
    %p163 = por %p161, %p162
    %p164 = scmp.ne.s32.totalorder %s156, %s158
    %p165 = scmp.eq.s32.totalorder %s22, 1
    %p166 = por %p164, %p165
    %p167 = scmp.ne.s32.totalorder %s158, %s159
    %p168 = scmp.eq.s32.totalorder %s22, 0
    %p169 = por %p167, %p168
    %p170 = scmp.ne.s32.totalorder %s158, %s159
    %p171 = scmp.eq.s32.totalorder %s23, 1
    %p172 = por %p170, %p171
    %p174 = scmp.ne.s32.totalorder %s159, %s173
    %p175 = scmp.eq.s32.totalorder %s23, 0
    %p176 = por %p174, %p175
    %s178 = sadd.s32 %s177, 1
    %p181 = scmp.eq.s32.totalorder %s17, 1
    %p182 = scmp.ne.s32.totalorder %s177, %s179
    %p183 = scmp.eq.s32.totalorder %s17, 0
    %p184 = por %p182, %p183
    %p185 = scmp.ne.s32.totalorder %s177, %s179
    %p186 = scmp.eq.s32.totalorder %s22, 1
    %p187 = por %p185, %p186
    %p188 = scmp.ne.s32.totalorder %s179, %s180
    %p189 = scmp.eq.s32.totalorder %s22, 0
    %p190 = por %p188, %p189
    %p191 = scmp.ne.s32.totalorder %s179, %s180
    %p192 = scmp.eq.s32.totalorder %s23, 1
    %p193 = por %p191, %p192
    %p195 = scmp.ne.s32.totalorder %s180, %s194
    %p196 = scmp.eq.s32.totalorder %s23, 0
    %p197 = por %p195, %p196
    %s199 = sadd.s32 %s198, 1
    %p202 = scmp.eq.s32.totalorder %s17, 1
    %p203 = scmp.ne.s32.totalorder %s198, %s200
    %p204 = scmp.eq.s32.totalorder %s17, 0
    %p205 = por %p203, %p204
    %p206 = scmp.ne.s32.totalorder %s198, %s200
    %p207 = scmp.eq.s32.totalorder %s22, 1
    %p208 = por %p206, %p207
    %p209 = scmp.ne.s32.totalorder %s200, %s201
    %p210 = scmp.eq.s32.totalorder %s22, 0
    %p211 = por %p209, %p210
    %p212 = scmp.ne.s32.totalorder %s200, %s201
    %p213 = scmp.eq.s32.totalorder %s23, 1
    %p214 = por %p212, %p213
    %p216 = scmp.ne.s32.totalorder %s201, %s215
    %p217 = scmp.eq.s32.totalorder %s23, 0
    %p218 = por %p216, %p217
    %s220 = sadd.s32 %s219, 1
    %p223 = scmp.eq.s32.totalorder %s17, 1
    %p224 = scmp.ne.s32.totalorder %s219, %s221
    %p225 = scmp.eq.s32.totalorder %s17, 0
    %p226 = por %p224, %p225
    %p227 = scmp.ne.s32.totalorder %s219, %s221
    %p228 = scmp.eq.s32.totalorder %s22, 1
    %p229 = por %p227, %p228
    %p230 = scmp.ne.s32.totalorder %s221, %s222
    %p231 = scmp.eq.s32.totalorder %s22, 0
    %p232 = por %p230, %p231
    %p233 = scmp.ne.s32.totalorder %s221, %s222
    %p234 = scmp.eq.s32.totalorder %s23, 1
    %p235 = por %p233, %p234
    %p237 = scmp.ne.s32.totalorder %s222, %s236
    %p238 = scmp.eq.s32.totalorder %s23, 0
    %p239 = por %p237, %p238
    %s241 = sadd.s32 %s240, 1
    %p244 = scmp.eq.s32.totalorder %s17, 1
    %p245 = scmp.ne.s32.totalorder %s240, %s242
    %p246 = scmp.eq.s32.totalorder %s17, 0
    %p247 = por %p245, %p246
    %p248 = scmp.ne.s32.totalorder %s240, %s242
    %p249 = scmp.eq.s32.totalorder %s22, 1
    %p250 = por %p248, %p249
    %p251 = scmp.ne.s32.totalorder %s242, %s243
    %p252 = scmp.eq.s32.totalorder %s22, 0
    %p253 = por %p251, %p252
    %p254 = scmp.ne.s32.totalorder %s242, %s243
    %p255 = scmp.eq.s32.totalorder %s23, 1
    %p256 = por %p254, %p255
    %p258 = scmp.ne.s32.totalorder %s243, %s257
    %p259 = scmp.eq.s32.totalorder %s23, 0
    %p260 = por %p258, %p259
    %s261 = ssub.s32 %s17, %s24
    %p262 = scmp.eq.s32.totalorder %s261, 0
    %s264 = sadd.s32 %s263, 1
    %s265 = scalar_select %p262, %s263, %s264
    %p268 = pneg %p262
    %p269 = scmp.eq.s32.totalorder %s17, 1
    %p270 = por %p268, %p269
    %p271 = scmp.ne.s32.totalorder %s263, %s266
    %p272 = scmp.eq.s32.totalorder %s17, 0
    %p273 = por %p271, %p272
    %p274 = scmp.ne.s32.totalorder %s263, %s266
    %p275 = scmp.eq.s32.totalorder %s22, 1
    %p276 = por %p274, %p275
    %p277 = scmp.ne.s32.totalorder %s266, %s267
    %p278 = scmp.eq.s32.totalorder %s22, 0
    %p279 = por %p277, %p278
    %p280 = scmp.ne.s32.totalorder %s266, %s267
    %p281 = scmp.eq.s32.totalorder %s23, 1
    %p282 = por %p280, %p281
    %p284 = scmp.ne.s32.totalorder %s267, %s283
    %p285 = scmp.eq.s32.totalorder %s23, 0
    %p286 = por %p284, %p285
    %p287 = scmp.le.s32.totalorder 1, %s17
    %p288 = scmp.lt.s32.totalorder %s17, 3
    %p289 = pnand %p287, %p288
    %p290 = pneg %p289
    // Predicated region
    $region9: #{_rnet_impl.1} parent=5 // pred_check
      _
    $region10: #{_rnet_impl.1} parent=5 // pred_check_branch
      %292 = sbr.rel (%p289) target = $region12
    $region11: #{_rnet_impl.1} parent=5 // pred_region
      %s293 = ssub.s32 %s17, 1
      // Predicated region
      $region13: #{_rnet_impl.1} parent=11 // pred_check
        %p294 = pneg %p64
      $region14: #{_rnet_impl.1} parent=11 // pred_check_branch
        %296 = sbr.rel (%p294) target = $region16
      $region15: #{_rnet_impl.1} parent=11 // pred_region
        _
      $region16: #{_rnet_impl.1} parent=11 // pred_fallthru
        _
      // Predicated region
      $region17: #{_rnet_impl.1} parent=11 // pred_check
        %p297 = pneg %p85
      $region18: #{_rnet_impl.1} parent=11 // pred_check_branch
        %299 = sbr.rel (%p297) target = $region20
      $region19: #{_rnet_impl.1} parent=11 // pred_region
        _
      $region20: #{_rnet_impl.1} parent=11 // pred_fallthru
        _
      // Predicated region
      $region21: #{_rnet_impl.1} parent=11 // pred_check
        %p300 = pneg %p106
      $region22: #{_rnet_impl.1} parent=11 // pred_check_branch
        %302 = sbr.rel (%p300) target = $region24
      $region23: #{_rnet_impl.1} parent=11 // pred_region
        _
      $region24: #{_rnet_impl.1} parent=11 // pred_fallthru
        _
      // Predicated region
      $region25: #{_rnet_impl.1} parent=11 // pred_check
        %p303 = pneg %p127
      $region26: #{_rnet_impl.1} parent=11 // pred_check_branch
        %305 = sbr.rel (%p303) target = $region28
      $region27: #{_rnet_impl.1} parent=11 // pred_region
        _
      $region28: #{_rnet_impl.1} parent=11 // pred_fallthru
        _
      // Predicated region
      $region29: #{_rnet_impl.1} parent=11 // pred_check
        %p306 = pneg %p148
      $region30: #{_rnet_impl.1} parent=11 // pred_check_branch
        %308 = sbr.rel (%p306) target = $region32
      $region31: #{_rnet_impl.1} parent=11 // pred_region
        _
      $region32: #{_rnet_impl.1} parent=11 // pred_fallthru
        _
      // Predicated region
      $region33: #{_rnet_impl.1} parent=11 // pred_check
        %p309 = pneg %p169
      $region34: #{_rnet_impl.1} parent=11 // pred_check_branch
        %311 = sbr.rel (%p309) target = $region36
      $region35: #{_rnet_impl.1} parent=11 // pred_region
        _
      $region36: #{_rnet_impl.1} parent=11 // pred_fallthru
        _
      // Predicated region
      $region37: #{_rnet_impl.1} parent=11 // pred_check
        %p312 = pneg %p190
      $region38: #{_rnet_impl.1} parent=11 // pred_check_branch
        %314 = sbr.rel (%p312) target = $region40
      $region39: #{_rnet_impl.1} parent=11 // pred_region
        _
      $region40: #{_rnet_impl.1} parent=11 // pred_fallthru
        _
      // Predicated region
      $region41: #{_rnet_impl.1} parent=11 // pred_check
        %p315 = pneg %p211
      $region42: #{_rnet_impl.1} parent=11 // pred_check_branch
        %317 = sbr.rel (%p315) target = $region44
      $region43: #{_rnet_impl.1} parent=11 // pred_region
        _
      $region44: #{_rnet_impl.1} parent=11 // pred_fallthru
        _
      // Predicated region
      $region45: #{_rnet_impl.1} parent=11 // pred_check
        %p318 = pneg %p232
      $region46: #{_rnet_impl.1} parent=11 // pred_check_branch
        %320 = sbr.rel (%p318) target = $region48
      $region47: #{_rnet_impl.1} parent=11 // pred_region
        _
      $region48: #{_rnet_impl.1} parent=11 // pred_fallthru
        _
      // Predicated region
      $region49: #{_rnet_impl.1} parent=11 // pred_check
        %p321 = pneg %p253
      $region50: #{_rnet_impl.1} parent=11 // pred_check_branch
        %323 = sbr.rel (%p321) target = $region52
      $region51: #{_rnet_impl.1} parent=11 // pred_region
        _
      $region52: #{_rnet_impl.1} parent=11 // pred_fallthru
        _
    $region12: #{_rnet_impl.1} parent=5 // pred_fallthru
      _
    %p324 = scmp.lt.s32.totalorder %s17, 2
    // Predicated region
    $region53: #{_rnet_impl.1} parent=5 // pred_check
      %p325 = pneg %p324
    $region54: #{_rnet_impl.1} parent=5 // pred_check_branch
      %327 = sbr.rel (%p325) target = $region56
    $region55: #{_rnet_impl.1} parent=5 // pred_region
      // Predicated region
      $region57: #{_rnet_impl.1} parent=55 // pred_check
        %p328 = pneg %p37
      $region58: #{_rnet_impl.1} parent=55 // pred_check_branch
        %330 = sbr.rel (%p328) target = $region60
      $region59: #{_rnet_impl.1} parent=55 // pred_region
        %s331 = smul.u32 2, %s17
        %p332 = scmp.lt.s32.totalorder %s331, 3
        %s333 = scalar_select %p332, %s331, 3
        %s334 = smul.addr %s333, 4
        %s335 = scalar_lea.vmem %s0, %s334
        %s336 = smul.u32 2, %s17
      $region60: #{_rnet_impl.1} parent=55 // pred_fallthru
        _
    $region56: #{_rnet_impl.1} parent=5 // pred_fallthru
      _
    %p337 = scmp.le.s32.totalorder 1, %s17
    %p338 = scmp.lt.s32.totalorder %s17, 3
    %p339 = pnand %p337, %p338
    %p340 = pneg %p339
    // Predicated region
    $region61: #{_rnet_impl.1} parent=5 // pred_check
      _
    $region62: #{_rnet_impl.1} parent=5 // pred_check_branch
      %342 = sbr.rel (%p339) target = $region64
    $region63: #{_rnet_impl.1} parent=5 // pred_region
      %s343 = ssub.s32 %s17, 1
      %s344 = smul.u32 2, %s22
      %p345 = scmp.lt.s32.totalorder %s344, 3
      %s346 = scalar_select %p345, %s344, 3
      %s347 = smul.addr %s346, 4
      %s348 = scalar_lea.vmem %s0, %s347
      %p349 = pneg %p43
      %p350 = pneg %p40
      %p351 = pneg %p64
      %p352 = pneg %p61
      %p353 = pneg %p85
      %p354 = pneg %p82
      %p355 = pneg %p106
      %p356 = pneg %p103
      %p357 = pneg %p127
      %p358 = pneg %p124
      %p359 = pneg %p148
      %p360 = pneg %p145
      %p361 = pneg %p169
      %p362 = pneg %p166
      %p363 = pneg %p190
      %p364 = pneg %p187
      %p365 = pneg %p211
      %p366 = pneg %p208
      %p367 = pneg %p232
      %p368 = pneg %p229
      %p369 = pneg %p253
      %p370 = pneg %p250
      %p371 = pneg %p279
      %p372 = pneg %p276
      %s373 = smul.u32 2, %s22
      %p374 = scmp.lt.s32.totalorder %s373, 3
      %s375 = scalar_select %p374, %s373, 3
      %s376 = smul.addr %s375, 4
      %s377 = scalar_lea.vmem %s11, %s376
      %s378 = smul.u32 2, %s22
      %p379 = scmp.lt.s32.totalorder %s378, 3
      %s380 = scalar_select %p379, %s378, 3
      %s381 = smul.addr %s380, 4
      %s382 = scalar_lea.vmem %s0, %s381
      %s383 = smul.u32 2, %s22
      %s384 = smul.u32 2, %s22
      %p385 = scmp.lt.s32.totalorder %s384, 3
      %s386 = scalar_select %p385, %s384, 3
      %s387 = smul.addr %s386, 4
      %s388 = scalar_lea.vmem %s11, %s387
      %s389 = smul.u32 2, %s22
      %v391 = vld [vmem:[%s382] sm:$0xff]
      %v392 = vunpack.c.l.bf16 %v391
      %v393 = vunpack.c.h.bf16 %v391
      %v394 = vld [vmem:[%s4] sm:$0xff]
      %v395 = vld [vmem:[%s4 + $0x8] sm:$0xff]
      %v396 = vld [vmem:[%s4 + $0x10] sm:$0xff]
      %v397 = vld [vmem:[%s4 + $0x18] sm:$0xff]
      %399 = vset.pattern.permute.xlu0 0
      %400 = vperm.xlu0 %399, %v394
      %v401 = vpop.permute.xlu0 %400
      %404 = vset.pattern.permute.xlu0 0
      %405 = vperm.xlu0 %404, %v395
      %v406 = vpop.permute.xlu0 %405
      %409 = vset.pattern.permute.xlu0 0
      %410 = vperm.xlu0 %409, %v396
      %v411 = vpop.permute.xlu0 %410
      %414 = vset.pattern.permute.xlu0 0
      %415 = vperm.xlu0 %414, %v397
      %v416 = vpop.permute.xlu0 %415
      %418 = vrot.lane.b32.xlu0 %v392, 34
      %v419 = vpop.permute.xlu0 %418
      %420 = vrot.lane.b32.xlu0 %v393, 34
      %v421 = vpop.permute.xlu0 %420
      %v422 = vlaneseq
      %v423 = vand.u32 %v422, 127
      %vm424 = vcmp.lt.s32.totalorder %v423, 34
      %v425 = vsel %vm424, %v419, %v421
      %v426 = vsel %vm424, %v421, %v419
      %v427 = vld [vmem:[%s1] ss:$8 sm:$0x3]
      %v429 = vlaneseq
      %v430 = vshrl.u32 %v429, 7
      %v431 = vsub.s32 0, %v430
      %v432 = vrot.slane %v427, %v431
      %v433 = vlaneseq
      %v434 = vshrl.u32 %v433, 7
      %v435 = vsub.s32 1, %v434
      %v436 = vrot.slane %v427, %v435
      %v439 = vmul.f32 %v426, %v432
      %v440 = vmul.f32 %v425, %v436
      %v441 = vld [vmem:[%s3] sm:$0xf]
      %v442 = vld [vmem:[%s3 + $0x4] sm:$0xf]
      %v443 = vld [vmem:[%s3 + $0x8] sm:$0xf]
      %v444 = vld [vmem:[%s3 + $0xc] sm:$0xf]
      %v445 = vpack.c.bf16 %v439, %v439
      %v446 = vpack.c.bf16 %v440, %v440
      %v451 = vunpack.c.l.b16 %v441
      %v452 = vunpack.c.l.b16 %v442
      %v453 = vunpack.c.l.b16 %v443
      %v454 = vunpack.c.l.b16 %v444
      %v455 = vpack.c.b16 %v452, %v451
      %v456 = vpack.c.b16 %v454, %v453
      %vm457 = vcmask 64512
      %v459 = vsel %vm457, %v455, 0
      %v462 = vsel %vm457, %v456, 0
      %vm464 = vcmask 1043456
      %v466 = vsel %vm464, %v445, 0
      %v469 = vsel %vm464, %v446, 0
      %471 = vmatprep.subr.bf16.mxu0 %v469
      %472 = vmatpush1.bf16.msra.mxu0 %v466
      %473 = vmatprep.subr.bf16.mxu0 0
      %474 = vmatpush1.bf16.msra.mxu0 0
      %475 = vmatprep.subr.bf16.mxu0 0
      %476 = vmatpush1.bf16.msra.mxu0 0
      %477 = vmatprep.subr.bf16.mxu0 0
      %478 = vmatpush1.bf16.msra.mxu0 0
      %479 = vmatprep.subr.bf16.mxu0 0
      %480 = vmatpush1.bf16.msra.mxu0 0
      %481 = vmatprep.subr.bf16.mxu0 0
      %482 = vmatpush1.bf16.msra.mxu0 0
      %483 = vmatprep.subr.bf16.mxu0 0
      %484 = vmatpush1.bf16.msra.mxu0 0
      %485 = vmatprep.subr.bf16.mxu0 0
      %486 = vmatpush1.bf16.msra.mxu0 0
      %487 = vmatprep.subr.bf16.mxu0 0
      %488 = vmatpush1.bf16.msra.mxu0 0
      %489 = vmatprep.subr.bf16.mxu0 0
      %490 = vmatpush1.bf16.msra.mxu0 0
      %491 = vmatprep.subr.bf16.mxu0 0
      %492 = vmatpush1.bf16.msra.mxu0 0
      %493 = vmatprep.subr.bf16.mxu0 0
      %494 = vmatpush1.bf16.msra.mxu0 0
      %495 = vmatprep.subr.bf16.mxu0 0
      %496 = vmatpush1.bf16.msra.mxu0 0
      %497 = vmatprep.subr.bf16.mxu0 0
      %498 = vmatpush1.bf16.msra.mxu0 0
      %499 = vmatprep.subr.bf16.mxu0 0
      %500 = vmatpush1.bf16.msra.mxu0 0
      %501 = vmatprep.subr.bf16.mxu0 0
      %502 = vmatpush1.bf16.msra.mxu0 0
      %503 = vmatprep.mubr.bf16.mxu0 0
      %504 = vmatmul.mubr.bf16.gmra.mrb[0].mxu0 %v459
      %v505 = vpop.f32.mrb[0].mxu0
      %v506 = vadd.f32 0.0, %v505
      %v507 = vpop.f32.mrb[0].mxu0
      %v508 = vadd.f32 0.0, %v507
      %v509 = vpop.f32.mrb[0].mxu0
      %v510 = vadd.f32 0.0, %v509
      %v511 = vpop.f32.mrb[0].mxu0
      %v512 = vadd.f32 0.0, %v511
      %513 = vmatprep.mubr.bf16.mxu0 0
      %514 = vmatmul.mubr.bf16.gmra.mrb[0].mxu0 %v462
      %v515 = vpop.f32.mrb[0].mxu0
      %v516 = vadd.f32 0.0, %v515
      %v517 = vpop.f32.mrb[0].mxu0
      %v518 = vadd.f32 0.0, %v517
      %v519 = vpop.f32.mrb[0].mxu0
      %v520 = vadd.f32 0.0, %v519
      %v521 = vpop.f32.mrb[0].mxu0
      %v522 = vadd.f32 0.0, %v521
      %523 = vdwg.mxu0
      %v524 = vadd.f32 %v401, %v506
      %v525 = vadd.f32 %v401, %v508
      %v526 = vadd.f32 %v406, %v510
      %v527 = vadd.f32 %v406, %v512
      %v528 = vadd.f32 %v411, %v516
      %v529 = vadd.f32 %v411, %v518
      %v530 = vadd.f32 %v416, %v520
      %v531 = vadd.f32 %v416, %v522
      %532 = vrot.lane.b32.xlu0 %v392, 33
      %v533 = vpop.permute.xlu0 %532
      %534 = vrot.lane.b32.xlu0 %v393, 33
      %v535 = vpop.permute.xlu0 %534
      %vm536 = vcmp.lt.s32.totalorder %v423, 33
      %v537 = vsel %vm536, %v533, %v535
      %v538 = vsel %vm536, %v535, %v533
      %s539 = scalar_lea.vmem %s1, 1
      %v540 = vld [vmem:[%s539] ss:$8 sm:$0x3]
      %v542 = vlaneseq
      %v543 = vshrl.u32 %v542, 7
      %v544 = vsub.s32 0, %v543
      %v545 = vrot.slane %v540, %v544
      %v546 = vlaneseq
      %v547 = vshrl.u32 %v546, 7
      %v548 = vsub.s32 1, %v547
      %v549 = vrot.slane %v540, %v548
      %v552 = vmul.f32 %v538, %v545
      %v553 = vmul.f32 %v537, %v549
      %s554 = scalar_lea.vmem %s3, 16
      %v555 = vld [vmem:[%s554] sm:$0xf]
      %v556 = vld [vmem:[%s554 + $0x4] sm:$0xf]
      %v557 = vld [vmem:[%s554 + $0x8] sm:$0xf]
      %v558 = vld [vmem:[%s554 + $0xc] sm:$0xf]
      %v559 = vpack.c.bf16 %v552, %v552
      %v560 = vpack.c.bf16 %v553, %v553
      %v565 = vunpack.c.l.b16 %v555
      %v566 = vunpack.c.l.b16 %v556
      %v567 = vunpack.c.l.b16 %v557
      %v568 = vunpack.c.l.b16 %v558
      %v569 = vpack.c.b16 %v566, %v565
      %v570 = vpack.c.b16 %v568, %v567
      %v572 = vsel %vm457, %v569, 0
      %v575 = vsel %vm457, %v570, 0
      %v578 = vsel %vm464, %v559, 0
      %v581 = vsel %vm464, %v560, 0
      %583 = vmatprep.subr.bf16.mxu0 %v581
      %584 = vmatpush1.bf16.msra.mxu0 %v578
      %585 = vmatprep.subr.bf16.mxu0 0
      %586 = vmatpush1.bf16.msra.mxu0 0
      %587 = vmatprep.subr.bf16.mxu0 0
      %588 = vmatpush1.bf16.msra.mxu0 0
      %589 = vmatprep.subr.bf16.mxu0 0
      %590 = vmatpush1.bf16.msra.mxu0 0
      %591 = vmatprep.subr.bf16.mxu0 0
      %592 = vmatpush1.bf16.msra.mxu0 0
      %593 = vmatprep.subr.bf16.mxu0 0
      %594 = vmatpush1.bf16.msra.mxu0 0
      %595 = vmatprep.subr.bf16.mxu0 0
      %596 = vmatpush1.bf16.msra.mxu0 0
      %597 = vmatprep.subr.bf16.mxu0 0
      %598 = vmatpush1.bf16.msra.mxu0 0
      %599 = vmatprep.subr.bf16.mxu0 0
      %600 = vmatpush1.bf16.msra.mxu0 0
      %601 = vmatprep.subr.bf16.mxu0 0
      %602 = vmatpush1.bf16.msra.mxu0 0
      %603 = vmatprep.subr.bf16.mxu0 0
      %604 = vmatpush1.bf16.msra.mxu0 0
      %605 = vmatprep.subr.bf16.mxu0 0
      %606 = vmatpush1.bf16.msra.mxu0 0
      %607 = vmatprep.subr.bf16.mxu0 0
      %608 = vmatpush1.bf16.msra.mxu0 0
      %609 = vmatprep.subr.bf16.mxu0 0
      %610 = vmatpush1.bf16.msra.mxu0 0
      %611 = vmatprep.subr.bf16.mxu0 0
      %612 = vmatpush1.bf16.msra.mxu0 0
      %613 = vmatprep.subr.bf16.mxu0 0
      %614 = vmatpush1.bf16.msra.mxu0 0
      %615 = vmatprep.mubr.bf16.mxu0 0
      %616 = vmatmul.mubr.bf16.gmra.mrb[0].mxu0 %v572
      %v617 = vpop.f32.mrb[0].mxu0
      %v618 = vadd.f32 0.0, %v617
      %v619 = vpop.f32.mrb[0].mxu0
      %v620 = vadd.f32 0.0, %v619
      %v621 = vpop.f32.mrb[0].mxu0
      %v622 = vadd.f32 0.0, %v621
      %v623 = vpop.f32.mrb[0].mxu0
      %v624 = vadd.f32 0.0, %v623
      %625 = vmatprep.mubr.bf16.mxu0 0
      %626 = vmatmul.mubr.bf16.gmra.mrb[0].mxu0 %v575
      %v627 = vpop.f32.mrb[0].mxu0
      %v628 = vadd.f32 0.0, %v627
      %v629 = vpop.f32.mrb[0].mxu0
      %v630 = vadd.f32 0.0, %v629
      %v631 = vpop.f32.mrb[0].mxu0
      %v632 = vadd.f32 0.0, %v631
      %v633 = vpop.f32.mrb[0].mxu0
      %v634 = vadd.f32 0.0, %v633
      %635 = vdwg.mxu0
      %v636 = vadd.f32 %v524, %v618
      %v637 = vadd.f32 %v525, %v620
      %v638 = vadd.f32 %v526, %v622
      %v639 = vadd.f32 %v527, %v624
      %v640 = vadd.f32 %v528, %v628
      %v641 = vadd.f32 %v529, %v630
      %v642 = vadd.f32 %v530, %v632
      %v643 = vadd.f32 %v531, %v634
      %644 = vrot.lane.b32.xlu0 %v392, 32
      %v645 = vpop.permute.xlu0 %644
      %646 = vrot.lane.b32.xlu0 %v393, 32
      %v647 = vpop.permute.xlu0 %646
      %vm648 = vcmp.lt.s32.totalorder %v423, 32
      %v649 = vsel %vm648, %v645, %v647
      %v650 = vsel %vm648, %v647, %v645
      %s651 = scalar_lea.vmem %s1, 2
      %v652 = vld [vmem:[%s651] ss:$8 sm:$0x3]
      %v654 = vlaneseq
      %v655 = vshrl.u32 %v654, 7
      %v656 = vsub.s32 0, %v655
      %v657 = vrot.slane %v652, %v656
      %v658 = vlaneseq
      %v659 = vshrl.u32 %v658, 7
      %v660 = vsub.s32 1, %v659
      %v661 = vrot.slane %v652, %v660
      %v664 = vmul.f32 %v650, %v657
      %v665 = vmul.f32 %v649, %v661
      %s666 = scalar_lea.vmem %s3, 32
      %v667 = vld [vmem:[%s666] sm:$0xf]
      %v668 = vld [vmem:[%s666 + $0x4] sm:$0xf]
      %v669 = vld [vmem:[%s666 + $0x8] sm:$0xf]
      %v670 = vld [vmem:[%s666 + $0xc] sm:$0xf]
      %v671 = vpack.c.bf16 %v664, %v664
      %v672 = vpack.c.bf16 %v665, %v665
      %v677 = vunpack.c.l.b16 %v667
      %v678 = vunpack.c.l.b16 %v668
      %v679 = vunpack.c.l.b16 %v669
      %v680 = vunpack.c.l.b16 %v670
      %v681 = vpack.c.b16 %v678, %v677
      %v682 = vpack.c.b16 %v680, %v679
      %v684 = vsel %vm457, %v681, 0
      %v687 = vsel %vm457, %v682, 0
      %v690 = vsel %vm464, %v671, 0
      %v693 = vsel %vm464, %v672, 0
      %695 = vmatprep.subr.bf16.mxu0 %v693
      %696 = vmatpush1.bf16.msra.mxu0 %v690
      %697 = vmatprep.subr.bf16.mxu0 0
      %698 = vmatpush1.bf16.msra.mxu0 0
      %699 = vmatprep.subr.bf16.mxu0 0
      %700 = vmatpush1.bf16.msra.mxu0 0
      %701 = vmatprep.subr.bf16.mxu0 0
      %702 = vmatpush1.bf16.msra.mxu0 0
      %703 = vmatprep.subr.bf16.mxu0 0
      %704 = vmatpush1.bf16.msra.mxu0 0
      %705 = vmatprep.subr.bf16.mxu0 0
      %706 = vmatpush1.bf16.msra.mxu0 0
      %707 = vmatprep.subr.bf16.mxu0 0
      %708 = vmatpush1.bf16.msra.mxu0 0
      %709 = vmatprep.subr.bf16.mxu0 0
      %710 = vmatpush1.bf16.msra.mxu0 0
      %711 = vmatprep.subr.bf16.mxu0 0
      %712 = vmatpush1.bf16.msra.mxu0 0
      %713 = vmatprep.subr.bf16.mxu0 0
      %714 = vmatpush1.bf16.msra.mxu0 0
      %715 = vmatprep.subr.bf16.mxu0 0
      %716 = vmatpush1.bf16.msra.mxu0 0
      %717 = vmatprep.subr.bf16.mxu0 0
      %718 = vmatpush1.bf16.msra.mxu0 0
      %719 = vmatprep.subr.bf16.mxu0 0
      %720 = vmatpush1.bf16.msra.mxu0 0
      %721 = vmatprep.subr.bf16.mxu0 0
      %722 = vmatpush1.bf16.msra.mxu0 0
      %723 = vmatprep.subr.bf16.mxu0 0
      %724 = vmatpush1.bf16.msra.mxu0 0
      %725 = vmatprep.subr.bf16.mxu0 0
      %726 = vmatpush1.bf16.msra.mxu0 0
      %727 = vmatprep.mubr.bf16.mxu0 0
      %728 = vmatmul.mubr.bf16.gmra.mrb[0].mxu0 %v684
      %v729 = vpop.f32.mrb[0].mxu0
      %v730 = vadd.f32 0.0, %v729
      %v731 = vpop.f32.mrb[0].mxu0
      %v732 = vadd.f32 0.0, %v731
      %v733 = vpop.f32.mrb[0].mxu0
      %v734 = vadd.f32 0.0, %v733
      %v735 = vpop.f32.mrb[0].mxu0
      %v736 = vadd.f32 0.0, %v735
      %737 = vmatprep.mubr.bf16.mxu0 0
      %738 = vmatmul.mubr.bf16.gmra.mrb[0].mxu0 %v687
      %v739 = vpop.f32.mrb[0].mxu0
      %v740 = vadd.f32 0.0, %v739
      %v741 = vpop.f32.mrb[0].mxu0
      %v742 = vadd.f32 0.0, %v741
      %v743 = vpop.f32.mrb[0].mxu0
      %v744 = vadd.f32 0.0, %v743
      %v745 = vpop.f32.mrb[0].mxu0
      %v746 = vadd.f32 0.0, %v745
      %747 = vdwg.mxu0
      %v748 = vadd.f32 %v636, %v730
      %v749 = vadd.f32 %v637, %v732
      %v750 = vadd.f32 %v638, %v734
      %v751 = vadd.f32 %v639, %v736
      %v752 = vadd.f32 %v640, %v740
      %v753 = vadd.f32 %v641, %v742
      %v754 = vadd.f32 %v642, %v744
      %v755 = vadd.f32 %v643, %v746
      %756 = vrot.lane.b32.xlu0 %v392, 31
      %v757 = vpop.permute.xlu0 %756
      %758 = vrot.lane.b32.xlu0 %v393, 31
      %v759 = vpop.permute.xlu0 %758
      %vm760 = vcmp.lt.s32.totalorder %v423, 31
      %v761 = vsel %vm760, %v757, %v759
      %v762 = vsel %vm760, %v759, %v757
      %s763 = scalar_lea.vmem %s1, 3
      %v764 = vld [vmem:[%s763] ss:$8 sm:$0x3]
      %v766 = vlaneseq
      %v767 = vshrl.u32 %v766, 7
      %v768 = vsub.s32 0, %v767
      %v769 = vrot.slane %v764, %v768
      %v770 = vlaneseq
      %v771 = vshrl.u32 %v770, 7
      %v772 = vsub.s32 1, %v771
      %v773 = vrot.slane %v764, %v772
      %v776 = vmul.f32 %v762, %v769
      %v777 = vmul.f32 %v761, %v773
      %s778 = scalar_lea.vmem %s3, 48
      %v779 = vld [vmem:[%s778] sm:$0xf]
      %v780 = vld [vmem:[%s778 + $0x4] sm:$0xf]
      %v781 = vld [vmem:[%s778 + $0x8] sm:$0xf]
      %v782 = vld [vmem:[%s778 + $0xc] sm:$0xf]
      %v783 = vpack.c.bf16 %v776, %v776
      %v784 = vpack.c.bf16 %v777, %v777
      %v789 = vunpack.c.l.b16 %v779
      %v790 = vunpack.c.l.b16 %v780
      %v791 = vunpack.c.l.b16 %v781
      %v792 = vunpack.c.l.b16 %v782
      %v793 = vpack.c.b16 %v790, %v789
      %v794 = vpack.c.b16 %v792, %v791
      %v796 = vsel %vm457, %v793, 0
      %v799 = vsel %vm457, %v794, 0
      %v802 = vsel %vm464, %v783, 0
      %v805 = vsel %vm464, %v784, 0
      %807 = vmatprep.subr.bf16.mxu0 %v805
      %808 = vmatpush1.bf16.msra.mxu0 %v802
      %809 = vmatprep.subr.bf16.mxu0 0
      %810 = vmatpush1.bf16.msra.mxu0 0
      %811 = vmatprep.subr.bf16.mxu0 0
      %812 = vmatpush1.bf16.msra.mxu0 0
      %813 = vmatprep.subr.bf16.mxu0 0
      %814 = vmatpush1.bf16.msra.mxu0 0
      %815 = vmatprep.subr.bf16.mxu0 0
      %816 = vmatpush1.bf16.msra.mxu0 0
      %817 = vmatprep.subr.bf16.mxu0 0
      %818 = vmatpush1.bf16.msra.mxu0 0
      %819 = vmatprep.subr.bf16.mxu0 0
      %820 = vmatpush1.bf16.msra.mxu0 0
      %821 = vmatprep.subr.bf16.mxu0 0
      %822 = vmatpush1.bf16.msra.mxu0 0
      %823 = vmatprep.subr.bf16.mxu0 0
      %824 = vmatpush1.bf16.msra.mxu0 0
      %825 = vmatprep.subr.bf16.mxu0 0
      %826 = vmatpush1.bf16.msra.mxu0 0
      %827 = vmatprep.subr.bf16.mxu0 0
      %828 = vmatpush1.bf16.msra.mxu0 0
      %829 = vmatprep.subr.bf16.mxu0 0
      %830 = vmatpush1.bf16.msra.mxu0 0
      %831 = vmatprep.subr.bf16.mxu0 0
      %832 = vmatpush1.bf16.msra.mxu0 0
      %833 = vmatprep.subr.bf16.mxu0 0
      %834 = vmatpush1.bf16.msra.mxu0 0
      %835 = vmatprep.subr.bf16.mxu0 0
      %836 = vmatpush1.bf16.msra.mxu0 0
      %837 = vmatprep.subr.bf16.mxu0 0
      %838 = vmatpush1.bf16.msra.mxu0 0
      %839 = vmatprep.mubr.bf16.mxu0 0
      %840 = vmatmul.mubr.bf16.gmra.mrb[0].mxu0 %v796
      %v841 = vpop.f32.mrb[0].mxu0
      %v842 = vadd.f32 0.0, %v841
      %v843 = vpop.f32.mrb[0].mxu0
      %v844 = vadd.f32 0.0, %v843
      %v845 = vpop.f32.mrb[0].mxu0
      %v846 = vadd.f32 0.0, %v845
      %v847 = vpop.f32.mrb[0].mxu0
      %v848 = vadd.f32 0.0, %v847
      %849 = vmatprep.mubr.bf16.mxu0 0
      %850 = vmatmul.mubr.bf16.gmra.mrb[0].mxu0 %v799
      %v851 = vpop.f32.mrb[0].mxu0
      %v852 = vadd.f32 0.0, %v851
      %v853 = vpop.f32.mrb[0].mxu0
      %v854 = vadd.f32 0.0, %v853
      %v855 = vpop.f32.mrb[0].mxu0
      %v856 = vadd.f32 0.0, %v855
      %v857 = vpop.f32.mrb[0].mxu0
      %v858 = vadd.f32 0.0, %v857
      %859 = vdwg.mxu0
      %v860 = vadd.f32 %v748, %v842
      %v861 = vadd.f32 %v749, %v844
      %v862 = vadd.f32 %v750, %v846
      %v863 = vadd.f32 %v751, %v848
      %v864 = vadd.f32 %v752, %v852
      %v865 = vadd.f32 %v753, %v854
      %v866 = vadd.f32 %v754, %v856
      %v867 = vadd.f32 %v755, %v858
      %868 = vrot.lane.b32.xlu0 %v392, 30
      %v869 = vpop.permute.xlu0 %868
      %870 = vrot.lane.b32.xlu0 %v393, 30
      %v871 = vpop.permute.xlu0 %870
      %vm872 = vcmp.lt.s32.totalorder %v423, 30
      %v873 = vsel %vm872, %v869, %v871
      %v874 = vsel %vm872, %v871, %v869
      %s875 = scalar_lea.vmem %s1, 4
      %v876 = vld [vmem:[%s875] ss:$8 sm:$0x3]
      %v878 = vlaneseq
      %v879 = vshrl.u32 %v878, 7
      %v880 = vsub.s32 0, %v879
      %v881 = vrot.slane %v876, %v880
      %v882 = vlaneseq
      %v883 = vshrl.u32 %v882, 7
      %v884 = vsub.s32 1, %v883
      %v885 = vrot.slane %v876, %v884
      %v888 = vmul.f32 %v874, %v881
      %v889 = vmul.f32 %v873, %v885
      %s890 = scalar_lea.vmem %s3, 64
      %v891 = vld [vmem:[%s890] sm:$0xf]
      %v892 = vld [vmem:[%s890 + $0x4] sm:$0xf]
      %v893 = vld [vmem:[%s890 + $0x8] sm:$0xf]
      %v894 = vld [vmem:[%s890 + $0xc] sm:$0xf]
      %v895 = vpack.c.bf16 %v888, %v888
      %v896 = vpack.c.bf16 %v889, %v889
      %v901 = vunpack.c.l.b16 %v891
      %v902 = vunpack.c.l.b16 %v892
      %v903 = vunpack.c.l.b16 %v893
      %v904 = vunpack.c.l.b16 %v894
      %v905 = vpack.c.b16 %v902, %v901
      %v906 = vpack.c.b16 %v904, %v903
      %v908 = vsel %vm457, %v905, 0
      %v911 = vsel %vm457, %v906, 0
      %v914 = vsel %vm464, %v895, 0
      %v917 = vsel %vm464, %v896, 0
      %919 = vmatprep.subr.bf16.mxu0 %v917
      %920 = vmatpush1.bf16.msra.mxu0 %v914
      %921 = vmatprep.subr.bf16.mxu0 0
      %922 = vmatpush1.bf16.msra.mxu0 0
      %923 = vmatprep.subr.bf16.mxu0 0
      %924 = vmatpush1.bf16.msra.mxu0 0
      %925 = vmatprep.subr.bf16.mxu0 0
      %926 = vmatpush1.bf16.msra.mxu0 0
      %927 = vmatprep.subr.bf16.mxu0 0
      %928 = vmatpush1.bf16.msra.mxu0 0
      %929 = vmatprep.subr.bf16.mxu0 0
      %930 = vmatpush1.bf16.msra.mxu0 0
      %931 = vmatprep.subr.bf16.mxu0 0
      %932 = vmatpush1.bf16.msra.mxu0 0
      %933 = vmatprep.subr.bf16.mxu0 0
      %934 = vmatpush1.bf16.msra.mxu0 0
      %935 = vmatprep.subr.bf16.mxu0 0
      %936 = vmatpush1.bf16.msra.mxu0 0
      %937 = vmatprep.subr.bf16.mxu0 0
      %938 = vmatpush1.bf16.msra.mxu0 0
      %939 = vmatprep.subr.bf16.mxu0 0
      %940 = vmatpush1.bf16.msra.mxu0 0
      %941 = vmatprep.subr.bf16.mxu0 0
      %942 = vmatpush1.bf16.msra.mxu0 0
      %943 = vmatprep.subr.bf16.mxu0 0
      %944 = vmatpush1.bf16.msra.mxu0 0
      %945 = vmatprep.subr.bf16.mxu0 0
      %946 = vmatpush1.bf16.msra.mxu0 0
      %947 = vmatprep.subr.bf16.mxu0 0
      %948 = vmatpush1.bf16.msra.mxu0 0
      %949 = vmatprep.subr.bf16.mxu0 0
      %950 = vmatpush1.bf16.msra.mxu0 0
      %951 = vmatprep.mubr.bf16.mxu0 0
      %952 = vmatmul.mubr.bf16.gmra.mrb[0].mxu0 %v908
      %v953 = vpop.f32.mrb[0].mxu0
      %v954 = vadd.f32 0.0, %v953
      %v955 = vpop.f32.mrb[0].mxu0
      %v956 = vadd.f32 0.0, %v955
      %v957 = vpop.f32.mrb[0].mxu0
      %v958 = vadd.f32 0.0, %v957
      %v959 = vpop.f32.mrb[0].mxu0
      %v960 = vadd.f32 0.0, %v959
      %961 = vmatprep.mubr.bf16.mxu0 0
      %962 = vmatmul.mubr.bf16.gmra.mrb[0].mxu0 %v911
      %v963 = vpop.f32.mrb[0].mxu0
      %v964 = vadd.f32 0.0, %v963
      %v965 = vpop.f32.mrb[0].mxu0
      %v966 = vadd.f32 0.0, %v965
      %v967 = vpop.f32.mrb[0].mxu0
      %v968 = vadd.f32 0.0, %v967
      %v969 = vpop.f32.mrb[0].mxu0
      %v970 = vadd.f32 0.0, %v969
      %971 = vdwg.mxu0
      %v972 = vadd.f32 %v860, %v954
      %v973 = vadd.f32 %v861, %v956
      %v974 = vadd.f32 %v862, %v958
      %v975 = vadd.f32 %v863, %v960
      %v976 = vadd.f32 %v864, %v964
      %v977 = vadd.f32 %v865, %v966
      %v978 = vadd.f32 %v866, %v968
      %v979 = vadd.f32 %v867, %v970
      %980 = vrot.lane.b32.xlu0 %v392, 18
      %v981 = vpop.permute.xlu0 %980
      %982 = vrot.lane.b32.xlu0 %v393, 18
      %v983 = vpop.permute.xlu0 %982
      %vm984 = vcmp.lt.s32.totalorder %v423, 18
      %v985 = vsel %vm984, %v981, %v983
      %v986 = vsel %vm984, %v983, %v981
      %s987 = scalar_lea.vmem %s1, 5
      %v988 = vld [vmem:[%s987] ss:$8 sm:$0x3]
      %v990 = vlaneseq
      %v991 = vshrl.u32 %v990, 7
      %v992 = vsub.s32 0, %v991
      %v993 = vrot.slane %v988, %v992
      %v994 = vlaneseq
      %v995 = vshrl.u32 %v994, 7
      %v996 = vsub.s32 1, %v995
      %v997 = vrot.slane %v988, %v996
      %v1000 = vmul.f32 %v986, %v993
      %v1001 = vmul.f32 %v985, %v997
      %s1002 = scalar_lea.vmem %s3, 80
      %v1003 = vld [vmem:[%s1002] sm:$0xf]
      %v1004 = vld [vmem:[%s1002 + $0x4] sm:$0xf]
      %v1005 = vld [vmem:[%s1002 + $0x8] sm:$0xf]
      %v1006 = vld [vmem:[%s1002 + $0xc] sm:$0xf]
      %v1007 = vpack.c.bf16 %v1000, %v1000
      %v1008 = vpack.c.bf16 %v1001, %v1001
      %v1013 = vunpack.c.l.b16 %v1003
      %v1014 = vunpack.c.l.b16 %v1004
      %v1015 = vunpack.c.l.b16 %v1005
      %v1016 = vunpack.c.l.b16 %v1006
      %v1017 = vpack.c.b16 %v1014, %v1013
      %v1018 = vpack.c.b16 %v1016, %v1015
      %v1020 = vsel %vm457, %v1017, 0
      %v1023 = vsel %vm457, %v1018, 0
      %v1026 = vsel %vm464, %v1007, 0
      %v1029 = vsel %vm464, %v1008, 0
      %1031 = vmatprep.subr.bf16.mxu0 %v1029
      %1032 = vmatpush1.bf16.msra.mxu0 %v1026
      %1033 = vmatprep.subr.bf16.mxu0 0
      %1034 = vmatpush1.bf16.msra.mxu0 0
      %1035 = vmatprep.subr.bf16.mxu0 0
      %1036 = vmatpush1.bf16.msra.mxu0 0
      %1037 = vmatprep.subr.bf16.mxu0 0
      %1038 = vmatpush1.bf16.msra.mxu0 0
      %1039 = vmatprep.subr.bf16.mxu0 0
      %1040 = vmatpush1.bf16.msra.mxu0 0
      %1041 = vmatprep.subr.bf16.mxu0 0
      %1042 = vmatpush1.bf16.msra.mxu0 0
      %1043 = vmatprep.subr.bf16.mxu0 0
      %1044 = vmatpush1.bf16.msra.mxu0 0
      %1045 = vmatprep.subr.bf16.mxu0 0
      %1046 = vmatpush1.bf16.msra.mxu0 0
      %1047 = vmatprep.subr.bf16.mxu0 0
      %1048 = vmatpush1.bf16.msra.mxu0 0
      %1049 = vmatprep.subr.bf16.mxu0 0
      %1050 = vmatpush1.bf16.msra.mxu0 0
      %1051 = vmatprep.subr.bf16.mxu0 0
      %1052 = vmatpush1.bf16.msra.mxu0 0
      %1053 = vmatprep.subr.bf16.mxu0 0
      %1054 = vmatpush1.bf16.msra.mxu0 0
      %1055 = vmatprep.subr.bf16.mxu0 0
      %1056 = vmatpush1.bf16.msra.mxu0 0
      %1057 = vmatprep.subr.bf16.mxu0 0
      %1058 = vmatpush1.bf16.msra.mxu0 0
      %1059 = vmatprep.subr.bf16.mxu0 0
      %1060 = vmatpush1.bf16.msra.mxu0 0
      %1061 = vmatprep.subr.bf16.mxu0 0
      %1062 = vmatpush1.bf16.msra.mxu0 0
      %1063 = vmatprep.mubr.bf16.mxu0 0
      %1064 = vmatmul.mubr.bf16.gmra.mrb[0].mxu0 %v1020
      %v1065 = vpop.f32.mrb[0].mxu0
      %v1066 = vadd.f32 0.0, %v1065
      %v1067 = vpop.f32.mrb[0].mxu0
      %v1068 = vadd.f32 0.0, %v1067
      %v1069 = vpop.f32.mrb[0].mxu0
      %v1070 = vadd.f32 0.0, %v1069
      %v1071 = vpop.f32.mrb[0].mxu0
      %v1072 = vadd.f32 0.0, %v1071
      %1073 = vmatprep.mubr.bf16.mxu0 0
      %1074 = vmatmul.mubr.bf16.gmra.mrb[0].mxu0 %v1023
      %v1075 = vpop.f32.mrb[0].mxu0
      %v1076 = vadd.f32 0.0, %v1075
      %v1077 = vpop.f32.mrb[0].mxu0
      %v1078 = vadd.f32 0.0, %v1077
      %v1079 = vpop.f32.mrb[0].mxu0
      %v1080 = vadd.f32 0.0, %v1079
      %v1081 = vpop.f32.mrb[0].mxu0
      %v1082 = vadd.f32 0.0, %v1081
      %1083 = vdwg.mxu0
      %v1084 = vadd.f32 %v972, %v1066
      %v1085 = vadd.f32 %v973, %v1068
      %v1086 = vadd.f32 %v974, %v1070
      %v1087 = vadd.f32 %v975, %v1072
      %v1088 = vadd.f32 %v976, %v1076
      %v1089 = vadd.f32 %v977, %v1078
      %v1090 = vadd.f32 %v978, %v1080
      %v1091 = vadd.f32 %v979, %v1082
      %1092 = vrot.lane.b32.xlu0 %v392, 17
      %v1093 = vpop.permute.xlu0 %1092
      %1094 = vrot.lane.b32.xlu0 %v393, 17
      %v1095 = vpop.permute.xlu0 %1094
      %vm1096 = vcmp.lt.s32.totalorder %v423, 17
      %v1097 = vsel %vm1096, %v1093, %v1095
      %v1098 = vsel %vm1096, %v1095, %v1093
      %s1099 = scalar_lea.vmem %s1, 6
      %v1100 = vld [vmem:[%s1099] ss:$8 sm:$0x3]
      %v1102 = vlaneseq
      %v1103 = vshrl.u32 %v1102, 7
      %v1104 = vsub.s32 0, %v1103
      %v1105 = vrot.slane %v1100, %v1104
      %v1106 = vlaneseq
      %v1107 = vshrl.u32 %v1106, 7
      %v1108 = vsub.s32 1, %v1107
      %v1109 = vrot.slane %v1100, %v1108
      %v1112 = vmul.f32 %v1098, %v1105
      %v1113 = vmul.f32 %v1097, %v1109
      %s1114 = scalar_lea.vmem %s3, 96
      %v1115 = vld [vmem:[%s1114] sm:$0xf]
      %v1116 = vld [vmem:[%s1114 + $0x4] sm:$0xf]
      %v1117 = vld [vmem:[%s1114 + $0x8] sm:$0xf]
      %v1118 = vld [vmem:[%s1114 + $0xc] sm:$0xf]
      %v1119 = vpack.c.bf16 %v1112, %v1112
      %v1120 = vpack.c.bf16 %v1113, %v1113
      %v1125 = vunpack.c.l.b16 %v1115
      %v1126 = vunpack.c.l.b16 %v1116
      %v1127 = vunpack.c.l.b16 %v1117
      %v1128 = vunpack.c.l.b16 %v1118
      %v1129 = vpack.c.b16 %v1126, %v1125
      %v1130 = vpack.c.b16 %v1128, %v1127
      %v1132 = vsel %vm457, %v1129, 0
      %v1135 = vsel %vm457, %v1130, 0
      %v1138 = vsel %vm464, %v1119, 0
      %v1141 = vsel %vm464, %v1120, 0
      %1143 = vmatprep.subr.bf16.mxu0 %v1141
      %1144 = vmatpush1.bf16.msra.mxu0 %v1138
      %1145 = vmatprep.subr.bf16.mxu0 0
      %1146 = vmatpush1.bf16.msra.mxu0 0
      %1147 = vmatprep.subr.bf16.mxu0 0
      %1148 = vmatpush1.bf16.msra.mxu0 0
      %1149 = vmatprep.subr.bf16.mxu0 0
      %1150 = vmatpush1.bf16.msra.mxu0 0
      %1151 = vmatprep.subr.bf16.mxu0 0
      %1152 = vmatpush1.bf16.msra.mxu0 0
      %1153 = vmatprep.subr.bf16.mxu0 0
      %1154 = vmatpush1.bf16.msra.mxu0 0
      %1155 = vmatprep.subr.bf16.mxu0 0
      %1156 = vmatpush1.bf16.msra.mxu0 0
      %1157 = vmatprep.subr.bf16.mxu0 0
      %1158 = vmatpush1.bf16.msra.mxu0 0
      %1159 = vmatprep.subr.bf16.mxu0 0
      %1160 = vmatpush1.bf16.msra.mxu0 0
      %1161 = vmatprep.subr.bf16.mxu0 0
      %1162 = vmatpush1.bf16.msra.mxu0 0
      %1163 = vmatprep.subr.bf16.mxu0 0
      %1164 = vmatpush1.bf16.msra.mxu0 0
      %1165 = vmatprep.subr.bf16.mxu0 0
      %1166 = vmatpush1.bf16.msra.mxu0 0
      %1167 = vmatprep.subr.bf16.mxu0 0
      %1168 = vmatpush1.bf16.msra.mxu0 0
      %1169 = vmatprep.subr.bf16.mxu0 0
      %1170 = vmatpush1.bf16.msra.mxu0 0
      %1171 = vmatprep.subr.bf16.mxu0 0
      %1172 = vmatpush1.bf16.msra.mxu0 0
      %1173 = vmatprep.subr.bf16.mxu0 0
      %1174 = vmatpush1.bf16.msra.mxu0 0
      %1175 = vmatprep.mubr.bf16.mxu0 0
      %1176 = vmatmul.mubr.bf16.gmra.mrb[0].mxu0 %v1132
      %v1177 = vpop.f32.mrb[0].mxu0
      %v1178 = vadd.f32 0.0, %v1177
      %v1179 = vpop.f32.mrb[0].mxu0
      %v1180 = vadd.f32 0.0, %v1179
      %v1181 = vpop.f32.mrb[0].mxu0
      %v1182 = vadd.f32 0.0, %v1181
      %v1183 = vpop.f32.mrb[0].mxu0
      %v1184 = vadd.f32 0.0, %v1183
      %1185 = vmatprep.mubr.bf16.mxu0 0
      %1186 = vmatmul.mubr.bf16.gmra.mrb[0].mxu0 %v1135
      %v1187 = vpop.f32.mrb[0].mxu0
      %v1188 = vadd.f32 0.0, %v1187
      %v1189 = vpop.f32.mrb[0].mxu0
      %v1190 = vadd.f32 0.0, %v1189
      %v1191 = vpop.f32.mrb[0].mxu0
      %v1192 = vadd.f32 0.0, %v1191
      %v1193 = vpop.f32.mrb[0].mxu0
      %v1194 = vadd.f32 0.0, %v1193
      %1195 = vdwg.mxu0
      %v1196 = vadd.f32 %v1084, %v1178
      %v1197 = vadd.f32 %v1085, %v1180
      %v1198 = vadd.f32 %v1086, %v1182
      %v1199 = vadd.f32 %v1087, %v1184
      %v1200 = vadd.f32 %v1088, %v1188
      %v1201 = vadd.f32 %v1089, %v1190
      %v1202 = vadd.f32 %v1090, %v1192
      %v1203 = vadd.f32 %v1091, %v1194
      %1204 = vrot.lane.b32.xlu0 %v392, 16
      %v1205 = vpop.permute.xlu0 %1204
      %1206 = vrot.lane.b32.xlu0 %v393, 16
      %v1207 = vpop.permute.xlu0 %1206
      %vm1208 = vcmp.lt.s32.totalorder %v423, 16
      %v1209 = vsel %vm1208, %v1205, %v1207
      %v1210 = vsel %vm1208, %v1207, %v1205
      %s1211 = scalar_lea.vmem %s1, 7
      %v1212 = vld [vmem:[%s1211] ss:$8 sm:$0x3]
      %v1214 = vlaneseq
      %v1215 = vshrl.u32 %v1214, 7
      %v1216 = vsub.s32 0, %v1215
      %v1217 = vrot.slane %v1212, %v1216
      %v1218 = vlaneseq
      %v1219 = vshrl.u32 %v1218, 7
      %v1220 = vsub.s32 1, %v1219
      %v1221 = vrot.slane %v1212, %v1220
      %v1224 = vmul.f32 %v1210, %v1217
      %v1225 = vmul.f32 %v1209, %v1221
      %s1226 = scalar_lea.vmem %s3, 112
      %v1227 = vld [vmem:[%s1226] sm:$0xf]
      %v1228 = vld [vmem:[%s1226 + $0x4] sm:$0xf]
      %v1229 = vld [vmem:[%s1226 + $0x8] sm:$0xf]
      %v1230 = vld [vmem:[%s1226 + $0xc] sm:$0xf]
      %v1231 = vpack.c.bf16 %v1224, %v1224
      %v1232 = vpack.c.bf16 %v1225, %v1225
      %v1237 = vunpack.c.l.b16 %v1227
      %v1238 = vunpack.c.l.b16 %v1228
      %v1239 = vunpack.c.l.b16 %v1229
      %v1240 = vunpack.c.l.b16 %v1230
      %v1241 = vpack.c.b16 %v1238, %v1237
      %v1242 = vpack.c.b16 %v1240, %v1239
      %v1244 = vsel %vm457, %v1241, 0
      %v1247 = vsel %vm457, %v1242, 0
      %v1250 = vsel %vm464, %v1231, 0
      %v1253 = vsel %vm464, %v1232, 0
      %1255 = vmatprep.subr.bf16.mxu0 %v1253
      %1256 = vmatpush1.bf16.msra.mxu0 %v1250
      %1257 = vmatprep.subr.bf16.mxu0 0
      %1258 = vmatpush1.bf16.msra.mxu0 0
      %1259 = vmatprep.subr.bf16.mxu0 0
      %1260 = vmatpush1.bf16.msra.mxu0 0
      %1261 = vmatprep.subr.bf16.mxu0 0
      %1262 = vmatpush1.bf16.msra.mxu0 0
      %1263 = vmatprep.subr.bf16.mxu0 0
      %1264 = vmatpush1.bf16.msra.mxu0 0
      %1265 = vmatprep.subr.bf16.mxu0 0
      %1266 = vmatpush1.bf16.msra.mxu0 0
      %1267 = vmatprep.subr.bf16.mxu0 0
      %1268 = vmatpush1.bf16.msra.mxu0 0
      %1269 = vmatprep.subr.bf16.mxu0 0
      %1270 = vmatpush1.bf16.msra.mxu0 0
      %1271 = vmatprep.subr.bf16.mxu0 0
      %1272 = vmatpush1.bf16.msra.mxu0 0
      %1273 = vmatprep.subr.bf16.mxu0 0
      %1274 = vmatpush1.bf16.msra.mxu0 0
      %1275 = vmatprep.subr.bf16.mxu0 0
      %1276 = vmatpush1.bf16.msra.mxu0 0
      %1277 = vmatprep.subr.bf16.mxu0 0
      %1278 = vmatpush1.bf16.msra.mxu0 0
      %1279 = vmatprep.subr.bf16.mxu0 0
      %1280 = vmatpush1.bf16.msra.mxu0 0
      %1281 = vmatprep.subr.bf16.mxu0 0
      %1282 = vmatpush1.bf16.msra.mxu0 0
      %1283 = vmatprep.subr.bf16.mxu0 0
      %1284 = vmatpush1.bf16.msra.mxu0 0
      %1285 = vmatprep.subr.bf16.mxu0 0
      %1286 = vmatpush1.bf16.msra.mxu0 0
      %1287 = vmatprep.mubr.bf16.mxu0 0
      %1288 = vmatmul.mubr.bf16.gmra.mrb[0].mxu0 %v1244
      %v1289 = vpop.f32.mrb[0].mxu0
      %v1290 = vadd.f32 0.0, %v1289
      %v1291 = vpop.f32.mrb[0].mxu0
      %v1292 = vadd.f32 0.0, %v1291
      %v1293 = vpop.f32.mrb[0].mxu0
      %v1294 = vadd.f32 0.0, %v1293
      %v1295 = vpop.f32.mrb[0].mxu0
      %v1296 = vadd.f32 0.0, %v1295
      %1297 = vmatprep.mubr.bf16.mxu0 0
      %1298 = vmatmul.mubr.bf16.gmra.mrb[0].mxu0 %v1247
      %v1299 = vpop.f32.mrb[0].mxu0
      %v1300 = vadd.f32 0.0, %v1299
      %v1301 = vpop.f32.mrb[0].mxu0
      %v1302 = vadd.f32 0.0, %v1301
      %v1303 = vpop.f32.mrb[0].mxu0
      %v1304 = vadd.f32 0.0, %v1303
      %v1305 = vpop.f32.mrb[0].mxu0
      %v1306 = vadd.f32 0.0, %v1305
      %1307 = vdwg.mxu0
      %v1308 = vadd.f32 %v1196, %v1290
      %v1309 = vadd.f32 %v1197, %v1292
      %v1310 = vadd.f32 %v1198, %v1294
      %v1311 = vadd.f32 %v1199, %v1296
      %v1312 = vadd.f32 %v1200, %v1300
      %v1313 = vadd.f32 %v1201, %v1302
      %v1314 = vadd.f32 %v1202, %v1304
      %v1315 = vadd.f32 %v1203, %v1306
      %1316 = vrot.lane.b32.xlu0 %v392, 15
      %v1317 = vpop.permute.xlu0 %1316
      %1318 = vrot.lane.b32.xlu0 %v393, 15
      %v1319 = vpop.permute.xlu0 %1318
      %vm1320 = vcmp.lt.s32.totalorder %v423, 15
      %v1321 = vsel %vm1320, %v1317, %v1319
      %v1322 = vsel %vm1320, %v1319, %v1317
      %s1323 = scalar_lea.vmem %s1, 16
      %v1324 = vld [vmem:[%s1323] ss:$8 sm:$0x3]
      %v1326 = vlaneseq
      %v1327 = vshrl.u32 %v1326, 7
      %v1328 = vsub.s32 0, %v1327
      %v1329 = vrot.slane %v1324, %v1328
      %v1330 = vlaneseq
      %v1331 = vshrl.u32 %v1330, 7
      %v1332 = vsub.s32 1, %v1331
      %v1333 = vrot.slane %v1324, %v1332
      %v1336 = vmul.f32 %v1322, %v1329
      %v1337 = vmul.f32 %v1321, %v1333
      %s1338 = scalar_lea.vmem %s3, 128
      %v1339 = vld [vmem:[%s1338] sm:$0xf]
      %v1340 = vld [vmem:[%s1338 + $0x4] sm:$0xf]
      %v1341 = vld [vmem:[%s1338 + $0x8] sm:$0xf]
      %v1342 = vld [vmem:[%s1338 + $0xc] sm:$0xf]
      %v1343 = vpack.c.bf16 %v1336, %v1336
      %v1344 = vpack.c.bf16 %v1337, %v1337
      %v1349 = vunpack.c.l.b16 %v1339
      %v1350 = vunpack.c.l.b16 %v1340
      %v1351 = vunpack.c.l.b16 %v1341
      %v1352 = vunpack.c.l.b16 %v1342
      %v1353 = vpack.c.b16 %v1350, %v1349
      %v1354 = vpack.c.b16 %v1352, %v1351
      %v1356 = vsel %vm457, %v1353, 0
      %v1359 = vsel %vm457, %v1354, 0
      %v1362 = vsel %vm464, %v1343, 0
      %v1365 = vsel %vm464, %v1344, 0
      %1367 = vmatprep.subr.bf16.mxu0 %v1365
      %1368 = vmatpush1.bf16.msra.mxu0 %v1362
      %1369 = vmatprep.subr.bf16.mxu0 0
      %1370 = vmatpush1.bf16.msra.mxu0 0
      %1371 = vmatprep.subr.bf16.mxu0 0
      %1372 = vmatpush1.bf16.msra.mxu0 0
      %1373 = vmatprep.subr.bf16.mxu0 0
      %1374 = vmatpush1.bf16.msra.mxu0 0
      %1375 = vmatprep.subr.bf16.mxu0 0
      %1376 = vmatpush1.bf16.msra.mxu0 0
      %1377 = vmatprep.subr.bf16.mxu0 0
      %1378 = vmatpush1.bf16.msra.mxu0 0
      %1379 = vmatprep.subr.bf16.mxu0 0
      %1380 = vmatpush1.bf16.msra.mxu0 0
      %1381 = vmatprep.subr.bf16.mxu0 0
      %1382 = vmatpush1.bf16.msra.mxu0 0
      %1383 = vmatprep.subr.bf16.mxu0 0
      %1384 = vmatpush1.bf16.msra.mxu0 0
      %1385 = vmatprep.subr.bf16.mxu0 0
      %1386 = vmatpush1.bf16.msra.mxu0 0
      %1387 = vmatprep.subr.bf16.mxu0 0
      %1388 = vmatpush1.bf16.msra.mxu0 0
      %1389 = vmatprep.subr.bf16.mxu0 0
      %1390 = vmatpush1.bf16.msra.mxu0 0
      %1391 = vmatprep.subr.bf16.mxu0 0
      %1392 = vmatpush1.bf16.msra.mxu0 0
      %1393 = vmatprep.subr.bf16.mxu0 0
      %1394 = vmatpush1.bf16.msra.mxu0 0
      %1395 = vmatprep.subr.bf16.mxu0 0
      %1396 = vmatpush1.bf16.msra.mxu0 0
      %1397 = vmatprep.subr.bf16.mxu0 0
      %1398 = vmatpush1.bf16.msra.mxu0 0
      %1399 = vmatprep.mubr.bf16.mxu0 0
      %1400 = vmatmul.mubr.bf16.gmra.mrb[0].mxu0 %v1356
      %v1401 = vpop.f32.mrb[0].mxu0
      %v1402 = vadd.f32 0.0, %v1401
      %v1403 = vpop.f32.mrb[0].mxu0
      %v1404 = vadd.f32 0.0, %v1403
      %v1405 = vpop.f32.mrb[0].mxu0
      %v1406 = vadd.f32 0.0, %v1405
      %v1407 = vpop.f32.mrb[0].mxu0
      %v1408 = vadd.f32 0.0, %v1407
      %1409 = vmatprep.mubr.bf16.mxu0 0
      %1410 = vmatmul.mubr.bf16.gmra.mrb[0].mxu0 %v1359
      %v1411 = vpop.f32.mrb[0].mxu0
      %v1412 = vadd.f32 0.0, %v1411
      %v1413 = vpop.f32.mrb[0].mxu0
      %v1414 = vadd.f32 0.0, %v1413
      %v1415 = vpop.f32.mrb[0].mxu0
      %v1416 = vadd.f32 0.0, %v1415
      %v1417 = vpop.f32.mrb[0].mxu0
      %v1418 = vadd.f32 0.0, %v1417
      %1419 = vdwg.mxu0
      %v1420 = vadd.f32 %v1308, %v1402
      %v1421 = vadd.f32 %v1309, %v1404
      %v1422 = vadd.f32 %v1310, %v1406
      %v1423 = vadd.f32 %v1311, %v1408
      %v1424 = vadd.f32 %v1312, %v1412
      %v1425 = vadd.f32 %v1313, %v1414
      %v1426 = vadd.f32 %v1314, %v1416
      %v1427 = vadd.f32 %v1315, %v1418
      %1428 = vrot.lane.b32.xlu0 %v392, 14
      %v1429 = vpop.permute.xlu0 %1428
      %1430 = vrot.lane.b32.xlu0 %v393, 14
      %v1431 = vpop.permute.xlu0 %1430
      %vm1432 = vcmp.lt.s32.totalorder %v423, 14
      %v1433 = vsel %vm1432, %v1429, %v1431
      %v1434 = vsel %vm1432, %v1431, %v1429
      %s1435 = scalar_lea.vmem %s1, 17
      %v1436 = vld [vmem:[%s1435] ss:$8 sm:$0x3]
      %v1438 = vlaneseq
      %v1439 = vshrl.u32 %v1438, 7
      %v1440 = vsub.s32 0, %v1439
      %v1441 = vrot.slane %v1436, %v1440
      %v1442 = vlaneseq
      %v1443 = vshrl.u32 %v1442, 7
      %v1444 = vsub.s32 1, %v1443
      %v1445 = vrot.slane %v1436, %v1444
      %v1448 = vmul.f32 %v1434, %v1441
      %v1449 = vmul.f32 %v1433, %v1445
      %s1450 = scalar_lea.vmem %s3, 144
      %v1451 = vld [vmem:[%s1450] sm:$0xf]
      %v1452 = vld [vmem:[%s1450 + $0x4] sm:$0xf]
      %v1453 = vld [vmem:[%s1450 + $0x8] sm:$0xf]
      %v1454 = vld [vmem:[%s1450 + $0xc] sm:$0xf]
      %v1455 = vpack.c.bf16 %v1448, %v1448
      %v1456 = vpack.c.bf16 %v1449, %v1449
      %v1461 = vunpack.c.l.b16 %v1451
      %v1462 = vunpack.c.l.b16 %v1452
      %v1463 = vunpack.c.l.b16 %v1453
      %v1464 = vunpack.c.l.b16 %v1454
      %v1465 = vpack.c.b16 %v1462, %v1461
      %v1466 = vpack.c.b16 %v1464, %v1463
      %v1468 = vsel %vm457, %v1465, 0
      %v1471 = vsel %vm457, %v1466, 0
      %v1474 = vsel %vm464, %v1455, 0
      %v1477 = vsel %vm464, %v1456, 0
      %1479 = vmatprep.subr.bf16.mxu0 %v1477
      %1480 = vmatpush1.bf16.msra.mxu0 %v1474
      %1481 = vmatprep.subr.bf16.mxu0 0
      %1482 = vmatpush1.bf16.msra.mxu0 0
      %1483 = vmatprep.subr.bf16.mxu0 0
      %1484 = vmatpush1.bf16.msra.mxu0 0
      %1485 = vmatprep.subr.bf16.mxu0 0
      %1486 = vmatpush1.bf16.msra.mxu0 0
      %1487 = vmatprep.subr.bf16.mxu0 0
      %1488 = vmatpush1.bf16.msra.mxu0 0
      %1489 = vmatprep.subr.bf16.mxu0 0
      %1490 = vmatpush1.bf16.msra.mxu0 0
      %1491 = vmatprep.subr.bf16.mxu0 0
      %1492 = vmatpush1.bf16.msra.mxu0 0
      %1493 = vmatprep.subr.bf16.mxu0 0
      %1494 = vmatpush1.bf16.msra.mxu0 0
      %1495 = vmatprep.subr.bf16.mxu0 0
      %1496 = vmatpush1.bf16.msra.mxu0 0
      %1497 = vmatprep.subr.bf16.mxu0 0
      %1498 = vmatpush1.bf16.msra.mxu0 0
      %1499 = vmatprep.subr.bf16.mxu0 0
      %1500 = vmatpush1.bf16.msra.mxu0 0
      %1501 = vmatprep.subr.bf16.mxu0 0
      %1502 = vmatpush1.bf16.msra.mxu0 0
      %1503 = vmatprep.subr.bf16.mxu0 0
      %1504 = vmatpush1.bf16.msra.mxu0 0
      %1505 = vmatprep.subr.bf16.mxu0 0
      %1506 = vmatpush1.bf16.msra.mxu0 0
      %1507 = vmatprep.subr.bf16.mxu0 0
      %1508 = vmatpush1.bf16.msra.mxu0 0
      %1509 = vmatprep.subr.bf16.mxu0 0
      %1510 = vmatpush1.bf16.msra.mxu0 0
      %1511 = vmatprep.mubr.bf16.mxu0 0
      %1512 = vmatmul.mubr.bf16.gmra.mrb[0].mxu0 %v1468
      %v1513 = vpop.f32.mrb[0].mxu0
      %v1514 = vadd.f32 0.0, %v1513
      %v1515 = vpop.f32.mrb[0].mxu0
      %v1516 = vadd.f32 0.0, %v1515
      %v1517 = vpop.f32.mrb[0].mxu0
      %v1518 = vadd.f32 0.0, %v1517
      %v1519 = vpop.f32.mrb[0].mxu0
      %v1520 = vadd.f32 0.0, %v1519
      %1521 = vmatprep.mubr.bf16.mxu0 0
      %1522 = vmatmul.mubr.bf16.gmra.mrb[0].mxu0 %v1471
      %v1523 = vpop.f32.mrb[0].mxu0
      %v1524 = vadd.f32 0.0, %v1523
      %v1525 = vpop.f32.mrb[0].mxu0
      %v1526 = vadd.f32 0.0, %v1525
      %v1527 = vpop.f32.mrb[0].mxu0
      %v1528 = vadd.f32 0.0, %v1527
      %v1529 = vpop.f32.mrb[0].mxu0
      %v1530 = vadd.f32 0.0, %v1529
      %1531 = vdwg.mxu0
      %v1532 = vadd.f32 %v1420, %v1514
      %v1533 = vadd.f32 %v1421, %v1516
      %v1534 = vadd.f32 %v1422, %v1518
      %v1535 = vadd.f32 %v1423, %v1520
      %v1536 = vadd.f32 %v1424, %v1524
      %v1537 = vadd.f32 %v1425, %v1526
      %v1538 = vadd.f32 %v1426, %v1528
      %v1539 = vadd.f32 %v1427, %v1530
      %1540 = vrot.lane.b32.xlu0 %v392, 2
      %v1541 = vpop.permute.xlu0 %1540
      %1542 = vrot.lane.b32.xlu0 %v393, 2
      %v1543 = vpop.permute.xlu0 %1542
      %vm1544 = vcmp.lt.s32.totalorder %v423, 2
      %v1545 = vsel %vm1544, %v1541, %v1543
      %v1546 = vsel %vm1544, %v1543, %v1541
      %s1547 = scalar_lea.vmem %s1, 18
      %v1548 = vld [vmem:[%s1547] ss:$8 sm:$0x3]
      %v1550 = vlaneseq
      %v1551 = vshrl.u32 %v1550, 7
      %v1552 = vsub.s32 0, %v1551
      %v1553 = vrot.slane %v1548, %v1552
      %v1554 = vlaneseq
      %v1555 = vshrl.u32 %v1554, 7
      %v1556 = vsub.s32 1, %v1555
      %v1557 = vrot.slane %v1548, %v1556
      %v1560 = vmul.f32 %v1546, %v1553
      %v1561 = vmul.f32 %v1545, %v1557
      %s1562 = scalar_lea.vmem %s3, 160
      %v1563 = vld [vmem:[%s1562] sm:$0xf]
      %v1564 = vld [vmem:[%s1562 + $0x4] sm:$0xf]
      %v1565 = vld [vmem:[%s1562 + $0x8] sm:$0xf]
      %v1566 = vld [vmem:[%s1562 + $0xc] sm:$0xf]
      %v1567 = vpack.c.bf16 %v1560, %v1560
      %v1568 = vpack.c.bf16 %v1561, %v1561
      %v1573 = vunpack.c.l.b16 %v1563
      %v1574 = vunpack.c.l.b16 %v1564
      %v1575 = vunpack.c.l.b16 %v1565
      %v1576 = vunpack.c.l.b16 %v1566
      %v1577 = vpack.c.b16 %v1574, %v1573
      %v1578 = vpack.c.b16 %v1576, %v1575
      %v1580 = vsel %vm457, %v1577, 0
      %v1583 = vsel %vm457, %v1578, 0
      %v1586 = vsel %vm464, %v1567, 0
      %v1589 = vsel %vm464, %v1568, 0
      %1591 = vmatprep.subr.bf16.mxu0 %v1589
      %1592 = vmatpush1.bf16.msra.mxu0 %v1586
      %1593 = vmatprep.subr.bf16.mxu0 0
      %1594 = vmatpush1.bf16.msra.mxu0 0
      %1595 = vmatprep.subr.bf16.mxu0 0
      %1596 = vmatpush1.bf16.msra.mxu0 0
      %1597 = vmatprep.subr.bf16.mxu0 0
      %1598 = vmatpush1.bf16.msra.mxu0 0
      %1599 = vmatprep.subr.bf16.mxu0 0
      %1600 = vmatpush1.bf16.msra.mxu0 0
      %1601 = vmatprep.subr.bf16.mxu0 0
      %1602 = vmatpush1.bf16.msra.mxu0 0
      %1603 = vmatprep.subr.bf16.mxu0 0
      %1604 = vmatpush1.bf16.msra.mxu0 0
      %1605 = vmatprep.subr.bf16.mxu0 0
      %1606 = vmatpush1.bf16.msra.mxu0 0
      %1607 = vmatprep.subr.bf16.mxu0 0
      %1608 = vmatpush1.bf16.msra.mxu0 0
      %1609 = vmatprep.subr.bf16.mxu0 0
      %1610 = vmatpush1.bf16.msra.mxu0 0
      %1611 = vmatprep.subr.bf16.mxu0 0
      %1612 = vmatpush1.bf16.msra.mxu0 0
      %1613 = vmatprep.subr.bf16.mxu0 0
      %1614 = vmatpush1.bf16.msra.mxu0 0
      %1615 = vmatprep.subr.bf16.mxu0 0
      %1616 = vmatpush1.bf16.msra.mxu0 0
      %1617 = vmatprep.subr.bf16.mxu0 0
      %1618 = vmatpush1.bf16.msra.mxu0 0
      %1619 = vmatprep.subr.bf16.mxu0 0
      %1620 = vmatpush1.bf16.msra.mxu0 0
      %1621 = vmatprep.subr.bf16.mxu0 0
      %1622 = vmatpush1.bf16.msra.mxu0 0
      %1623 = vmatprep.mubr.bf16.mxu0 0
      %1624 = vmatmul.mubr.bf16.gmra.mrb[0].mxu0 %v1580
      %v1625 = vpop.f32.mrb[0].mxu0
      %v1626 = vadd.f32 0.0, %v1625
      %v1627 = vpop.f32.mrb[0].mxu0
      %v1628 = vadd.f32 0.0, %v1627
      %v1629 = vpop.f32.mrb[0].mxu0
      %v1630 = vadd.f32 0.0, %v1629
      %v1631 = vpop.f32.mrb[0].mxu0
      %v1632 = vadd.f32 0.0, %v1631
      %1633 = vmatprep.mubr.bf16.mxu0 0
      %1634 = vmatmul.mubr.bf16.gmra.mrb[0].mxu0 %v1583
      %v1635 = vpop.f32.mrb[0].mxu0
      %v1636 = vadd.f32 0.0, %v1635
      %v1637 = vpop.f32.mrb[0].mxu0
      %v1638 = vadd.f32 0.0, %v1637
      %v1639 = vpop.f32.mrb[0].mxu0
      %v1640 = vadd.f32 0.0, %v1639
      %v1641 = vpop.f32.mrb[0].mxu0
      %v1642 = vadd.f32 0.0, %v1641
      %1643 = vdwg.mxu0
      %v1644 = vadd.f32 %v1532, %v1626
      %v1645 = vadd.f32 %v1533, %v1628
      %v1646 = vadd.f32 %v1534, %v1630
      %v1647 = vadd.f32 %v1535, %v1632
      %v1648 = vadd.f32 %v1536, %v1636
      %v1649 = vadd.f32 %v1537, %v1638
      %v1650 = vadd.f32 %v1538, %v1640
      %v1651 = vadd.f32 %v1539, %v1642
      %1652 = vrot.lane.b32.xlu0 %v392, 1
      %v1653 = vpop.permute.xlu0 %1652
      %1654 = vrot.lane.b32.xlu0 %v393, 1
      %v1655 = vpop.permute.xlu0 %1654
      %vm1656 = vcmp.lt.s32.totalorder %v423, 1
      %v1657 = vsel %vm1656, %v1653, %v1655
      %v1658 = vsel %vm1656, %v1655, %v1653
      %s1659 = scalar_lea.vmem %s1, 19
      %v1660 = vld [vmem:[%s1659] ss:$8 sm:$0x3]
      %v1662 = vlaneseq
      %v1663 = vshrl.u32 %v1662, 7
      %v1664 = vsub.s32 0, %v1663
      %v1665 = vrot.slane %v1660, %v1664
      %v1666 = vlaneseq
      %v1667 = vshrl.u32 %v1666, 7
      %v1668 = vsub.s32 1, %v1667
      %v1669 = vrot.slane %v1660, %v1668
      %v1672 = vmul.f32 %v1658, %v1665
      %v1673 = vmul.f32 %v1657, %v1669
      %s1674 = scalar_lea.vmem %s3, 176
      %v1675 = vld [vmem:[%s1674] sm:$0xf]
      %v1676 = vld [vmem:[%s1674 + $0x4] sm:$0xf]
      %v1677 = vld [vmem:[%s1674 + $0x8] sm:$0xf]
      %v1678 = vld [vmem:[%s1674 + $0xc] sm:$0xf]
      %v1679 = vpack.c.bf16 %v1672, %v1672
      %v1680 = vpack.c.bf16 %v1673, %v1673
      %v1685 = vunpack.c.l.b16 %v1675
      %v1686 = vunpack.c.l.b16 %v1676
      %v1687 = vunpack.c.l.b16 %v1677
      %v1688 = vunpack.c.l.b16 %v1678
      %v1689 = vpack.c.b16 %v1686, %v1685
      %v1690 = vpack.c.b16 %v1688, %v1687
      %v1692 = vsel %vm457, %v1689, 0
      %v1695 = vsel %vm457, %v1690, 0
      %v1698 = vsel %vm464, %v1679, 0
      %v1701 = vsel %vm464, %v1680, 0
      %1703 = vmatprep.subr.bf16.mxu0 %v1701
      %1704 = vmatpush1.bf16.msra.mxu0 %v1698
      %1705 = vmatprep.subr.bf16.mxu0 0
      %1706 = vmatpush1.bf16.msra.mxu0 0
      %1707 = vmatprep.subr.bf16.mxu0 0
      %1708 = vmatpush1.bf16.msra.mxu0 0
      %1709 = vmatprep.subr.bf16.mxu0 0
      %1710 = vmatpush1.bf16.msra.mxu0 0
      %1711 = vmatprep.subr.bf16.mxu0 0
      %1712 = vmatpush1.bf16.msra.mxu0 0
      %1713 = vmatprep.subr.bf16.mxu0 0
      %1714 = vmatpush1.bf16.msra.mxu0 0
      %1715 = vmatprep.subr.bf16.mxu0 0
      %1716 = vmatpush1.bf16.msra.mxu0 0
      %1717 = vmatprep.subr.bf16.mxu0 0
      %1718 = vmatpush1.bf16.msra.mxu0 0
      %1719 = vmatprep.subr.bf16.mxu0 0
      %1720 = vmatpush1.bf16.msra.mxu0 0
      %1721 = vmatprep.subr.bf16.mxu0 0
      %1722 = vmatpush1.bf16.msra.mxu0 0
      %1723 = vmatprep.subr.bf16.mxu0 0
      %1724 = vmatpush1.bf16.msra.mxu0 0
      %1725 = vmatprep.subr.bf16.mxu0 0
      %1726 = vmatpush1.bf16.msra.mxu0 0
      %1727 = vmatprep.subr.bf16.mxu0 0
      %1728 = vmatpush1.bf16.msra.mxu0 0
      %1729 = vmatprep.subr.bf16.mxu0 0
      %1730 = vmatpush1.bf16.msra.mxu0 0
      %1731 = vmatprep.subr.bf16.mxu0 0
      %1732 = vmatpush1.bf16.msra.mxu0 0
      %1733 = vmatprep.subr.bf16.mxu0 0
      %1734 = vmatpush1.bf16.msra.mxu0 0
      %1735 = vmatprep.mubr.bf16.mxu0 0
      %1736 = vmatmul.mubr.bf16.gmra.mrb[0].mxu0 %v1692
      %v1737 = vpop.f32.mrb[0].mxu0
      %v1738 = vadd.f32 0.0, %v1737
      %v1739 = vpop.f32.mrb[0].mxu0
      %v1740 = vadd.f32 0.0, %v1739
      %v1741 = vpop.f32.mrb[0].mxu0
      %v1742 = vadd.f32 0.0, %v1741
      %v1743 = vpop.f32.mrb[0].mxu0
      %v1744 = vadd.f32 0.0, %v1743
      %1745 = vmatprep.mubr.bf16.mxu0 0
      %1746 = vmatmul.mubr.bf16.gmra.mrb[0].mxu0 %v1695
      %v1747 = vpop.f32.mrb[0].mxu0
      %v1748 = vadd.f32 0.0, %v1747
      %v1749 = vpop.f32.mrb[0].mxu0
      %v1750 = vadd.f32 0.0, %v1749
      %v1751 = vpop.f32.mrb[0].mxu0
      %v1752 = vadd.f32 0.0, %v1751
      %v1753 = vpop.f32.mrb[0].mxu0
      %v1754 = vadd.f32 0.0, %v1753
      %1755 = vdwg.mxu0
      %v1756 = vadd.f32 %v1644, %v1738
      %v1757 = vadd.f32 %v1645, %v1740
      %v1758 = vadd.f32 %v1646, %v1742
      %v1759 = vadd.f32 %v1647, %v1744
      %v1760 = vadd.f32 %v1648, %v1748
      %v1761 = vadd.f32 %v1649, %v1750
      %v1762 = vadd.f32 %v1650, %v1752
      %v1763 = vadd.f32 %v1651, %v1754
      %s1764 = scalar_lea.vmem %s3, 192
      %v1765 = vld [vmem:[%s1764] sm:$0xf]
      %v1766 = vld [vmem:[%s1764 + $0x4] sm:$0xf]
      %v1767 = vld [vmem:[%s1764 + $0x8] sm:$0xf]
      %v1768 = vld [vmem:[%s1764 + $0xc] sm:$0xf]
      %v1773 = vunpack.c.l.b16 %v1765
      %v1774 = vunpack.c.l.b16 %v1766
      %v1775 = vunpack.c.l.b16 %v1767
      %v1776 = vunpack.c.l.b16 %v1768
      %v1777 = vpack.c.b16 %v1774, %v1773
      %v1778 = vpack.c.b16 %v1776, %v1775
      %v1780 = vunpack.c.l.b16 %v391
      %v1781 = vunpack.c.h.b16 %v391
      %v1782 = vpack.c.b16 %v1780, %v1780
      %v1783 = vpack.c.b16 %v1781, %v1781
      %v1785 = vsel %vm457, %v1777, 0
      %v1788 = vsel %vm457, %v1778, 0
      %v1791 = vsel %vm464, %v1782, 0
      %v1794 = vsel %vm464, %v1783, 0
      %1796 = vmatprep.subr.bf16.mxu0 %v1794
      %1797 = vmatpush1.bf16.msra.mxu0 %v1791
      %1798 = vmatprep.subr.bf16.mxu0 0
      %1799 = vmatpush1.bf16.msra.mxu0 0
      %1800 = vmatprep.subr.bf16.mxu0 0
      %1801 = vmatpush1.bf16.msra.mxu0 0
      %1802 = vmatprep.subr.bf16.mxu0 0
      %1803 = vmatpush1.bf16.msra.mxu0 0
      %1804 = vmatprep.subr.bf16.mxu0 0
      %1805 = vmatpush1.bf16.msra.mxu0 0
      %1806 = vmatprep.subr.bf16.mxu0 0
      %1807 = vmatpush1.bf16.msra.mxu0 0
      %1808 = vmatprep.subr.bf16.mxu0 0
      %1809 = vmatpush1.bf16.msra.mxu0 0
      %1810 = vmatprep.subr.bf16.mxu0 0
      %1811 = vmatpush1.bf16.msra.mxu0 0
      %1812 = vmatprep.subr.bf16.mxu0 0
      %1813 = vmatpush1.bf16.msra.mxu0 0
      %1814 = vmatprep.subr.bf16.mxu0 0
      %1815 = vmatpush1.bf16.msra.mxu0 0
      %1816 = vmatprep.subr.bf16.mxu0 0
      %1817 = vmatpush1.bf16.msra.mxu0 0
      %1818 = vmatprep.subr.bf16.mxu0 0
      %1819 = vmatpush1.bf16.msra.mxu0 0
      %1820 = vmatprep.subr.bf16.mxu0 0
      %1821 = vmatpush1.bf16.msra.mxu0 0
      %1822 = vmatprep.subr.bf16.mxu0 0
      %1823 = vmatpush1.bf16.msra.mxu0 0
      %1824 = vmatprep.subr.bf16.mxu0 0
      %1825 = vmatpush1.bf16.msra.mxu0 0
      %1826 = vmatprep.subr.bf16.mxu0 0
      %1827 = vmatpush1.bf16.msra.mxu0 0
      %1828 = vmatprep.mubr.bf16.mxu0 0
      %1829 = vmatmul.mubr.bf16.gmra.mrb[0].mxu0 %v1785
      %v1830 = vpop.f32.mrb[0].mxu0
      %v1831 = vadd.f32 0.0, %v1830
      %v1832 = vpop.f32.mrb[0].mxu0
      %v1833 = vadd.f32 0.0, %v1832
      %v1834 = vpop.f32.mrb[0].mxu0
      %v1835 = vadd.f32 0.0, %v1834
      %v1836 = vpop.f32.mrb[0].mxu0
      %v1837 = vadd.f32 0.0, %v1836
      %1838 = vmatprep.mubr.bf16.mxu0 0
      %1839 = vmatmul.mubr.bf16.gmra.mrb[0].mxu0 %v1788
      %v1840 = vpop.f32.mrb[0].mxu0
      %v1841 = vadd.f32 0.0, %v1840
      %v1842 = vpop.f32.mrb[0].mxu0
      %v1843 = vadd.f32 0.0, %v1842
      %v1844 = vpop.f32.mrb[0].mxu0
      %v1845 = vadd.f32 0.0, %v1844
      %v1846 = vpop.f32.mrb[0].mxu0
      %v1847 = vadd.f32 0.0, %v1846
      %1848 = vdwg.mxu0
      %v1849 = vadd.f32 %v1756, %v1831
      %v1850 = vadd.f32 %v1757, %v1833
      %v1851 = vadd.f32 %v1758, %v1835
      %v1852 = vadd.f32 %v1759, %v1837
      %v1853 = vadd.f32 %v1760, %v1841
      %v1854 = vadd.f32 %v1761, %v1843
      %v1855 = vadd.f32 %v1762, %v1845
      %v1856 = vadd.f32 %v1763, %v1847
      %1857 = vrot.lane.b32.xlu0 %v392, 127
      %v1858 = vpop.permute.xlu0 %1857
      %1859 = vrot.lane.b32.xlu0 %v393, 127
      %v1860 = vpop.permute.xlu0 %1859
      %vm1861 = vcmp.lt.s32.totalorder %v423, 127
      %v1862 = vsel %vm1861, %v1858, %v1860
      %v1863 = vsel %vm1861, %v1860, %v1858
      %s1864 = scalar_lea.vmem %s1, 21
      %v1865 = vld [vmem:[%s1864] ss:$8 sm:$0x3]
      %v1867 = vlaneseq
      %v1868 = vshrl.u32 %v1867, 7
      %v1869 = vsub.s32 0, %v1868
      %v1870 = vrot.slane %v1865, %v1869
      %v1871 = vlaneseq
      %v1872 = vshrl.u32 %v1871, 7
      %v1873 = vsub.s32 1, %v1872
      %v1874 = vrot.slane %v1865, %v1873
      %v1877 = vmul.f32 %v1862, %v1870
      %v1878 = vmul.f32 %v1863, %v1874
      %s1879 = scalar_lea.vmem %s3, 208
      %v1880 = vld [vmem:[%s1879] sm:$0xf]
      %v1881 = vld [vmem:[%s1879 + $0x4] sm:$0xf]
      %v1882 = vld [vmem:[%s1879 + $0x8] sm:$0xf]
      %v1883 = vld [vmem:[%s1879 + $0xc] sm:$0xf]
      %v1884 = vpack.c.bf16 %v1877, %v1877
      %v1885 = vpack.c.bf16 %v1878, %v1878
      %v1890 = vunpack.c.l.b16 %v1880
      %v1891 = vunpack.c.l.b16 %v1881
      %v1892 = vunpack.c.l.b16 %v1882
      %v1893 = vunpack.c.l.b16 %v1883
      %v1894 = vpack.c.b16 %v1891, %v1890
      %v1895 = vpack.c.b16 %v1893, %v1892
      %v1897 = vsel %vm457, %v1894, 0
      %v1900 = vsel %vm457, %v1895, 0
      %v1903 = vsel %vm464, %v1884, 0
      %v1906 = vsel %vm464, %v1885, 0
      %1908 = vmatprep.subr.bf16.mxu0 %v1906
      %1909 = vmatpush1.bf16.msra.mxu0 %v1903
      %1910 = vmatprep.subr.bf16.mxu0 0
      %1911 = vmatpush1.bf16.msra.mxu0 0
      %1912 = vmatprep.subr.bf16.mxu0 0
      %1913 = vmatpush1.bf16.msra.mxu0 0
      %1914 = vmatprep.subr.bf16.mxu0 0
      %1915 = vmatpush1.bf16.msra.mxu0 0
      %1916 = vmatprep.subr.bf16.mxu0 0
      %1917 = vmatpush1.bf16.msra.mxu0 0
      %1918 = vmatprep.subr.bf16.mxu0 0
      %1919 = vmatpush1.bf16.msra.mxu0 0
      %1920 = vmatprep.subr.bf16.mxu0 0
      %1921 = vmatpush1.bf16.msra.mxu0 0
      %1922 = vmatprep.subr.bf16.mxu0 0
      %1923 = vmatpush1.bf16.msra.mxu0 0
      %1924 = vmatprep.subr.bf16.mxu0 0
      %1925 = vmatpush1.bf16.msra.mxu0 0
      %1926 = vmatprep.subr.bf16.mxu0 0
      %1927 = vmatpush1.bf16.msra.mxu0 0
      %1928 = vmatprep.subr.bf16.mxu0 0
      %1929 = vmatpush1.bf16.msra.mxu0 0
      %1930 = vmatprep.subr.bf16.mxu0 0
      %1931 = vmatpush1.bf16.msra.mxu0 0
      %1932 = vmatprep.subr.bf16.mxu0 0
      %1933 = vmatpush1.bf16.msra.mxu0 0
      %1934 = vmatprep.subr.bf16.mxu0 0
      %1935 = vmatpush1.bf16.msra.mxu0 0
      %1936 = vmatprep.subr.bf16.mxu0 0
      %1937 = vmatpush1.bf16.msra.mxu0 0
      %1938 = vmatprep.subr.bf16.mxu0 0
      %1939 = vmatpush1.bf16.msra.mxu0 0
      %1940 = vmatprep.mubr.bf16.mxu0 0
      %1941 = vmatmul.mubr.bf16.gmra.mrb[0].mxu0 %v1897
      %v1942 = vpop.f32.mrb[0].mxu0
      %v1943 = vadd.f32 0.0, %v1942
      %v1944 = vpop.f32.mrb[0].mxu0
      %v1945 = vadd.f32 0.0, %v1944
      %v1946 = vpop.f32.mrb[0].mxu0
      %v1947 = vadd.f32 0.0, %v1946
      %v1948 = vpop.f32.mrb[0].mxu0
      %v1949 = vadd.f32 0.0, %v1948
      %1950 = vmatprep.mubr.bf16.mxu0 0
      %1951 = vmatmul.mubr.bf16.gmra.mrb[0].mxu0 %v1900
      %v1952 = vpop.f32.mrb[0].mxu0
      %v1953 = vadd.f32 0.0, %v1952
      %v1954 = vpop.f32.mrb[0].mxu0
      %v1955 = vadd.f32 0.0, %v1954
      %v1956 = vpop.f32.mrb[0].mxu0
      %v1957 = vadd.f32 0.0, %v1956
      %v1958 = vpop.f32.mrb[0].mxu0
      %v1959 = vadd.f32 0.0, %v1958
      %1960 = vdwg.mxu0
      %v1961 = vadd.f32 %v1849, %v1943
      %v1962 = vadd.f32 %v1850, %v1945
      %v1963 = vadd.f32 %v1851, %v1947
      %v1964 = vadd.f32 %v1852, %v1949
      %v1965 = vadd.f32 %v1853, %v1953
      %v1966 = vadd.f32 %v1854, %v1955
      %v1967 = vadd.f32 %v1855, %v1957
      %v1968 = vadd.f32 %v1856, %v1959
      %1969 = vrot.lane.b32.xlu0 %v392, 126
      %v1970 = vpop.permute.xlu0 %1969
      %1971 = vrot.lane.b32.xlu0 %v393, 126
      %v1972 = vpop.permute.xlu0 %1971
      %vm1973 = vcmp.lt.s32.totalorder %v423, 126
      %v1974 = vsel %vm1973, %v1970, %v1972
      %v1975 = vsel %vm1973, %v1972, %v1970
      %s1976 = scalar_lea.vmem %s1, 22
      %v1977 = vld [vmem:[%s1976] ss:$8 sm:$0x3]
      %v1979 = vlaneseq
      %v1980 = vshrl.u32 %v1979, 7
      %v1981 = vsub.s32 0, %v1980
      %v1982 = vrot.slane %v1977, %v1981
      %v1983 = vlaneseq
      %v1984 = vshrl.u32 %v1983, 7
      %v1985 = vsub.s32 1, %v1984
      %v1986 = vrot.slane %v1977, %v1985
      %v1989 = vmul.f32 %v1974, %v1982
      %v1990 = vmul.f32 %v1975, %v1986
      %s1991 = scalar_lea.vmem %s3, 224
      %v1992 = vld [vmem:[%s1991] sm:$0xf]
      %v1993 = vld [vmem:[%s1991 + $0x4] sm:$0xf]
      %v1994 = vld [vmem:[%s1991 + $0x8] sm:$0xf]
      %v1995 = vld [vmem:[%s1991 + $0xc] sm:$0xf]
      %v1996 = vpack.c.bf16 %v1989, %v1989
      %v1997 = vpack.c.bf16 %v1990, %v1990
      %v2002 = vunpack.c.l.b16 %v1992
      %v2003 = vunpack.c.l.b16 %v1993
      %v2004 = vunpack.c.l.b16 %v1994
      %v2005 = vunpack.c.l.b16 %v1995
      %v2006 = vpack.c.b16 %v2003, %v2002
      %v2007 = vpack.c.b16 %v2005, %v2004
      %v2009 = vsel %vm457, %v2006, 0
      %v2012 = vsel %vm457, %v2007, 0
      %v2015 = vsel %vm464, %v1996, 0
      %v2018 = vsel %vm464, %v1997, 0
      %2020 = vmatprep.subr.bf16.mxu0 %v2018
      %2021 = vmatpush1.bf16.msra.mxu0 %v2015
      %2022 = vmatprep.subr.bf16.mxu0 0
      %2023 = vmatpush1.bf16.msra.mxu0 0
      %2024 = vmatprep.subr.bf16.mxu0 0
      %2025 = vmatpush1.bf16.msra.mxu0 0
      %2026 = vmatprep.subr.bf16.mxu0 0
      %2027 = vmatpush1.bf16.msra.mxu0 0
      %2028 = vmatprep.subr.bf16.mxu0 0
      %2029 = vmatpush1.bf16.msra.mxu0 0
      %2030 = vmatprep.subr.bf16.mxu0 0
      %2031 = vmatpush1.bf16.msra.mxu0 0
      %2032 = vmatprep.subr.bf16.mxu0 0
      %2033 = vmatpush1.bf16.msra.mxu0 0
      %2034 = vmatprep.subr.bf16.mxu0 0
      %2035 = vmatpush1.bf16.msra.mxu0 0
      %2036 = vmatprep.subr.bf16.mxu0 0
      %2037 = vmatpush1.bf16.msra.mxu0 0
      %2038 = vmatprep.subr.bf16.mxu0 0
      %2039 = vmatpush1.bf16.msra.mxu0 0
      %2040 = vmatprep.subr.bf16.mxu0 0
      %2041 = vmatpush1.bf16.msra.mxu0 0
      %2042 = vmatprep.subr.bf16.mxu0 0
      %2043 = vmatpush1.bf16.msra.mxu0 0
      %2044 = vmatprep.subr.bf16.mxu0 0
      %2045 = vmatpush1.bf16.msra.mxu0 0
      %2046 = vmatprep.subr.bf16.mxu0 0
      %2047 = vmatpush1.bf16.msra.mxu0 0
      %2048 = vmatprep.subr.bf16.mxu0 0
      %2049 = vmatpush1.bf16.msra.mxu0 0
      %2050 = vmatprep.subr.bf16.mxu0 0
      %2051 = vmatpush1.bf16.msra.mxu0 0
      %2052 = vmatprep.mubr.bf16.mxu0 0
      %2053 = vmatmul.mubr.bf16.gmra.mrb[0].mxu0 %v2009
      %v2054 = vpop.f32.mrb[0].mxu0
      %v2055 = vadd.f32 0.0, %v2054
      %v2056 = vpop.f32.mrb[0].mxu0
      %v2057 = vadd.f32 0.0, %v2056
      %v2058 = vpop.f32.mrb[0].mxu0
      %v2059 = vadd.f32 0.0, %v2058
      %v2060 = vpop.f32.mrb[0].mxu0
      %v2061 = vadd.f32 0.0, %v2060
      %2062 = vmatprep.mubr.bf16.mxu0 0
      %2063 = vmatmul.mubr.bf16.gmra.mrb[0].mxu0 %v2012
      %v2064 = vpop.f32.mrb[0].mxu0
      %v2065 = vadd.f32 0.0, %v2064
      %v2066 = vpop.f32.mrb[0].mxu0
      %v2067 = vadd.f32 0.0, %v2066
      %v2068 = vpop.f32.mrb[0].mxu0
      %v2069 = vadd.f32 0.0, %v2068
      %v2070 = vpop.f32.mrb[0].mxu0
      %v2071 = vadd.f32 0.0, %v2070
      %2072 = vdwg.mxu0
      %v2073 = vadd.f32 %v1961, %v2055
      %v2074 = vadd.f32 %v1962, %v2057
      %v2075 = vadd.f32 %v1963, %v2059
      %v2076 = vadd.f32 %v1964, %v2061
      %v2077 = vadd.f32 %v1965, %v2065
      %v2078 = vadd.f32 %v1966, %v2067
      %v2079 = vadd.f32 %v1967, %v2069
      %v2080 = vadd.f32 %v1968, %v2071
      %2081 = vrot.lane.b32.xlu0 %v392, 114
      %v2082 = vpop.permute.xlu0 %2081
      %2083 = vrot.lane.b32.xlu0 %v393, 114
      %v2084 = vpop.permute.xlu0 %2083
      %vm2085 = vcmp.lt.s32.totalorder %v423, 114
      %v2086 = vsel %vm2085, %v2082, %v2084
      %v2087 = vsel %vm2085, %v2084, %v2082
      %s2088 = scalar_lea.vmem %s1, 23
      %v2089 = vld [vmem:[%s2088] ss:$8 sm:$0x3]
      %v2091 = vlaneseq
      %v2092 = vshrl.u32 %v2091, 7
      %v2093 = vsub.s32 0, %v2092
      %v2094 = vrot.slane %v2089, %v2093
      %v2095 = vlaneseq
      %v2096 = vshrl.u32 %v2095, 7
      %v2097 = vsub.s32 1, %v2096
      %v2098 = vrot.slane %v2089, %v2097
      %v2101 = vmul.f32 %v2086, %v2094
      %v2102 = vmul.f32 %v2087, %v2098
      %s2103 = scalar_lea.vmem %s3, 240
      %v2104 = vld [vmem:[%s2103] sm:$0xf]
      %v2105 = vld [vmem:[%s2103 + $0x4] sm:$0xf]
      %v2106 = vld [vmem:[%s2103 + $0x8] sm:$0xf]
      %v2107 = vld [vmem:[%s2103 + $0xc] sm:$0xf]
      %v2108 = vpack.c.bf16 %v2101, %v2101
      %v2109 = vpack.c.bf16 %v2102, %v2102
      %v2114 = vunpack.c.l.b16 %v2104
      %v2115 = vunpack.c.l.b16 %v2105
      %v2116 = vunpack.c.l.b16 %v2106
      %v2117 = vunpack.c.l.b16 %v2107
      %v2118 = vpack.c.b16 %v2115, %v2114
      %v2119 = vpack.c.b16 %v2117, %v2116
      %v2121 = vsel %vm457, %v2118, 0
      %v2124 = vsel %vm457, %v2119, 0
      %v2127 = vsel %vm464, %v2108, 0
      %v2130 = vsel %vm464, %v2109, 0
      %2132 = vmatprep.subr.bf16.mxu0 %v2130
      %2133 = vmatpush1.bf16.msra.mxu0 %v2127
      %2134 = vmatprep.subr.bf16.mxu0 0
      %2135 = vmatpush1.bf16.msra.mxu0 0
      %2136 = vmatprep.subr.bf16.mxu0 0
      %2137 = vmatpush1.bf16.msra.mxu0 0
      %2138 = vmatprep.subr.bf16.mxu0 0
      %2139 = vmatpush1.bf16.msra.mxu0 0
      %2140 = vmatprep.subr.bf16.mxu0 0
      %2141 = vmatpush1.bf16.msra.mxu0 0
      %2142 = vmatprep.subr.bf16.mxu0 0
      %2143 = vmatpush1.bf16.msra.mxu0 0
      %2144 = vmatprep.subr.bf16.mxu0 0
      %2145 = vmatpush1.bf16.msra.mxu0 0
      %2146 = vmatprep.subr.bf16.mxu0 0
      %2147 = vmatpush1.bf16.msra.mxu0 0
      %2148 = vmatprep.subr.bf16.mxu0 0
      %2149 = vmatpush1.bf16.msra.mxu0 0
      %2150 = vmatprep.subr.bf16.mxu0 0
      %2151 = vmatpush1.bf16.msra.mxu0 0
      %2152 = vmatprep.subr.bf16.mxu0 0
      %2153 = vmatpush1.bf16.msra.mxu0 0
      %2154 = vmatprep.subr.bf16.mxu0 0
      %2155 = vmatpush1.bf16.msra.mxu0 0
      %2156 = vmatprep.subr.bf16.mxu0 0
      %2157 = vmatpush1.bf16.msra.mxu0 0
      %2158 = vmatprep.subr.bf16.mxu0 0
      %2159 = vmatpush1.bf16.msra.mxu0 0
      %2160 = vmatprep.subr.bf16.mxu0 0
      %2161 = vmatpush1.bf16.msra.mxu0 0
      %2162 = vmatprep.subr.bf16.mxu0 0
      %2163 = vmatpush1.bf16.msra.mxu0 0
      %2164 = vmatprep.mubr.bf16.mxu0 0
      %2165 = vmatmul.mubr.bf16.gmra.mrb[0].mxu0 %v2121
      %v2166 = vpop.f32.mrb[0].mxu0
      %v2167 = vadd.f32 0.0, %v2166
      %v2168 = vpop.f32.mrb[0].mxu0
      %v2169 = vadd.f32 0.0, %v2168
      %v2170 = vpop.f32.mrb[0].mxu0
      %v2171 = vadd.f32 0.0, %v2170
      %v2172 = vpop.f32.mrb[0].mxu0
      %v2173 = vadd.f32 0.0, %v2172
      %2174 = vmatprep.mubr.bf16.mxu0 0
      %2175 = vmatmul.mubr.bf16.gmra.mrb[0].mxu0 %v2124
      %v2176 = vpop.f32.mrb[0].mxu0
      %v2177 = vadd.f32 0.0, %v2176
      %v2178 = vpop.f32.mrb[0].mxu0
      %v2179 = vadd.f32 0.0, %v2178
      %v2180 = vpop.f32.mrb[0].mxu0
      %v2181 = vadd.f32 0.0, %v2180
      %v2182 = vpop.f32.mrb[0].mxu0
      %v2183 = vadd.f32 0.0, %v2182
      %2184 = vdwg.mxu0
      %v2185 = vadd.f32 %v2073, %v2167
      %v2186 = vadd.f32 %v2074, %v2169
      %v2187 = vadd.f32 %v2075, %v2171
      %v2188 = vadd.f32 %v2076, %v2173
      %v2189 = vadd.f32 %v2077, %v2177
      %v2190 = vadd.f32 %v2078, %v2179
      %v2191 = vadd.f32 %v2079, %v2181
      %v2192 = vadd.f32 %v2080, %v2183
      %2193 = vrot.lane.b32.xlu0 %v392, 113
      %v2194 = vpop.permute.xlu0 %2193
      %2195 = vrot.lane.b32.xlu0 %v393, 113
      %v2196 = vpop.permute.xlu0 %2195
      %vm2197 = vcmp.lt.s32.totalorder %v423, 113
      %v2198 = vsel %vm2197, %v2194, %v2196
      %v2199 = vsel %vm2197, %v2196, %v2194
      %s2200 = scalar_lea.vmem %s1, 32
      %v2201 = vld [vmem:[%s2200] ss:$8 sm:$0x3]
      %v2203 = vlaneseq
      %v2204 = vshrl.u32 %v2203, 7
      %v2205 = vsub.s32 0, %v2204
      %v2206 = vrot.slane %v2201, %v2205
      %v2207 = vlaneseq
      %v2208 = vshrl.u32 %v2207, 7
      %v2209 = vsub.s32 1, %v2208
      %v2210 = vrot.slane %v2201, %v2209
      %v2213 = vmul.f32 %v2198, %v2206
      %v2214 = vmul.f32 %v2199, %v2210
      %s2215 = scalar_lea.vmem %s3, 256
      %v2216 = vld [vmem:[%s2215] sm:$0xf]
      %v2217 = vld [vmem:[%s2215 + $0x4] sm:$0xf]
      %v2218 = vld [vmem:[%s2215 + $0x8] sm:$0xf]
      %v2219 = vld [vmem:[%s2215 + $0xc] sm:$0xf]
      %v2220 = vpack.c.bf16 %v2213, %v2213
      %v2221 = vpack.c.bf16 %v2214, %v2214
      %v2226 = vunpack.c.l.b16 %v2216
      %v2227 = vunpack.c.l.b16 %v2217
      %v2228 = vunpack.c.l.b16 %v2218
      %v2229 = vunpack.c.l.b16 %v2219
      %v2230 = vpack.c.b16 %v2227, %v2226
      %v2231 = vpack.c.b16 %v2229, %v2228
      %v2233 = vsel %vm457, %v2230, 0
      %v2236 = vsel %vm457, %v2231, 0
      %v2239 = vsel %vm464, %v2220, 0
      %v2242 = vsel %vm464, %v2221, 0
      %2244 = vmatprep.subr.bf16.mxu0 %v2242
      %2245 = vmatpush1.bf16.msra.mxu0 %v2239
      %2246 = vmatprep.subr.bf16.mxu0 0
      %2247 = vmatpush1.bf16.msra.mxu0 0
      %2248 = vmatprep.subr.bf16.mxu0 0
      %2249 = vmatpush1.bf16.msra.mxu0 0
      %2250 = vmatprep.subr.bf16.mxu0 0
      %2251 = vmatpush1.bf16.msra.mxu0 0
      %2252 = vmatprep.subr.bf16.mxu0 0
      %2253 = vmatpush1.bf16.msra.mxu0 0
      %2254 = vmatprep.subr.bf16.mxu0 0
      %2255 = vmatpush1.bf16.msra.mxu0 0
      %2256 = vmatprep.subr.bf16.mxu0 0
      %2257 = vmatpush1.bf16.msra.mxu0 0
      %2258 = vmatprep.subr.bf16.mxu0 0
      %2259 = vmatpush1.bf16.msra.mxu0 0
      %2260 = vmatprep.subr.bf16.mxu0 0
      %2261 = vmatpush1.bf16.msra.mxu0 0
      %2262 = vmatprep.subr.bf16.mxu0 0
      %2263 = vmatpush1.bf16.msra.mxu0 0
      %2264 = vmatprep.subr.bf16.mxu0 0
      %2265 = vmatpush1.bf16.msra.mxu0 0
      %2266 = vmatprep.subr.bf16.mxu0 0
      %2267 = vmatpush1.bf16.msra.mxu0 0
      %2268 = vmatprep.subr.bf16.mxu0 0
      %2269 = vmatpush1.bf16.msra.mxu0 0
      %2270 = vmatprep.subr.bf16.mxu0 0
      %2271 = vmatpush1.bf16.msra.mxu0 0
      %2272 = vmatprep.subr.bf16.mxu0 0
      %2273 = vmatpush1.bf16.msra.mxu0 0
      %2274 = vmatprep.subr.bf16.mxu0 0
      %2275 = vmatpush1.bf16.msra.mxu0 0
      %2276 = vmatprep.mubr.bf16.mxu0 0
      %2277 = vmatmul.mubr.bf16.gmra.mrb[0].mxu0 %v2233
      %v2278 = vpop.f32.mrb[0].mxu0
      %v2279 = vadd.f32 0.0, %v2278
      %v2280 = vpop.f32.mrb[0].mxu0
      %v2281 = vadd.f32 0.0, %v2280
      %v2282 = vpop.f32.mrb[0].mxu0
      %v2283 = vadd.f32 0.0, %v2282
      %v2284 = vpop.f32.mrb[0].mxu0
      %v2285 = vadd.f32 0.0, %v2284
      %2286 = vmatprep.mubr.bf16.mxu0 0
      %2287 = vmatmul.mubr.bf16.gmra.mrb[0].mxu0 %v2236
      %v2288 = vpop.f32.mrb[0].mxu0
      %v2289 = vadd.f32 0.0, %v2288
      %v2290 = vpop.f32.mrb[0].mxu0
      %v2291 = vadd.f32 0.0, %v2290
      %v2292 = vpop.f32.mrb[0].mxu0
      %v2293 = vadd.f32 0.0, %v2292
      %v2294 = vpop.f32.mrb[0].mxu0
      %v2295 = vadd.f32 0.0, %v2294
      %2296 = vdwg.mxu0
      %v2297 = vadd.f32 %v2185, %v2279
      %v2298 = vadd.f32 %v2186, %v2281
      %v2299 = vadd.f32 %v2187, %v2283
      %v2300 = vadd.f32 %v2188, %v2285
      %v2301 = vadd.f32 %v2189, %v2289
      %v2302 = vadd.f32 %v2190, %v2291
      %v2303 = vadd.f32 %v2191, %v2293
      %v2304 = vadd.f32 %v2192, %v2295
      %2305 = vrot.lane.b32.xlu0 %v392, 112
      %v2306 = vpop.permute.xlu0 %2305
      %2307 = vrot.lane.b32.xlu0 %v393, 112
      %v2308 = vpop.permute.xlu0 %2307
      %vm2309 = vcmp.lt.s32.totalorder %v423, 112
      %v2310 = vsel %vm2309, %v2306, %v2308
      %v2311 = vsel %vm2309, %v2308, %v2306
      %s2312 = scalar_lea.vmem %s1, 33
      %v2313 = vld [vmem:[%s2312] ss:$8 sm:$0x3]
      %v2315 = vlaneseq
      %v2316 = vshrl.u32 %v2315, 7
      %v2317 = vsub.s32 0, %v2316
      %v2318 = vrot.slane %v2313, %v2317
      %v2319 = vlaneseq
      %v2320 = vshrl.u32 %v2319, 7
      %v2321 = vsub.s32 1, %v2320
      %v2322 = vrot.slane %v2313, %v2321
      %v2325 = vmul.f32 %v2310, %v2318
      %v2326 = vmul.f32 %v2311, %v2322
      %s2327 = scalar_lea.vmem %s3, 272
      %v2328 = vld [vmem:[%s2327] sm:$0xf]
      %v2329 = vld [vmem:[%s2327 + $0x4] sm:$0xf]
      %v2330 = vld [vmem:[%s2327 + $0x8] sm:$0xf]
      %v2331 = vld [vmem:[%s2327 + $0xc] sm:$0xf]
      %v2332 = vpack.c.bf16 %v2325, %v2325
      %v2333 = vpack.c.bf16 %v2326, %v2326
      %v2338 = vunpack.c.l.b16 %v2328
      %v2339 = vunpack.c.l.b16 %v2329
      %v2340 = vunpack.c.l.b16 %v2330
      %v2341 = vunpack.c.l.b16 %v2331
      %v2342 = vpack.c.b16 %v2339, %v2338
      %v2343 = vpack.c.b16 %v2341, %v2340
      %v2345 = vsel %vm457, %v2342, 0
      %v2348 = vsel %vm457, %v2343, 0
      %v2351 = vsel %vm464, %v2332, 0
      %v2354 = vsel %vm464, %v2333, 0
      %2356 = vmatprep.subr.bf16.mxu0 %v2354
      %2357 = vmatpush1.bf16.msra.mxu0 %v2351
      %2358 = vmatprep.subr.bf16.mxu0 0
      %2359 = vmatpush1.bf16.msra.mxu0 0
      %2360 = vmatprep.subr.bf16.mxu0 0
      %2361 = vmatpush1.bf16.msra.mxu0 0
      %2362 = vmatprep.subr.bf16.mxu0 0
      %2363 = vmatpush1.bf16.msra.mxu0 0
      %2364 = vmatprep.subr.bf16.mxu0 0
      %2365 = vmatpush1.bf16.msra.mxu0 0
      %2366 = vmatprep.subr.bf16.mxu0 0
      %2367 = vmatpush1.bf16.msra.mxu0 0
      %2368 = vmatprep.subr.bf16.mxu0 0
      %2369 = vmatpush1.bf16.msra.mxu0 0
      %2370 = vmatprep.subr.bf16.mxu0 0
      %2371 = vmatpush1.bf16.msra.mxu0 0
      %2372 = vmatprep.subr.bf16.mxu0 0
      %2373 = vmatpush1.bf16.msra.mxu0 0
      %2374 = vmatprep.subr.bf16.mxu0 0
      %2375 = vmatpush1.bf16.msra.mxu0 0
      %2376 = vmatprep.subr.bf16.mxu0 0
      %2377 = vmatpush1.bf16.msra.mxu0 0
      %2378 = vmatprep.subr.bf16.mxu0 0
      %2379 = vmatpush1.bf16.msra.mxu0 0
      %2380 = vmatprep.subr.bf16.mxu0 0
      %2381 = vmatpush1.bf16.msra.mxu0 0
      %2382 = vmatprep.subr.bf16.mxu0 0
      %2383 = vmatpush1.bf16.msra.mxu0 0
      %2384 = vmatprep.subr.bf16.mxu0 0
      %2385 = vmatpush1.bf16.msra.mxu0 0
      %2386 = vmatprep.subr.bf16.mxu0 0
      %2387 = vmatpush1.bf16.msra.mxu0 0
      %2388 = vmatprep.mubr.bf16.mxu0 0
      %2389 = vmatmul.mubr.bf16.gmra.mrb[0].mxu0 %v2345
      %v2390 = vpop.f32.mrb[0].mxu0
      %v2391 = vadd.f32 0.0, %v2390
      %v2392 = vpop.f32.mrb[0].mxu0
      %v2393 = vadd.f32 0.0, %v2392
      %v2394 = vpop.f32.mrb[0].mxu0
      %v2395 = vadd.f32 0.0, %v2394
      %v2396 = vpop.f32.mrb[0].mxu0
      %v2397 = vadd.f32 0.0, %v2396
      %2398 = vmatprep.mubr.bf16.mxu0 0
      %2399 = vmatmul.mubr.bf16.gmra.mrb[0].mxu0 %v2348
      %v2400 = vpop.f32.mrb[0].mxu0
      %v2401 = vadd.f32 0.0, %v2400
      %v2402 = vpop.f32.mrb[0].mxu0
      %v2403 = vadd.f32 0.0, %v2402
      %v2404 = vpop.f32.mrb[0].mxu0
      %v2405 = vadd.f32 0.0, %v2404
      %v2406 = vpop.f32.mrb[0].mxu0
      %v2407 = vadd.f32 0.0, %v2406
      %2408 = vdwg.mxu0
      %v2409 = vadd.f32 %v2297, %v2391
      %v2410 = vadd.f32 %v2298, %v2393
      %v2411 = vadd.f32 %v2299, %v2395
      %v2412 = vadd.f32 %v2300, %v2397
      %v2413 = vadd.f32 %v2301, %v2401
      %v2414 = vadd.f32 %v2302, %v2403
      %v2415 = vadd.f32 %v2303, %v2405
      %v2416 = vadd.f32 %v2304, %v2407
      %2417 = vrot.lane.b32.xlu0 %v392, 111
      %v2418 = vpop.permute.xlu0 %2417
      %2419 = vrot.lane.b32.xlu0 %v393, 111
      %v2420 = vpop.permute.xlu0 %2419
      %vm2421 = vcmp.lt.s32.totalorder %v423, 111
      %v2422 = vsel %vm2421, %v2418, %v2420
      %v2423 = vsel %vm2421, %v2420, %v2418
      %s2424 = scalar_lea.vmem %s1, 34
      %v2425 = vld [vmem:[%s2424] ss:$8 sm:$0x3]
      %v2427 = vlaneseq
      %v2428 = vshrl.u32 %v2427, 7
      %v2429 = vsub.s32 0, %v2428
      %v2430 = vrot.slane %v2425, %v2429
      %v2431 = vlaneseq
      %v2432 = vshrl.u32 %v2431, 7
      %v2433 = vsub.s32 1, %v2432
      %v2434 = vrot.slane %v2425, %v2433
      %v2437 = vmul.f32 %v2422, %v2430
      %v2438 = vmul.f32 %v2423, %v2434
      %s2439 = scalar_lea.vmem %s3, 288
      %v2440 = vld [vmem:[%s2439] sm:$0xf]
      %v2441 = vld [vmem:[%s2439 + $0x4] sm:$0xf]
      %v2442 = vld [vmem:[%s2439 + $0x8] sm:$0xf]
      %v2443 = vld [vmem:[%s2439 + $0xc] sm:$0xf]
      %v2444 = vpack.c.bf16 %v2437, %v2437
      %v2445 = vpack.c.bf16 %v2438, %v2438
      %v2450 = vunpack.c.l.b16 %v2440
      %v2451 = vunpack.c.l.b16 %v2441
      %v2452 = vunpack.c.l.b16 %v2442
      %v2453 = vunpack.c.l.b16 %v2443
      %v2454 = vpack.c.b16 %v2451, %v2450
      %v2455 = vpack.c.b16 %v2453, %v2452
      %v2457 = vsel %vm457, %v2454, 0
      %v2460 = vsel %vm457, %v2455, 0
      %v2463 = vsel %vm464, %v2444, 0
      %v2466 = vsel %vm464, %v2445, 0
      %2468 = vmatprep.subr.bf16.mxu0 %v2466
      %2469 = vmatpush1.bf16.msra.mxu0 %v2463
      %2470 = vmatprep.subr.bf16.mxu0 0
      %2471 = vmatpush1.bf16.msra.mxu0 0
      %2472 = vmatprep.subr.bf16.mxu0 0
      %2473 = vmatpush1.bf16.msra.mxu0 0
      %2474 = vmatprep.subr.bf16.mxu0 0
      %2475 = vmatpush1.bf16.msra.mxu0 0
      %2476 = vmatprep.subr.bf16.mxu0 0
      %2477 = vmatpush1.bf16.msra.mxu0 0
      %2478 = vmatprep.subr.bf16.mxu0 0
      %2479 = vmatpush1.bf16.msra.mxu0 0
      %2480 = vmatprep.subr.bf16.mxu0 0
      %2481 = vmatpush1.bf16.msra.mxu0 0
      %2482 = vmatprep.subr.bf16.mxu0 0
      %2483 = vmatpush1.bf16.msra.mxu0 0
      %2484 = vmatprep.subr.bf16.mxu0 0
      %2485 = vmatpush1.bf16.msra.mxu0 0
      %2486 = vmatprep.subr.bf16.mxu0 0
      %2487 = vmatpush1.bf16.msra.mxu0 0
      %2488 = vmatprep.subr.bf16.mxu0 0
      %2489 = vmatpush1.bf16.msra.mxu0 0
      %2490 = vmatprep.subr.bf16.mxu0 0
      %2491 = vmatpush1.bf16.msra.mxu0 0
      %2492 = vmatprep.subr.bf16.mxu0 0
      %2493 = vmatpush1.bf16.msra.mxu0 0
      %2494 = vmatprep.subr.bf16.mxu0 0
      %2495 = vmatpush1.bf16.msra.mxu0 0
      %2496 = vmatprep.subr.bf16.mxu0 0
      %2497 = vmatpush1.bf16.msra.mxu0 0
      %2498 = vmatprep.subr.bf16.mxu0 0
      %2499 = vmatpush1.bf16.msra.mxu0 0
      %2500 = vmatprep.mubr.bf16.mxu0 0
      %2501 = vmatmul.mubr.bf16.gmra.mrb[0].mxu0 %v2457
      %v2502 = vpop.f32.mrb[0].mxu0
      %v2503 = vadd.f32 0.0, %v2502
      %v2504 = vpop.f32.mrb[0].mxu0
      %v2505 = vadd.f32 0.0, %v2504
      %v2506 = vpop.f32.mrb[0].mxu0
      %v2507 = vadd.f32 0.0, %v2506
      %v2508 = vpop.f32.mrb[0].mxu0
      %v2509 = vadd.f32 0.0, %v2508
      %2510 = vmatprep.mubr.bf16.mxu0 0
      %2511 = vmatmul.mubr.bf16.gmra.mrb[0].mxu0 %v2460
      %v2512 = vpop.f32.mrb[0].mxu0
      %v2513 = vadd.f32 0.0, %v2512
      %v2514 = vpop.f32.mrb[0].mxu0
      %v2515 = vadd.f32 0.0, %v2514
      %v2516 = vpop.f32.mrb[0].mxu0
      %v2517 = vadd.f32 0.0, %v2516
      %v2518 = vpop.f32.mrb[0].mxu0
      %v2519 = vadd.f32 0.0, %v2518
      %2520 = vdwg.mxu0
      %v2521 = vadd.f32 %v2409, %v2503
      %v2522 = vadd.f32 %v2410, %v2505
      %v2523 = vadd.f32 %v2411, %v2507
      %v2524 = vadd.f32 %v2412, %v2509
      %v2525 = vadd.f32 %v2413, %v2513
      %v2526 = vadd.f32 %v2414, %v2515
      %v2527 = vadd.f32 %v2415, %v2517
      %v2528 = vadd.f32 %v2416, %v2519
      %2529 = vrot.lane.b32.xlu0 %v392, 110
      %v2530 = vpop.permute.xlu0 %2529
      %2531 = vrot.lane.b32.xlu0 %v393, 110
      %v2532 = vpop.permute.xlu0 %2531
      %vm2533 = vcmp.lt.s32.totalorder %v423, 110
      %v2534 = vsel %vm2533, %v2530, %v2532
      %v2535 = vsel %vm2533, %v2532, %v2530
      %s2536 = scalar_lea.vmem %s1, 35
      %v2537 = vld [vmem:[%s2536] ss:$8 sm:$0x3]
      %v2539 = vlaneseq
      %v2540 = vshrl.u32 %v2539, 7
      %v2541 = vsub.s32 0, %v2540
      %v2542 = vrot.slane %v2537, %v2541
      %v2543 = vlaneseq
      %v2544 = vshrl.u32 %v2543, 7
      %v2545 = vsub.s32 1, %v2544
      %v2546 = vrot.slane %v2537, %v2545
      %v2549 = vmul.f32 %v2534, %v2542
      %v2550 = vmul.f32 %v2535, %v2546
      %s2551 = scalar_lea.vmem %s3, 304
      %v2552 = vld [vmem:[%s2551] sm:$0xf]
      %v2553 = vld [vmem:[%s2551 + $0x4] sm:$0xf]
      %v2554 = vld [vmem:[%s2551 + $0x8] sm:$0xf]
      %v2555 = vld [vmem:[%s2551 + $0xc] sm:$0xf]
      %v2556 = vpack.c.bf16 %v2549, %v2549
      %v2557 = vpack.c.bf16 %v2550, %v2550
      %v2562 = vunpack.c.l.b16 %v2552
      %v2563 = vunpack.c.l.b16 %v2553
      %v2564 = vunpack.c.l.b16 %v2554
      %v2565 = vunpack.c.l.b16 %v2555
      %v2566 = vpack.c.b16 %v2563, %v2562
      %v2567 = vpack.c.b16 %v2565, %v2564
      %v2569 = vsel %vm457, %v2566, 0
      %v2572 = vsel %vm457, %v2567, 0
      %v2575 = vsel %vm464, %v2556, 0
      %v2578 = vsel %vm464, %v2557, 0
      %2580 = vmatprep.subr.bf16.mxu0 %v2578
      %2581 = vmatpush1.bf16.msra.mxu0 %v2575
      %2582 = vmatprep.subr.bf16.mxu0 0
      %2583 = vmatpush1.bf16.msra.mxu0 0
      %2584 = vmatprep.subr.bf16.mxu0 0
      %2585 = vmatpush1.bf16.msra.mxu0 0
      %2586 = vmatprep.subr.bf16.mxu0 0
      %2587 = vmatpush1.bf16.msra.mxu0 0
      %2588 = vmatprep.subr.bf16.mxu0 0
      %2589 = vmatpush1.bf16.msra.mxu0 0
      %2590 = vmatprep.subr.bf16.mxu0 0
      %2591 = vmatpush1.bf16.msra.mxu0 0
      %2592 = vmatprep.subr.bf16.mxu0 0
      %2593 = vmatpush1.bf16.msra.mxu0 0
      %2594 = vmatprep.subr.bf16.mxu0 0
      %2595 = vmatpush1.bf16.msra.mxu0 0
      %2596 = vmatprep.subr.bf16.mxu0 0
      %2597 = vmatpush1.bf16.msra.mxu0 0
      %2598 = vmatprep.subr.bf16.mxu0 0
      %2599 = vmatpush1.bf16.msra.mxu0 0
      %2600 = vmatprep.subr.bf16.mxu0 0
      %2601 = vmatpush1.bf16.msra.mxu0 0
      %2602 = vmatprep.subr.bf16.mxu0 0
      %2603 = vmatpush1.bf16.msra.mxu0 0
      %2604 = vmatprep.subr.bf16.mxu0 0
      %2605 = vmatpush1.bf16.msra.mxu0 0
      %2606 = vmatprep.subr.bf16.mxu0 0
      %2607 = vmatpush1.bf16.msra.mxu0 0
      %2608 = vmatprep.subr.bf16.mxu0 0
      %2609 = vmatpush1.bf16.msra.mxu0 0
      %2610 = vmatprep.subr.bf16.mxu0 0
      %2611 = vmatpush1.bf16.msra.mxu0 0
      %2612 = vmatprep.mubr.bf16.mxu0 0
      %2613 = vmatmul.mubr.bf16.gmra.mrb[0].mxu0 %v2569
      %v2614 = vpop.f32.mrb[0].mxu0
      %v2615 = vadd.f32 0.0, %v2614
      %v2616 = vpop.f32.mrb[0].mxu0
      %v2617 = vadd.f32 0.0, %v2616
      %v2618 = vpop.f32.mrb[0].mxu0
      %v2619 = vadd.f32 0.0, %v2618
      %v2620 = vpop.f32.mrb[0].mxu0
      %v2621 = vadd.f32 0.0, %v2620
      %2622 = vmatprep.mubr.bf16.mxu0 0
      %2623 = vmatmul.mubr.bf16.gmra.mrb[0].mxu0 %v2572
      %v2624 = vpop.f32.mrb[0].mxu0
      %v2625 = vadd.f32 0.0, %v2624
      %v2626 = vpop.f32.mrb[0].mxu0
      %v2627 = vadd.f32 0.0, %v2626
      %v2628 = vpop.f32.mrb[0].mxu0
      %v2629 = vadd.f32 0.0, %v2628
      %v2630 = vpop.f32.mrb[0].mxu0
      %v2631 = vadd.f32 0.0, %v2630
      %2632 = vdwg.mxu0
      %v2633 = vadd.f32 %v2521, %v2615
      %v2634 = vadd.f32 %v2522, %v2617
      %v2635 = vadd.f32 %v2523, %v2619
      %v2636 = vadd.f32 %v2524, %v2621
      %v2637 = vadd.f32 %v2525, %v2625
      %v2638 = vadd.f32 %v2526, %v2627
      %v2639 = vadd.f32 %v2527, %v2629
      %v2640 = vadd.f32 %v2528, %v2631
      %2641 = vrot.lane.b32.xlu0 %v392, 98
      %v2642 = vpop.permute.xlu0 %2641
      %2643 = vrot.lane.b32.xlu0 %v393, 98
      %v2644 = vpop.permute.xlu0 %2643
      %vm2645 = vcmp.lt.s32.totalorder %v423, 98
      %v2646 = vsel %vm2645, %v2642, %v2644
      %v2647 = vsel %vm2645, %v2644, %v2642
      %s2648 = scalar_lea.vmem %s1, 36
      %v2649 = vld [vmem:[%s2648] ss:$8 sm:$0x3]
      %v2651 = vlaneseq
      %v2652 = vshrl.u32 %v2651, 7
      %v2653 = vsub.s32 0, %v2652
      %v2654 = vrot.slane %v2649, %v2653
      %v2655 = vlaneseq
      %v2656 = vshrl.u32 %v2655, 7
      %v2657 = vsub.s32 1, %v2656
      %v2658 = vrot.slane %v2649, %v2657
      %v2661 = vmul.f32 %v2646, %v2654
      %v2662 = vmul.f32 %v2647, %v2658
      %s2663 = scalar_lea.vmem %s3, 320
      %v2664 = vld [vmem:[%s2663] sm:$0xf]
      %v2665 = vld [vmem:[%s2663 + $0x4] sm:$0xf]
      %v2666 = vld [vmem:[%s2663 + $0x8] sm:$0xf]
      %v2667 = vld [vmem:[%s2663 + $0xc] sm:$0xf]
      %v2668 = vpack.c.bf16 %v2661, %v2661
      %v2669 = vpack.c.bf16 %v2662, %v2662
      %v2674 = vunpack.c.l.b16 %v2664
      %v2675 = vunpack.c.l.b16 %v2665
      %v2676 = vunpack.c.l.b16 %v2666
      %v2677 = vunpack.c.l.b16 %v2667
      %v2678 = vpack.c.b16 %v2675, %v2674
      %v2679 = vpack.c.b16 %v2677, %v2676
      %v2681 = vsel %vm457, %v2678, 0
      %v2684 = vsel %vm457, %v2679, 0
      %v2687 = vsel %vm464, %v2668, 0
      %v2690 = vsel %vm464, %v2669, 0
      %2692 = vmatprep.subr.bf16.mxu0 %v2690
      %2693 = vmatpush1.bf16.msra.mxu0 %v2687
      %2694 = vmatprep.subr.bf16.mxu0 0
      %2695 = vmatpush1.bf16.msra.mxu0 0
      %2696 = vmatprep.subr.bf16.mxu0 0
      %2697 = vmatpush1.bf16.msra.mxu0 0
      %2698 = vmatprep.subr.bf16.mxu0 0
      %2699 = vmatpush1.bf16.msra.mxu0 0
      %2700 = vmatprep.subr.bf16.mxu0 0
      %2701 = vmatpush1.bf16.msra.mxu0 0
      %2702 = vmatprep.subr.bf16.mxu0 0
      %2703 = vmatpush1.bf16.msra.mxu0 0
      %2704 = vmatprep.subr.bf16.mxu0 0
      %2705 = vmatpush1.bf16.msra.mxu0 0
      %2706 = vmatprep.subr.bf16.mxu0 0
      %2707 = vmatpush1.bf16.msra.mxu0 0
      %2708 = vmatprep.subr.bf16.mxu0 0
      %2709 = vmatpush1.bf16.msra.mxu0 0
      %2710 = vmatprep.subr.bf16.mxu0 0
      %2711 = vmatpush1.bf16.msra.mxu0 0
      %2712 = vmatprep.subr.bf16.mxu0 0
      %2713 = vmatpush1.bf16.msra.mxu0 0
      %2714 = vmatprep.subr.bf16.mxu0 0
      %2715 = vmatpush1.bf16.msra.mxu0 0
      %2716 = vmatprep.subr.bf16.mxu0 0
      %2717 = vmatpush1.bf16.msra.mxu0 0
      %2718 = vmatprep.subr.bf16.mxu0 0
      %2719 = vmatpush1.bf16.msra.mxu0 0
      %2720 = vmatprep.subr.bf16.mxu0 0
      %2721 = vmatpush1.bf16.msra.mxu0 0
      %2722 = vmatprep.subr.bf16.mxu0 0
      %2723 = vmatpush1.bf16.msra.mxu0 0
      %2724 = vmatprep.mubr.bf16.mxu0 0
      %2725 = vmatmul.mubr.bf16.gmra.mrb[0].mxu0 %v2681
      %v2726 = vpop.f32.mrb[0].mxu0
      %v2727 = vadd.f32 0.0, %v2726
      %v2728 = vpop.f32.mrb[0].mxu0
      %v2729 = vadd.f32 0.0, %v2728
      %v2730 = vpop.f32.mrb[0].mxu0
      %v2731 = vadd.f32 0.0, %v2730
      %v2732 = vpop.f32.mrb[0].mxu0
      %v2733 = vadd.f32 0.0, %v2732
      %2734 = vmatprep.mubr.bf16.mxu0 0
      %2735 = vmatmul.mubr.bf16.gmra.mrb[0].mxu0 %v2684
      %v2736 = vpop.f32.mrb[0].mxu0
      %v2737 = vadd.f32 0.0, %v2736
      %v2738 = vpop.f32.mrb[0].mxu0
      %v2739 = vadd.f32 0.0, %v2738
      %v2740 = vpop.f32.mrb[0].mxu0
      %v2741 = vadd.f32 0.0, %v2740
      %v2742 = vpop.f32.mrb[0].mxu0
      %v2743 = vadd.f32 0.0, %v2742
      %2744 = vdwg.mxu0
      %v2745 = vadd.f32 %v2633, %v2727
      %v2746 = vadd.f32 %v2634, %v2729
      %v2747 = vadd.f32 %v2635, %v2731
      %v2748 = vadd.f32 %v2636, %v2733
      %v2749 = vadd.f32 %v2637, %v2737
      %v2750 = vadd.f32 %v2638, %v2739
      %v2751 = vadd.f32 %v2639, %v2741
      %v2752 = vadd.f32 %v2640, %v2743
      %2753 = vrot.lane.b32.xlu0 %v392, 97
      %v2754 = vpop.permute.xlu0 %2753
      %2755 = vrot.lane.b32.xlu0 %v393, 97
      %v2756 = vpop.permute.xlu0 %2755
      %vm2757 = vcmp.lt.s32.totalorder %v423, 97
      %v2758 = vsel %vm2757, %v2754, %v2756
      %v2759 = vsel %vm2757, %v2756, %v2754
      %s2760 = scalar_lea.vmem %s1, 37
      %v2761 = vld [vmem:[%s2760] ss:$8 sm:$0x3]
      %v2763 = vlaneseq
      %v2764 = vshrl.u32 %v2763, 7
      %v2765 = vsub.s32 0, %v2764
      %v2766 = vrot.slane %v2761, %v2765
      %v2767 = vlaneseq
      %v2768 = vshrl.u32 %v2767, 7
      %v2769 = vsub.s32 1, %v2768
      %v2770 = vrot.slane %v2761, %v2769
      %v2773 = vmul.f32 %v2758, %v2766
      %v2774 = vmul.f32 %v2759, %v2770
      %s2775 = scalar_lea.vmem %s3, 336
      %v2776 = vld [vmem:[%s2775] sm:$0xf]
      %v2777 = vld [vmem:[%s2775 + $0x4] sm:$0xf]
      %v2778 = vld [vmem:[%s2775 + $0x8] sm:$0xf]
      %v2779 = vld [vmem:[%s2775 + $0xc] sm:$0xf]
      %v2780 = vpack.c.bf16 %v2773, %v2773
      %v2781 = vpack.c.bf16 %v2774, %v2774
      %v2786 = vunpack.c.l.b16 %v2776
      %v2787 = vunpack.c.l.b16 %v2777
      %v2788 = vunpack.c.l.b16 %v2778
      %v2789 = vunpack.c.l.b16 %v2779
      %v2790 = vpack.c.b16 %v2787, %v2786
      %v2791 = vpack.c.b16 %v2789, %v2788
      %v2793 = vsel %vm457, %v2790, 0
      %v2796 = vsel %vm457, %v2791, 0
      %v2799 = vsel %vm464, %v2780, 0
      %v2802 = vsel %vm464, %v2781, 0
      %2804 = vmatprep.subr.bf16.mxu0 %v2802
      %2805 = vmatpush1.bf16.msra.mxu0 %v2799
      %2806 = vmatprep.subr.bf16.mxu0 0
      %2807 = vmatpush1.bf16.msra.mxu0 0
      %2808 = vmatprep.subr.bf16.mxu0 0
      %2809 = vmatpush1.bf16.msra.mxu0 0
      %2810 = vmatprep.subr.bf16.mxu0 0
      %2811 = vmatpush1.bf16.msra.mxu0 0
      %2812 = vmatprep.subr.bf16.mxu0 0
      %2813 = vmatpush1.bf16.msra.mxu0 0
      %2814 = vmatprep.subr.bf16.mxu0 0
      %2815 = vmatpush1.bf16.msra.mxu0 0
      %2816 = vmatprep.subr.bf16.mxu0 0
      %2817 = vmatpush1.bf16.msra.mxu0 0
      %2818 = vmatprep.subr.bf16.mxu0 0
      %2819 = vmatpush1.bf16.msra.mxu0 0
      %2820 = vmatprep.subr.bf16.mxu0 0
      %2821 = vmatpush1.bf16.msra.mxu0 0
      %2822 = vmatprep.subr.bf16.mxu0 0
      %2823 = vmatpush1.bf16.msra.mxu0 0
      %2824 = vmatprep.subr.bf16.mxu0 0
      %2825 = vmatpush1.bf16.msra.mxu0 0
      %2826 = vmatprep.subr.bf16.mxu0 0
      %2827 = vmatpush1.bf16.msra.mxu0 0
      %2828 = vmatprep.subr.bf16.mxu0 0
      %2829 = vmatpush1.bf16.msra.mxu0 0
      %2830 = vmatprep.subr.bf16.mxu0 0
      %2831 = vmatpush1.bf16.msra.mxu0 0
      %2832 = vmatprep.subr.bf16.mxu0 0
      %2833 = vmatpush1.bf16.msra.mxu0 0
      %2834 = vmatprep.subr.bf16.mxu0 0
      %2835 = vmatpush1.bf16.msra.mxu0 0
      %2836 = vmatprep.mubr.bf16.mxu0 0
      %2837 = vmatmul.mubr.bf16.gmra.mrb[0].mxu0 %v2793
      %v2838 = vpop.f32.mrb[0].mxu0
      %v2839 = vadd.f32 0.0, %v2838
      %v2840 = vpop.f32.mrb[0].mxu0
      %v2841 = vadd.f32 0.0, %v2840
      %v2842 = vpop.f32.mrb[0].mxu0
      %v2843 = vadd.f32 0.0, %v2842
      %v2844 = vpop.f32.mrb[0].mxu0
      %v2845 = vadd.f32 0.0, %v2844
      %2846 = vmatprep.mubr.bf16.mxu0 0
      %2847 = vmatmul.mubr.bf16.gmra.mrb[0].mxu0 %v2796
      %v2848 = vpop.f32.mrb[0].mxu0
      %v2849 = vadd.f32 0.0, %v2848
      %v2850 = vpop.f32.mrb[0].mxu0
      %v2851 = vadd.f32 0.0, %v2850
      %v2852 = vpop.f32.mrb[0].mxu0
      %v2853 = vadd.f32 0.0, %v2852
      %v2854 = vpop.f32.mrb[0].mxu0
      %v2855 = vadd.f32 0.0, %v2854
      %2856 = vdwg.mxu0
      %v2857 = vadd.f32 %v2745, %v2839
      %v2858 = vadd.f32 %v2746, %v2841
      %v2859 = vadd.f32 %v2747, %v2843
      %v2860 = vadd.f32 %v2748, %v2845
      %v2861 = vadd.f32 %v2749, %v2849
      %v2862 = vadd.f32 %v2750, %v2851
      %v2863 = vadd.f32 %v2751, %v2853
      %v2864 = vadd.f32 %v2752, %v2855
      %2865 = vrot.lane.b32.xlu0 %v392, 96
      %v2866 = vpop.permute.xlu0 %2865
      %2867 = vrot.lane.b32.xlu0 %v393, 96
      %v2868 = vpop.permute.xlu0 %2867
      %vm2869 = vcmp.lt.s32.totalorder %v423, 96
      %v2870 = vsel %vm2869, %v2866, %v2868
      %v2871 = vsel %vm2869, %v2868, %v2866
      %s2872 = scalar_lea.vmem %s1, 38
      %v2873 = vld [vmem:[%s2872] ss:$8 sm:$0x3]
      %v2875 = vlaneseq
      %v2876 = vshrl.u32 %v2875, 7
      %v2877 = vsub.s32 0, %v2876
      %v2878 = vrot.slane %v2873, %v2877
      %v2879 = vlaneseq
      %v2880 = vshrl.u32 %v2879, 7
      %v2881 = vsub.s32 1, %v2880
      %v2882 = vrot.slane %v2873, %v2881
      %v2885 = vmul.f32 %v2870, %v2878
      %v2886 = vmul.f32 %v2871, %v2882
      %s2887 = scalar_lea.vmem %s3, 352
      %v2888 = vld [vmem:[%s2887] sm:$0xf]
      %v2889 = vld [vmem:[%s2887 + $0x4] sm:$0xf]
      %v2890 = vld [vmem:[%s2887 + $0x8] sm:$0xf]
      %v2891 = vld [vmem:[%s2887 + $0xc] sm:$0xf]
      %v2892 = vpack.c.bf16 %v2885, %v2885
      %v2893 = vpack.c.bf16 %v2886, %v2886
      %v2898 = vunpack.c.l.b16 %v2888
      %v2899 = vunpack.c.l.b16 %v2889
      %v2900 = vunpack.c.l.b16 %v2890
      %v2901 = vunpack.c.l.b16 %v2891
      %v2902 = vpack.c.b16 %v2899, %v2898
      %v2903 = vpack.c.b16 %v2901, %v2900
      %v2905 = vsel %vm457, %v2902, 0
      %v2908 = vsel %vm457, %v2903, 0
      %v2911 = vsel %vm464, %v2892, 0
      %v2914 = vsel %vm464, %v2893, 0
      %2916 = vmatprep.subr.bf16.mxu0 %v2914
      %2917 = vmatpush1.bf16.msra.mxu0 %v2911
      %2918 = vmatprep.subr.bf16.mxu0 0
      %2919 = vmatpush1.bf16.msra.mxu0 0
      %2920 = vmatprep.subr.bf16.mxu0 0
      %2921 = vmatpush1.bf16.msra.mxu0 0
      %2922 = vmatprep.subr.bf16.mxu0 0
      %2923 = vmatpush1.bf16.msra.mxu0 0
      %2924 = vmatprep.subr.bf16.mxu0 0
      %2925 = vmatpush1.bf16.msra.mxu0 0
      %2926 = vmatprep.subr.bf16.mxu0 0
      %2927 = vmatpush1.bf16.msra.mxu0 0
      %2928 = vmatprep.subr.bf16.mxu0 0
      %2929 = vmatpush1.bf16.msra.mxu0 0
      %2930 = vmatprep.subr.bf16.mxu0 0
      %2931 = vmatpush1.bf16.msra.mxu0 0
      %2932 = vmatprep.subr.bf16.mxu0 0
      %2933 = vmatpush1.bf16.msra.mxu0 0
      %2934 = vmatprep.subr.bf16.mxu0 0
      %2935 = vmatpush1.bf16.msra.mxu0 0
      %2936 = vmatprep.subr.bf16.mxu0 0
      %2937 = vmatpush1.bf16.msra.mxu0 0
      %2938 = vmatprep.subr.bf16.mxu0 0
      %2939 = vmatpush1.bf16.msra.mxu0 0
      %2940 = vmatprep.subr.bf16.mxu0 0
      %2941 = vmatpush1.bf16.msra.mxu0 0
      %2942 = vmatprep.subr.bf16.mxu0 0
      %2943 = vmatpush1.bf16.msra.mxu0 0
      %2944 = vmatprep.subr.bf16.mxu0 0
      %2945 = vmatpush1.bf16.msra.mxu0 0
      %2946 = vmatprep.subr.bf16.mxu0 0
      %2947 = vmatpush1.bf16.msra.mxu0 0
      %2948 = vmatprep.mubr.bf16.mxu0 0
      %2949 = vmatmul.mubr.bf16.gmra.mrb[0].mxu0 %v2905
      %v2950 = vpop.f32.mrb[0].mxu0
      %v2951 = vadd.f32 0.0, %v2950
      %v2952 = vpop.f32.mrb[0].mxu0
      %v2953 = vadd.f32 0.0, %v2952
      %v2954 = vpop.f32.mrb[0].mxu0
      %v2955 = vadd.f32 0.0, %v2954
      %v2956 = vpop.f32.mrb[0].mxu0
      %v2957 = vadd.f32 0.0, %v2956
      %2958 = vmatprep.mubr.bf16.mxu0 0
      %2959 = vmatmul.mubr.bf16.gmra.mrb[0].mxu0 %v2908
      %v2960 = vpop.f32.mrb[0].mxu0
      %v2961 = vadd.f32 0.0, %v2960
      %v2962 = vpop.f32.mrb[0].mxu0
      %v2963 = vadd.f32 0.0, %v2962
      %v2964 = vpop.f32.mrb[0].mxu0
      %v2965 = vadd.f32 0.0, %v2964
      %v2966 = vpop.f32.mrb[0].mxu0
      %v2967 = vadd.f32 0.0, %v2966
      %2968 = vdwg.mxu0
      %v2969 = vadd.f32 %v2857, %v2951
      %v2970 = vadd.f32 %v2858, %v2953
      %v2971 = vadd.f32 %v2859, %v2955
      %v2972 = vadd.f32 %v2860, %v2957
      %v2973 = vadd.f32 %v2861, %v2961
      %v2974 = vadd.f32 %v2862, %v2963
      %v2975 = vadd.f32 %v2863, %v2965
      %v2976 = vadd.f32 %v2864, %v2967
      %2977 = vrot.lane.b32.xlu0 %v392, 95
      %v2978 = vpop.permute.xlu0 %2977
      %2979 = vrot.lane.b32.xlu0 %v393, 95
      %v2980 = vpop.permute.xlu0 %2979
      %vm2981 = vcmp.lt.s32.totalorder %v423, 95
      %v2982 = vsel %vm2981, %v2978, %v2980
      %v2983 = vsel %vm2981, %v2980, %v2978
      %s2984 = scalar_lea.vmem %s1, 39
      %v2985 = vld [vmem:[%s2984] ss:$8 sm:$0x3]
      %v2987 = vlaneseq
      %v2988 = vshrl.u32 %v2987, 7
      %v2989 = vsub.s32 0, %v2988
      %v2990 = vrot.slane %v2985, %v2989
      %v2991 = vlaneseq
      %v2992 = vshrl.u32 %v2991, 7
      %v2993 = vsub.s32 1, %v2992
      %v2994 = vrot.slane %v2985, %v2993
      %v2997 = vmul.f32 %v2982, %v2990
      %v2998 = vmul.f32 %v2983, %v2994
      %s2999 = scalar_lea.vmem %s3, 368
      %v3000 = vld [vmem:[%s2999] sm:$0xf]
      %v3001 = vld [vmem:[%s2999 + $0x4] sm:$0xf]
      %v3002 = vld [vmem:[%s2999 + $0x8] sm:$0xf]
      %v3003 = vld [vmem:[%s2999 + $0xc] sm:$0xf]
      %v3004 = vpack.c.bf16 %v2997, %v2997
      %v3005 = vpack.c.bf16 %v2998, %v2998
      %v3010 = vunpack.c.l.b16 %v3000
      %v3011 = vunpack.c.l.b16 %v3001
      %v3012 = vunpack.c.l.b16 %v3002
      %v3013 = vunpack.c.l.b16 %v3003
      %v3014 = vpack.c.b16 %v3011, %v3010
      %v3015 = vpack.c.b16 %v3013, %v3012
      %v3017 = vsel %vm457, %v3014, 0
      %v3020 = vsel %vm457, %v3015, 0
      %v3023 = vsel %vm464, %v3004, 0
      %v3026 = vsel %vm464, %v3005, 0
      %3028 = vmatprep.subr.bf16.mxu0 %v3026
      %3029 = vmatpush1.bf16.msra.mxu0 %v3023
      %3030 = vmatprep.subr.bf16.mxu0 0
      %3031 = vmatpush1.bf16.msra.mxu0 0
      %3032 = vmatprep.subr.bf16.mxu0 0
      %3033 = vmatpush1.bf16.msra.mxu0 0
      %3034 = vmatprep.subr.bf16.mxu0 0
      %3035 = vmatpush1.bf16.msra.mxu0 0
      %3036 = vmatprep.subr.bf16.mxu0 0
      %3037 = vmatpush1.bf16.msra.mxu0 0
      %3038 = vmatprep.subr.bf16.mxu0 0
      %3039 = vmatpush1.bf16.msra.mxu0 0
      %3040 = vmatprep.subr.bf16.mxu0 0
      %3041 = vmatpush1.bf16.msra.mxu0 0
      %3042 = vmatprep.subr.bf16.mxu0 0
      %3043 = vmatpush1.bf16.msra.mxu0 0
      %3044 = vmatprep.subr.bf16.mxu0 0
      %3045 = vmatpush1.bf16.msra.mxu0 0
      %3046 = vmatprep.subr.bf16.mxu0 0
      %3047 = vmatpush1.bf16.msra.mxu0 0
      %3048 = vmatprep.subr.bf16.mxu0 0
      %3049 = vmatpush1.bf16.msra.mxu0 0
      %3050 = vmatprep.subr.bf16.mxu0 0
      %3051 = vmatpush1.bf16.msra.mxu0 0
      %3052 = vmatprep.subr.bf16.mxu0 0
      %3053 = vmatpush1.bf16.msra.mxu0 0
      %3054 = vmatprep.subr.bf16.mxu0 0
      %3055 = vmatpush1.bf16.msra.mxu0 0
      %3056 = vmatprep.subr.bf16.mxu0 0
      %3057 = vmatpush1.bf16.msra.mxu0 0
      %3058 = vmatprep.subr.bf16.mxu0 0
      %3059 = vmatpush1.bf16.msra.mxu0 0
      %3060 = vmatprep.mubr.bf16.mxu0 0
      %3061 = vmatmul.mubr.bf16.gmra.mrb[0].mxu0 %v3017
      %v3062 = vpop.f32.mrb[0].mxu0
      %v3063 = vadd.f32 0.0, %v3062
      %v3064 = vpop.f32.mrb[0].mxu0
      %v3065 = vadd.f32 0.0, %v3064
      %v3066 = vpop.f32.mrb[0].mxu0
      %v3067 = vadd.f32 0.0, %v3066
      %v3068 = vpop.f32.mrb[0].mxu0
      %v3069 = vadd.f32 0.0, %v3068
      %3070 = vmatprep.mubr.bf16.mxu0 0
      %3071 = vmatmul.mubr.bf16.gmra.mrb[0].mxu0 %v3020
      %v3072 = vpop.f32.mrb[0].mxu0
      %v3073 = vadd.f32 0.0, %v3072
      %v3074 = vpop.f32.mrb[0].mxu0
      %v3075 = vadd.f32 0.0, %v3074
      %v3076 = vpop.f32.mrb[0].mxu0
      %v3077 = vadd.f32 0.0, %v3076
      %v3078 = vpop.f32.mrb[0].mxu0
      %v3079 = vadd.f32 0.0, %v3078
      %3080 = vdwg.mxu0
      %v3081 = vadd.f32 %v2969, %v3063
      %v3082 = vadd.f32 %v2970, %v3065
      %v3083 = vadd.f32 %v2971, %v3067
      %v3084 = vadd.f32 %v2972, %v3069
      %v3085 = vadd.f32 %v2973, %v3073
      %v3086 = vadd.f32 %v2974, %v3075
      %v3087 = vadd.f32 %v2975, %v3077
      %v3088 = vadd.f32 %v2976, %v3079
      %3089 = vrot.lane.b32.xlu0 %v392, 94
      %v3090 = vpop.permute.xlu0 %3089
      %3091 = vrot.lane.b32.xlu0 %v393, 94
      %v3092 = vpop.permute.xlu0 %3091
      %vm3093 = vcmp.lt.s32.totalorder %v423, 94
      %v3094 = vsel %vm3093, %v3090, %v3092
      %v3095 = vsel %vm3093, %v3092, %v3090
      %s3096 = scalar_lea.vmem %s1, 48
      %v3097 = vld [vmem:[%s3096] ss:$8 sm:$0x3]
      %v3099 = vlaneseq
      %v3100 = vshrl.u32 %v3099, 7
      %v3101 = vsub.s32 0, %v3100
      %v3102 = vrot.slane %v3097, %v3101
      %v3103 = vlaneseq
      %v3104 = vshrl.u32 %v3103, 7
      %v3105 = vsub.s32 1, %v3104
      %v3106 = vrot.slane %v3097, %v3105
      %v3109 = vmul.f32 %v3094, %v3102
      %v3110 = vmul.f32 %v3095, %v3106
      %s3111 = scalar_lea.vmem %s3, 384
      %v3112 = vld [vmem:[%s3111] sm:$0xf]
      %v3113 = vld [vmem:[%s3111 + $0x4] sm:$0xf]
      %v3114 = vld [vmem:[%s3111 + $0x8] sm:$0xf]
      %v3115 = vld [vmem:[%s3111 + $0xc] sm:$0xf]
      %v3116 = vpack.c.bf16 %v3109, %v3109
      %v3117 = vpack.c.bf16 %v3110, %v3110
      %v3122 = vunpack.c.l.b16 %v3112
      %v3123 = vunpack.c.l.b16 %v3113
      %v3124 = vunpack.c.l.b16 %v3114
      %v3125 = vunpack.c.l.b16 %v3115
      %v3126 = vpack.c.b16 %v3123, %v3122
      %v3127 = vpack.c.b16 %v3125, %v3124
      %v3129 = vsel %vm457, %v3126, 0
      %v3132 = vsel %vm457, %v3127, 0
      %v3135 = vsel %vm464, %v3116, 0
      %v3138 = vsel %vm464, %v3117, 0
      %3140 = vmatprep.subr.bf16.mxu0 %v3138
      %3141 = vmatpush1.bf16.msra.mxu0 %v3135
      %3142 = vmatprep.subr.bf16.mxu0 0
      %3143 = vmatpush1.bf16.msra.mxu0 0
      %3144 = vmatprep.subr.bf16.mxu0 0
      %3145 = vmatpush1.bf16.msra.mxu0 0
      %3146 = vmatprep.subr.bf16.mxu0 0
      %3147 = vmatpush1.bf16.msra.mxu0 0
      %3148 = vmatprep.subr.bf16.mxu0 0
      %3149 = vmatpush1.bf16.msra.mxu0 0
      %3150 = vmatprep.subr.bf16.mxu0 0
      %3151 = vmatpush1.bf16.msra.mxu0 0
      %3152 = vmatprep.subr.bf16.mxu0 0
      %3153 = vmatpush1.bf16.msra.mxu0 0
      %3154 = vmatprep.subr.bf16.mxu0 0
      %3155 = vmatpush1.bf16.msra.mxu0 0
      %3156 = vmatprep.subr.bf16.mxu0 0
      %3157 = vmatpush1.bf16.msra.mxu0 0
      %3158 = vmatprep.subr.bf16.mxu0 0
      %3159 = vmatpush1.bf16.msra.mxu0 0
      %3160 = vmatprep.subr.bf16.mxu0 0
      %3161 = vmatpush1.bf16.msra.mxu0 0
      %3162 = vmatprep.subr.bf16.mxu0 0
      %3163 = vmatpush1.bf16.msra.mxu0 0
      %3164 = vmatprep.subr.bf16.mxu0 0
      %3165 = vmatpush1.bf16.msra.mxu0 0
      %3166 = vmatprep.subr.bf16.mxu0 0
      %3167 = vmatpush1.bf16.msra.mxu0 0
      %3168 = vmatprep.subr.bf16.mxu0 0
      %3169 = vmatpush1.bf16.msra.mxu0 0
      %3170 = vmatprep.subr.bf16.mxu0 0
      %3171 = vmatpush1.bf16.msra.mxu0 0
      %3172 = vmatprep.mubr.bf16.mxu0 0
      %3173 = vmatmul.mubr.bf16.gmra.mrb[0].mxu0 %v3129
      %v3174 = vpop.f32.mrb[0].mxu0
      %v3175 = vadd.f32 0.0, %v3174
      %v3176 = vpop.f32.mrb[0].mxu0
      %v3177 = vadd.f32 0.0, %v3176
      %v3178 = vpop.f32.mrb[0].mxu0
      %v3179 = vadd.f32 0.0, %v3178
      %v3180 = vpop.f32.mrb[0].mxu0
      %v3181 = vadd.f32 0.0, %v3180
      %3182 = vmatprep.mubr.bf16.mxu0 0
      %3183 = vmatmul.mubr.bf16.gmra.mrb[0].mxu0 %v3132
      %v3184 = vpop.f32.mrb[0].mxu0
      %v3185 = vadd.f32 0.0, %v3184
      %v3186 = vpop.f32.mrb[0].mxu0
      %v3187 = vadd.f32 0.0, %v3186
      %v3188 = vpop.f32.mrb[0].mxu0
      %v3189 = vadd.f32 0.0, %v3188
      %v3190 = vpop.f32.mrb[0].mxu0
      %v3191 = vadd.f32 0.0, %v3190
      %3192 = vdwg.mxu0
      %v3193 = vadd.f32 %v3081, %v3175
      %v3194 = vadd.f32 %v3082, %v3177
      %v3195 = vadd.f32 %v3083, %v3179
      %v3196 = vadd.f32 %v3084, %v3181
      %v3197 = vadd.f32 %v3085, %v3185
      %v3198 = vadd.f32 %v3086, %v3187
      %v3199 = vadd.f32 %v3087, %v3189
      %v3200 = vadd.f32 %v3088, %v3191
      %vm3201 = vcmp.gt.f32.partialorder %v3193, 0.0
      %vm3202 = vcmp.gt.f32.partialorder %v3194, 0.0
      %vm3203 = vcmp.gt.f32.partialorder %v3195, 0.0
      %vm3204 = vcmp.gt.f32.partialorder %v3196, 0.0
      %vm3205 = vcmp.gt.f32.partialorder %v3197, 0.0
      %vm3206 = vcmp.gt.f32.partialorder %v3198, 0.0
      %vm3207 = vcmp.gt.f32.partialorder %v3199, 0.0
      %vm3208 = vcmp.gt.f32.partialorder %v3200, 0.0
      %v3209 = vmul.f32 %v3193, 0.01
      %v3210 = vmul.f32 %v3194, 0.01
      %v3211 = vmul.f32 %v3195, 0.01
      %v3212 = vmul.f32 %v3196, 0.01
      %v3213 = vmul.f32 %v3197, 0.01
      %v3214 = vmul.f32 %v3198, 0.01
      %v3215 = vmul.f32 %v3199, 0.01
      %v3216 = vmul.f32 %v3200, 0.01
      %v3217 = vsel %vm3201, %v3193, %v3209
      %v3218 = vsel %vm3202, %v3194, %v3210
      %v3219 = vsel %vm3203, %v3195, %v3211
      %v3220 = vsel %vm3204, %v3196, %v3212
      %v3221 = vsel %vm3205, %v3197, %v3213
      %v3222 = vsel %vm3206, %v3198, %v3214
      %v3223 = vsel %vm3207, %v3199, %v3215
      %v3224 = vsel %vm3208, %v3200, %v3216
      %v3225 = vld [vmem:[%s6] sm:$0xff]
      %v3226 = vld [vmem:[%s6 + $0x8] sm:$0xff]
      %v3227 = vld [vmem:[%s6 + $0x10] sm:$0xff]
      %v3228 = vld [vmem:[%s6 + $0x18] sm:$0xff]
      %v3229 = vld [vmem:[%s6 + $0x20] sm:$0xff]
      %v3230 = vld [vmem:[%s6 + $0x28] sm:$0xff]
      %v3231 = vld [vmem:[%s6 + $0x30] sm:$0xff]
      %v3232 = vld [vmem:[%s6 + $0x38] sm:$0xff]
      %3234 = vset.pattern.permute.xlu0 0
      %3235 = vperm.xlu0 %3234, %v3225
      %v3236 = vpop.permute.xlu0 %3235
      %3239 = vset.pattern.permute.xlu0 0
      %3240 = vperm.xlu0 %3239, %v3226
      %v3241 = vpop.permute.xlu0 %3240
      %3244 = vset.pattern.permute.xlu0 0
      %3245 = vperm.xlu0 %3244, %v3227
      %v3246 = vpop.permute.xlu0 %3245
      %3249 = vset.pattern.permute.xlu0 0
      %3250 = vperm.xlu0 %3249, %v3228
      %v3251 = vpop.permute.xlu0 %3250
      %3254 = vset.pattern.permute.xlu0 0
      %3255 = vperm.xlu0 %3254, %v3229
      %v3256 = vpop.permute.xlu0 %3255
      %3259 = vset.pattern.permute.xlu0 0
      %3260 = vperm.xlu0 %3259, %v3230
      %v3261 = vpop.permute.xlu0 %3260
      %3264 = vset.pattern.permute.xlu0 0
      %3265 = vperm.xlu0 %3264, %v3231
      %v3266 = vpop.permute.xlu0 %3265
      %3269 = vset.pattern.permute.xlu0 0
      %3270 = vperm.xlu0 %3269, %v3232
      %v3271 = vpop.permute.xlu0 %3270
      %3273 = vrot.lane.b32.xlu0 %v3217, 17
      %v3274 = vpop.permute.xlu0 %3273
      %3275 = vrot.lane.b32.xlu0 %v3219, 17
      %v3276 = vpop.permute.xlu0 %3275
      %3277 = vrot.lane.b32.xlu0 %v3221, 17
      %v3278 = vpop.permute.xlu0 %3277
      %3279 = vrot.lane.b32.xlu0 %v3223, 17
      %v3280 = vpop.permute.xlu0 %3279
      %3281 = vrot.lane.b32.xlu0 %v3218, 17
      %v3282 = vpop.permute.xlu0 %3281
      %3283 = vrot.lane.b32.xlu0 %v3220, 17
      %v3284 = vpop.permute.xlu0 %3283
      %3285 = vrot.lane.b32.xlu0 %v3222, 17
      %v3286 = vpop.permute.xlu0 %3285
      %3287 = vrot.lane.b32.xlu0 %v3224, 17
      %v3288 = vpop.permute.xlu0 %3287
      %v3289 = vsel %vm1096, %v3274, %v3282
      %v3290 = vsel %vm1096, %v3276, %v3284
      %v3291 = vsel %vm1096, %v3278, %v3286
      %v3292 = vsel %vm1096, %v3280, %v3288
      %v3293 = vsel %vm1096, %v3282, %v3274
      %v3294 = vsel %vm1096, %v3284, %v3276
      %v3295 = vsel %vm1096, %v3286, %v3278
      %v3296 = vsel %vm1096, %v3288, %v3280
      %v3297 = vld [vmem:[%s2] ss:$8 sm:$0x3]
      %v3299 = vlaneseq
      %v3300 = vshrl.u32 %v3299, 7
      %v3301 = vsub.s32 0, %v3300
      %v3302 = vrot.slane %v3297, %v3301
      %v3303 = vlaneseq
      %v3304 = vshrl.u32 %v3303, 7
      %v3305 = vsub.s32 1, %v3304
      %v3306 = vrot.slane %v3297, %v3305
      %v3309 = vmul.f32 %v3293, %v3302
      %v3310 = vmul.f32 %v3289, %v3306
      %v3311 = vmul.f32 %v3294, %v3302
      %v3312 = vmul.f32 %v3290, %v3306
      %v3313 = vmul.f32 %v3295, %v3302
      %v3314 = vmul.f32 %v3291, %v3306
      %v3315 = vmul.f32 %v3296, %v3302
      %v3316 = vmul.f32 %v3292, %v3306
      %v3317 = vld [vmem:[%s5] sm:$0xf]
      %v3318 = vld [vmem:[%s5 + $0x4] sm:$0xf]
      %v3319 = vld [vmem:[%s5 + $0x8] sm:$0xf]
      %v3320 = vld [vmem:[%s5 + $0xc] sm:$0xf]
      %v3321 = vld [vmem:[%s5 + $0x10] sm:$0xf]
      %v3322 = vld [vmem:[%s5 + $0x14] sm:$0xf]
      %v3323 = vld [vmem:[%s5 + $0x18] sm:$0xf]
      %v3324 = vld [vmem:[%s5 + $0x1c] sm:$0xf]
      %v3325 = vpack.c.bf16 %v3311, %v3309
      %v3326 = vpack.c.bf16 %v3312, %v3310
      %v3327 = vpack.c.bf16 %v3315, %v3313
      %v3328 = vpack.c.bf16 %v3316, %v3314
      %v3337 = vunpack.c.l.b16 %v3317
      %v3338 = vunpack.c.l.b16 %v3318
      %v3339 = vunpack.c.l.b16 %v3319
      %v3340 = vunpack.c.l.b16 %v3320
      %v3341 = vunpack.c.l.b16 %v3321
      %v3342 = vunpack.c.l.b16 %v3322
      %v3343 = vunpack.c.l.b16 %v3323
      %v3344 = vunpack.c.l.b16 %v3324
      %v3345 = vpack.c.b16 %v3338, %v3337
      %v3346 = vpack.c.b16 %v3340, %v3339
      %v3347 = vpack.c.b16 %v3342, %v3341
      %v3348 = vpack.c.b16 %v3344, %v3343
      %vm3349 = vcmask 261120
      %v3351 = vsel %vm3349, %v3345, 0
      %v3354 = vsel %vm3349, %v3346, 0
      %v3357 = vsel %vm3349, %v3347, 0
      %v3360 = vsel %vm3349, %v3348, 0
      %3362 = vmatprep.subr.bf16.mxu0 %v3326
      %3363 = vmatpush1.bf16.msra.mxu0 %v3325
      %3364 = vmatprep.subr.bf16.mxu0 %v3328
      %3365 = vmatpush1.bf16.msra.mxu0 %v3327
      %3366 = vmatprep.subr.bf16.mxu0 0
      %3367 = vmatpush1.bf16.msra.mxu0 0
      %3368 = vmatprep.subr.bf16.mxu0 0
      %3369 = vmatpush1.bf16.msra.mxu0 0
      %3370 = vmatprep.subr.bf16.mxu0 0
      %3371 = vmatpush1.bf16.msra.mxu0 0
      %3372 = vmatprep.subr.bf16.mxu0 0
      %3373 = vmatpush1.bf16.msra.mxu0 0
      %3374 = vmatprep.subr.bf16.mxu0 0
      %3375 = vmatpush1.bf16.msra.mxu0 0
      %3376 = vmatprep.subr.bf16.mxu0 0
      %3377 = vmatpush1.bf16.msra.mxu0 0
      %3378 = vmatprep.subr.bf16.mxu0 0
      %3379 = vmatpush1.bf16.msra.mxu0 0
      %3380 = vmatprep.subr.bf16.mxu0 0
      %3381 = vmatpush1.bf16.msra.mxu0 0
      %3382 = vmatprep.subr.bf16.mxu0 0
      %3383 = vmatpush1.bf16.msra.mxu0 0
      %3384 = vmatprep.subr.bf16.mxu0 0
      %3385 = vmatpush1.bf16.msra.mxu0 0
      %3386 = vmatprep.subr.bf16.mxu0 0
      %3387 = vmatpush1.bf16.msra.mxu0 0
      %3388 = vmatprep.subr.bf16.mxu0 0
      %3389 = vmatpush1.bf16.msra.mxu0 0
      %3390 = vmatprep.subr.bf16.mxu0 0
      %3391 = vmatpush1.bf16.msra.mxu0 0
      %3392 = vmatprep.subr.bf16.mxu0 0
      %3393 = vmatpush1.bf16.msra.mxu0 0
      %3394 = vmatprep.mubr.bf16.mxu0 0
      %3395 = vmatmul.mubr.bf16.gmra.mrb[0].mxu0 %v3351
      %v3396 = vpop.f32.mrb[0].mxu0
      %v3397 = vadd.f32 0.0, %v3396
      %v3398 = vpop.f32.mrb[0].mxu0
      %v3399 = vadd.f32 0.0, %v3398
      %v3400 = vpop.f32.mrb[0].mxu0
      %v3401 = vadd.f32 0.0, %v3400
      %v3402 = vpop.f32.mrb[0].mxu0
      %v3403 = vadd.f32 0.0, %v3402
      %3404 = vmatprep.mubr.bf16.mxu0 0
      %3405 = vmatmul.mubr.bf16.gmra.mrb[0].mxu0 %v3354
      %v3406 = vpop.f32.mrb[0].mxu0
      %v3407 = vadd.f32 0.0, %v3406
      %v3408 = vpop.f32.mrb[0].mxu0
      %v3409 = vadd.f32 0.0, %v3408
      %v3410 = vpop.f32.mrb[0].mxu0
      %v3411 = vadd.f32 0.0, %v3410
      %v3412 = vpop.f32.mrb[0].mxu0
      %v3413 = vadd.f32 0.0, %v3412
      %3414 = vmatprep.mubr.bf16.mxu0 0
      %3415 = vmatmul.mubr.bf16.gmra.mrb[0].mxu0 %v3357
      %v3416 = vpop.f32.mrb[0].mxu0
      %v3417 = vadd.f32 0.0, %v3416
      %v3418 = vpop.f32.mrb[0].mxu0
      %v3419 = vadd.f32 0.0, %v3418
      %v3420 = vpop.f32.mrb[0].mxu0
      %v3421 = vadd.f32 0.0, %v3420
      %v3422 = vpop.f32.mrb[0].mxu0
      %v3423 = vadd.f32 0.0, %v3422
      %3424 = vmatprep.mubr.bf16.mxu0 0
      %3425 = vmatmul.mubr.bf16.gmra.mrb[0].mxu0 %v3360
      %v3426 = vpop.f32.mrb[0].mxu0
      %v3427 = vadd.f32 0.0, %v3426
      %v3428 = vpop.f32.mrb[0].mxu0
      %v3429 = vadd.f32 0.0, %v3428
      %v3430 = vpop.f32.mrb[0].mxu0
      %v3431 = vadd.f32 0.0, %v3430
      %v3432 = vpop.f32.mrb[0].mxu0
      %v3433 = vadd.f32 0.0, %v3432
      %3434 = vdwg.mxu0
      %v3435 = vadd.f32 %v3236, %v3397
      %v3436 = vadd.f32 %v3236, %v3399
      %v3437 = vadd.f32 %v3241, %v3401
      %v3438 = vadd.f32 %v3241, %v3403
      %v3439 = vadd.f32 %v3246, %v3407
      %v3440 = vadd.f32 %v3246, %v3409
      %v3441 = vadd.f32 %v3251, %v3411
      %v3442 = vadd.f32 %v3251, %v3413
      %v3443 = vadd.f32 %v3256, %v3417
      %v3444 = vadd.f32 %v3256, %v3419
      %v3445 = vadd.f32 %v3261, %v3421
      %v3446 = vadd.f32 %v3261, %v3423
      %v3447 = vadd.f32 %v3266, %v3427
      %v3448 = vadd.f32 %v3266, %v3429
      %v3449 = vadd.f32 %v3271, %v3431
      %v3450 = vadd.f32 %v3271, %v3433
      %3451 = vrot.lane.b32.xlu0 %v3217, 16
      %v3452 = vpop.permute.xlu0 %3451
      %3453 = vrot.lane.b32.xlu0 %v3219, 16
      %v3454 = vpop.permute.xlu0 %3453
      %3455 = vrot.lane.b32.xlu0 %v3221, 16
      %v3456 = vpop.permute.xlu0 %3455
      %3457 = vrot.lane.b32.xlu0 %v3223, 16
      %v3458 = vpop.permute.xlu0 %3457
      %3459 = vrot.lane.b32.xlu0 %v3218, 16
      %v3460 = vpop.permute.xlu0 %3459
      %3461 = vrot.lane.b32.xlu0 %v3220, 16
      %v3462 = vpop.permute.xlu0 %3461
      %3463 = vrot.lane.b32.xlu0 %v3222, 16
      %v3464 = vpop.permute.xlu0 %3463
      %3465 = vrot.lane.b32.xlu0 %v3224, 16
      %v3466 = vpop.permute.xlu0 %3465
      %v3467 = vsel %vm1208, %v3452, %v3460
      %v3468 = vsel %vm1208, %v3454, %v3462
      %v3469 = vsel %vm1208, %v3456, %v3464
      %v3470 = vsel %vm1208, %v3458, %v3466
      %v3471 = vsel %vm1208, %v3460, %v3452
      %v3472 = vsel %vm1208, %v3462, %v3454
      %v3473 = vsel %vm1208, %v3464, %v3456
      %v3474 = vsel %vm1208, %v3466, %v3458
      %s3475 = scalar_lea.vmem %s2, 1
      %v3476 = vld [vmem:[%s3475] ss:$8 sm:$0x3]
      %v3478 = vlaneseq
      %v3479 = vshrl.u32 %v3478, 7
      %v3480 = vsub.s32 0, %v3479
      %v3481 = vrot.slane %v3476, %v3480
      %v3482 = vlaneseq
      %v3483 = vshrl.u32 %v3482, 7
      %v3484 = vsub.s32 1, %v3483
      %v3485 = vrot.slane %v3476, %v3484
      %v3488 = vmul.f32 %v3471, %v3481
      %v3489 = vmul.f32 %v3467, %v3485
      %v3490 = vmul.f32 %v3472, %v3481
      %v3491 = vmul.f32 %v3468, %v3485
      %v3492 = vmul.f32 %v3473, %v3481
      %v3493 = vmul.f32 %v3469, %v3485
      %v3494 = vmul.f32 %v3474, %v3481
      %v3495 = vmul.f32 %v3470, %v3485
      %s3496 = scalar_lea.vmem %s5, 32
      %v3497 = vld [vmem:[%s3496] sm:$0xf]
      %v3498 = vld [vmem:[%s3496 + $0x4] sm:$0xf]
      %v3499 = vld [vmem:[%s3496 + $0x8] sm:$0xf]
      %v3500 = vld [vmem:[%s3496 + $0xc] sm:$0xf]
      %v3501 = vld [vmem:[%s3496 + $0x10] sm:$0xf]
      %v3502 = vld [vmem:[%s3496 + $0x14] sm:$0xf]
      %v3503 = vld [vmem:[%s3496 + $0x18] sm:$0xf]
      %v3504 = vld [vmem:[%s3496 + $0x1c] sm:$0xf]
      %v3505 = vpack.c.bf16 %v3490, %v3488
      %v3506 = vpack.c.bf16 %v3491, %v3489
      %v3507 = vpack.c.bf16 %v3494, %v3492
      %v3508 = vpack.c.bf16 %v3495, %v3493
      %v3517 = vunpack.c.l.b16 %v3497
      %v3518 = vunpack.c.l.b16 %v3498
      %v3519 = vunpack.c.l.b16 %v3499
      %v3520 = vunpack.c.l.b16 %v3500
      %v3521 = vunpack.c.l.b16 %v3501
      %v3522 = vunpack.c.l.b16 %v3502
      %v3523 = vunpack.c.l.b16 %v3503
      %v3524 = vunpack.c.l.b16 %v3504
      %v3525 = vpack.c.b16 %v3518, %v3517
      %v3526 = vpack.c.b16 %v3520, %v3519
      %v3527 = vpack.c.b16 %v3522, %v3521
      %v3528 = vpack.c.b16 %v3524, %v3523
      %v3530 = vsel %vm3349, %v3525, 0
      %v3533 = vsel %vm3349, %v3526, 0
      %v3536 = vsel %vm3349, %v3527, 0
      %v3539 = vsel %vm3349, %v3528, 0
      %3541 = vmatprep.subr.bf16.mxu0 %v3506
      %3542 = vmatpush1.bf16.msra.mxu0 %v3505
      %3543 = vmatprep.subr.bf16.mxu0 %v3508
      %3544 = vmatpush1.bf16.msra.mxu0 %v3507
      %3545 = vmatprep.subr.bf16.mxu0 0
      %3546 = vmatpush1.bf16.msra.mxu0 0
      %3547 = vmatprep.subr.bf16.mxu0 0
      %3548 = vmatpush1.bf16.msra.mxu0 0
      %3549 = vmatprep.subr.bf16.mxu0 0
      %3550 = vmatpush1.bf16.msra.mxu0 0
      %3551 = vmatprep.subr.bf16.mxu0 0
      %3552 = vmatpush1.bf16.msra.mxu0 0
      %3553 = vmatprep.subr.bf16.mxu0 0
      %3554 = vmatpush1.bf16.msra.mxu0 0
      %3555 = vmatprep.subr.bf16.mxu0 0
      %3556 = vmatpush1.bf16.msra.mxu0 0
      %3557 = vmatprep.subr.bf16.mxu0 0
      %3558 = vmatpush1.bf16.msra.mxu0 0
      %3559 = vmatprep.subr.bf16.mxu0 0
      %3560 = vmatpush1.bf16.msra.mxu0 0
      %3561 = vmatprep.subr.bf16.mxu0 0
      %3562 = vmatpush1.bf16.msra.mxu0 0
      %3563 = vmatprep.subr.bf16.mxu0 0
      %3564 = vmatpush1.bf16.msra.mxu0 0
      %3565 = vmatprep.subr.bf16.mxu0 0
      %3566 = vmatpush1.bf16.msra.mxu0 0
      %3567 = vmatprep.subr.bf16.mxu0 0
      %3568 = vmatpush1.bf16.msra.mxu0 0
      %3569 = vmatprep.subr.bf16.mxu0 0
      %3570 = vmatpush1.bf16.msra.mxu0 0
      %3571 = vmatprep.subr.bf16.mxu0 0
      %3572 = vmatpush1.bf16.msra.mxu0 0
      %3573 = vmatprep.mubr.bf16.mxu0 0
      %3574 = vmatmul.mubr.bf16.gmra.mrb[0].mxu0 %v3530
      %v3575 = vpop.f32.mrb[0].mxu0
      %v3576 = vadd.f32 0.0, %v3575
      %v3577 = vpop.f32.mrb[0].mxu0
      %v3578 = vadd.f32 0.0, %v3577
      %v3579 = vpop.f32.mrb[0].mxu0
      %v3580 = vadd.f32 0.0, %v3579
      %v3581 = vpop.f32.mrb[0].mxu0
      %v3582 = vadd.f32 0.0, %v3581
      %3583 = vmatprep.mubr.bf16.mxu0 0
      %3584 = vmatmul.mubr.bf16.gmra.mrb[0].mxu0 %v3533
      %v3585 = vpop.f32.mrb[0].mxu0
      %v3586 = vadd.f32 0.0, %v3585
      %v3587 = vpop.f32.mrb[0].mxu0
      %v3588 = vadd.f32 0.0, %v3587
      %v3589 = vpop.f32.mrb[0].mxu0
      %v3590 = vadd.f32 0.0, %v3589
      %v3591 = vpop.f32.mrb[0].mxu0
      %v3592 = vadd.f32 0.0, %v3591
      %3593 = vmatprep.mubr.bf16.mxu0 0
      %3594 = vmatmul.mubr.bf16.gmra.mrb[0].mxu0 %v3536
      %v3595 = vpop.f32.mrb[0].mxu0
      %v3596 = vadd.f32 0.0, %v3595
      %v3597 = vpop.f32.mrb[0].mxu0
      %v3598 = vadd.f32 0.0, %v3597
      %v3599 = vpop.f32.mrb[0].mxu0
      %v3600 = vadd.f32 0.0, %v3599
      %v3601 = vpop.f32.mrb[0].mxu0
      %v3602 = vadd.f32 0.0, %v3601
      %3603 = vmatprep.mubr.bf16.mxu0 0
      %3604 = vmatmul.mubr.bf16.gmra.mrb[0].mxu0 %v3539
      %v3605 = vpop.f32.mrb[0].mxu0
      %v3606 = vadd.f32 0.0, %v3605
      %v3607 = vpop.f32.mrb[0].mxu0
      %v3608 = vadd.f32 0.0, %v3607
      %v3609 = vpop.f32.mrb[0].mxu0
      %v3610 = vadd.f32 0.0, %v3609
      %v3611 = vpop.f32.mrb[0].mxu0
      %v3612 = vadd.f32 0.0, %v3611
      %3613 = vdwg.mxu0
      %v3614 = vadd.f32 %v3435, %v3576
      %v3615 = vadd.f32 %v3436, %v3578
      %v3616 = vadd.f32 %v3437, %v3580
      %v3617 = vadd.f32 %v3438, %v3582
      %v3618 = vadd.f32 %v3439, %v3586
      %v3619 = vadd.f32 %v3440, %v3588
      %v3620 = vadd.f32 %v3441, %v3590
      %v3621 = vadd.f32 %v3442, %v3592
      %v3622 = vadd.f32 %v3443, %v3596
      %v3623 = vadd.f32 %v3444, %v3598
      %v3624 = vadd.f32 %v3445, %v3600
      %v3625 = vadd.f32 %v3446, %v3602
      %v3626 = vadd.f32 %v3447, %v3606
      %v3627 = vadd.f32 %v3448, %v3608
      %v3628 = vadd.f32 %v3449, %v3610
      %v3629 = vadd.f32 %v3450, %v3612
      %3630 = vrot.lane.b32.xlu0 %v3217, 15
      %v3631 = vpop.permute.xlu0 %3630
      %3632 = vrot.lane.b32.xlu0 %v3219, 15
      %v3633 = vpop.permute.xlu0 %3632
      %3634 = vrot.lane.b32.xlu0 %v3221, 15
      %v3635 = vpop.permute.xlu0 %3634
      %3636 = vrot.lane.b32.xlu0 %v3223, 15
      %v3637 = vpop.permute.xlu0 %3636
      %3638 = vrot.lane.b32.xlu0 %v3218, 15
      %v3639 = vpop.permute.xlu0 %3638
      %3640 = vrot.lane.b32.xlu0 %v3220, 15
      %v3641 = vpop.permute.xlu0 %3640
      %3642 = vrot.lane.b32.xlu0 %v3222, 15
      %v3643 = vpop.permute.xlu0 %3642
      %3644 = vrot.lane.b32.xlu0 %v3224, 15
      %v3645 = vpop.permute.xlu0 %3644
      %v3646 = vsel %vm1320, %v3631, %v3639
      %v3647 = vsel %vm1320, %v3633, %v3641
      %v3648 = vsel %vm1320, %v3635, %v3643
      %v3649 = vsel %vm1320, %v3637, %v3645
      %v3650 = vsel %vm1320, %v3639, %v3631
      %v3651 = vsel %vm1320, %v3641, %v3633
      %v3652 = vsel %vm1320, %v3643, %v3635
      %v3653 = vsel %vm1320, %v3645, %v3637
      %s3654 = scalar_lea.vmem %s2, 2
      %v3655 = vld [vmem:[%s3654] ss:$8 sm:$0x3]
      %v3657 = vlaneseq
      %v3658 = vshrl.u32 %v3657, 7
      %v3659 = vsub.s32 0, %v3658
      %v3660 = vrot.slane %v3655, %v3659
      %v3661 = vlaneseq
      %v3662 = vshrl.u32 %v3661, 7
      %v3663 = vsub.s32 1, %v3662
      %v3664 = vrot.slane %v3655, %v3663
      %v3667 = vmul.f32 %v3650, %v3660
      %v3668 = vmul.f32 %v3646, %v3664
      %v3669 = vmul.f32 %v3651, %v3660
      %v3670 = vmul.f32 %v3647, %v3664
      %v3671 = vmul.f32 %v3652, %v3660
      %v3672 = vmul.f32 %v3648, %v3664
      %v3673 = vmul.f32 %v3653, %v3660
      %v3674 = vmul.f32 %v3649, %v3664
      %s3675 = scalar_lea.vmem %s5, 64
      %v3676 = vld [vmem:[%s3675] sm:$0xf]
      %v3677 = vld [vmem:[%s3675 + $0x4] sm:$0xf]
      %v3678 = vld [vmem:[%s3675 + $0x8] sm:$0xf]
      %v3679 = vld [vmem:[%s3675 + $0xc] sm:$0xf]
      %v3680 = vld [vmem:[%s3675 + $0x10] sm:$0xf]
      %v3681 = vld [vmem:[%s3675 + $0x14] sm:$0xf]
      %v3682 = vld [vmem:[%s3675 + $0x18] sm:$0xf]
      %v3683 = vld [vmem:[%s3675 + $0x1c] sm:$0xf]
      %v3684 = vpack.c.bf16 %v3669, %v3667
      %v3685 = vpack.c.bf16 %v3670, %v3668
      %v3686 = vpack.c.bf16 %v3673, %v3671
      %v3687 = vpack.c.bf16 %v3674, %v3672
      %v3696 = vunpack.c.l.b16 %v3676
      %v3697 = vunpack.c.l.b16 %v3677
      %v3698 = vunpack.c.l.b16 %v3678
      %v3699 = vunpack.c.l.b16 %v3679
      %v3700 = vunpack.c.l.b16 %v3680
      %v3701 = vunpack.c.l.b16 %v3681
      %v3702 = vunpack.c.l.b16 %v3682
      %v3703 = vunpack.c.l.b16 %v3683
      %v3704 = vpack.c.b16 %v3697, %v3696
      %v3705 = vpack.c.b16 %v3699, %v3698
      %v3706 = vpack.c.b16 %v3701, %v3700
      %v3707 = vpack.c.b16 %v3703, %v3702
      %v3709 = vsel %vm3349, %v3704, 0
      %v3712 = vsel %vm3349, %v3705, 0
      %v3715 = vsel %vm3349, %v3706, 0
      %v3718 = vsel %vm3349, %v3707, 0
      %3720 = vmatprep.subr.bf16.mxu0 %v3685
      %3721 = vmatpush1.bf16.msra.mxu0 %v3684
      %3722 = vmatprep.subr.bf16.mxu0 %v3687
      %3723 = vmatpush1.bf16.msra.mxu0 %v3686
      %3724 = vmatprep.subr.bf16.mxu0 0
      %3725 = vmatpush1.bf16.msra.mxu0 0
      %3726 = vmatprep.subr.bf16.mxu0 0
      %3727 = vmatpush1.bf16.msra.mxu0 0
      %3728 = vmatprep.subr.bf16.mxu0 0
      %3729 = vmatpush1.bf16.msra.mxu0 0
      %3730 = vmatprep.subr.bf16.mxu0 0
      %3731 = vmatpush1.bf16.msra.mxu0 0
      %3732 = vmatprep.subr.bf16.mxu0 0
      %3733 = vmatpush1.bf16.msra.mxu0 0
      %3734 = vmatprep.subr.bf16.mxu0 0
      %3735 = vmatpush1.bf16.msra.mxu0 0
      %3736 = vmatprep.subr.bf16.mxu0 0
      %3737 = vmatpush1.bf16.msra.mxu0 0
      %3738 = vmatprep.subr.bf16.mxu0 0
      %3739 = vmatpush1.bf16.msra.mxu0 0
      %3740 = vmatprep.subr.bf16.mxu0 0
      %3741 = vmatpush1.bf16.msra.mxu0 0
      %3742 = vmatprep.subr.bf16.mxu0 0
      %3743 = vmatpush1.bf16.msra.mxu0 0
      %3744 = vmatprep.subr.bf16.mxu0 0
      %3745 = vmatpush1.bf16.msra.mxu0 0
      %3746 = vmatprep.subr.bf16.mxu0 0
      %3747 = vmatpush1.bf16.msra.mxu0 0
      %3748 = vmatprep.subr.bf16.mxu0 0
      %3749 = vmatpush1.bf16.msra.mxu0 0
      %3750 = vmatprep.subr.bf16.mxu0 0
      %3751 = vmatpush1.bf16.msra.mxu0 0
      %3752 = vmatprep.mubr.bf16.mxu0 0
      %3753 = vmatmul.mubr.bf16.gmra.mrb[0].mxu0 %v3709
      %v3754 = vpop.f32.mrb[0].mxu0
      %v3755 = vadd.f32 0.0, %v3754
      %v3756 = vpop.f32.mrb[0].mxu0
      %v3757 = vadd.f32 0.0, %v3756
      %v3758 = vpop.f32.mrb[0].mxu0
      %v3759 = vadd.f32 0.0, %v3758
      %v3760 = vpop.f32.mrb[0].mxu0
      %v3761 = vadd.f32 0.0, %v3760
      %3762 = vmatprep.mubr.bf16.mxu0 0
      %3763 = vmatmul.mubr.bf16.gmra.mrb[0].mxu0 %v3712
      %v3764 = vpop.f32.mrb[0].mxu0
      %v3765 = vadd.f32 0.0, %v3764
      %v3766 = vpop.f32.mrb[0].mxu0
      %v3767 = vadd.f32 0.0, %v3766
      %v3768 = vpop.f32.mrb[0].mxu0
      %v3769 = vadd.f32 0.0, %v3768
      %v3770 = vpop.f32.mrb[0].mxu0
      %v3771 = vadd.f32 0.0, %v3770
      %3772 = vmatprep.mubr.bf16.mxu0 0
      %3773 = vmatmul.mubr.bf16.gmra.mrb[0].mxu0 %v3715
      %v3774 = vpop.f32.mrb[0].mxu0
      %v3775 = vadd.f32 0.0, %v3774
      %v3776 = vpop.f32.mrb[0].mxu0
      %v3777 = vadd.f32 0.0, %v3776
      %v3778 = vpop.f32.mrb[0].mxu0
      %v3779 = vadd.f32 0.0, %v3778
      %v3780 = vpop.f32.mrb[0].mxu0
      %v3781 = vadd.f32 0.0, %v3780
      %3782 = vmatprep.mubr.bf16.mxu0 0
      %3783 = vmatmul.mubr.bf16.gmra.mrb[0].mxu0 %v3718
      %v3784 = vpop.f32.mrb[0].mxu0
      %v3785 = vadd.f32 0.0, %v3784
      %v3786 = vpop.f32.mrb[0].mxu0
      %v3787 = vadd.f32 0.0, %v3786
      %v3788 = vpop.f32.mrb[0].mxu0
      %v3789 = vadd.f32 0.0, %v3788
      %v3790 = vpop.f32.mrb[0].mxu0
      %v3791 = vadd.f32 0.0, %v3790
      %3792 = vdwg.mxu0
      %v3793 = vadd.f32 %v3614, %v3755
      %v3794 = vadd.f32 %v3615, %v3757
      %v3795 = vadd.f32 %v3616, %v3759
      %v3796 = vadd.f32 %v3617, %v3761
      %v3797 = vadd.f32 %v3618, %v3765
      %v3798 = vadd.f32 %v3619, %v3767
      %v3799 = vadd.f32 %v3620, %v3769
      %v3800 = vadd.f32 %v3621, %v3771
      %v3801 = vadd.f32 %v3622, %v3775
      %v3802 = vadd.f32 %v3623, %v3777
      %v3803 = vadd.f32 %v3624, %v3779
      %v3804 = vadd.f32 %v3625, %v3781
      %v3805 = vadd.f32 %v3626, %v3785
      %v3806 = vadd.f32 %v3627, %v3787
      %v3807 = vadd.f32 %v3628, %v3789
      %v3808 = vadd.f32 %v3629, %v3791
      %3809 = vrot.lane.b32.xlu0 %v3217, 1
      %v3810 = vpop.permute.xlu0 %3809
      %3811 = vrot.lane.b32.xlu0 %v3219, 1
      %v3812 = vpop.permute.xlu0 %3811
      %3813 = vrot.lane.b32.xlu0 %v3221, 1
      %v3814 = vpop.permute.xlu0 %3813
      %3815 = vrot.lane.b32.xlu0 %v3223, 1
      %v3816 = vpop.permute.xlu0 %3815
      %3817 = vrot.lane.b32.xlu0 %v3218, 1
      %v3818 = vpop.permute.xlu0 %3817
      %3819 = vrot.lane.b32.xlu0 %v3220, 1
      %v3820 = vpop.permute.xlu0 %3819
      %3821 = vrot.lane.b32.xlu0 %v3222, 1
      %v3822 = vpop.permute.xlu0 %3821
      %3823 = vrot.lane.b32.xlu0 %v3224, 1
      %v3824 = vpop.permute.xlu0 %3823
      %v3825 = vsel %vm1656, %v3810, %v3818
      %v3826 = vsel %vm1656, %v3812, %v3820
      %v3827 = vsel %vm1656, %v3814, %v3822
      %v3828 = vsel %vm1656, %v3816, %v3824
      %v3829 = vsel %vm1656, %v3818, %v3810
      %v3830 = vsel %vm1656, %v3820, %v3812
      %v3831 = vsel %vm1656, %v3822, %v3814
      %v3832 = vsel %vm1656, %v3824, %v3816
      %s3833 = scalar_lea.vmem %s2, 3
      %v3834 = vld [vmem:[%s3833] ss:$8 sm:$0x3]
      %v3836 = vlaneseq
      %v3837 = vshrl.u32 %v3836, 7
      %v3838 = vsub.s32 0, %v3837
      %v3839 = vrot.slane %v3834, %v3838
      %v3840 = vlaneseq
      %v3841 = vshrl.u32 %v3840, 7
      %v3842 = vsub.s32 1, %v3841
      %v3843 = vrot.slane %v3834, %v3842
      %v3846 = vmul.f32 %v3829, %v3839
      %v3847 = vmul.f32 %v3825, %v3843
      %v3848 = vmul.f32 %v3830, %v3839
      %v3849 = vmul.f32 %v3826, %v3843
      %v3850 = vmul.f32 %v3831, %v3839
      %v3851 = vmul.f32 %v3827, %v3843
      %v3852 = vmul.f32 %v3832, %v3839
      %v3853 = vmul.f32 %v3828, %v3843
      %s3854 = scalar_lea.vmem %s5, 96
      %v3855 = vld [vmem:[%s3854] sm:$0xf]
      %v3856 = vld [vmem:[%s3854 + $0x4] sm:$0xf]
      %v3857 = vld [vmem:[%s3854 + $0x8] sm:$0xf]
      %v3858 = vld [vmem:[%s3854 + $0xc] sm:$0xf]
      %v3859 = vld [vmem:[%s3854 + $0x10] sm:$0xf]
      %v3860 = vld [vmem:[%s3854 + $0x14] sm:$0xf]
      %v3861 = vld [vmem:[%s3854 + $0x18] sm:$0xf]
      %v3862 = vld [vmem:[%s3854 + $0x1c] sm:$0xf]
      %v3863 = vpack.c.bf16 %v3848, %v3846
      %v3864 = vpack.c.bf16 %v3849, %v3847
      %v3865 = vpack.c.bf16 %v3852, %v3850
      %v3866 = vpack.c.bf16 %v3853, %v3851
      %v3875 = vunpack.c.l.b16 %v3855
      %v3876 = vunpack.c.l.b16 %v3856
      %v3877 = vunpack.c.l.b16 %v3857
      %v3878 = vunpack.c.l.b16 %v3858
      %v3879 = vunpack.c.l.b16 %v3859
      %v3880 = vunpack.c.l.b16 %v3860
      %v3881 = vunpack.c.l.b16 %v3861
      %v3882 = vunpack.c.l.b16 %v3862
      %v3883 = vpack.c.b16 %v3876, %v3875
      %v3884 = vpack.c.b16 %v3878, %v3877
      %v3885 = vpack.c.b16 %v3880, %v3879
      %v3886 = vpack.c.b16 %v3882, %v3881
      %v3888 = vsel %vm3349, %v3883, 0
      %v3891 = vsel %vm3349, %v3884, 0
      %v3894 = vsel %vm3349, %v3885, 0
      %v3897 = vsel %vm3349, %v3886, 0
      %3899 = vmatprep.subr.bf16.mxu0 %v3864
      %3900 = vmatpush1.bf16.msra.mxu0 %v3863
      %3901 = vmatprep.subr.bf16.mxu0 %v3866
      %3902 = vmatpush1.bf16.msra.mxu0 %v3865
      %3903 = vmatprep.subr.bf16.mxu0 0
      %3904 = vmatpush1.bf16.msra.mxu0 0
      %3905 = vmatprep.subr.bf16.mxu0 0
      %3906 = vmatpush1.bf16.msra.mxu0 0
      %3907 = vmatprep.subr.bf16.mxu0 0
      %3908 = vmatpush1.bf16.msra.mxu0 0
      %3909 = vmatprep.subr.bf16.mxu0 0
      %3910 = vmatpush1.bf16.msra.mxu0 0
      %3911 = vmatprep.subr.bf16.mxu0 0
      %3912 = vmatpush1.bf16.msra.mxu0 0
      %3913 = vmatprep.subr.bf16.mxu0 0
      %3914 = vmatpush1.bf16.msra.mxu0 0
      %3915 = vmatprep.subr.bf16.mxu0 0
      %3916 = vmatpush1.bf16.msra.mxu0 0
      %3917 = vmatprep.subr.bf16.mxu0 0
      %3918 = vmatpush1.bf16.msra.mxu0 0
      %3919 = vmatprep.subr.bf16.mxu0 0
      %3920 = vmatpush1.bf16.msra.mxu0 0
      %3921 = vmatprep.subr.bf16.mxu0 0
      %3922 = vmatpush1.bf16.msra.mxu0 0
      %3923 = vmatprep.subr.bf16.mxu0 0
      %3924 = vmatpush1.bf16.msra.mxu0 0
      %3925 = vmatprep.subr.bf16.mxu0 0
      %3926 = vmatpush1.bf16.msra.mxu0 0
      %3927 = vmatprep.subr.bf16.mxu0 0
      %3928 = vmatpush1.bf16.msra.mxu0 0
      %3929 = vmatprep.subr.bf16.mxu0 0
      %3930 = vmatpush1.bf16.msra.mxu0 0
      %3931 = vmatprep.mubr.bf16.mxu0 0
      %3932 = vmatmul.mubr.bf16.gmra.mrb[0].mxu0 %v3888
      %v3933 = vpop.f32.mrb[0].mxu0
      %v3934 = vadd.f32 0.0, %v3933
      %v3935 = vpop.f32.mrb[0].mxu0
      %v3936 = vadd.f32 0.0, %v3935
      %v3937 = vpop.f32.mrb[0].mxu0
      %v3938 = vadd.f32 0.0, %v3937
      %v3939 = vpop.f32.mrb[0].mxu0
      %v3940 = vadd.f32 0.0, %v3939
      %3941 = vmatprep.mubr.bf16.mxu0 0
      %3942 = vmatmul.mubr.bf16.gmra.mrb[0].mxu0 %v3891
      %v3943 = vpop.f32.mrb[0].mxu0
      %v3944 = vadd.f32 0.0, %v3943
      %v3945 = vpop.f32.mrb[0].mxu0
      %v3946 = vadd.f32 0.0, %v3945
      %v3947 = vpop.f32.mrb[0].mxu0
      %v3948 = vadd.f32 0.0, %v3947
      %v3949 = vpop.f32.mrb[0].mxu0
      %v3950 = vadd.f32 0.0, %v3949
      %3951 = vmatprep.mubr.bf16.mxu0 0
      %3952 = vmatmul.mubr.bf16.gmra.mrb[0].mxu0 %v3894
      %v3953 = vpop.f32.mrb[0].mxu0
      %v3954 = vadd.f32 0.0, %v3953
      %v3955 = vpop.f32.mrb[0].mxu0
      %v3956 = vadd.f32 0.0, %v3955
      %v3957 = vpop.f32.mrb[0].mxu0
      %v3958 = vadd.f32 0.0, %v3957
      %v3959 = vpop.f32.mrb[0].mxu0
      %v3960 = vadd.f32 0.0, %v3959
      %3961 = vmatprep.mubr.bf16.mxu0 0
      %3962 = vmatmul.mubr.bf16.gmra.mrb[0].mxu0 %v3897
      %v3963 = vpop.f32.mrb[0].mxu0
      %v3964 = vadd.f32 0.0, %v3963
      %v3965 = vpop.f32.mrb[0].mxu0
      %v3966 = vadd.f32 0.0, %v3965
      %v3967 = vpop.f32.mrb[0].mxu0
      %v3968 = vadd.f32 0.0, %v3967
      %v3969 = vpop.f32.mrb[0].mxu0
      %v3970 = vadd.f32 0.0, %v3969
      %3971 = vdwg.mxu0
      %v3972 = vadd.f32 %v3793, %v3934
      %v3973 = vadd.f32 %v3794, %v3936
      %v3974 = vadd.f32 %v3795, %v3938
      %v3975 = vadd.f32 %v3796, %v3940
      %v3976 = vadd.f32 %v3797, %v3944
      %v3977 = vadd.f32 %v3798, %v3946
      %v3978 = vadd.f32 %v3799, %v3948
      %v3979 = vadd.f32 %v3800, %v3950
      %v3980 = vadd.f32 %v3801, %v3954
      %v3981 = vadd.f32 %v3802, %v3956
      %v3982 = vadd.f32 %v3803, %v3958
      %v3983 = vadd.f32 %v3804, %v3960
      %v3984 = vadd.f32 %v3805, %v3964
      %v3985 = vadd.f32 %v3806, %v3966
      %v3986 = vadd.f32 %v3807, %v3968
      %v3987 = vadd.f32 %v3808, %v3970
      %s3988 = scalar_lea.vmem %s5, 128
      %v3989 = vld [vmem:[%s3988] sm:$0xf]
      %v3990 = vld [vmem:[%s3988 + $0x4] sm:$0xf]
      %v3991 = vld [vmem:[%s3988 + $0x8] sm:$0xf]
      %v3992 = vld [vmem:[%s3988 + $0xc] sm:$0xf]
      %v3993 = vld [vmem:[%s3988 + $0x10] sm:$0xf]
      %v3994 = vld [vmem:[%s3988 + $0x14] sm:$0xf]
      %v3995 = vld [vmem:[%s3988 + $0x18] sm:$0xf]
      %v3996 = vld [vmem:[%s3988 + $0x1c] sm:$0xf]
      %v3997 = vpack.c.bf16 %v3219, %v3217
      %v3998 = vpack.c.bf16 %v3220, %v3218
      %v3999 = vpack.c.bf16 %v3223, %v3221
      %v4000 = vpack.c.bf16 %v3224, %v3222
      %v4009 = vunpack.c.l.b16 %v3989
      %v4010 = vunpack.c.l.b16 %v3990
      %v4011 = vunpack.c.l.b16 %v3991
      %v4012 = vunpack.c.l.b16 %v3992
      %v4013 = vunpack.c.l.b16 %v3993
      %v4014 = vunpack.c.l.b16 %v3994
      %v4015 = vunpack.c.l.b16 %v3995
      %v4016 = vunpack.c.l.b16 %v3996
      %v4017 = vpack.c.b16 %v4010, %v4009
      %v4018 = vpack.c.b16 %v4012, %v4011
      %v4019 = vpack.c.b16 %v4014, %v4013
      %v4020 = vpack.c.b16 %v4016, %v4015
      %v4022 = vsel %vm3349, %v4017, 0
      %v4025 = vsel %vm3349, %v4018, 0
      %v4028 = vsel %vm3349, %v4019, 0
      %v4031 = vsel %vm3349, %v4020, 0
      %4033 = vmatprep.subr.bf16.mxu0 %v3998
      %4034 = vmatpush1.bf16.msra.mxu0 %v3997
      %4035 = vmatprep.subr.bf16.mxu0 %v4000
      %4036 = vmatpush1.bf16.msra.mxu0 %v3999
      %4037 = vmatprep.subr.bf16.mxu0 0
      %4038 = vmatpush1.bf16.msra.mxu0 0
      %4039 = vmatprep.subr.bf16.mxu0 0
      %4040 = vmatpush1.bf16.msra.mxu0 0
      %4041 = vmatprep.subr.bf16.mxu0 0
      %4042 = vmatpush1.bf16.msra.mxu0 0
      %4043 = vmatprep.subr.bf16.mxu0 0
      %4044 = vmatpush1.bf16.msra.mxu0 0
      %4045 = vmatprep.subr.bf16.mxu0 0
      %4046 = vmatpush1.bf16.msra.mxu0 0
      %4047 = vmatprep.subr.bf16.mxu0 0
      %4048 = vmatpush1.bf16.msra.mxu0 0
      %4049 = vmatprep.subr.bf16.mxu0 0
      %4050 = vmatpush1.bf16.msra.mxu0 0
      %4051 = vmatprep.subr.bf16.mxu0 0
      %4052 = vmatpush1.bf16.msra.mxu0 0
      %4053 = vmatprep.subr.bf16.mxu0 0
      %4054 = vmatpush1.bf16.msra.mxu0 0
      %4055 = vmatprep.subr.bf16.mxu0 0
      %4056 = vmatpush1.bf16.msra.mxu0 0
      %4057 = vmatprep.subr.bf16.mxu0 0
      %4058 = vmatpush1.bf16.msra.mxu0 0
      %4059 = vmatprep.subr.bf16.mxu0 0
      %4060 = vmatpush1.bf16.msra.mxu0 0
      %4061 = vmatprep.subr.bf16.mxu0 0
      %4062 = vmatpush1.bf16.msra.mxu0 0
      %4063 = vmatprep.subr.bf16.mxu0 0
      %4064 = vmatpush1.bf16.msra.mxu0 0
      %4065 = vmatprep.mubr.bf16.mxu0 0
      %4066 = vmatmul.mubr.bf16.gmra.mrb[0].mxu0 %v4022
      %v4067 = vpop.f32.mrb[0].mxu0
      %v4068 = vadd.f32 0.0, %v4067
      %v4069 = vpop.f32.mrb[0].mxu0
      %v4070 = vadd.f32 0.0, %v4069
      %v4071 = vpop.f32.mrb[0].mxu0
      %v4072 = vadd.f32 0.0, %v4071
      %v4073 = vpop.f32.mrb[0].mxu0
      %v4074 = vadd.f32 0.0, %v4073
      %4075 = vmatprep.mubr.bf16.mxu0 0
      %4076 = vmatmul.mubr.bf16.gmra.mrb[0].mxu0 %v4025
      %v4077 = vpop.f32.mrb[0].mxu0
      %v4078 = vadd.f32 0.0, %v4077
      %v4079 = vpop.f32.mrb[0].mxu0
      %v4080 = vadd.f32 0.0, %v4079
      %v4081 = vpop.f32.mrb[0].mxu0
      %v4082 = vadd.f32 0.0, %v4081
      %v4083 = vpop.f32.mrb[0].mxu0
      %v4084 = vadd.f32 0.0, %v4083
      %4085 = vmatprep.mubr.bf16.mxu0 0
      %4086 = vmatmul.mubr.bf16.gmra.mrb[0].mxu0 %v4028
      %v4087 = vpop.f32.mrb[0].mxu0
      %v4088 = vadd.f32 0.0, %v4087
      %v4089 = vpop.f32.mrb[0].mxu0
      %v4090 = vadd.f32 0.0, %v4089
      %v4091 = vpop.f32.mrb[0].mxu0
      %v4092 = vadd.f32 0.0, %v4091
      %v4093 = vpop.f32.mrb[0].mxu0
      %v4094 = vadd.f32 0.0, %v4093
      %4095 = vmatprep.mubr.bf16.mxu0 0
      %4096 = vmatmul.mubr.bf16.gmra.mrb[0].mxu0 %v4031
      %v4097 = vpop.f32.mrb[0].mxu0
      %v4098 = vadd.f32 0.0, %v4097
      %v4099 = vpop.f32.mrb[0].mxu0
      %v4100 = vadd.f32 0.0, %v4099
      %v4101 = vpop.f32.mrb[0].mxu0
      %v4102 = vadd.f32 0.0, %v4101
      %v4103 = vpop.f32.mrb[0].mxu0
      %v4104 = vadd.f32 0.0, %v4103
      %4105 = vdwg.mxu0
      %v4106 = vadd.f32 %v3972, %v4068
      %v4107 = vadd.f32 %v3973, %v4070
      %v4108 = vadd.f32 %v3974, %v4072
      %v4109 = vadd.f32 %v3975, %v4074
      %v4110 = vadd.f32 %v3976, %v4078
      %v4111 = vadd.f32 %v3977, %v4080
      %v4112 = vadd.f32 %v3978, %v4082
      %v4113 = vadd.f32 %v3979, %v4084
      %v4114 = vadd.f32 %v3980, %v4088
      %v4115 = vadd.f32 %v3981, %v4090
      %v4116 = vadd.f32 %v3982, %v4092
      %v4117 = vadd.f32 %v3983, %v4094
      %v4118 = vadd.f32 %v3984, %v4098
      %v4119 = vadd.f32 %v3985, %v4100
      %v4120 = vadd.f32 %v3986, %v4102
      %v4121 = vadd.f32 %v3987, %v4104
      %4122 = vrot.lane.b32.xlu0 %v3217, 127
      %v4123 = vpop.permute.xlu0 %4122
      %4124 = vrot.lane.b32.xlu0 %v3219, 127
      %v4125 = vpop.permute.xlu0 %4124
      %4126 = vrot.lane.b32.xlu0 %v3221, 127
      %v4127 = vpop.permute.xlu0 %4126
      %4128 = vrot.lane.b32.xlu0 %v3223, 127
      %v4129 = vpop.permute.xlu0 %4128
      %4130 = vrot.lane.b32.xlu0 %v3218, 127
      %v4131 = vpop.permute.xlu0 %4130
      %4132 = vrot.lane.b32.xlu0 %v3220, 127
      %v4133 = vpop.permute.xlu0 %4132
      %4134 = vrot.lane.b32.xlu0 %v3222, 127
      %v4135 = vpop.permute.xlu0 %4134
      %4136 = vrot.lane.b32.xlu0 %v3224, 127
      %v4137 = vpop.permute.xlu0 %4136
      %v4138 = vsel %vm1861, %v4123, %v4131
      %v4139 = vsel %vm1861, %v4125, %v4133
      %v4140 = vsel %vm1861, %v4127, %v4135
      %v4141 = vsel %vm1861, %v4129, %v4137
      %v4142 = vsel %vm1861, %v4131, %v4123
      %v4143 = vsel %vm1861, %v4133, %v4125
      %v4144 = vsel %vm1861, %v4135, %v4127
      %v4145 = vsel %vm1861, %v4137, %v4129
      %s4146 = scalar_lea.vmem %s2, 5
      %v4147 = vld [vmem:[%s4146] ss:$8 sm:$0x3]
      %v4149 = vlaneseq
      %v4150 = vshrl.u32 %v4149, 7
      %v4151 = vsub.s32 0, %v4150
      %v4152 = vrot.slane %v4147, %v4151
      %v4153 = vlaneseq
      %v4154 = vshrl.u32 %v4153, 7
      %v4155 = vsub.s32 1, %v4154
      %v4156 = vrot.slane %v4147, %v4155
      %v4159 = vmul.f32 %v4138, %v4152
      %v4160 = vmul.f32 %v4142, %v4156
      %v4161 = vmul.f32 %v4139, %v4152
      %v4162 = vmul.f32 %v4143, %v4156
      %v4163 = vmul.f32 %v4140, %v4152
      %v4164 = vmul.f32 %v4144, %v4156
      %v4165 = vmul.f32 %v4141, %v4152
      %v4166 = vmul.f32 %v4145, %v4156
      %s4167 = scalar_lea.vmem %s5, 160
      %v4168 = vld [vmem:[%s4167] sm:$0xf]
      %v4169 = vld [vmem:[%s4167 + $0x4] sm:$0xf]
      %v4170 = vld [vmem:[%s4167 + $0x8] sm:$0xf]
      %v4171 = vld [vmem:[%s4167 + $0xc] sm:$0xf]
      %v4172 = vld [vmem:[%s4167 + $0x10] sm:$0xf]
      %v4173 = vld [vmem:[%s4167 + $0x14] sm:$0xf]
      %v4174 = vld [vmem:[%s4167 + $0x18] sm:$0xf]
      %v4175 = vld [vmem:[%s4167 + $0x1c] sm:$0xf]
      %v4176 = vpack.c.bf16 %v4161, %v4159
      %v4177 = vpack.c.bf16 %v4162, %v4160
      %v4178 = vpack.c.bf16 %v4165, %v4163
      %v4179 = vpack.c.bf16 %v4166, %v4164
      %v4188 = vunpack.c.l.b16 %v4168
      %v4189 = vunpack.c.l.b16 %v4169
      %v4190 = vunpack.c.l.b16 %v4170
      %v4191 = vunpack.c.l.b16 %v4171
      %v4192 = vunpack.c.l.b16 %v4172
      %v4193 = vunpack.c.l.b16 %v4173
      %v4194 = vunpack.c.l.b16 %v4174
      %v4195 = vunpack.c.l.b16 %v4175
      %v4196 = vpack.c.b16 %v4189, %v4188
      %v4197 = vpack.c.b16 %v4191, %v4190
      %v4198 = vpack.c.b16 %v4193, %v4192
      %v4199 = vpack.c.b16 %v4195, %v4194
      %v4201 = vsel %vm3349, %v4196, 0
      %v4204 = vsel %vm3349, %v4197, 0
      %v4207 = vsel %vm3349, %v4198, 0
      %v4210 = vsel %vm3349, %v4199, 0
      %4212 = vmatprep.subr.bf16.mxu0 %v4177
      %4213 = vmatpush1.bf16.msra.mxu0 %v4176
      %4214 = vmatprep.subr.bf16.mxu0 %v4179
      %4215 = vmatpush1.bf16.msra.mxu0 %v4178
      %4216 = vmatprep.subr.bf16.mxu0 0
      %4217 = vmatpush1.bf16.msra.mxu0 0
      %4218 = vmatprep.subr.bf16.mxu0 0
      %4219 = vmatpush1.bf16.msra.mxu0 0
      %4220 = vmatprep.subr.bf16.mxu0 0
      %4221 = vmatpush1.bf16.msra.mxu0 0
      %4222 = vmatprep.subr.bf16.mxu0 0
      %4223 = vmatpush1.bf16.msra.mxu0 0
      %4224 = vmatprep.subr.bf16.mxu0 0
      %4225 = vmatpush1.bf16.msra.mxu0 0
      %4226 = vmatprep.subr.bf16.mxu0 0
      %4227 = vmatpush1.bf16.msra.mxu0 0
      %4228 = vmatprep.subr.bf16.mxu0 0
      %4229 = vmatpush1.bf16.msra.mxu0 0
      %4230 = vmatprep.subr.bf16.mxu0 0
      %4231 = vmatpush1.bf16.msra.mxu0 0
      %4232 = vmatprep.subr.bf16.mxu0 0
      %4233 = vmatpush1.bf16.msra.mxu0 0
      %4234 = vmatprep.subr.bf16.mxu0 0
      %4235 = vmatpush1.bf16.msra.mxu0 0
      %4236 = vmatprep.subr.bf16.mxu0 0
      %4237 = vmatpush1.bf16.msra.mxu0 0
      %4238 = vmatprep.subr.bf16.mxu0 0
      %4239 = vmatpush1.bf16.msra.mxu0 0
      %4240 = vmatprep.subr.bf16.mxu0 0
      %4241 = vmatpush1.bf16.msra.mxu0 0
      %4242 = vmatprep.subr.bf16.mxu0 0
      %4243 = vmatpush1.bf16.msra.mxu0 0
      %4244 = vmatprep.mubr.bf16.mxu0 0
      %4245 = vmatmul.mubr.bf16.gmra.mrb[0].mxu0 %v4201
      %v4246 = vpop.f32.mrb[0].mxu0
      %v4247 = vadd.f32 0.0, %v4246
      %v4248 = vpop.f32.mrb[0].mxu0
      %v4249 = vadd.f32 0.0, %v4248
      %v4250 = vpop.f32.mrb[0].mxu0
      %v4251 = vadd.f32 0.0, %v4250
      %v4252 = vpop.f32.mrb[0].mxu0
      %v4253 = vadd.f32 0.0, %v4252
      %4254 = vmatprep.mubr.bf16.mxu0 0
      %4255 = vmatmul.mubr.bf16.gmra.mrb[0].mxu0 %v4204
      %v4256 = vpop.f32.mrb[0].mxu0
      %v4257 = vadd.f32 0.0, %v4256
      %v4258 = vpop.f32.mrb[0].mxu0
      %v4259 = vadd.f32 0.0, %v4258
      %v4260 = vpop.f32.mrb[0].mxu0
      %v4261 = vadd.f32 0.0, %v4260
      %v4262 = vpop.f32.mrb[0].mxu0
      %v4263 = vadd.f32 0.0, %v4262
      %4264 = vmatprep.mubr.bf16.mxu0 0
      %4265 = vmatmul.mubr.bf16.gmra.mrb[0].mxu0 %v4207
      %v4266 = vpop.f32.mrb[0].mxu0
      %v4267 = vadd.f32 0.0, %v4266
      %v4268 = vpop.f32.mrb[0].mxu0
      %v4269 = vadd.f32 0.0, %v4268
      %v4270 = vpop.f32.mrb[0].mxu0
      %v4271 = vadd.f32 0.0, %v4270
      %v4272 = vpop.f32.mrb[0].mxu0
      %v4273 = vadd.f32 0.0, %v4272
      %4274 = vmatprep.mubr.bf16.mxu0 0
      %4275 = vmatmul.mubr.bf16.gmra.mrb[0].mxu0 %v4210
      %v4276 = vpop.f32.mrb[0].mxu0
      %v4277 = vadd.f32 0.0, %v4276
      %v4278 = vpop.f32.mrb[0].mxu0
      %v4279 = vadd.f32 0.0, %v4278
      %v4280 = vpop.f32.mrb[0].mxu0
      %v4281 = vadd.f32 0.0, %v4280
      %v4282 = vpop.f32.mrb[0].mxu0
      %v4283 = vadd.f32 0.0, %v4282
      %4284 = vdwg.mxu0
      %v4285 = vadd.f32 %v4106, %v4247
      %v4286 = vadd.f32 %v4107, %v4249
      %v4287 = vadd.f32 %v4108, %v4251
      %v4288 = vadd.f32 %v4109, %v4253
      %v4289 = vadd.f32 %v4110, %v4257
      %v4290 = vadd.f32 %v4111, %v4259
      %v4291 = vadd.f32 %v4112, %v4261
      %v4292 = vadd.f32 %v4113, %v4263
      %v4293 = vadd.f32 %v4114, %v4267
      %v4294 = vadd.f32 %v4115, %v4269
      %v4295 = vadd.f32 %v4116, %v4271
      %v4296 = vadd.f32 %v4117, %v4273
      %v4297 = vadd.f32 %v4118, %v4277
      %v4298 = vadd.f32 %v4119, %v4279
      %v4299 = vadd.f32 %v4120, %v4281
      %v4300 = vadd.f32 %v4121, %v4283
      %4301 = vrot.lane.b32.xlu0 %v3217, 113
      %v4302 = vpop.permute.xlu0 %4301
      %4303 = vrot.lane.b32.xlu0 %v3219, 113
      %v4304 = vpop.permute.xlu0 %4303
      %4305 = vrot.lane.b32.xlu0 %v3221, 113
      %v4306 = vpop.permute.xlu0 %4305
      %4307 = vrot.lane.b32.xlu0 %v3223, 113
      %v4308 = vpop.permute.xlu0 %4307
      %4309 = vrot.lane.b32.xlu0 %v3218, 113
      %v4310 = vpop.permute.xlu0 %4309
      %4311 = vrot.lane.b32.xlu0 %v3220, 113
      %v4312 = vpop.permute.xlu0 %4311
      %4313 = vrot.lane.b32.xlu0 %v3222, 113
      %v4314 = vpop.permute.xlu0 %4313
      %4315 = vrot.lane.b32.xlu0 %v3224, 113
      %v4316 = vpop.permute.xlu0 %4315
      %v4317 = vsel %vm2197, %v4302, %v4310
      %v4318 = vsel %vm2197, %v4304, %v4312
      %v4319 = vsel %vm2197, %v4306, %v4314
      %v4320 = vsel %vm2197, %v4308, %v4316
      %v4321 = vsel %vm2197, %v4310, %v4302
      %v4322 = vsel %vm2197, %v4312, %v4304
      %v4323 = vsel %vm2197, %v4314, %v4306
      %v4324 = vsel %vm2197, %v4316, %v4308
      %s4325 = scalar_lea.vmem %s2, 6
      %v4326 = vld [vmem:[%s4325] ss:$8 sm:$0x3]
      %v4328 = vlaneseq
      %v4329 = vshrl.u32 %v4328, 7
      %v4330 = vsub.s32 0, %v4329
      %v4331 = vrot.slane %v4326, %v4330
      %v4332 = vlaneseq
      %v4333 = vshrl.u32 %v4332, 7
      %v4334 = vsub.s32 1, %v4333
      %v4335 = vrot.slane %v4326, %v4334
      %v4338 = vmul.f32 %v4317, %v4331
      %v4339 = vmul.f32 %v4321, %v4335
      %v4340 = vmul.f32 %v4318, %v4331
      %v4341 = vmul.f32 %v4322, %v4335
      %v4342 = vmul.f32 %v4319, %v4331
      %v4343 = vmul.f32 %v4323, %v4335
      %v4344 = vmul.f32 %v4320, %v4331
      %v4345 = vmul.f32 %v4324, %v4335
      %s4346 = scalar_lea.vmem %s5, 192
      %v4347 = vld [vmem:[%s4346] sm:$0xf]
      %v4348 = vld [vmem:[%s4346 + $0x4] sm:$0xf]
      %v4349 = vld [vmem:[%s4346 + $0x8] sm:$0xf]
      %v4350 = vld [vmem:[%s4346 + $0xc] sm:$0xf]
      %v4351 = vld [vmem:[%s4346 + $0x10] sm:$0xf]
      %v4352 = vld [vmem:[%s4346 + $0x14] sm:$0xf]
      %v4353 = vld [vmem:[%s4346 + $0x18] sm:$0xf]
      %v4354 = vld [vmem:[%s4346 + $0x1c] sm:$0xf]
      %v4355 = vpack.c.bf16 %v4340, %v4338
      %v4356 = vpack.c.bf16 %v4341, %v4339
      %v4357 = vpack.c.bf16 %v4344, %v4342
      %v4358 = vpack.c.bf16 %v4345, %v4343
      %v4367 = vunpack.c.l.b16 %v4347
      %v4368 = vunpack.c.l.b16 %v4348
      %v4369 = vunpack.c.l.b16 %v4349
      %v4370 = vunpack.c.l.b16 %v4350
      %v4371 = vunpack.c.l.b16 %v4351
      %v4372 = vunpack.c.l.b16 %v4352
      %v4373 = vunpack.c.l.b16 %v4353
      %v4374 = vunpack.c.l.b16 %v4354
      %v4375 = vpack.c.b16 %v4368, %v4367
      %v4376 = vpack.c.b16 %v4370, %v4369
      %v4377 = vpack.c.b16 %v4372, %v4371
      %v4378 = vpack.c.b16 %v4374, %v4373
      %v4380 = vsel %vm3349, %v4375, 0
      %v4383 = vsel %vm3349, %v4376, 0
      %v4386 = vsel %vm3349, %v4377, 0
      %v4389 = vsel %vm3349, %v4378, 0
      %4391 = vmatprep.subr.bf16.mxu0 %v4356
      %4392 = vmatpush1.bf16.msra.mxu0 %v4355
      %4393 = vmatprep.subr.bf16.mxu0 %v4358
      %4394 = vmatpush1.bf16.msra.mxu0 %v4357
      %4395 = vmatprep.subr.bf16.mxu0 0
      %4396 = vmatpush1.bf16.msra.mxu0 0
      %4397 = vmatprep.subr.bf16.mxu0 0
      %4398 = vmatpush1.bf16.msra.mxu0 0
      %4399 = vmatprep.subr.bf16.mxu0 0
      %4400 = vmatpush1.bf16.msra.mxu0 0
      %4401 = vmatprep.subr.bf16.mxu0 0
      %4402 = vmatpush1.bf16.msra.mxu0 0
      %4403 = vmatprep.subr.bf16.mxu0 0
      %4404 = vmatpush1.bf16.msra.mxu0 0
      %4405 = vmatprep.subr.bf16.mxu0 0
      %4406 = vmatpush1.bf16.msra.mxu0 0
      %4407 = vmatprep.subr.bf16.mxu0 0
      %4408 = vmatpush1.bf16.msra.mxu0 0
      %4409 = vmatprep.subr.bf16.mxu0 0
      %4410 = vmatpush1.bf16.msra.mxu0 0
      %4411 = vmatprep.subr.bf16.mxu0 0
      %4412 = vmatpush1.bf16.msra.mxu0 0
      %4413 = vmatprep.subr.bf16.mxu0 0
      %4414 = vmatpush1.bf16.msra.mxu0 0
      %4415 = vmatprep.subr.bf16.mxu0 0
      %4416 = vmatpush1.bf16.msra.mxu0 0
      %4417 = vmatprep.subr.bf16.mxu0 0
      %4418 = vmatpush1.bf16.msra.mxu0 0
      %4419 = vmatprep.subr.bf16.mxu0 0
      %4420 = vmatpush1.bf16.msra.mxu0 0
      %4421 = vmatprep.subr.bf16.mxu0 0
      %4422 = vmatpush1.bf16.msra.mxu0 0
      %4423 = vmatprep.mubr.bf16.mxu0 0
      %4424 = vmatmul.mubr.bf16.gmra.mrb[0].mxu0 %v4380
      %v4425 = vpop.f32.mrb[0].mxu0
      %v4426 = vadd.f32 0.0, %v4425
      %v4427 = vpop.f32.mrb[0].mxu0
      %v4428 = vadd.f32 0.0, %v4427
      %v4429 = vpop.f32.mrb[0].mxu0
      %v4430 = vadd.f32 0.0, %v4429
      %v4431 = vpop.f32.mrb[0].mxu0
      %v4432 = vadd.f32 0.0, %v4431
      %4433 = vmatprep.mubr.bf16.mxu0 0
      %4434 = vmatmul.mubr.bf16.gmra.mrb[0].mxu0 %v4383
      %v4435 = vpop.f32.mrb[0].mxu0
      %v4436 = vadd.f32 0.0, %v4435
      %v4437 = vpop.f32.mrb[0].mxu0
      %v4438 = vadd.f32 0.0, %v4437
      %v4439 = vpop.f32.mrb[0].mxu0
      %v4440 = vadd.f32 0.0, %v4439
      %v4441 = vpop.f32.mrb[0].mxu0
      %v4442 = vadd.f32 0.0, %v4441
      %4443 = vmatprep.mubr.bf16.mxu0 0
      %4444 = vmatmul.mubr.bf16.gmra.mrb[0].mxu0 %v4386
      %v4445 = vpop.f32.mrb[0].mxu0
      %v4446 = vadd.f32 0.0, %v4445
      %v4447 = vpop.f32.mrb[0].mxu0
      %v4448 = vadd.f32 0.0, %v4447
      %v4449 = vpop.f32.mrb[0].mxu0
      %v4450 = vadd.f32 0.0, %v4449
      %v4451 = vpop.f32.mrb[0].mxu0
      %v4452 = vadd.f32 0.0, %v4451
      %4453 = vmatprep.mubr.bf16.mxu0 0
      %4454 = vmatmul.mubr.bf16.gmra.mrb[0].mxu0 %v4389
      %v4455 = vpop.f32.mrb[0].mxu0
      %v4456 = vadd.f32 0.0, %v4455
      %v4457 = vpop.f32.mrb[0].mxu0
      %v4458 = vadd.f32 0.0, %v4457
      %v4459 = vpop.f32.mrb[0].mxu0
      %v4460 = vadd.f32 0.0, %v4459
      %v4461 = vpop.f32.mrb[0].mxu0
      %v4462 = vadd.f32 0.0, %v4461
      %4463 = vdwg.mxu0
      %v4464 = vadd.f32 %v4285, %v4426
      %v4465 = vadd.f32 %v4286, %v4428
      %v4466 = vadd.f32 %v4287, %v4430
      %v4467 = vadd.f32 %v4288, %v4432
      %v4468 = vadd.f32 %v4289, %v4436
      %v4469 = vadd.f32 %v4290, %v4438
      %v4470 = vadd.f32 %v4291, %v4440
      %v4471 = vadd.f32 %v4292, %v4442
      %v4472 = vadd.f32 %v4293, %v4446
      %v4473 = vadd.f32 %v4294, %v4448
      %v4474 = vadd.f32 %v4295, %v4450
      %v4475 = vadd.f32 %v4296, %v4452
      %v4476 = vadd.f32 %v4297, %v4456
      %v4477 = vadd.f32 %v4298, %v4458
      %v4478 = vadd.f32 %v4299, %v4460
      %v4479 = vadd.f32 %v4300, %v4462
      %4480 = vrot.lane.b32.xlu0 %v3217, 112
      %v4481 = vpop.permute.xlu0 %4480
      %4482 = vrot.lane.b32.xlu0 %v3219, 112
      %v4483 = vpop.permute.xlu0 %4482
      %4484 = vrot.lane.b32.xlu0 %v3221, 112
      %v4485 = vpop.permute.xlu0 %4484
      %4486 = vrot.lane.b32.xlu0 %v3223, 112
      %v4487 = vpop.permute.xlu0 %4486
      %4488 = vrot.lane.b32.xlu0 %v3218, 112
      %v4489 = vpop.permute.xlu0 %4488
      %4490 = vrot.lane.b32.xlu0 %v3220, 112
      %v4491 = vpop.permute.xlu0 %4490
      %4492 = vrot.lane.b32.xlu0 %v3222, 112
      %v4493 = vpop.permute.xlu0 %4492
      %4494 = vrot.lane.b32.xlu0 %v3224, 112
      %v4495 = vpop.permute.xlu0 %4494
      %v4496 = vsel %vm2309, %v4481, %v4489
      %v4497 = vsel %vm2309, %v4483, %v4491
      %v4498 = vsel %vm2309, %v4485, %v4493
      %v4499 = vsel %vm2309, %v4487, %v4495
      %v4500 = vsel %vm2309, %v4489, %v4481
      %v4501 = vsel %vm2309, %v4491, %v4483
      %v4502 = vsel %vm2309, %v4493, %v4485
      %v4503 = vsel %vm2309, %v4495, %v4487
      %s4504 = scalar_lea.vmem %s2, 7
      %v4505 = vld [vmem:[%s4504] ss:$8 sm:$0x3]
      %v4507 = vlaneseq
      %v4508 = vshrl.u32 %v4507, 7
      %v4509 = vsub.s32 0, %v4508
      %v4510 = vrot.slane %v4505, %v4509
      %v4511 = vlaneseq
      %v4512 = vshrl.u32 %v4511, 7
      %v4513 = vsub.s32 1, %v4512
      %v4514 = vrot.slane %v4505, %v4513
      %v4517 = vmul.f32 %v4496, %v4510
      %v4518 = vmul.f32 %v4500, %v4514
      %v4519 = vmul.f32 %v4497, %v4510
      %v4520 = vmul.f32 %v4501, %v4514
      %v4521 = vmul.f32 %v4498, %v4510
      %v4522 = vmul.f32 %v4502, %v4514
      %v4523 = vmul.f32 %v4499, %v4510
      %v4524 = vmul.f32 %v4503, %v4514
      %s4525 = scalar_lea.vmem %s5, 224
      %v4526 = vld [vmem:[%s4525] sm:$0xf]
      %v4527 = vld [vmem:[%s4525 + $0x4] sm:$0xf]
      %v4528 = vld [vmem:[%s4525 + $0x8] sm:$0xf]
      %v4529 = vld [vmem:[%s4525 + $0xc] sm:$0xf]
      %v4530 = vld [vmem:[%s4525 + $0x10] sm:$0xf]
      %v4531 = vld [vmem:[%s4525 + $0x14] sm:$0xf]
      %v4532 = vld [vmem:[%s4525 + $0x18] sm:$0xf]
      %v4533 = vld [vmem:[%s4525 + $0x1c] sm:$0xf]
      %v4534 = vpack.c.bf16 %v4519, %v4517
      %v4535 = vpack.c.bf16 %v4520, %v4518
      %v4536 = vpack.c.bf16 %v4523, %v4521
      %v4537 = vpack.c.bf16 %v4524, %v4522
      %v4546 = vunpack.c.l.b16 %v4526
      %v4547 = vunpack.c.l.b16 %v4527
      %v4548 = vunpack.c.l.b16 %v4528
      %v4549 = vunpack.c.l.b16 %v4529
      %v4550 = vunpack.c.l.b16 %v4530
      %v4551 = vunpack.c.l.b16 %v4531
      %v4552 = vunpack.c.l.b16 %v4532
      %v4553 = vunpack.c.l.b16 %v4533
      %v4554 = vpack.c.b16 %v4547, %v4546
      %v4555 = vpack.c.b16 %v4549, %v4548
      %v4556 = vpack.c.b16 %v4551, %v4550
      %v4557 = vpack.c.b16 %v4553, %v4552
      %v4559 = vsel %vm3349, %v4554, 0
      %v4562 = vsel %vm3349, %v4555, 0
      %v4565 = vsel %vm3349, %v4556, 0
      %v4568 = vsel %vm3349, %v4557, 0
      %4570 = vmatprep.subr.bf16.mxu0 %v4535
      %4571 = vmatpush1.bf16.msra.mxu0 %v4534
      %4572 = vmatprep.subr.bf16.mxu0 %v4537
      %4573 = vmatpush1.bf16.msra.mxu0 %v4536
      %4574 = vmatprep.subr.bf16.mxu0 0
      %4575 = vmatpush1.bf16.msra.mxu0 0
      %4576 = vmatprep.subr.bf16.mxu0 0
      %4577 = vmatpush1.bf16.msra.mxu0 0
      %4578 = vmatprep.subr.bf16.mxu0 0
      %4579 = vmatpush1.bf16.msra.mxu0 0
      %4580 = vmatprep.subr.bf16.mxu0 0
      %4581 = vmatpush1.bf16.msra.mxu0 0
      %4582 = vmatprep.subr.bf16.mxu0 0
      %4583 = vmatpush1.bf16.msra.mxu0 0
      %4584 = vmatprep.subr.bf16.mxu0 0
      %4585 = vmatpush1.bf16.msra.mxu0 0
      %4586 = vmatprep.subr.bf16.mxu0 0
      %4587 = vmatpush1.bf16.msra.mxu0 0
      %4588 = vmatprep.subr.bf16.mxu0 0
      %4589 = vmatpush1.bf16.msra.mxu0 0
      %4590 = vmatprep.subr.bf16.mxu0 0
      %4591 = vmatpush1.bf16.msra.mxu0 0
      %4592 = vmatprep.subr.bf16.mxu0 0
      %4593 = vmatpush1.bf16.msra.mxu0 0
      %4594 = vmatprep.subr.bf16.mxu0 0
      %4595 = vmatpush1.bf16.msra.mxu0 0
      %4596 = vmatprep.subr.bf16.mxu0 0
      %4597 = vmatpush1.bf16.msra.mxu0 0
      %4598 = vmatprep.subr.bf16.mxu0 0
      %4599 = vmatpush1.bf16.msra.mxu0 0
      %4600 = vmatprep.subr.bf16.mxu0 0
      %4601 = vmatpush1.bf16.msra.mxu0 0
      %4602 = vmatprep.mubr.bf16.mxu0 0
      %4603 = vmatmul.mubr.bf16.gmra.mrb[0].mxu0 %v4559
      %v4604 = vpop.f32.mrb[0].mxu0
      %v4605 = vadd.f32 0.0, %v4604
      %v4606 = vpop.f32.mrb[0].mxu0
      %v4607 = vadd.f32 0.0, %v4606
      %v4608 = vpop.f32.mrb[0].mxu0
      %v4609 = vadd.f32 0.0, %v4608
      %v4610 = vpop.f32.mrb[0].mxu0
      %v4611 = vadd.f32 0.0, %v4610
      %4612 = vmatprep.mubr.bf16.mxu0 0
      %4613 = vmatmul.mubr.bf16.gmra.mrb[0].mxu0 %v4562
      %v4614 = vpop.f32.mrb[0].mxu0
      %v4615 = vadd.f32 0.0, %v4614
      %v4616 = vpop.f32.mrb[0].mxu0
      %v4617 = vadd.f32 0.0, %v4616
      %v4618 = vpop.f32.mrb[0].mxu0
      %v4619 = vadd.f32 0.0, %v4618
      %v4620 = vpop.f32.mrb[0].mxu0
      %v4621 = vadd.f32 0.0, %v4620
      %4622 = vmatprep.mubr.bf16.mxu0 0
      %4623 = vmatmul.mubr.bf16.gmra.mrb[0].mxu0 %v4565
      %v4624 = vpop.f32.mrb[0].mxu0
      %v4625 = vadd.f32 0.0, %v4624
      %v4626 = vpop.f32.mrb[0].mxu0
      %v4627 = vadd.f32 0.0, %v4626
      %v4628 = vpop.f32.mrb[0].mxu0
      %v4629 = vadd.f32 0.0, %v4628
      %v4630 = vpop.f32.mrb[0].mxu0
      %v4631 = vadd.f32 0.0, %v4630
      %4632 = vmatprep.mubr.bf16.mxu0 0
      %4633 = vmatmul.mubr.bf16.gmra.mrb[0].mxu0 %v4568
      %v4634 = vpop.f32.mrb[0].mxu0
      %v4635 = vadd.f32 0.0, %v4634
      %v4636 = vpop.f32.mrb[0].mxu0
      %v4637 = vadd.f32 0.0, %v4636
      %v4638 = vpop.f32.mrb[0].mxu0
      %v4639 = vadd.f32 0.0, %v4638
      %v4640 = vpop.f32.mrb[0].mxu0
      %v4641 = vadd.f32 0.0, %v4640
      %4642 = vdwg.mxu0
      %v4643 = vadd.f32 %v4464, %v4605
      %v4644 = vadd.f32 %v4465, %v4607
      %v4645 = vadd.f32 %v4466, %v4609
      %v4646 = vadd.f32 %v4467, %v4611
      %v4647 = vadd.f32 %v4468, %v4615
      %v4648 = vadd.f32 %v4469, %v4617
      %v4649 = vadd.f32 %v4470, %v4619
      %v4650 = vadd.f32 %v4471, %v4621
      %v4651 = vadd.f32 %v4472, %v4625
      %v4652 = vadd.f32 %v4473, %v4627
      %v4653 = vadd.f32 %v4474, %v4629
      %v4654 = vadd.f32 %v4475, %v4631
      %v4655 = vadd.f32 %v4476, %v4635
      %v4656 = vadd.f32 %v4477, %v4637
      %v4657 = vadd.f32 %v4478, %v4639
      %v4658 = vadd.f32 %v4479, %v4641
      %4659 = vrot.lane.b32.xlu0 %v3217, 111
      %v4660 = vpop.permute.xlu0 %4659
      %4661 = vrot.lane.b32.xlu0 %v3219, 111
      %v4662 = vpop.permute.xlu0 %4661
      %4663 = vrot.lane.b32.xlu0 %v3221, 111
      %v4664 = vpop.permute.xlu0 %4663
      %4665 = vrot.lane.b32.xlu0 %v3223, 111
      %v4666 = vpop.permute.xlu0 %4665
      %4667 = vrot.lane.b32.xlu0 %v3218, 111
      %v4668 = vpop.permute.xlu0 %4667
      %4669 = vrot.lane.b32.xlu0 %v3220, 111
      %v4670 = vpop.permute.xlu0 %4669
      %4671 = vrot.lane.b32.xlu0 %v3222, 111
      %v4672 = vpop.permute.xlu0 %4671
      %4673 = vrot.lane.b32.xlu0 %v3224, 111
      %v4674 = vpop.permute.xlu0 %4673
      %v4675 = vsel %vm2421, %v4660, %v4668
      %v4676 = vsel %vm2421, %v4662, %v4670
      %v4677 = vsel %vm2421, %v4664, %v4672
      %v4678 = vsel %vm2421, %v4666, %v4674
      %v4679 = vsel %vm2421, %v4668, %v4660
      %v4680 = vsel %vm2421, %v4670, %v4662
      %v4681 = vsel %vm2421, %v4672, %v4664
      %v4682 = vsel %vm2421, %v4674, %v4666
      %s4683 = scalar_lea.vmem %s2, 16
      %v4684 = vld [vmem:[%s4683] ss:$8 sm:$0x3]
      %v4686 = vlaneseq
      %v4687 = vshrl.u32 %v4686, 7
      %v4688 = vsub.s32 0, %v4687
      %v4689 = vrot.slane %v4684, %v4688
      %v4690 = vlaneseq
      %v4691 = vshrl.u32 %v4690, 7
      %v4692 = vsub.s32 1, %v4691
      %v4693 = vrot.slane %v4684, %v4692
      %v4696 = vmul.f32 %v4675, %v4689
      %v4697 = vmul.f32 %v4679, %v4693
      %v4698 = vmul.f32 %v4676, %v4689
      %v4699 = vmul.f32 %v4680, %v4693
      %v4700 = vmul.f32 %v4677, %v4689
      %v4701 = vmul.f32 %v4681, %v4693
      %v4702 = vmul.f32 %v4678, %v4689
      %v4703 = vmul.f32 %v4682, %v4693
      %s4704 = scalar_lea.vmem %s5, 256
      %v4705 = vld [vmem:[%s4704] sm:$0xf]
      %v4706 = vld [vmem:[%s4704 + $0x4] sm:$0xf]
      %v4707 = vld [vmem:[%s4704 + $0x8] sm:$0xf]
      %v4708 = vld [vmem:[%s4704 + $0xc] sm:$0xf]
      %v4709 = vld [vmem:[%s4704 + $0x10] sm:$0xf]
      %v4710 = vld [vmem:[%s4704 + $0x14] sm:$0xf]
      %v4711 = vld [vmem:[%s4704 + $0x18] sm:$0xf]
      %v4712 = vld [vmem:[%s4704 + $0x1c] sm:$0xf]
      %v4713 = vpack.c.bf16 %v4698, %v4696
      %v4714 = vpack.c.bf16 %v4699, %v4697
      %v4715 = vpack.c.bf16 %v4702, %v4700
      %v4716 = vpack.c.bf16 %v4703, %v4701
      %v4725 = vunpack.c.l.b16 %v4705
      %v4726 = vunpack.c.l.b16 %v4706
      %v4727 = vunpack.c.l.b16 %v4707
      %v4728 = vunpack.c.l.b16 %v4708
      %v4729 = vunpack.c.l.b16 %v4709
      %v4730 = vunpack.c.l.b16 %v4710
      %v4731 = vunpack.c.l.b16 %v4711
      %v4732 = vunpack.c.l.b16 %v4712
      %v4733 = vpack.c.b16 %v4726, %v4725
      %v4734 = vpack.c.b16 %v4728, %v4727
      %v4735 = vpack.c.b16 %v4730, %v4729
      %v4736 = vpack.c.b16 %v4732, %v4731
      %v4738 = vsel %vm3349, %v4733, 0
      %v4741 = vsel %vm3349, %v4734, 0
      %v4744 = vsel %vm3349, %v4735, 0
      %v4747 = vsel %vm3349, %v4736, 0
      %4749 = vmatprep.subr.bf16.mxu0 %v4714
      %4750 = vmatpush1.bf16.msra.mxu0 %v4713
      %4751 = vmatprep.subr.bf16.mxu0 %v4716
      %4752 = vmatpush1.bf16.msra.mxu0 %v4715
      %4753 = vmatprep.subr.bf16.mxu0 0
      %4754 = vmatpush1.bf16.msra.mxu0 0
      %4755 = vmatprep.subr.bf16.mxu0 0
      %4756 = vmatpush1.bf16.msra.mxu0 0
      %4757 = vmatprep.subr.bf16.mxu0 0
      %4758 = vmatpush1.bf16.msra.mxu0 0
      %4759 = vmatprep.subr.bf16.mxu0 0
      %4760 = vmatpush1.bf16.msra.mxu0 0
      %4761 = vmatprep.subr.bf16.mxu0 0
      %4762 = vmatpush1.bf16.msra.mxu0 0
      %4763 = vmatprep.subr.bf16.mxu0 0
      %4764 = vmatpush1.bf16.msra.mxu0 0
      %4765 = vmatprep.subr.bf16.mxu0 0
      %4766 = vmatpush1.bf16.msra.mxu0 0
      %4767 = vmatprep.subr.bf16.mxu0 0
      %4768 = vmatpush1.bf16.msra.mxu0 0
      %4769 = vmatprep.subr.bf16.mxu0 0
      %4770 = vmatpush1.bf16.msra.mxu0 0
      %4771 = vmatprep.subr.bf16.mxu0 0
      %4772 = vmatpush1.bf16.msra.mxu0 0
      %4773 = vmatprep.subr.bf16.mxu0 0
      %4774 = vmatpush1.bf16.msra.mxu0 0
      %4775 = vmatprep.subr.bf16.mxu0 0
      %4776 = vmatpush1.bf16.msra.mxu0 0
      %4777 = vmatprep.subr.bf16.mxu0 0
      %4778 = vmatpush1.bf16.msra.mxu0 0
      %4779 = vmatprep.subr.bf16.mxu0 0
      %4780 = vmatpush1.bf16.msra.mxu0 0
      %4781 = vmatprep.mubr.bf16.mxu0 0
      %4782 = vmatmul.mubr.bf16.gmra.mrb[0].mxu0 %v4738
      %v4783 = vpop.f32.mrb[0].mxu0
      %v4784 = vadd.f32 0.0, %v4783
      %v4785 = vpop.f32.mrb[0].mxu0
      %v4786 = vadd.f32 0.0, %v4785
      %v4787 = vpop.f32.mrb[0].mxu0
      %v4788 = vadd.f32 0.0, %v4787
      %v4789 = vpop.f32.mrb[0].mxu0
      %v4790 = vadd.f32 0.0, %v4789
      %4791 = vmatprep.mubr.bf16.mxu0 0
      %4792 = vmatmul.mubr.bf16.gmra.mrb[0].mxu0 %v4741
      %v4793 = vpop.f32.mrb[0].mxu0
      %v4794 = vadd.f32 0.0, %v4793
      %v4795 = vpop.f32.mrb[0].mxu0
      %v4796 = vadd.f32 0.0, %v4795
      %v4797 = vpop.f32.mrb[0].mxu0
      %v4798 = vadd.f32 0.0, %v4797
      %v4799 = vpop.f32.mrb[0].mxu0
      %v4800 = vadd.f32 0.0, %v4799
      %4801 = vmatprep.mubr.bf16.mxu0 0
      %4802 = vmatmul.mubr.bf16.gmra.mrb[0].mxu0 %v4744
      %v4803 = vpop.f32.mrb[0].mxu0
      %v4804 = vadd.f32 0.0, %v4803
      %v4805 = vpop.f32.mrb[0].mxu0
      %v4806 = vadd.f32 0.0, %v4805
      %v4807 = vpop.f32.mrb[0].mxu0
      %v4808 = vadd.f32 0.0, %v4807
      %v4809 = vpop.f32.mrb[0].mxu0
      %v4810 = vadd.f32 0.0, %v4809
      %4811 = vmatprep.mubr.bf16.mxu0 0
      %4812 = vmatmul.mubr.bf16.gmra.mrb[0].mxu0 %v4747
      %v4813 = vpop.f32.mrb[0].mxu0
      %v4814 = vadd.f32 0.0, %v4813
      %v4815 = vpop.f32.mrb[0].mxu0
      %v4816 = vadd.f32 0.0, %v4815
      %v4817 = vpop.f32.mrb[0].mxu0
      %v4818 = vadd.f32 0.0, %v4817
      %v4819 = vpop.f32.mrb[0].mxu0
      %v4820 = vadd.f32 0.0, %v4819
      %4821 = vdwg.mxu0
      %v4822 = vadd.f32 %v4643, %v4784
      %v4823 = vadd.f32 %v4644, %v4786
      %v4824 = vadd.f32 %v4645, %v4788
      %v4825 = vadd.f32 %v4646, %v4790
      %v4826 = vadd.f32 %v4647, %v4794
      %v4827 = vadd.f32 %v4648, %v4796
      %v4828 = vadd.f32 %v4649, %v4798
      %v4829 = vadd.f32 %v4650, %v4800
      %v4830 = vadd.f32 %v4651, %v4804
      %v4831 = vadd.f32 %v4652, %v4806
      %v4832 = vadd.f32 %v4653, %v4808
      %v4833 = vadd.f32 %v4654, %v4810
      %v4834 = vadd.f32 %v4655, %v4814
      %v4835 = vadd.f32 %v4656, %v4816
      %v4836 = vadd.f32 %v4657, %v4818
      %v4837 = vadd.f32 %v4658, %v4820
      %vm4838 = vcmp.gt.f32.partialorder %v4822, 0.0
      %vm4839 = vcmp.gt.f32.partialorder %v4823, 0.0
      %vm4840 = vcmp.gt.f32.partialorder %v4824, 0.0
      %vm4841 = vcmp.gt.f32.partialorder %v4825, 0.0
      %vm4842 = vcmp.gt.f32.partialorder %v4826, 0.0
      %vm4843 = vcmp.gt.f32.partialorder %v4827, 0.0
      %vm4844 = vcmp.gt.f32.partialorder %v4828, 0.0
      %vm4845 = vcmp.gt.f32.partialorder %v4829, 0.0
      %vm4846 = vcmp.gt.f32.partialorder %v4830, 0.0
      %vm4847 = vcmp.gt.f32.partialorder %v4831, 0.0
      %vm4848 = vcmp.gt.f32.partialorder %v4832, 0.0
      %vm4849 = vcmp.gt.f32.partialorder %v4833, 0.0
      %vm4850 = vcmp.gt.f32.partialorder %v4834, 0.0
      %vm4851 = vcmp.gt.f32.partialorder %v4835, 0.0
      %vm4852 = vcmp.gt.f32.partialorder %v4836, 0.0
      %vm4853 = vcmp.gt.f32.partialorder %v4837, 0.0
      %v4854 = vmul.f32 %v4822, 0.01
      %v4855 = vmul.f32 %v4823, 0.01
      %v4856 = vmul.f32 %v4824, 0.01
      %v4857 = vmul.f32 %v4825, 0.01
      %v4858 = vmul.f32 %v4826, 0.01
      %v4859 = vmul.f32 %v4827, 0.01
      %v4860 = vmul.f32 %v4828, 0.01
      %v4861 = vmul.f32 %v4829, 0.01
      %v4862 = vmul.f32 %v4830, 0.01
      %v4863 = vmul.f32 %v4831, 0.01
      %v4864 = vmul.f32 %v4832, 0.01
      %v4865 = vmul.f32 %v4833, 0.01
      %v4866 = vmul.f32 %v4834, 0.01
      %v4867 = vmul.f32 %v4835, 0.01
      %v4868 = vmul.f32 %v4836, 0.01
      %v4869 = vmul.f32 %v4837, 0.01
      %v4870 = vsel %vm4838, %v4822, %v4854
      %v4871 = vsel %vm4839, %v4823, %v4855
      %v4872 = vsel %vm4840, %v4824, %v4856
      %v4873 = vsel %vm4841, %v4825, %v4857
      %v4874 = vsel %vm4842, %v4826, %v4858
      %v4875 = vsel %vm4843, %v4827, %v4859
      %v4876 = vsel %vm4844, %v4828, %v4860
      %v4877 = vsel %vm4845, %v4829, %v4861
      %v4878 = vsel %vm4846, %v4830, %v4862
      %v4879 = vsel %vm4847, %v4831, %v4863
      %v4880 = vsel %vm4848, %v4832, %v4864
      %v4881 = vsel %vm4849, %v4833, %v4865
      %v4882 = vsel %vm4850, %v4834, %v4866
      %v4883 = vsel %vm4851, %v4835, %v4867
      %v4884 = vsel %vm4852, %v4836, %v4868
      %v4885 = vsel %vm4853, %v4837, %v4869
      %v4886 = vld [vmem:[%s8] sm:$0xff]
      %v4887 = vld [vmem:[%s8 + $0x8] sm:$0xff]
      %v4888 = vld [vmem:[%s8 + $0x10] sm:$0xff]
      %v4889 = vld [vmem:[%s8 + $0x18] sm:$0xff]
      %4891 = vset.pattern.permute.xlu0 0
      %4892 = vperm.xlu0 %4891, %v4886
      %v4893 = vpop.permute.xlu0 %4892
      %4896 = vset.pattern.permute.xlu0 0
      %4897 = vperm.xlu0 %4896, %v4887
      %v4898 = vpop.permute.xlu0 %4897
      %4901 = vset.pattern.permute.xlu0 0
      %4902 = vperm.xlu0 %4901, %v4888
      %v4903 = vpop.permute.xlu0 %4902
      %4906 = vset.pattern.permute.xlu0 0
      %4907 = vperm.xlu0 %4906, %v4889
      %v4908 = vpop.permute.xlu0 %4907
      %4910 = vrot.lane.b32.xlu0 %v4870, 17
      %v4911 = vpop.permute.xlu0 %4910
      %4912 = vrot.lane.b32.xlu0 %v4872, 17
      %v4913 = vpop.permute.xlu0 %4912
      %4914 = vrot.lane.b32.xlu0 %v4874, 17
      %v4915 = vpop.permute.xlu0 %4914
      %4916 = vrot.lane.b32.xlu0 %v4876, 17
      %v4917 = vpop.permute.xlu0 %4916
      %4918 = vrot.lane.b32.xlu0 %v4878, 17
      %v4919 = vpop.permute.xlu0 %4918
      %4920 = vrot.lane.b32.xlu0 %v4880, 17
      %v4921 = vpop.permute.xlu0 %4920
      %4922 = vrot.lane.b32.xlu0 %v4882, 17
      %v4923 = vpop.permute.xlu0 %4922
      %4924 = vrot.lane.b32.xlu0 %v4884, 17
      %v4925 = vpop.permute.xlu0 %4924
      %4926 = vrot.lane.b32.xlu0 %v4871, 17
      %v4927 = vpop.permute.xlu0 %4926
      %4928 = vrot.lane.b32.xlu0 %v4873, 17
      %v4929 = vpop.permute.xlu0 %4928
      %4930 = vrot.lane.b32.xlu0 %v4875, 17
      %v4931 = vpop.permute.xlu0 %4930
      %4932 = vrot.lane.b32.xlu0 %v4877, 17
      %v4933 = vpop.permute.xlu0 %4932
      %4934 = vrot.lane.b32.xlu0 %v4879, 17
      %v4935 = vpop.permute.xlu0 %4934
      %4936 = vrot.lane.b32.xlu0 %v4881, 17
      %v4937 = vpop.permute.xlu0 %4936
      %4938 = vrot.lane.b32.xlu0 %v4883, 17
      %v4939 = vpop.permute.xlu0 %4938
      %4940 = vrot.lane.b32.xlu0 %v4885, 17
      %v4941 = vpop.permute.xlu0 %4940
      %v4942 = vsel %vm1096, %v4911, %v4927
      %v4943 = vsel %vm1096, %v4913, %v4929
      %v4944 = vsel %vm1096, %v4915, %v4931
      %v4945 = vsel %vm1096, %v4917, %v4933
      %v4946 = vsel %vm1096, %v4919, %v4935
      %v4947 = vsel %vm1096, %v4921, %v4937
      %v4948 = vsel %vm1096, %v4923, %v4939
      %v4949 = vsel %vm1096, %v4925, %v4941
      %v4950 = vsel %vm1096, %v4927, %v4911
      %v4951 = vsel %vm1096, %v4929, %v4913
      %v4952 = vsel %vm1096, %v4931, %v4915
      %v4953 = vsel %vm1096, %v4933, %v4917
      %v4954 = vsel %vm1096, %v4935, %v4919
      %v4955 = vsel %vm1096, %v4937, %v4921
      %v4956 = vsel %vm1096, %v4939, %v4923
      %v4957 = vsel %vm1096, %v4941, %v4925
      %v4958 = vmul.f32 %v4950, %v3302
      %v4959 = vmul.f32 %v4942, %v3306
      %v4960 = vmul.f32 %v4951, %v3302
      %v4961 = vmul.f32 %v4943, %v3306
      %v4962 = vmul.f32 %v4952, %v3302
      %v4963 = vmul.f32 %v4944, %v3306
      %v4964 = vmul.f32 %v4953, %v3302
      %v4965 = vmul.f32 %v4945, %v3306
      %v4966 = vmul.f32 %v4954, %v3302
      %v4967 = vmul.f32 %v4946, %v3306
      %v4968 = vmul.f32 %v4955, %v3302
      %v4969 = vmul.f32 %v4947, %v3306
      %v4970 = vmul.f32 %v4956, %v3302
      %v4971 = vmul.f32 %v4948, %v3306
      %v4972 = vmul.f32 %v4957, %v3302
      %v4973 = vmul.f32 %v4949, %v3306
      %v4974 = vld [vmem:[%s7] sm:$0xf]
      %v4975 = vld [vmem:[%s7 + $0x4] sm:$0xf]
      %v4976 = vld [vmem:[%s7 + $0x8] sm:$0xf]
      %v4977 = vld [vmem:[%s7 + $0xc] sm:$0xf]
      %v4978 = vpack.c.bf16 %v4960, %v4958
      %v4979 = vpack.c.bf16 %v4961, %v4959
      %v4980 = vpack.c.bf16 %v4964, %v4962
      %v4981 = vpack.c.bf16 %v4965, %v4963
      %v4982 = vpack.c.bf16 %v4968, %v4966
      %v4983 = vpack.c.bf16 %v4969, %v4967
      %v4984 = vpack.c.bf16 %v4972, %v4970
      %v4985 = vpack.c.bf16 %v4973, %v4971
      %v4990 = vunpack.c.l.b16 %v4974
      %v4991 = vunpack.c.l.b16 %v4975
      %v4992 = vunpack.c.l.b16 %v4976
      %v4993 = vunpack.c.l.b16 %v4977
      %v4994 = vpack.c.b16 %v4991, %v4990
      %v4995 = vpack.c.b16 %v4993, %v4992
      %vm4996 = vcmask 523264
      %v4998 = vsel %vm4996, %v4994, 0
      %v5001 = vsel %vm4996, %v4995, 0
      %5003 = vmatprep.subr.bf16.mxu0 %v4979
      %5004 = vmatpush1.bf16.msra.mxu0 %v4978
      %5005 = vmatprep.subr.bf16.mxu0 %v4981
      %5006 = vmatpush1.bf16.msra.mxu0 %v4980
      %5007 = vmatprep.subr.bf16.mxu0 %v4983
      %5008 = vmatpush1.bf16.msra.mxu0 %v4982
      %5009 = vmatprep.subr.bf16.mxu0 %v4985
      %5010 = vmatpush1.bf16.msra.mxu0 %v4984
      %5011 = vmatprep.subr.bf16.mxu0 0
      %5012 = vmatpush1.bf16.msra.mxu0 0
      %5013 = vmatprep.subr.bf16.mxu0 0
      %5014 = vmatpush1.bf16.msra.mxu0 0
      %5015 = vmatprep.subr.bf16.mxu0 0
      %5016 = vmatpush1.bf16.msra.mxu0 0
      %5017 = vmatprep.subr.bf16.mxu0 0
      %5018 = vmatpush1.bf16.msra.mxu0 0
      %5019 = vmatprep.subr.bf16.mxu0 0
      %5020 = vmatpush1.bf16.msra.mxu0 0
      %5021 = vmatprep.subr.bf16.mxu0 0
      %5022 = vmatpush1.bf16.msra.mxu0 0
      %5023 = vmatprep.subr.bf16.mxu0 0
      %5024 = vmatpush1.bf16.msra.mxu0 0
      %5025 = vmatprep.subr.bf16.mxu0 0
      %5026 = vmatpush1.bf16.msra.mxu0 0
      %5027 = vmatprep.subr.bf16.mxu0 0
      %5028 = vmatpush1.bf16.msra.mxu0 0
      %5029 = vmatprep.subr.bf16.mxu0 0
      %5030 = vmatpush1.bf16.msra.mxu0 0
      %5031 = vmatprep.subr.bf16.mxu0 0
      %5032 = vmatpush1.bf16.msra.mxu0 0
      %5033 = vmatprep.subr.bf16.mxu0 0
      %5034 = vmatpush1.bf16.msra.mxu0 0
      %5035 = vmatprep.mubr.bf16.mxu0 0
      %5036 = vmatmul.mubr.bf16.gmra.mrb[0].mxu0 %v4998
      %v5037 = vpop.f32.mrb[0].mxu0
      %v5038 = vadd.f32 0.0, %v5037
      %v5039 = vpop.f32.mrb[0].mxu0
      %v5040 = vadd.f32 0.0, %v5039
      %v5041 = vpop.f32.mrb[0].mxu0
      %v5042 = vadd.f32 0.0, %v5041
      %v5043 = vpop.f32.mrb[0].mxu0
      %v5044 = vadd.f32 0.0, %v5043
      %5045 = vmatprep.mubr.bf16.mxu0 0
      %5046 = vmatmul.mubr.bf16.gmra.mrb[0].mxu0 %v5001
      %v5047 = vpop.f32.mrb[0].mxu0
      %v5048 = vadd.f32 0.0, %v5047
      %v5049 = vpop.f32.mrb[0].mxu0
      %v5050 = vadd.f32 0.0, %v5049
      %v5051 = vpop.f32.mrb[0].mxu0
      %v5052 = vadd.f32 0.0, %v5051
      %v5053 = vpop.f32.mrb[0].mxu0
      %v5054 = vadd.f32 0.0, %v5053
      %5055 = vdwg.mxu0
      %v5056 = vadd.f32 %v4893, %v5038
      %v5057 = vadd.f32 %v4893, %v5040
      %v5058 = vadd.f32 %v4898, %v5042
      %v5059 = vadd.f32 %v4898, %v5044
      %v5060 = vadd.f32 %v4903, %v5048
      %v5061 = vadd.f32 %v4903, %v5050
      %v5062 = vadd.f32 %v4908, %v5052
      %v5063 = vadd.f32 %v4908, %v5054
      %5064 = vrot.lane.b32.xlu0 %v4870, 16
      %v5065 = vpop.permute.xlu0 %5064
      %5066 = vrot.lane.b32.xlu0 %v4872, 16
      %v5067 = vpop.permute.xlu0 %5066
      %5068 = vrot.lane.b32.xlu0 %v4874, 16
      %v5069 = vpop.permute.xlu0 %5068
      %5070 = vrot.lane.b32.xlu0 %v4876, 16
      %v5071 = vpop.permute.xlu0 %5070
      %5072 = vrot.lane.b32.xlu0 %v4878, 16
      %v5073 = vpop.permute.xlu0 %5072
      %5074 = vrot.lane.b32.xlu0 %v4880, 16
      %v5075 = vpop.permute.xlu0 %5074
      %5076 = vrot.lane.b32.xlu0 %v4882, 16
      %v5077 = vpop.permute.xlu0 %5076
      %5078 = vrot.lane.b32.xlu0 %v4884, 16
      %v5079 = vpop.permute.xlu0 %5078
      %5080 = vrot.lane.b32.xlu0 %v4871, 16
      %v5081 = vpop.permute.xlu0 %5080
      %5082 = vrot.lane.b32.xlu0 %v4873, 16
      %v5083 = vpop.permute.xlu0 %5082
      %5084 = vrot.lane.b32.xlu0 %v4875, 16
      %v5085 = vpop.permute.xlu0 %5084
      %5086 = vrot.lane.b32.xlu0 %v4877, 16
      %v5087 = vpop.permute.xlu0 %5086
      %5088 = vrot.lane.b32.xlu0 %v4879, 16
      %v5089 = vpop.permute.xlu0 %5088
      %5090 = vrot.lane.b32.xlu0 %v4881, 16
      %v5091 = vpop.permute.xlu0 %5090
      %5092 = vrot.lane.b32.xlu0 %v4883, 16
      %v5093 = vpop.permute.xlu0 %5092
      %5094 = vrot.lane.b32.xlu0 %v4885, 16
      %v5095 = vpop.permute.xlu0 %5094
      %v5096 = vsel %vm1208, %v5065, %v5081
      %v5097 = vsel %vm1208, %v5067, %v5083
      %v5098 = vsel %vm1208, %v5069, %v5085
      %v5099 = vsel %vm1208, %v5071, %v5087
      %v5100 = vsel %vm1208, %v5073, %v5089
      %v5101 = vsel %vm1208, %v5075, %v5091
      %v5102 = vsel %vm1208, %v5077, %v5093
      %v5103 = vsel %vm1208, %v5079, %v5095
      %v5104 = vsel %vm1208, %v5081, %v5065
      %v5105 = vsel %vm1208, %v5083, %v5067
      %v5106 = vsel %vm1208, %v5085, %v5069
      %v5107 = vsel %vm1208, %v5087, %v5071
      %v5108 = vsel %vm1208, %v5089, %v5073
      %v5109 = vsel %vm1208, %v5091, %v5075
      %v5110 = vsel %vm1208, %v5093, %v5077
      %v5111 = vsel %vm1208, %v5095, %v5079
      %v5112 = vmul.f32 %v5104, %v3481
      %v5113 = vmul.f32 %v5096, %v3485
      %v5114 = vmul.f32 %v5105, %v3481
      %v5115 = vmul.f32 %v5097, %v3485
      %v5116 = vmul.f32 %v5106, %v3481
      %v5117 = vmul.f32 %v5098, %v3485
      %v5118 = vmul.f32 %v5107, %v3481
      %v5119 = vmul.f32 %v5099, %v3485
      %v5120 = vmul.f32 %v5108, %v3481
      %v5121 = vmul.f32 %v5100, %v3485
      %v5122 = vmul.f32 %v5109, %v3481
      %v5123 = vmul.f32 %v5101, %v3485
      %v5124 = vmul.f32 %v5110, %v3481
      %v5125 = vmul.f32 %v5102, %v3485
      %v5126 = vmul.f32 %v5111, %v3481
      %v5127 = vmul.f32 %v5103, %v3485
      %s5128 = scalar_lea.vmem %s7, 16
      %v5129 = vld [vmem:[%s5128] sm:$0xf]
      %v5130 = vld [vmem:[%s5128 + $0x4] sm:$0xf]
      %v5131 = vld [vmem:[%s5128 + $0x8] sm:$0xf]
      %v5132 = vld [vmem:[%s5128 + $0xc] sm:$0xf]
      %v5133 = vpack.c.bf16 %v5114, %v5112
      %v5134 = vpack.c.bf16 %v5115, %v5113
      %v5135 = vpack.c.bf16 %v5118, %v5116
      %v5136 = vpack.c.bf16 %v5119, %v5117
      %v5137 = vpack.c.bf16 %v5122, %v5120
      %v5138 = vpack.c.bf16 %v5123, %v5121
      %v5139 = vpack.c.bf16 %v5126, %v5124
      %v5140 = vpack.c.bf16 %v5127, %v5125
      %v5145 = vunpack.c.l.b16 %v5129
      %v5146 = vunpack.c.l.b16 %v5130
      %v5147 = vunpack.c.l.b16 %v5131
      %v5148 = vunpack.c.l.b16 %v5132
      %v5149 = vpack.c.b16 %v5146, %v5145
      %v5150 = vpack.c.b16 %v5148, %v5147
      %v5152 = vsel %vm4996, %v5149, 0
      %v5155 = vsel %vm4996, %v5150, 0
      %5157 = vmatprep.subr.bf16.mxu0 %v5134
      %5158 = vmatpush1.bf16.msra.mxu0 %v5133
      %5159 = vmatprep.subr.bf16.mxu0 %v5136
      %5160 = vmatpush1.bf16.msra.mxu0 %v5135
      %5161 = vmatprep.subr.bf16.mxu0 %v5138
      %5162 = vmatpush1.bf16.msra.mxu0 %v5137
      %5163 = vmatprep.subr.bf16.mxu0 %v5140
      %5164 = vmatpush1.bf16.msra.mxu0 %v5139
      %5165 = vmatprep.subr.bf16.mxu0 0
      %5166 = vmatpush1.bf16.msra.mxu0 0
      %5167 = vmatprep.subr.bf16.mxu0 0
      %5168 = vmatpush1.bf16.msra.mxu0 0
      %5169 = vmatprep.subr.bf16.mxu0 0
      %5170 = vmatpush1.bf16.msra.mxu0 0
      %5171 = vmatprep.subr.bf16.mxu0 0
      %5172 = vmatpush1.bf16.msra.mxu0 0
      %5173 = vmatprep.subr.bf16.mxu0 0
      %5174 = vmatpush1.bf16.msra.mxu0 0
      %5175 = vmatprep.subr.bf16.mxu0 0
      %5176 = vmatpush1.bf16.msra.mxu0 0
      %5177 = vmatprep.subr.bf16.mxu0 0
      %5178 = vmatpush1.bf16.msra.mxu0 0
      %5179 = vmatprep.subr.bf16.mxu0 0
      %5180 = vmatpush1.bf16.msra.mxu0 0
      %5181 = vmatprep.subr.bf16.mxu0 0
      %5182 = vmatpush1.bf16.msra.mxu0 0
      %5183 = vmatprep.subr.bf16.mxu0 0
      %5184 = vmatpush1.bf16.msra.mxu0 0
      %5185 = vmatprep.subr.bf16.mxu0 0
      %5186 = vmatpush1.bf16.msra.mxu0 0
      %5187 = vmatprep.subr.bf16.mxu0 0
      %5188 = vmatpush1.bf16.msra.mxu0 0
      %5189 = vmatprep.mubr.bf16.mxu0 0
      %5190 = vmatmul.mubr.bf16.gmra.mrb[0].mxu0 %v5152
      %v5191 = vpop.f32.mrb[0].mxu0
      %v5192 = vadd.f32 0.0, %v5191
      %v5193 = vpop.f32.mrb[0].mxu0
      %v5194 = vadd.f32 0.0, %v5193
      %v5195 = vpop.f32.mrb[0].mxu0
      %v5196 = vadd.f32 0.0, %v5195
      %v5197 = vpop.f32.mrb[0].mxu0
      %v5198 = vadd.f32 0.0, %v5197
      %5199 = vmatprep.mubr.bf16.mxu0 0
      %5200 = vmatmul.mubr.bf16.gmra.mrb[0].mxu0 %v5155
      %v5201 = vpop.f32.mrb[0].mxu0
      %v5202 = vadd.f32 0.0, %v5201
      %v5203 = vpop.f32.mrb[0].mxu0
      %v5204 = vadd.f32 0.0, %v5203
      %v5205 = vpop.f32.mrb[0].mxu0
      %v5206 = vadd.f32 0.0, %v5205
      %v5207 = vpop.f32.mrb[0].mxu0
      %v5208 = vadd.f32 0.0, %v5207
      %5209 = vdwg.mxu0
      %v5210 = vadd.f32 %v5056, %v5192
      %v5211 = vadd.f32 %v5057, %v5194
      %v5212 = vadd.f32 %v5058, %v5196
      %v5213 = vadd.f32 %v5059, %v5198
      %v5214 = vadd.f32 %v5060, %v5202
      %v5215 = vadd.f32 %v5061, %v5204
      %v5216 = vadd.f32 %v5062, %v5206
      %v5217 = vadd.f32 %v5063, %v5208
      %5218 = vrot.lane.b32.xlu0 %v4870, 15
      %v5219 = vpop.permute.xlu0 %5218
      %5220 = vrot.lane.b32.xlu0 %v4872, 15
      %v5221 = vpop.permute.xlu0 %5220
      %5222 = vrot.lane.b32.xlu0 %v4874, 15
      %v5223 = vpop.permute.xlu0 %5222
      %5224 = vrot.lane.b32.xlu0 %v4876, 15
      %v5225 = vpop.permute.xlu0 %5224
      %5226 = vrot.lane.b32.xlu0 %v4878, 15
      %v5227 = vpop.permute.xlu0 %5226
      %5228 = vrot.lane.b32.xlu0 %v4880, 15
      %v5229 = vpop.permute.xlu0 %5228
      %5230 = vrot.lane.b32.xlu0 %v4882, 15
      %v5231 = vpop.permute.xlu0 %5230
      %5232 = vrot.lane.b32.xlu0 %v4884, 15
      %v5233 = vpop.permute.xlu0 %5232
      %5234 = vrot.lane.b32.xlu0 %v4871, 15
      %v5235 = vpop.permute.xlu0 %5234
      %5236 = vrot.lane.b32.xlu0 %v4873, 15
      %v5237 = vpop.permute.xlu0 %5236
      %5238 = vrot.lane.b32.xlu0 %v4875, 15
      %v5239 = vpop.permute.xlu0 %5238
      %5240 = vrot.lane.b32.xlu0 %v4877, 15
      %v5241 = vpop.permute.xlu0 %5240
      %5242 = vrot.lane.b32.xlu0 %v4879, 15
      %v5243 = vpop.permute.xlu0 %5242
      %5244 = vrot.lane.b32.xlu0 %v4881, 15
      %v5245 = vpop.permute.xlu0 %5244
      %5246 = vrot.lane.b32.xlu0 %v4883, 15
      %v5247 = vpop.permute.xlu0 %5246
      %5248 = vrot.lane.b32.xlu0 %v4885, 15
      %v5249 = vpop.permute.xlu0 %5248
      %v5250 = vsel %vm1320, %v5219, %v5235
      %v5251 = vsel %vm1320, %v5221, %v5237
      %v5252 = vsel %vm1320, %v5223, %v5239
      %v5253 = vsel %vm1320, %v5225, %v5241
      %v5254 = vsel %vm1320, %v5227, %v5243
      %v5255 = vsel %vm1320, %v5229, %v5245
      %v5256 = vsel %vm1320, %v5231, %v5247
      %v5257 = vsel %vm1320, %v5233, %v5249
      %v5258 = vsel %vm1320, %v5235, %v5219
      %v5259 = vsel %vm1320, %v5237, %v5221
      %v5260 = vsel %vm1320, %v5239, %v5223
      %v5261 = vsel %vm1320, %v5241, %v5225
      %v5262 = vsel %vm1320, %v5243, %v5227
      %v5263 = vsel %vm1320, %v5245, %v5229
      %v5264 = vsel %vm1320, %v5247, %v5231
      %v5265 = vsel %vm1320, %v5249, %v5233
      %v5266 = vmul.f32 %v5258, %v3660
      %v5267 = vmul.f32 %v5250, %v3664
      %v5268 = vmul.f32 %v5259, %v3660
      %v5269 = vmul.f32 %v5251, %v3664
      %v5270 = vmul.f32 %v5260, %v3660
      %v5271 = vmul.f32 %v5252, %v3664
      %v5272 = vmul.f32 %v5261, %v3660
      %v5273 = vmul.f32 %v5253, %v3664
      %v5274 = vmul.f32 %v5262, %v3660
      %v5275 = vmul.f32 %v5254, %v3664
      %v5276 = vmul.f32 %v5263, %v3660
      %v5277 = vmul.f32 %v5255, %v3664
      %v5278 = vmul.f32 %v5264, %v3660
      %v5279 = vmul.f32 %v5256, %v3664
      %v5280 = vmul.f32 %v5265, %v3660
      %v5281 = vmul.f32 %v5257, %v3664
      %s5282 = scalar_lea.vmem %s7, 32
      %v5283 = vld [vmem:[%s5282] sm:$0xf]
      %v5284 = vld [vmem:[%s5282 + $0x4] sm:$0xf]
      %v5285 = vld [vmem:[%s5282 + $0x8] sm:$0xf]
      %v5286 = vld [vmem:[%s5282 + $0xc] sm:$0xf]
      %v5287 = vpack.c.bf16 %v5268, %v5266
      %v5288 = vpack.c.bf16 %v5269, %v5267
      %v5289 = vpack.c.bf16 %v5272, %v5270
      %v5290 = vpack.c.bf16 %v5273, %v5271
      %v5291 = vpack.c.bf16 %v5276, %v5274
      %v5292 = vpack.c.bf16 %v5277, %v5275
      %v5293 = vpack.c.bf16 %v5280, %v5278
      %v5294 = vpack.c.bf16 %v5281, %v5279
      %v5299 = vunpack.c.l.b16 %v5283
      %v5300 = vunpack.c.l.b16 %v5284
      %v5301 = vunpack.c.l.b16 %v5285
      %v5302 = vunpack.c.l.b16 %v5286
      %v5303 = vpack.c.b16 %v5300, %v5299
      %v5304 = vpack.c.b16 %v5302, %v5301
      %v5306 = vsel %vm4996, %v5303, 0
      %v5309 = vsel %vm4996, %v5304, 0
      %5311 = vmatprep.subr.bf16.mxu0 %v5288
      %5312 = vmatpush1.bf16.msra.mxu0 %v5287
      %5313 = vmatprep.subr.bf16.mxu0 %v5290
      %5314 = vmatpush1.bf16.msra.mxu0 %v5289
      %5315 = vmatprep.subr.bf16.mxu0 %v5292
      %5316 = vmatpush1.bf16.msra.mxu0 %v5291
      %5317 = vmatprep.subr.bf16.mxu0 %v5294
      %5318 = vmatpush1.bf16.msra.mxu0 %v5293
      %5319 = vmatprep.subr.bf16.mxu0 0
      %5320 = vmatpush1.bf16.msra.mxu0 0
      %5321 = vmatprep.subr.bf16.mxu0 0
      %5322 = vmatpush1.bf16.msra.mxu0 0
      %5323 = vmatprep.subr.bf16.mxu0 0
      %5324 = vmatpush1.bf16.msra.mxu0 0
      %5325 = vmatprep.subr.bf16.mxu0 0
      %5326 = vmatpush1.bf16.msra.mxu0 0
      %5327 = vmatprep.subr.bf16.mxu0 0
      %5328 = vmatpush1.bf16.msra.mxu0 0
      %5329 = vmatprep.subr.bf16.mxu0 0
      %5330 = vmatpush1.bf16.msra.mxu0 0
      %5331 = vmatprep.subr.bf16.mxu0 0
      %5332 = vmatpush1.bf16.msra.mxu0 0
      %5333 = vmatprep.subr.bf16.mxu0 0
      %5334 = vmatpush1.bf16.msra.mxu0 0
      %5335 = vmatprep.subr.bf16.mxu0 0
      %5336 = vmatpush1.bf16.msra.mxu0 0
      %5337 = vmatprep.subr.bf16.mxu0 0
      %5338 = vmatpush1.bf16.msra.mxu0 0
      %5339 = vmatprep.subr.bf16.mxu0 0
      %5340 = vmatpush1.bf16.msra.mxu0 0
      %5341 = vmatprep.subr.bf16.mxu0 0
      %5342 = vmatpush1.bf16.msra.mxu0 0
      %5343 = vmatprep.mubr.bf16.mxu0 0
      %5344 = vmatmul.mubr.bf16.gmra.mrb[0].mxu0 %v5306
      %v5345 = vpop.f32.mrb[0].mxu0
      %v5346 = vadd.f32 0.0, %v5345
      %v5347 = vpop.f32.mrb[0].mxu0
      %v5348 = vadd.f32 0.0, %v5347
      %v5349 = vpop.f32.mrb[0].mxu0
      %v5350 = vadd.f32 0.0, %v5349
      %v5351 = vpop.f32.mrb[0].mxu0
      %v5352 = vadd.f32 0.0, %v5351
      %5353 = vmatprep.mubr.bf16.mxu0 0
      %5354 = vmatmul.mubr.bf16.gmra.mrb[0].mxu0 %v5309
      %v5355 = vpop.f32.mrb[0].mxu0
      %v5356 = vadd.f32 0.0, %v5355
      %v5357 = vpop.f32.mrb[0].mxu0
      %v5358 = vadd.f32 0.0, %v5357
      %v5359 = vpop.f32.mrb[0].mxu0
      %v5360 = vadd.f32 0.0, %v5359
      %v5361 = vpop.f32.mrb[0].mxu0
      %v5362 = vadd.f32 0.0, %v5361
      %5363 = vdwg.mxu0
      %v5364 = vadd.f32 %v5210, %v5346
      %v5365 = vadd.f32 %v5211, %v5348
      %v5366 = vadd.f32 %v5212, %v5350
      %v5367 = vadd.f32 %v5213, %v5352
      %v5368 = vadd.f32 %v5214, %v5356
      %v5369 = vadd.f32 %v5215, %v5358
      %v5370 = vadd.f32 %v5216, %v5360
      %v5371 = vadd.f32 %v5217, %v5362
      %5372 = vrot.lane.b32.xlu0 %v4870, 1
      %v5373 = vpop.permute.xlu0 %5372
      %5374 = vrot.lane.b32.xlu0 %v4872, 1
      %v5375 = vpop.permute.xlu0 %5374
      %5376 = vrot.lane.b32.xlu0 %v4874, 1
      %v5377 = vpop.permute.xlu0 %5376
      %5378 = vrot.lane.b32.xlu0 %v4876, 1
      %v5379 = vpop.permute.xlu0 %5378
      %5380 = vrot.lane.b32.xlu0 %v4878, 1
      %v5381 = vpop.permute.xlu0 %5380
      %5382 = vrot.lane.b32.xlu0 %v4880, 1
      %v5383 = vpop.permute.xlu0 %5382
      %5384 = vrot.lane.b32.xlu0 %v4882, 1
      %v5385 = vpop.permute.xlu0 %5384
      %5386 = vrot.lane.b32.xlu0 %v4884, 1
      %v5387 = vpop.permute.xlu0 %5386
      %5388 = vrot.lane.b32.xlu0 %v4871, 1
      %v5389 = vpop.permute.xlu0 %5388
      %5390 = vrot.lane.b32.xlu0 %v4873, 1
      %v5391 = vpop.permute.xlu0 %5390
      %5392 = vrot.lane.b32.xlu0 %v4875, 1
      %v5393 = vpop.permute.xlu0 %5392
      %5394 = vrot.lane.b32.xlu0 %v4877, 1
      %v5395 = vpop.permute.xlu0 %5394
      %5396 = vrot.lane.b32.xlu0 %v4879, 1
      %v5397 = vpop.permute.xlu0 %5396
      %5398 = vrot.lane.b32.xlu0 %v4881, 1
      %v5399 = vpop.permute.xlu0 %5398
      %5400 = vrot.lane.b32.xlu0 %v4883, 1
      %v5401 = vpop.permute.xlu0 %5400
      %5402 = vrot.lane.b32.xlu0 %v4885, 1
      %v5403 = vpop.permute.xlu0 %5402
      %v5404 = vsel %vm1656, %v5373, %v5389
      %v5405 = vsel %vm1656, %v5375, %v5391
      %v5406 = vsel %vm1656, %v5377, %v5393
      %v5407 = vsel %vm1656, %v5379, %v5395
      %v5408 = vsel %vm1656, %v5381, %v5397
      %v5409 = vsel %vm1656, %v5383, %v5399
      %v5410 = vsel %vm1656, %v5385, %v5401
      %v5411 = vsel %vm1656, %v5387, %v5403
      %v5412 = vsel %vm1656, %v5389, %v5373
      %v5413 = vsel %vm1656, %v5391, %v5375
      %v5414 = vsel %vm1656, %v5393, %v5377
      %v5415 = vsel %vm1656, %v5395, %v5379
      %v5416 = vsel %vm1656, %v5397, %v5381
      %v5417 = vsel %vm1656, %v5399, %v5383
      %v5418 = vsel %vm1656, %v5401, %v5385
      %v5419 = vsel %vm1656, %v5403, %v5387
      %v5420 = vmul.f32 %v5412, %v3839
      %v5421 = vmul.f32 %v5404, %v3843
      %v5422 = vmul.f32 %v5413, %v3839
      %v5423 = vmul.f32 %v5405, %v3843
      %v5424 = vmul.f32 %v5414, %v3839
      %v5425 = vmul.f32 %v5406, %v3843
      %v5426 = vmul.f32 %v5415, %v3839
      %v5427 = vmul.f32 %v5407, %v3843
      %v5428 = vmul.f32 %v5416, %v3839
      %v5429 = vmul.f32 %v5408, %v3843
      %v5430 = vmul.f32 %v5417, %v3839
      %v5431 = vmul.f32 %v5409, %v3843
      %v5432 = vmul.f32 %v5418, %v3839
      %v5433 = vmul.f32 %v5410, %v3843
      %v5434 = vmul.f32 %v5419, %v3839
      %v5435 = vmul.f32 %v5411, %v3843
      %s5436 = scalar_lea.vmem %s7, 48
      %v5437 = vld [vmem:[%s5436] sm:$0xf]
      %v5438 = vld [vmem:[%s5436 + $0x4] sm:$0xf]
      %v5439 = vld [vmem:[%s5436 + $0x8] sm:$0xf]
      %v5440 = vld [vmem:[%s5436 + $0xc] sm:$0xf]
      %v5441 = vpack.c.bf16 %v5422, %v5420
      %v5442 = vpack.c.bf16 %v5423, %v5421
      %v5443 = vpack.c.bf16 %v5426, %v5424
      %v5444 = vpack.c.bf16 %v5427, %v5425
      %v5445 = vpack.c.bf16 %v5430, %v5428
      %v5446 = vpack.c.bf16 %v5431, %v5429
      %v5447 = vpack.c.bf16 %v5434, %v5432
      %v5448 = vpack.c.bf16 %v5435, %v5433
      %v5453 = vunpack.c.l.b16 %v5437
      %v5454 = vunpack.c.l.b16 %v5438
      %v5455 = vunpack.c.l.b16 %v5439
      %v5456 = vunpack.c.l.b16 %v5440
      %v5457 = vpack.c.b16 %v5454, %v5453
      %v5458 = vpack.c.b16 %v5456, %v5455
      %v5460 = vsel %vm4996, %v5457, 0
      %v5463 = vsel %vm4996, %v5458, 0
      %5465 = vmatprep.subr.bf16.mxu0 %v5442
      %5466 = vmatpush1.bf16.msra.mxu0 %v5441
      %5467 = vmatprep.subr.bf16.mxu0 %v5444
      %5468 = vmatpush1.bf16.msra.mxu0 %v5443
      %5469 = vmatprep.subr.bf16.mxu0 %v5446
      %5470 = vmatpush1.bf16.msra.mxu0 %v5445
      %5471 = vmatprep.subr.bf16.mxu0 %v5448
      %5472 = vmatpush1.bf16.msra.mxu0 %v5447
      %5473 = vmatprep.subr.bf16.mxu0 0
      %5474 = vmatpush1.bf16.msra.mxu0 0
      %5475 = vmatprep.subr.bf16.mxu0 0
      %5476 = vmatpush1.bf16.msra.mxu0 0
      %5477 = vmatprep.subr.bf16.mxu0 0
      %5478 = vmatpush1.bf16.msra.mxu0 0
      %5479 = vmatprep.subr.bf16.mxu0 0
      %5480 = vmatpush1.bf16.msra.mxu0 0
      %5481 = vmatprep.subr.bf16.mxu0 0
      %5482 = vmatpush1.bf16.msra.mxu0 0
      %5483 = vmatprep.subr.bf16.mxu0 0
      %5484 = vmatpush1.bf16.msra.mxu0 0
      %5485 = vmatprep.subr.bf16.mxu0 0
      %5486 = vmatpush1.bf16.msra.mxu0 0
      %5487 = vmatprep.subr.bf16.mxu0 0
      %5488 = vmatpush1.bf16.msra.mxu0 0
      %5489 = vmatprep.subr.bf16.mxu0 0
      %5490 = vmatpush1.bf16.msra.mxu0 0
      %5491 = vmatprep.subr.bf16.mxu0 0
      %5492 = vmatpush1.bf16.msra.mxu0 0
      %5493 = vmatprep.subr.bf16.mxu0 0
      %5494 = vmatpush1.bf16.msra.mxu0 0
      %5495 = vmatprep.subr.bf16.mxu0 0
      %5496 = vmatpush1.bf16.msra.mxu0 0
      %5497 = vmatprep.mubr.bf16.mxu0 0
      %5498 = vmatmul.mubr.bf16.gmra.mrb[0].mxu0 %v5460
      %v5499 = vpop.f32.mrb[0].mxu0
      %v5500 = vadd.f32 0.0, %v5499
      %v5501 = vpop.f32.mrb[0].mxu0
      %v5502 = vadd.f32 0.0, %v5501
      %v5503 = vpop.f32.mrb[0].mxu0
      %v5504 = vadd.f32 0.0, %v5503
      %v5505 = vpop.f32.mrb[0].mxu0
      %v5506 = vadd.f32 0.0, %v5505
      %5507 = vmatprep.mubr.bf16.mxu0 0
      %5508 = vmatmul.mubr.bf16.gmra.mrb[0].mxu0 %v5463
      %v5509 = vpop.f32.mrb[0].mxu0
      %v5510 = vadd.f32 0.0, %v5509
      %v5511 = vpop.f32.mrb[0].mxu0
      %v5512 = vadd.f32 0.0, %v5511
      %v5513 = vpop.f32.mrb[0].mxu0
      %v5514 = vadd.f32 0.0, %v5513
      %v5515 = vpop.f32.mrb[0].mxu0
      %v5516 = vadd.f32 0.0, %v5515
      %5517 = vdwg.mxu0
      %v5518 = vadd.f32 %v5364, %v5500
      %v5519 = vadd.f32 %v5365, %v5502
      %v5520 = vadd.f32 %v5366, %v5504
      %v5521 = vadd.f32 %v5367, %v5506
      %v5522 = vadd.f32 %v5368, %v5510
      %v5523 = vadd.f32 %v5369, %v5512
      %v5524 = vadd.f32 %v5370, %v5514
      %v5525 = vadd.f32 %v5371, %v5516
      %s5526 = scalar_lea.vmem %s7, 64
      %v5527 = vld [vmem:[%s5526] sm:$0xf]
      %v5528 = vld [vmem:[%s5526 + $0x4] sm:$0xf]
      %v5529 = vld [vmem:[%s5526 + $0x8] sm:$0xf]
      %v5530 = vld [vmem:[%s5526 + $0xc] sm:$0xf]
      %v5531 = vpack.c.bf16 %v4872, %v4870
      %v5532 = vpack.c.bf16 %v4873, %v4871
      %v5533 = vpack.c.bf16 %v4876, %v4874
      %v5534 = vpack.c.bf16 %v4877, %v4875
      %v5535 = vpack.c.bf16 %v4880, %v4878
      %v5536 = vpack.c.bf16 %v4881, %v4879
      %v5537 = vpack.c.bf16 %v4884, %v4882
      %v5538 = vpack.c.bf16 %v4885, %v4883
      %v5543 = vunpack.c.l.b16 %v5527
      %v5544 = vunpack.c.l.b16 %v5528
      %v5545 = vunpack.c.l.b16 %v5529
      %v5546 = vunpack.c.l.b16 %v5530
      %v5547 = vpack.c.b16 %v5544, %v5543
      %v5548 = vpack.c.b16 %v5546, %v5545
      %v5550 = vsel %vm4996, %v5547, 0
      %v5553 = vsel %vm4996, %v5548, 0
      %5555 = vmatprep.subr.bf16.mxu0 %v5532
      %5556 = vmatpush1.bf16.msra.mxu0 %v5531
      %5557 = vmatprep.subr.bf16.mxu0 %v5534
      %5558 = vmatpush1.bf16.msra.mxu0 %v5533
      %5559 = vmatprep.subr.bf16.mxu0 %v5536
      %5560 = vmatpush1.bf16.msra.mxu0 %v5535
      %5561 = vmatprep.subr.bf16.mxu0 %v5538
      %5562 = vmatpush1.bf16.msra.mxu0 %v5537
      %5563 = vmatprep.subr.bf16.mxu0 0
      %5564 = vmatpush1.bf16.msra.mxu0 0
      %5565 = vmatprep.subr.bf16.mxu0 0
      %5566 = vmatpush1.bf16.msra.mxu0 0
      %5567 = vmatprep.subr.bf16.mxu0 0
      %5568 = vmatpush1.bf16.msra.mxu0 0
      %5569 = vmatprep.subr.bf16.mxu0 0
      %5570 = vmatpush1.bf16.msra.mxu0 0
      %5571 = vmatprep.subr.bf16.mxu0 0
      %5572 = vmatpush1.bf16.msra.mxu0 0
      %5573 = vmatprep.subr.bf16.mxu0 0
      %5574 = vmatpush1.bf16.msra.mxu0 0
      %5575 = vmatprep.subr.bf16.mxu0 0
      %5576 = vmatpush1.bf16.msra.mxu0 0
      %5577 = vmatprep.subr.bf16.mxu0 0
      %5578 = vmatpush1.bf16.msra.mxu0 0
      %5579 = vmatprep.subr.bf16.mxu0 0
      %5580 = vmatpush1.bf16.msra.mxu0 0
      %5581 = vmatprep.subr.bf16.mxu0 0
      %5582 = vmatpush1.bf16.msra.mxu0 0
      %5583 = vmatprep.subr.bf16.mxu0 0
      %5584 = vmatpush1.bf16.msra.mxu0 0
      %5585 = vmatprep.subr.bf16.mxu0 0
      %5586 = vmatpush1.bf16.msra.mxu0 0
      %5587 = vmatprep.mubr.bf16.mxu0 0
      %5588 = vmatmul.mubr.bf16.gmra.mrb[0].mxu0 %v5550
      %v5589 = vpop.f32.mrb[0].mxu0
      %v5590 = vadd.f32 0.0, %v5589
      %v5591 = vpop.f32.mrb[0].mxu0
      %v5592 = vadd.f32 0.0, %v5591
      %v5593 = vpop.f32.mrb[0].mxu0
      %v5594 = vadd.f32 0.0, %v5593
      %v5595 = vpop.f32.mrb[0].mxu0
      %v5596 = vadd.f32 0.0, %v5595
      %5597 = vmatprep.mubr.bf16.mxu0 0
      %5598 = vmatmul.mubr.bf16.gmra.mrb[0].mxu0 %v5553
      %v5599 = vpop.f32.mrb[0].mxu0
      %v5600 = vadd.f32 0.0, %v5599
      %v5601 = vpop.f32.mrb[0].mxu0
      %v5602 = vadd.f32 0.0, %v5601
      %v5603 = vpop.f32.mrb[0].mxu0
      %v5604 = vadd.f32 0.0, %v5603
      %v5605 = vpop.f32.mrb[0].mxu0
      %v5606 = vadd.f32 0.0, %v5605
      %5607 = vdwg.mxu0
      %v5608 = vadd.f32 %v5518, %v5590
      %v5609 = vadd.f32 %v5519, %v5592
      %v5610 = vadd.f32 %v5520, %v5594
      %v5611 = vadd.f32 %v5521, %v5596
      %v5612 = vadd.f32 %v5522, %v5600
      %v5613 = vadd.f32 %v5523, %v5602
      %v5614 = vadd.f32 %v5524, %v5604
      %v5615 = vadd.f32 %v5525, %v5606
      %5616 = vrot.lane.b32.xlu0 %v4870, 127
      %v5617 = vpop.permute.xlu0 %5616
      %5618 = vrot.lane.b32.xlu0 %v4872, 127
      %v5619 = vpop.permute.xlu0 %5618
      %5620 = vrot.lane.b32.xlu0 %v4874, 127
      %v5621 = vpop.permute.xlu0 %5620
      %5622 = vrot.lane.b32.xlu0 %v4876, 127
      %v5623 = vpop.permute.xlu0 %5622
      %5624 = vrot.lane.b32.xlu0 %v4878, 127
      %v5625 = vpop.permute.xlu0 %5624
      %5626 = vrot.lane.b32.xlu0 %v4880, 127
      %v5627 = vpop.permute.xlu0 %5626
      %5628 = vrot.lane.b32.xlu0 %v4882, 127
      %v5629 = vpop.permute.xlu0 %5628
      %5630 = vrot.lane.b32.xlu0 %v4884, 127
      %v5631 = vpop.permute.xlu0 %5630
      %5632 = vrot.lane.b32.xlu0 %v4871, 127
      %v5633 = vpop.permute.xlu0 %5632
      %5634 = vrot.lane.b32.xlu0 %v4873, 127
      %v5635 = vpop.permute.xlu0 %5634
      %5636 = vrot.lane.b32.xlu0 %v4875, 127
      %v5637 = vpop.permute.xlu0 %5636
      %5638 = vrot.lane.b32.xlu0 %v4877, 127
      %v5639 = vpop.permute.xlu0 %5638
      %5640 = vrot.lane.b32.xlu0 %v4879, 127
      %v5641 = vpop.permute.xlu0 %5640
      %5642 = vrot.lane.b32.xlu0 %v4881, 127
      %v5643 = vpop.permute.xlu0 %5642
      %5644 = vrot.lane.b32.xlu0 %v4883, 127
      %v5645 = vpop.permute.xlu0 %5644
      %5646 = vrot.lane.b32.xlu0 %v4885, 127
      %v5647 = vpop.permute.xlu0 %5646
      %v5648 = vsel %vm1861, %v5617, %v5633
      %v5649 = vsel %vm1861, %v5619, %v5635
      %v5650 = vsel %vm1861, %v5621, %v5637
      %v5651 = vsel %vm1861, %v5623, %v5639
      %v5652 = vsel %vm1861, %v5625, %v5641
      %v5653 = vsel %vm1861, %v5627, %v5643
      %v5654 = vsel %vm1861, %v5629, %v5645
      %v5655 = vsel %vm1861, %v5631, %v5647
      %v5656 = vsel %vm1861, %v5633, %v5617
      %v5657 = vsel %vm1861, %v5635, %v5619
      %v5658 = vsel %vm1861, %v5637, %v5621
      %v5659 = vsel %vm1861, %v5639, %v5623
      %v5660 = vsel %vm1861, %v5641, %v5625
      %v5661 = vsel %vm1861, %v5643, %v5627
      %v5662 = vsel %vm1861, %v5645, %v5629
      %v5663 = vsel %vm1861, %v5647, %v5631
      %v5664 = vmul.f32 %v5648, %v4152
      %v5665 = vmul.f32 %v5656, %v4156
      %v5666 = vmul.f32 %v5649, %v4152
      %v5667 = vmul.f32 %v5657, %v4156
      %v5668 = vmul.f32 %v5650, %v4152
      %v5669 = vmul.f32 %v5658, %v4156
      %v5670 = vmul.f32 %v5651, %v4152
      %v5671 = vmul.f32 %v5659, %v4156
      %v5672 = vmul.f32 %v5652, %v4152
      %v5673 = vmul.f32 %v5660, %v4156
      %v5674 = vmul.f32 %v5653, %v4152
      %v5675 = vmul.f32 %v5661, %v4156
      %v5676 = vmul.f32 %v5654, %v4152
      %v5677 = vmul.f32 %v5662, %v4156
      %v5678 = vmul.f32 %v5655, %v4152
      %v5679 = vmul.f32 %v5663, %v4156
      %s5680 = scalar_lea.vmem %s7, 80
      %v5681 = vld [vmem:[%s5680] sm:$0xf]
      %v5682 = vld [vmem:[%s5680 + $0x4] sm:$0xf]
      %v5683 = vld [vmem:[%s5680 + $0x8] sm:$0xf]
      %v5684 = vld [vmem:[%s5680 + $0xc] sm:$0xf]
      %v5685 = vpack.c.bf16 %v5666, %v5664
      %v5686 = vpack.c.bf16 %v5667, %v5665
      %v5687 = vpack.c.bf16 %v5670, %v5668
      %v5688 = vpack.c.bf16 %v5671, %v5669
      %v5689 = vpack.c.bf16 %v5674, %v5672
      %v5690 = vpack.c.bf16 %v5675, %v5673
      %v5691 = vpack.c.bf16 %v5678, %v5676
      %v5692 = vpack.c.bf16 %v5679, %v5677
      %v5697 = vunpack.c.l.b16 %v5681
      %v5698 = vunpack.c.l.b16 %v5682
      %v5699 = vunpack.c.l.b16 %v5683
      %v5700 = vunpack.c.l.b16 %v5684
      %v5701 = vpack.c.b16 %v5698, %v5697
      %v5702 = vpack.c.b16 %v5700, %v5699
      %v5704 = vsel %vm4996, %v5701, 0
      %v5707 = vsel %vm4996, %v5702, 0
      %5709 = vmatprep.subr.bf16.mxu0 %v5686
      %5710 = vmatpush1.bf16.msra.mxu0 %v5685
      %5711 = vmatprep.subr.bf16.mxu0 %v5688
      %5712 = vmatpush1.bf16.msra.mxu0 %v5687
      %5713 = vmatprep.subr.bf16.mxu0 %v5690
      %5714 = vmatpush1.bf16.msra.mxu0 %v5689
      %5715 = vmatprep.subr.bf16.mxu0 %v5692
      %5716 = vmatpush1.bf16.msra.mxu0 %v5691
      %5717 = vmatprep.subr.bf16.mxu0 0
      %5718 = vmatpush1.bf16.msra.mxu0 0
      %5719 = vmatprep.subr.bf16.mxu0 0
      %5720 = vmatpush1.bf16.msra.mxu0 0
      %5721 = vmatprep.subr.bf16.mxu0 0
      %5722 = vmatpush1.bf16.msra.mxu0 0
      %5723 = vmatprep.subr.bf16.mxu0 0
      %5724 = vmatpush1.bf16.msra.mxu0 0
      %5725 = vmatprep.subr.bf16.mxu0 0
      %5726 = vmatpush1.bf16.msra.mxu0 0
      %5727 = vmatprep.subr.bf16.mxu0 0
      %5728 = vmatpush1.bf16.msra.mxu0 0
      %5729 = vmatprep.subr.bf16.mxu0 0
      %5730 = vmatpush1.bf16.msra.mxu0 0
      %5731 = vmatprep.subr.bf16.mxu0 0
      %5732 = vmatpush1.bf16.msra.mxu0 0
      %5733 = vmatprep.subr.bf16.mxu0 0
      %5734 = vmatpush1.bf16.msra.mxu0 0
      %5735 = vmatprep.subr.bf16.mxu0 0
      %5736 = vmatpush1.bf16.msra.mxu0 0
      %5737 = vmatprep.subr.bf16.mxu0 0
      %5738 = vmatpush1.bf16.msra.mxu0 0
      %5739 = vmatprep.subr.bf16.mxu0 0
      %5740 = vmatpush1.bf16.msra.mxu0 0
      %5741 = vmatprep.mubr.bf16.mxu0 0
      %5742 = vmatmul.mubr.bf16.gmra.mrb[0].mxu0 %v5704
      %v5743 = vpop.f32.mrb[0].mxu0
      %v5744 = vadd.f32 0.0, %v5743
      %v5745 = vpop.f32.mrb[0].mxu0
      %v5746 = vadd.f32 0.0, %v5745
      %v5747 = vpop.f32.mrb[0].mxu0
      %v5748 = vadd.f32 0.0, %v5747
      %v5749 = vpop.f32.mrb[0].mxu0
      %v5750 = vadd.f32 0.0, %v5749
      %5751 = vmatprep.mubr.bf16.mxu0 0
      %5752 = vmatmul.mubr.bf16.gmra.mrb[0].mxu0 %v5707
      %v5753 = vpop.f32.mrb[0].mxu0
      %v5754 = vadd.f32 0.0, %v5753
      %v5755 = vpop.f32.mrb[0].mxu0
      %v5756 = vadd.f32 0.0, %v5755
      %v5757 = vpop.f32.mrb[0].mxu0
      %v5758 = vadd.f32 0.0, %v5757
      %v5759 = vpop.f32.mrb[0].mxu0
      %v5760 = vadd.f32 0.0, %v5759
      %5761 = vdwg.mxu0
      %v5762 = vadd.f32 %v5608, %v5744
      %v5763 = vadd.f32 %v5609, %v5746
      %v5764 = vadd.f32 %v5610, %v5748
      %v5765 = vadd.f32 %v5611, %v5750
      %v5766 = vadd.f32 %v5612, %v5754
      %v5767 = vadd.f32 %v5613, %v5756
      %v5768 = vadd.f32 %v5614, %v5758
      %v5769 = vadd.f32 %v5615, %v5760
      %5770 = vrot.lane.b32.xlu0 %v4870, 113
      %v5771 = vpop.permute.xlu0 %5770
      %5772 = vrot.lane.b32.xlu0 %v4872, 113
      %v5773 = vpop.permute.xlu0 %5772
      %5774 = vrot.lane.b32.xlu0 %v4874, 113
      %v5775 = vpop.permute.xlu0 %5774
      %5776 = vrot.lane.b32.xlu0 %v4876, 113
      %v5777 = vpop.permute.xlu0 %5776
      %5778 = vrot.lane.b32.xlu0 %v4878, 113
      %v5779 = vpop.permute.xlu0 %5778
      %5780 = vrot.lane.b32.xlu0 %v4880, 113
      %v5781 = vpop.permute.xlu0 %5780
      %5782 = vrot.lane.b32.xlu0 %v4882, 113
      %v5783 = vpop.permute.xlu0 %5782
      %5784 = vrot.lane.b32.xlu0 %v4884, 113
      %v5785 = vpop.permute.xlu0 %5784
      %5786 = vrot.lane.b32.xlu0 %v4871, 113
      %v5787 = vpop.permute.xlu0 %5786
      %5788 = vrot.lane.b32.xlu0 %v4873, 113
      %v5789 = vpop.permute.xlu0 %5788
      %5790 = vrot.lane.b32.xlu0 %v4875, 113
      %v5791 = vpop.permute.xlu0 %5790
      %5792 = vrot.lane.b32.xlu0 %v4877, 113
      %v5793 = vpop.permute.xlu0 %5792
      %5794 = vrot.lane.b32.xlu0 %v4879, 113
      %v5795 = vpop.permute.xlu0 %5794
      %5796 = vrot.lane.b32.xlu0 %v4881, 113
      %v5797 = vpop.permute.xlu0 %5796
      %5798 = vrot.lane.b32.xlu0 %v4883, 113
      %v5799 = vpop.permute.xlu0 %5798
      %5800 = vrot.lane.b32.xlu0 %v4885, 113
      %v5801 = vpop.permute.xlu0 %5800
      %v5802 = vsel %vm2197, %v5771, %v5787
      %v5803 = vsel %vm2197, %v5773, %v5789
      %v5804 = vsel %vm2197, %v5775, %v5791
      %v5805 = vsel %vm2197, %v5777, %v5793
      %v5806 = vsel %vm2197, %v5779, %v5795
      %v5807 = vsel %vm2197, %v5781, %v5797
      %v5808 = vsel %vm2197, %v5783, %v5799
      %v5809 = vsel %vm2197, %v5785, %v5801
      %v5810 = vsel %vm2197, %v5787, %v5771
      %v5811 = vsel %vm2197, %v5789, %v5773
      %v5812 = vsel %vm2197, %v5791, %v5775
      %v5813 = vsel %vm2197, %v5793, %v5777
      %v5814 = vsel %vm2197, %v5795, %v5779
      %v5815 = vsel %vm2197, %v5797, %v5781
      %v5816 = vsel %vm2197, %v5799, %v5783
      %v5817 = vsel %vm2197, %v5801, %v5785
      %v5818 = vmul.f32 %v5802, %v4331
      %v5819 = vmul.f32 %v5810, %v4335
      %v5820 = vmul.f32 %v5803, %v4331
      %v5821 = vmul.f32 %v5811, %v4335
      %v5822 = vmul.f32 %v5804, %v4331
      %v5823 = vmul.f32 %v5812, %v4335
      %v5824 = vmul.f32 %v5805, %v4331
      %v5825 = vmul.f32 %v5813, %v4335
      %v5826 = vmul.f32 %v5806, %v4331
      %v5827 = vmul.f32 %v5814, %v4335
      %v5828 = vmul.f32 %v5807, %v4331
      %v5829 = vmul.f32 %v5815, %v4335
      %v5830 = vmul.f32 %v5808, %v4331
      %v5831 = vmul.f32 %v5816, %v4335
      %v5832 = vmul.f32 %v5809, %v4331
      %v5833 = vmul.f32 %v5817, %v4335
      %s5834 = scalar_lea.vmem %s7, 96
      %v5835 = vld [vmem:[%s5834] sm:$0xf]
      %v5836 = vld [vmem:[%s5834 + $0x4] sm:$0xf]
      %v5837 = vld [vmem:[%s5834 + $0x8] sm:$0xf]
      %v5838 = vld [vmem:[%s5834 + $0xc] sm:$0xf]
      %v5839 = vpack.c.bf16 %v5820, %v5818
      %v5840 = vpack.c.bf16 %v5821, %v5819
      %v5841 = vpack.c.bf16 %v5824, %v5822
      %v5842 = vpack.c.bf16 %v5825, %v5823
      %v5843 = vpack.c.bf16 %v5828, %v5826
      %v5844 = vpack.c.bf16 %v5829, %v5827
      %v5845 = vpack.c.bf16 %v5832, %v5830
      %v5846 = vpack.c.bf16 %v5833, %v5831
      %v5851 = vunpack.c.l.b16 %v5835
      %v5852 = vunpack.c.l.b16 %v5836
      %v5853 = vunpack.c.l.b16 %v5837
      %v5854 = vunpack.c.l.b16 %v5838
      %v5855 = vpack.c.b16 %v5852, %v5851
      %v5856 = vpack.c.b16 %v5854, %v5853
      %v5858 = vsel %vm4996, %v5855, 0
      %v5861 = vsel %vm4996, %v5856, 0
      %5863 = vmatprep.subr.bf16.mxu0 %v5840
      %5864 = vmatpush1.bf16.msra.mxu0 %v5839
      %5865 = vmatprep.subr.bf16.mxu0 %v5842
      %5866 = vmatpush1.bf16.msra.mxu0 %v5841
      %5867 = vmatprep.subr.bf16.mxu0 %v5844
      %5868 = vmatpush1.bf16.msra.mxu0 %v5843
      %5869 = vmatprep.subr.bf16.mxu0 %v5846
      %5870 = vmatpush1.bf16.msra.mxu0 %v5845
      %5871 = vmatprep.subr.bf16.mxu0 0
      %5872 = vmatpush1.bf16.msra.mxu0 0
      %5873 = vmatprep.subr.bf16.mxu0 0
      %5874 = vmatpush1.bf16.msra.mxu0 0
      %5875 = vmatprep.subr.bf16.mxu0 0
      %5876 = vmatpush1.bf16.msra.mxu0 0
      %5877 = vmatprep.subr.bf16.mxu0 0
      %5878 = vmatpush1.bf16.msra.mxu0 0
      %5879 = vmatprep.subr.bf16.mxu0 0
      %5880 = vmatpush1.bf16.msra.mxu0 0
      %5881 = vmatprep.subr.bf16.mxu0 0
      %5882 = vmatpush1.bf16.msra.mxu0 0
      %5883 = vmatprep.subr.bf16.mxu0 0
      %5884 = vmatpush1.bf16.msra.mxu0 0
      %5885 = vmatprep.subr.bf16.mxu0 0
      %5886 = vmatpush1.bf16.msra.mxu0 0
      %5887 = vmatprep.subr.bf16.mxu0 0
      %5888 = vmatpush1.bf16.msra.mxu0 0
      %5889 = vmatprep.subr.bf16.mxu0 0
      %5890 = vmatpush1.bf16.msra.mxu0 0
      %5891 = vmatprep.subr.bf16.mxu0 0
      %5892 = vmatpush1.bf16.msra.mxu0 0
      %5893 = vmatprep.subr.bf16.mxu0 0
      %5894 = vmatpush1.bf16.msra.mxu0 0
      %5895 = vmatprep.mubr.bf16.mxu0 0
      %5896 = vmatmul.mubr.bf16.gmra.mrb[0].mxu0 %v5858
      %v5897 = vpop.f32.mrb[0].mxu0
      %v5898 = vadd.f32 0.0, %v5897
      %v5899 = vpop.f32.mrb[0].mxu0
      %v5900 = vadd.f32 0.0, %v5899
      %v5901 = vpop.f32.mrb[0].mxu0
      %v5902 = vadd.f32 0.0, %v5901
      %v5903 = vpop.f32.mrb[0].mxu0
      %v5904 = vadd.f32 0.0, %v5903
      %5905 = vmatprep.mubr.bf16.mxu0 0
      %5906 = vmatmul.mubr.bf16.gmra.mrb[0].mxu0 %v5861
      %v5907 = vpop.f32.mrb[0].mxu0
      %v5908 = vadd.f32 0.0, %v5907
      %v5909 = vpop.f32.mrb[0].mxu0
      %v5910 = vadd.f32 0.0, %v5909
      %v5911 = vpop.f32.mrb[0].mxu0
      %v5912 = vadd.f32 0.0, %v5911
      %v5913 = vpop.f32.mrb[0].mxu0
      %v5914 = vadd.f32 0.0, %v5913
      %5915 = vdwg.mxu0
      %v5916 = vadd.f32 %v5762, %v5898
      %v5917 = vadd.f32 %v5763, %v5900
      %v5918 = vadd.f32 %v5764, %v5902
      %v5919 = vadd.f32 %v5765, %v5904
      %v5920 = vadd.f32 %v5766, %v5908
      %v5921 = vadd.f32 %v5767, %v5910
      %v5922 = vadd.f32 %v5768, %v5912
      %v5923 = vadd.f32 %v5769, %v5914
      %5924 = vrot.lane.b32.xlu0 %v4870, 112
      %v5925 = vpop.permute.xlu0 %5924
      %5926 = vrot.lane.b32.xlu0 %v4872, 112
      %v5927 = vpop.permute.xlu0 %5926
      %5928 = vrot.lane.b32.xlu0 %v4874, 112
      %v5929 = vpop.permute.xlu0 %5928
      %5930 = vrot.lane.b32.xlu0 %v4876, 112
      %v5931 = vpop.permute.xlu0 %5930
      %5932 = vrot.lane.b32.xlu0 %v4878, 112
      %v5933 = vpop.permute.xlu0 %5932
      %5934 = vrot.lane.b32.xlu0 %v4880, 112
      %v5935 = vpop.permute.xlu0 %5934
      %5936 = vrot.lane.b32.xlu0 %v4882, 112
      %v5937 = vpop.permute.xlu0 %5936
      %5938 = vrot.lane.b32.xlu0 %v4884, 112
      %v5939 = vpop.permute.xlu0 %5938
      %5940 = vrot.lane.b32.xlu0 %v4871, 112
      %v5941 = vpop.permute.xlu0 %5940
      %5942 = vrot.lane.b32.xlu0 %v4873, 112
      %v5943 = vpop.permute.xlu0 %5942
      %5944 = vrot.lane.b32.xlu0 %v4875, 112
      %v5945 = vpop.permute.xlu0 %5944
      %5946 = vrot.lane.b32.xlu0 %v4877, 112
      %v5947 = vpop.permute.xlu0 %5946
      %5948 = vrot.lane.b32.xlu0 %v4879, 112
      %v5949 = vpop.permute.xlu0 %5948
      %5950 = vrot.lane.b32.xlu0 %v4881, 112
      %v5951 = vpop.permute.xlu0 %5950
      %5952 = vrot.lane.b32.xlu0 %v4883, 112
      %v5953 = vpop.permute.xlu0 %5952
      %5954 = vrot.lane.b32.xlu0 %v4885, 112
      %v5955 = vpop.permute.xlu0 %5954
      %v5956 = vsel %vm2309, %v5925, %v5941
      %v5957 = vsel %vm2309, %v5927, %v5943
      %v5958 = vsel %vm2309, %v5929, %v5945
      %v5959 = vsel %vm2309, %v5931, %v5947
      %v5960 = vsel %vm2309, %v5933, %v5949
      %v5961 = vsel %vm2309, %v5935, %v5951
      %v5962 = vsel %vm2309, %v5937, %v5953
      %v5963 = vsel %vm2309, %v5939, %v5955
      %v5964 = vsel %vm2309, %v5941, %v5925
      %v5965 = vsel %vm2309, %v5943, %v5927
      %v5966 = vsel %vm2309, %v5945, %v5929
      %v5967 = vsel %vm2309, %v5947, %v5931
      %v5968 = vsel %vm2309, %v5949, %v5933
      %v5969 = vsel %vm2309, %v5951, %v5935
      %v5970 = vsel %vm2309, %v5953, %v5937
      %v5971 = vsel %vm2309, %v5955, %v5939
      %v5972 = vmul.f32 %v5956, %v4510
      %v5973 = vmul.f32 %v5964, %v4514
      %v5974 = vmul.f32 %v5957, %v4510
      %v5975 = vmul.f32 %v5965, %v4514
      %v5976 = vmul.f32 %v5958, %v4510
      %v5977 = vmul.f32 %v5966, %v4514
      %v5978 = vmul.f32 %v5959, %v4510
      %v5979 = vmul.f32 %v5967, %v4514
      %v5980 = vmul.f32 %v5960, %v4510
      %v5981 = vmul.f32 %v5968, %v4514
      %v5982 = vmul.f32 %v5961, %v4510
      %v5983 = vmul.f32 %v5969, %v4514
      %v5984 = vmul.f32 %v5962, %v4510
      %v5985 = vmul.f32 %v5970, %v4514
      %v5986 = vmul.f32 %v5963, %v4510
      %v5987 = vmul.f32 %v5971, %v4514
      %s5988 = scalar_lea.vmem %s7, 112
      %v5989 = vld [vmem:[%s5988] sm:$0xf]
      %v5990 = vld [vmem:[%s5988 + $0x4] sm:$0xf]
      %v5991 = vld [vmem:[%s5988 + $0x8] sm:$0xf]
      %v5992 = vld [vmem:[%s5988 + $0xc] sm:$0xf]
      %v5993 = vpack.c.bf16 %v5974, %v5972
      %v5994 = vpack.c.bf16 %v5975, %v5973
      %v5995 = vpack.c.bf16 %v5978, %v5976
      %v5996 = vpack.c.bf16 %v5979, %v5977
      %v5997 = vpack.c.bf16 %v5982, %v5980
      %v5998 = vpack.c.bf16 %v5983, %v5981
      %v5999 = vpack.c.bf16 %v5986, %v5984
      %v6000 = vpack.c.bf16 %v5987, %v5985
      %v6005 = vunpack.c.l.b16 %v5989
      %v6006 = vunpack.c.l.b16 %v5990
      %v6007 = vunpack.c.l.b16 %v5991
      %v6008 = vunpack.c.l.b16 %v5992
      %v6009 = vpack.c.b16 %v6006, %v6005
      %v6010 = vpack.c.b16 %v6008, %v6007
      %v6012 = vsel %vm4996, %v6009, 0
      %v6015 = vsel %vm4996, %v6010, 0
      %6017 = vmatprep.subr.bf16.mxu0 %v5994
      %6018 = vmatpush1.bf16.msra.mxu0 %v5993
      %6019 = vmatprep.subr.bf16.mxu0 %v5996
      %6020 = vmatpush1.bf16.msra.mxu0 %v5995
      %6021 = vmatprep.subr.bf16.mxu0 %v5998
      %6022 = vmatpush1.bf16.msra.mxu0 %v5997
      %6023 = vmatprep.subr.bf16.mxu0 %v6000
      %6024 = vmatpush1.bf16.msra.mxu0 %v5999
      %6025 = vmatprep.subr.bf16.mxu0 0
      %6026 = vmatpush1.bf16.msra.mxu0 0
      %6027 = vmatprep.subr.bf16.mxu0 0
      %6028 = vmatpush1.bf16.msra.mxu0 0
      %6029 = vmatprep.subr.bf16.mxu0 0
      %6030 = vmatpush1.bf16.msra.mxu0 0
      %6031 = vmatprep.subr.bf16.mxu0 0
      %6032 = vmatpush1.bf16.msra.mxu0 0
      %6033 = vmatprep.subr.bf16.mxu0 0
      %6034 = vmatpush1.bf16.msra.mxu0 0
      %6035 = vmatprep.subr.bf16.mxu0 0
      %6036 = vmatpush1.bf16.msra.mxu0 0
      %6037 = vmatprep.subr.bf16.mxu0 0
      %6038 = vmatpush1.bf16.msra.mxu0 0
      %6039 = vmatprep.subr.bf16.mxu0 0
      %6040 = vmatpush1.bf16.msra.mxu0 0
      %6041 = vmatprep.subr.bf16.mxu0 0
      %6042 = vmatpush1.bf16.msra.mxu0 0
      %6043 = vmatprep.subr.bf16.mxu0 0
      %6044 = vmatpush1.bf16.msra.mxu0 0
      %6045 = vmatprep.subr.bf16.mxu0 0
      %6046 = vmatpush1.bf16.msra.mxu0 0
      %6047 = vmatprep.subr.bf16.mxu0 0
      %6048 = vmatpush1.bf16.msra.mxu0 0
      %6049 = vmatprep.mubr.bf16.mxu0 0
      %6050 = vmatmul.mubr.bf16.gmra.mrb[0].mxu0 %v6012
      %v6051 = vpop.f32.mrb[0].mxu0
      %v6052 = vadd.f32 0.0, %v6051
      %v6053 = vpop.f32.mrb[0].mxu0
      %v6054 = vadd.f32 0.0, %v6053
      %v6055 = vpop.f32.mrb[0].mxu0
      %v6056 = vadd.f32 0.0, %v6055
      %v6057 = vpop.f32.mrb[0].mxu0
      %v6058 = vadd.f32 0.0, %v6057
      %6059 = vmatprep.mubr.bf16.mxu0 0
      %6060 = vmatmul.mubr.bf16.gmra.mrb[0].mxu0 %v6015
      %v6061 = vpop.f32.mrb[0].mxu0
      %v6062 = vadd.f32 0.0, %v6061
      %v6063 = vpop.f32.mrb[0].mxu0
      %v6064 = vadd.f32 0.0, %v6063
      %v6065 = vpop.f32.mrb[0].mxu0
      %v6066 = vadd.f32 0.0, %v6065
      %v6067 = vpop.f32.mrb[0].mxu0
      %v6068 = vadd.f32 0.0, %v6067
      %6069 = vdwg.mxu0
      %v6070 = vadd.f32 %v5916, %v6052
      %v6071 = vadd.f32 %v5917, %v6054
      %v6072 = vadd.f32 %v5918, %v6056
      %v6073 = vadd.f32 %v5919, %v6058
      %v6074 = vadd.f32 %v5920, %v6062
      %v6075 = vadd.f32 %v5921, %v6064
      %v6076 = vadd.f32 %v5922, %v6066
      %v6077 = vadd.f32 %v5923, %v6068
      %6078 = vrot.lane.b32.xlu0 %v4870, 111
      %v6079 = vpop.permute.xlu0 %6078
      %6080 = vrot.lane.b32.xlu0 %v4872, 111
      %v6081 = vpop.permute.xlu0 %6080
      %6082 = vrot.lane.b32.xlu0 %v4874, 111
      %v6083 = vpop.permute.xlu0 %6082
      %6084 = vrot.lane.b32.xlu0 %v4876, 111
      %v6085 = vpop.permute.xlu0 %6084
      %6086 = vrot.lane.b32.xlu0 %v4878, 111
      %v6087 = vpop.permute.xlu0 %6086
      %6088 = vrot.lane.b32.xlu0 %v4880, 111
      %v6089 = vpop.permute.xlu0 %6088
      %6090 = vrot.lane.b32.xlu0 %v4882, 111
      %v6091 = vpop.permute.xlu0 %6090
      %6092 = vrot.lane.b32.xlu0 %v4884, 111
      %v6093 = vpop.permute.xlu0 %6092
      %6094 = vrot.lane.b32.xlu0 %v4871, 111
      %v6095 = vpop.permute.xlu0 %6094
      %6096 = vrot.lane.b32.xlu0 %v4873, 111
      %v6097 = vpop.permute.xlu0 %6096
      %6098 = vrot.lane.b32.xlu0 %v4875, 111
      %v6099 = vpop.permute.xlu0 %6098
      %6100 = vrot.lane.b32.xlu0 %v4877, 111
      %v6101 = vpop.permute.xlu0 %6100
      %6102 = vrot.lane.b32.xlu0 %v4879, 111
      %v6103 = vpop.permute.xlu0 %6102
      %6104 = vrot.lane.b32.xlu0 %v4881, 111
      %v6105 = vpop.permute.xlu0 %6104
      %6106 = vrot.lane.b32.xlu0 %v4883, 111
      %v6107 = vpop.permute.xlu0 %6106
      %6108 = vrot.lane.b32.xlu0 %v4885, 111
      %v6109 = vpop.permute.xlu0 %6108
      %v6110 = vsel %vm2421, %v6079, %v6095
      %v6111 = vsel %vm2421, %v6081, %v6097
      %v6112 = vsel %vm2421, %v6083, %v6099
      %v6113 = vsel %vm2421, %v6085, %v6101
      %v6114 = vsel %vm2421, %v6087, %v6103
      %v6115 = vsel %vm2421, %v6089, %v6105
      %v6116 = vsel %vm2421, %v6091, %v6107
      %v6117 = vsel %vm2421, %v6093, %v6109
      %v6118 = vsel %vm2421, %v6095, %v6079
      %v6119 = vsel %vm2421, %v6097, %v6081
      %v6120 = vsel %vm2421, %v6099, %v6083
      %v6121 = vsel %vm2421, %v6101, %v6085
      %v6122 = vsel %vm2421, %v6103, %v6087
      %v6123 = vsel %vm2421, %v6105, %v6089
      %v6124 = vsel %vm2421, %v6107, %v6091
      %v6125 = vsel %vm2421, %v6109, %v6093
      %v6126 = vmul.f32 %v6110, %v4689
      %v6127 = vmul.f32 %v6118, %v4693
      %v6128 = vmul.f32 %v6111, %v4689
      %v6129 = vmul.f32 %v6119, %v4693
      %v6130 = vmul.f32 %v6112, %v4689
      %v6131 = vmul.f32 %v6120, %v4693
      %v6132 = vmul.f32 %v6113, %v4689
      %v6133 = vmul.f32 %v6121, %v4693
      %v6134 = vmul.f32 %v6114, %v4689
      %v6135 = vmul.f32 %v6122, %v4693
      %v6136 = vmul.f32 %v6115, %v4689
      %v6137 = vmul.f32 %v6123, %v4693
      %v6138 = vmul.f32 %v6116, %v4689
      %v6139 = vmul.f32 %v6124, %v4693
      %v6140 = vmul.f32 %v6117, %v4689
      %v6141 = vmul.f32 %v6125, %v4693
      %s6142 = scalar_lea.vmem %s7, 128
      %v6143 = vld [vmem:[%s6142] sm:$0xf]
      %v6144 = vld [vmem:[%s6142 + $0x4] sm:$0xf]
      %v6145 = vld [vmem:[%s6142 + $0x8] sm:$0xf]
      %v6146 = vld [vmem:[%s6142 + $0xc] sm:$0xf]
      %v6147 = vpack.c.bf16 %v6128, %v6126
      %v6148 = vpack.c.bf16 %v6129, %v6127
      %v6149 = vpack.c.bf16 %v6132, %v6130
      %v6150 = vpack.c.bf16 %v6133, %v6131
      %v6151 = vpack.c.bf16 %v6136, %v6134
      %v6152 = vpack.c.bf16 %v6137, %v6135
      %v6153 = vpack.c.bf16 %v6140, %v6138
      %v6154 = vpack.c.bf16 %v6141, %v6139
      %v6159 = vunpack.c.l.b16 %v6143
      %v6160 = vunpack.c.l.b16 %v6144
      %v6161 = vunpack.c.l.b16 %v6145
      %v6162 = vunpack.c.l.b16 %v6146
      %v6163 = vpack.c.b16 %v6160, %v6159
      %v6164 = vpack.c.b16 %v6162, %v6161
      %v6166 = vsel %vm4996, %v6163, 0
      %v6169 = vsel %vm4996, %v6164, 0
      %6171 = vmatprep.subr.bf16.mxu0 %v6148
      %6172 = vmatpush1.bf16.msra.mxu0 %v6147
      %6173 = vmatprep.subr.bf16.mxu0 %v6150
      %6174 = vmatpush1.bf16.msra.mxu0 %v6149
      %6175 = vmatprep.subr.bf16.mxu0 %v6152
      %6176 = vmatpush1.bf16.msra.mxu0 %v6151
      %6177 = vmatprep.subr.bf16.mxu0 %v6154
      %6178 = vmatpush1.bf16.msra.mxu0 %v6153
      %6179 = vmatprep.subr.bf16.mxu0 0
      %6180 = vmatpush1.bf16.msra.mxu0 0
      %6181 = vmatprep.subr.bf16.mxu0 0
      %6182 = vmatpush1.bf16.msra.mxu0 0
      %6183 = vmatprep.subr.bf16.mxu0 0
      %6184 = vmatpush1.bf16.msra.mxu0 0
      %6185 = vmatprep.subr.bf16.mxu0 0
      %6186 = vmatpush1.bf16.msra.mxu0 0
      %6187 = vmatprep.subr.bf16.mxu0 0
      %6188 = vmatpush1.bf16.msra.mxu0 0
      %6189 = vmatprep.subr.bf16.mxu0 0
      %6190 = vmatpush1.bf16.msra.mxu0 0
      %6191 = vmatprep.subr.bf16.mxu0 0
      %6192 = vmatpush1.bf16.msra.mxu0 0
      %6193 = vmatprep.subr.bf16.mxu0 0
      %6194 = vmatpush1.bf16.msra.mxu0 0
      %6195 = vmatprep.subr.bf16.mxu0 0
      %6196 = vmatpush1.bf16.msra.mxu0 0
      %6197 = vmatprep.subr.bf16.mxu0 0
      %6198 = vmatpush1.bf16.msra.mxu0 0
      %6199 = vmatprep.subr.bf16.mxu0 0
      %6200 = vmatpush1.bf16.msra.mxu0 0
      %6201 = vmatprep.subr.bf16.mxu0 0
      %6202 = vmatpush1.bf16.msra.mxu0 0
      %6203 = vmatprep.mubr.bf16.mxu0 0
      %6204 = vmatmul.mubr.bf16.gmra.mrb[0].mxu0 %v6166
      %v6205 = vpop.f32.mrb[0].mxu0
      %v6206 = vadd.f32 0.0, %v6205
      %v6207 = vpop.f32.mrb[0].mxu0
      %v6208 = vadd.f32 0.0, %v6207
      %v6209 = vpop.f32.mrb[0].mxu0
      %v6210 = vadd.f32 0.0, %v6209
      %v6211 = vpop.f32.mrb[0].mxu0
      %v6212 = vadd.f32 0.0, %v6211
      %6213 = vmatprep.mubr.bf16.mxu0 0
      %6214 = vmatmul.mubr.bf16.gmra.mrb[0].mxu0 %v6169
      %v6215 = vpop.f32.mrb[0].mxu0
      %v6216 = vadd.f32 0.0, %v6215
      %v6217 = vpop.f32.mrb[0].mxu0
      %v6218 = vadd.f32 0.0, %v6217
      %v6219 = vpop.f32.mrb[0].mxu0
      %v6220 = vadd.f32 0.0, %v6219
      %v6221 = vpop.f32.mrb[0].mxu0
      %v6222 = vadd.f32 0.0, %v6221
      %6223 = vdwg.mxu0
      %v6224 = vadd.f32 %v6070, %v6206
      %v6225 = vadd.f32 %v6071, %v6208
      %v6226 = vadd.f32 %v6072, %v6210
      %v6227 = vadd.f32 %v6073, %v6212
      %v6228 = vadd.f32 %v6074, %v6216
      %v6229 = vadd.f32 %v6075, %v6218
      %v6230 = vadd.f32 %v6076, %v6220
      %v6231 = vadd.f32 %v6077, %v6222
      %vm6232 = vcmp.gt.f32.partialorder %v6224, 0.0
      %vm6233 = vcmp.gt.f32.partialorder %v6225, 0.0
      %vm6234 = vcmp.gt.f32.partialorder %v6226, 0.0
      %vm6235 = vcmp.gt.f32.partialorder %v6227, 0.0
      %vm6236 = vcmp.gt.f32.partialorder %v6228, 0.0
      %vm6237 = vcmp.gt.f32.partialorder %v6229, 0.0
      %vm6238 = vcmp.gt.f32.partialorder %v6230, 0.0
      %vm6239 = vcmp.gt.f32.partialorder %v6231, 0.0
      %v6240 = vmul.f32 %v6224, 0.01
      %v6241 = vmul.f32 %v6225, 0.01
      %v6242 = vmul.f32 %v6226, 0.01
      %v6243 = vmul.f32 %v6227, 0.01
      %v6244 = vmul.f32 %v6228, 0.01
      %v6245 = vmul.f32 %v6229, 0.01
      %v6246 = vmul.f32 %v6230, 0.01
      %v6247 = vmul.f32 %v6231, 0.01
      %v6248 = vsel %vm6232, %v6224, %v6240
      %v6249 = vsel %vm6233, %v6225, %v6241
      %v6250 = vsel %vm6234, %v6226, %v6242
      %v6251 = vsel %vm6235, %v6227, %v6243
      %v6252 = vsel %vm6236, %v6228, %v6244
      %v6253 = vsel %vm6237, %v6229, %v6245
      %v6254 = vsel %vm6238, %v6230, %v6246
      %v6255 = vsel %vm6239, %v6231, %v6247
      %v6256 = vld [vmem:[%s9] sm:$0x3]
      %v6257 = vpack.c.bf16 %v6250, %v6248
      %v6258 = vpack.c.bf16 %v6251, %v6249
      %v6259 = vpack.c.bf16 %v6254, %v6252
      %v6260 = vpack.c.bf16 %v6255, %v6253
      %v6261 = vld [vmem:[%s10] sm:$0xf]
      %6263 = vset.pattern.permute.xlu0 0
      %6264 = vperm.xlu0 %6263, %v6261
      %v6265 = vpop.permute.xlu0 %6264
      %v6268 = vsel %vm3349, %v6256, 0
      %6270 = vmatprep.subr.bf16.mxu0 %v6258
      %6271 = vmatpush1.bf16.msra.mxu0 %v6257
      %6272 = vmatprep.subr.bf16.mxu0 %v6260
      %6273 = vmatpush1.bf16.msra.mxu0 %v6259
      %6274 = vmatprep.subr.bf16.mxu0 0
      %6275 = vmatpush1.bf16.msra.mxu0 0
      %6276 = vmatprep.subr.bf16.mxu0 0
      %6277 = vmatpush1.bf16.msra.mxu0 0
      %6278 = vmatprep.subr.bf16.mxu0 0
      %6279 = vmatpush1.bf16.msra.mxu0 0
      %6280 = vmatprep.subr.bf16.mxu0 0
      %6281 = vmatpush1.bf16.msra.mxu0 0
      %6282 = vmatprep.subr.bf16.mxu0 0
      %6283 = vmatpush1.bf16.msra.mxu0 0
      %6284 = vmatprep.subr.bf16.mxu0 0
      %6285 = vmatpush1.bf16.msra.mxu0 0
      %6286 = vmatprep.subr.bf16.mxu0 0
      %6287 = vmatpush1.bf16.msra.mxu0 0
      %6288 = vmatprep.subr.bf16.mxu0 0
      %6289 = vmatpush1.bf16.msra.mxu0 0
      %6290 = vmatprep.subr.bf16.mxu0 0
      %6291 = vmatpush1.bf16.msra.mxu0 0
      %6292 = vmatprep.subr.bf16.mxu0 0
      %6293 = vmatpush1.bf16.msra.mxu0 0
      %6294 = vmatprep.subr.bf16.mxu0 0
      %6295 = vmatpush1.bf16.msra.mxu0 0
      %6296 = vmatprep.subr.bf16.mxu0 0
      %6297 = vmatpush1.bf16.msra.mxu0 0
      %6298 = vmatprep.subr.bf16.mxu0 0
      %6299 = vmatpush1.bf16.msra.mxu0 0
      %6300 = vmatprep.subr.bf16.mxu0 0
      %6301 = vmatpush1.bf16.msra.mxu0 0
      %6302 = vmatprep.mubr.bf16.mxu0 0
      %6303 = vmatmul.mubr.bf16.gmra.mrb[0].mxu0 %v6268
      %v6304 = vpop.f32.mrb[0].mxu0
      %v6305 = vadd.f32 %v6265, %v6304
      %v6306 = vpop.f32.mrb[0].mxu0
      %v6307 = vadd.f32 %v6265, %v6306
      %v6308 = vpop.f32.mrb[0].mxu0
      %v6309 = vpop.f32.mrb[0].mxu0
      %6310 = vdwg.mxu0
      %v6313 = vcombine.low %v6305, %v6307
      %6315 = vst [vmem:[%s388] sm:$0xff] %v6313
      %s6316 = smul.u32 2, %s22
      %p6317 = scmp.lt.s32.totalorder %s6316, 3
      %s6318 = scalar_select %p6317, %s6316, 3
      %s6319 = smul.addr %s6318, 4
      %s6320 = scalar_lea.vmem %s11, %s6319
      // Predicated region
      $region65: #{_rnet_impl.1} parent=63 // pred_check
        %p6321 = pneg %p276
      $region66: #{_rnet_impl.1} parent=63 // pred_check_branch
        %6323 = sbr.rel (%p6321) target = $region68
      $region67: #{_rnet_impl.1} parent=63 // pred_region
        %s6324 = smul.u32 2, %s22
      $region68: #{_rnet_impl.1} parent=63 // pred_fallthru
        _
    $region64: #{_rnet_impl.1} parent=5 // pred_fallthru
      _
    %p6325 = scmp.le.s32.totalorder 2, %s17
    // Predicated region
    $region69: #{_rnet_impl.1} parent=5 // pred_check
      %p6326 = pneg %p6325
    $region70: #{_rnet_impl.1} parent=5 // pred_check_branch
      %6328 = sbr.rel (%p6326) target = $region72
    $region71: #{_rnet_impl.1} parent=5 // pred_region
      %s6329 = ssub.s32 %s17, 2
      // Predicated region
      $region73: #{_rnet_impl.1} parent=71 // pred_check
        %p6330 = pneg %p282
      $region74: #{_rnet_impl.1} parent=71 // pred_check_branch
        %6332 = sbr.rel (%p6330) target = $region76
      $region75: #{_rnet_impl.1} parent=71 // pred_region
        %s6333 = smul.u32 2, %s23
        %p6334 = scmp.lt.s32.totalorder %s6333, 3
        %s6335 = scalar_select %p6334, %s6333, 3
        %s6336 = smul.addr %s6335, 4
        %s6337 = scalar_lea.vmem %s11, %s6336
      $region76: #{_rnet_impl.1} parent=71 // pred_fallthru
        _
    $region72: #{_rnet_impl.1} parent=5 // pred_fallthru
      _
  $region6: #{_rnet_impl.1} parent=0 // loop_footer
    %s21 = sadd.s32 1, %s17
  $region7: #{_rnet_impl.1} parent=0 // loop_footer_branch
    %16 = sbr.rel target = $region3
  $region8: #{_rnet_impl.1} parent=0 // loop_exit
    _

</llo_original>
